<compile_context>
chip_gen: v6e
topology: v6e:2x2x1
jax: 0.10.0
libtpu: 0.0.40
codegen_flags: <defaults>
</compile_context>

<pallas_src>
import functools

import numpy as np
import jax
import jax.numpy as jnp
from jax import lax
from jax.experimental import pallas as pl
from jax.experimental.pallas import tpu as pltpu


def _round_up(x, m):
    return (x + m - 1) // m * m


# ---------------------------------------------------------------------------
# Fused upsample(x2, trilinear) + Conv3d(3x3x3, pad=1) + bias + ReLU for one
# (batch n, depth-block j) grid step.
#
#   refs[0..tb+1] : (1, 1, cin_p, lp)  edge-padded original depth slices
#                   j*tb-1 .. j*tb+tb (clamped), flattened over (H+2)*(W+2)
#   w_ref         : (8*Cout, 64*cin_p) fused weight matrix
#   bias_ref      : (8*Cout, 1)
#   mask_ref      : (4, l3)            conv zero-pad masks per (row,col) parity
#   o_ref         : (1, 1, 8*Cout, tb*ncol_p)
#   im_ref        : (64*cin_p, tb*ncol_p)  im2col scratch (VMEM)
# ---------------------------------------------------------------------------
def _upconv_kernel(*refs, cin_p, wp, ncol_p, lp, tb):
    x_refs = refs[:tb + 2]
    w_ref, bias_ref, mask_ref, o_ref, im_ref = refs[tb + 2:]

    j = pl.program_id(1)
    nj = pl.num_programs(1)
    l2 = lp - wp        # row-blend plane length
    l3 = l2 - 1         # col-blend plane length

    for t in range(tb):
        xp_prev = x_refs[t][0, 0]        # X[k-1] (edge clamped), (cin_p, lp)
        xp_cur = x_refs[t + 1][0, 0]     # X[k]
        xp_next = x_refs[t + 2][0, 0]    # X[k+1] (edge clamped)
        dt = xp_cur.dtype

        # Depth-upsampled slabs for upsampled depths 2k-1 .. 2k+2.  The conv's
        # zero padding along depth (U[-1], U[2D]) is folded into the scalar
        # blend coefficients; interior steps pay no extra full-slab pass.
        if t == 0:
            lo = jnp.where(j == 0, 0.0, 1.0).astype(dt)
            slab0 = (0.75 * lo) * xp_prev + (0.25 * lo) * xp_cur
        else:
            slab0 = 0.75 * xp_prev + 0.25 * xp_cur
        slab1 = 0.25 * xp_prev + 0.75 * xp_cur
        slab2 = 0.75 * xp_cur + 0.25 * xp_next
        if t == tb - 1:
            hi = jnp.where(j == nj - 1, 0.0, 1.0).astype(dt)
            slab3 = (0.25 * hi) * xp_cur + (0.75 * hi) * xp_next
        else:
            slab3 = 0.25 * xp_cur + 0.75 * xp_next

        for s, slab in enumerate((slab0, slab1, slab2, slab3)):
            # Row (H) upsample: both parities come from two static slices of
            # the same slab (offsets 0 / +wp) -- no zero-fill, no concatenate.
            s0 = slab[:, 0:l2]
            s1 = slab[:, wp:wp + l2]
            rows = (0.25 * s0 + 0.75 * s1,   # e=0 (even upsampled rows), base wp
                    0.75 * s0 + 0.25 * s1)   # e=1 (odd  upsampled rows), base 0
            for e, r in enumerate(rows):
                # Column (W) upsample + conv zero-padding mask (mask rows are
                # pre-shifted host-side to this plane's lane offset).
                r0 = r[:, 0:l3]
                r1 = r[:, 1:1 + l3]
                planes = (
                    (0.25 * r0 + 0.75 * r1) * mask_ref[2 * e:2 * e + 1, :],
                    (0.75 * r0 + 0.25 * r1) * mask_ref[2 * e + 1:2 * e + 2, :],
                )
                for f, g in enumerate(planes):
                    for a in range(2):
                        for b in range(2):
                            kidx = (((e * 2 + a) * 2 + f) * 2 + b) * 4 + s
                            m0 = a * wp + b
                            im_ref[kidx * cin_p:(kidx + 1) * cin_p,
                                   t * ncol_p:(t + 1) * ncol_p] = (
                                       g[:, m0:m0 + ncol_p])

    # Single MXU contraction per grid step.
    acc = jnp.dot(w_ref[...], im_ref[...], preferred_element_type=jnp.float32)
    acc = acc + bias_ref[...]
    o_ref[0, 0] = jnp.maximum(acc, 0.0).astype(o_ref.dtype)


# ---------------------------------------------------------------------------
# Wrapper-side (tiny) constant construction.
# ---------------------------------------------------------------------------
def _build_weight_matrix(weight):
    """(Cout, Cin_p, 3, 3, 3) -> fused (8*Cout, 64*Cin_p) matrix.

    Output rows: (p, q, r, cout) = depth/row/col output parities x Cout.
    K columns:   (e, a, f, b, s, ci) matching the kernel's im2col rows.
    """
    cout, cin_p = weight.shape[0], weight.shape[1]
    tap = {0: {(1, 0): 0, (0, 0): 1, (1, 1): 2},
           1: {(0, 0): 0, (1, 1): 1, (0, 1): 2}}
    sel = np.zeros((2, 2, 2, 2, 2, 2, 2, 4, 3, 3, 3), np.float32)
    for p in range(2):
        for q in range(2):
            for r in range(2):
                for e in range(2):
                    for a in range(2):
                        dh = tap[q].get((e, a))
                        if dh is None:
                            continue
                        for f in range(2):
                            for b in range(2):
                                dw = tap[r].get((f, b))
                                if dw is None:
                                    continue
                                for s in range(4):
                                    dd = s - p
                                    if 0 <= dd <= 2:
                                        sel[p, q, r, e, a, f, b, s,
                                            dd, dh, dw] = 1.0
    amat = jnp.einsum('pqreafbsdhw,oidhw->pqroeafbsi',
                      jnp.asarray(sel), weight.astype(jnp.float32))
    return amat.reshape(8 * cout, 64 * cin_p)


def _build_boundary_masks(h, w, wp, flat, l3):
    """Conv zero-padding masks, one row per (row-parity e, col-parity f).

    The per-(e, f) lane offset of the in-kernel column plane is baked in so
    the kernel can multiply without any further shifting.
    """
    masks = np.zeros((4, l3), np.float32)
    for e in range(2):
        for f in range(2):
            off = (1 - e) * wp + (1 - f)
            pos = off + np.arange(l3)
            row = pos // wp
            col = pos % wp
            ok = pos < flat
            ok &= (row != h + 1) if e == 0 else (row != 0)
            ok &= (col != w + 1) if f == 0 else (col != 0)
            masks[2 * e + f] = ok.astype(np.float32)
    return masks


# ---------------------------------------------------------------------------
# Full module forward: NCDHW in, NCDHW out (matches PyTorch semantics).
# ---------------------------------------------------------------------------
def _upsampling_forward(x, weight, bias):
    n, cin, d, h, w = x.shape
    cout = weight.shape[0]

    cin_p = _round_up(cin, 8)                 # sublane-aligned im2col blocks
    wp = w + 2
    flat = (h + 2) * wp
    ncol = h * wp                             # valid output columns per depth
    ncol_p = _round_up(ncol, 128)             # lane-dense matmul / output width
    lp = _round_up(2 * wp + 2 + ncol_p, 128)  # padded input lane width
    l3 = lp - wp - 1
    m = 8 * cout
    kdim = 64 * cin_p

    # Depth slices per grid step: bigger matmul N & fewer steps, but bounded so
    # the im2col scratch stays comfortably inside v7x's 64 MiB VMEM.
    tb = 1
    for cand in (4, 2):
        if d % cand == 0 and kdim * cand * ncol_p * 4 <= 6 * 2**20:
            tb = cand
            break
    d2 = d // tb

    # Small, input-sized preprocessing only (1/8th of the output element count).
    xt = jnp.transpose(x, (0, 2, 1, 3, 4)).astype(jnp.float32)   # (N,D,Cin,H,W)
    xt = jnp.pad(xt, ((0, 0), (1, 1), (0, 0), (1, 1), (1, 1)), mode='edge')
    if cin_p != cin:
        xt = jnp.pad(xt, ((0, 0), (0, 0), (0, cin_p - cin), (0, 0), (0, 0)))
    xt = xt.reshape(n, d + 2, cin_p, flat)
    xt = jnp.pad(xt, ((0, 0), (0, 0), (0, 0), (0, lp - flat)))   # (N,D+2,Cin_p,LP)

    w_pad = weight.astype(jnp.float32)
    if cin_p != cin:
        w_pad = jnp.pad(w_pad, ((0, 0), (0, cin_p - cin), (0, 0), (0, 0), (0, 0)))
    amat = _build_weight_matrix(w_pad)                           # (8Cout, 64Cin_p)
    bias2 = jnp.tile(bias.astype(jnp.float32), 8).reshape(m, 1)
    masks = jnp.asarray(_build_boundary_masks(h, w, wp, flat, l3))

    out_dtype = x.dtype

    # VMEM budget: double-buffered inputs/outputs + resident weights + scratch.
    est = ((tb + 2) * 2 * cin_p * lp * 4
           + 2 * m * kdim * 4
           + 2 * m * 128 * 4
           + 2 * 8 * _round_up(l3, 128) * 4
           + 2 * m * tb * ncol_p * jnp.dtype(out_dtype).itemsize
           + kdim * tb * ncol_p * 4)
    vmem_limit = int(min(100 * 2**20, max(24 * 2**20, 2 * est + 8 * 2**20)))

    kernel = functools.partial(_upconv_kernel, cin_p=cin_p, wp=wp,
                               ncol_p=ncol_p, lp=lp, tb=tb)

    def _slice_spec(c):
        # Overlapping depth halo: block c of this step is padded depth j*tb + c.
        return pl.BlockSpec((1, 1, cin_p, lp),
                            lambda i, j, _c=c: (i, j * tb + _c, 0, 0))

    out = pl.pallas_call(
        kernel,
        out_shape=jax.ShapeDtypeStruct((n, d2, m, tb * ncol_p), out_dtype),
        grid_spec=pltpu.PrefetchScalarGridSpec(
            num_scalar_prefetch=0,
            grid=(n, d2),
            in_specs=[_slice_spec(c) for c in range(tb + 2)] + [
                pl.BlockSpec((m, kdim), lambda i, j: (0, 0)),
                pl.BlockSpec((m, 1), lambda i, j: (0, 0)),
                pl.BlockSpec((4, l3), lambda i, j: (0, 0)),
            ],
            out_specs=pl.BlockSpec((1, 1, m, tb * ncol_p),
                                   lambda i, j: (i, j, 0, 0)),
            scratch_shapes=[pltpu.VMEM((kdim, tb * ncol_p), jnp.float32)],
        ),
        compiler_params=pltpu.CompilerParams(
            dimension_semantics=("parallel", "parallel"),
            vmem_limit_bytes=vmem_limit),
    )(*([xt] * (tb + 2)), amat, bias2, masks)

    # Layout plumbing only: drop pad columns, interleave parities -> NCDHW.
    y = out.reshape(n, d2, 2, 2, 2, cout, tb, ncol_p)[..., :ncol]
    y = y.reshape(n, d2, 2, 2, 2, cout, tb, h, wp)[..., :w]
    # dims: (n, j, p, q, r, cout, t, h_idx, w_idx)
    y = jnp.transpose(y, (0, 5, 1, 6, 2, 7, 3, 8, 4))
    return y.reshape(n, cout, 2 * d, 2 * h, 2 * w).astype(x.dtype)


_upsampling_forward_jit = jax.jit(_upsampling_forward)


def upsampling_forward(x, weight, bias, stride=2):
    assert stride == 2, "this implementation specializes scale_factor=2"
    return _upsampling_forward_jit(x, weight, bias)


# ---------------------------------------------------------------------------
# Pure-JAX reference (PyTorch trilinear x2, align_corners=False) for the check.
# ---------------------------------------------------------------------------
def _upsample_axis_x2(x, axis):
    L = x.shape[axis]
    x_prev = jnp.concatenate(
        [lax.slice_in_dim(x, 0, 1, axis=axis),
         lax.slice_in_dim(x, 0, L - 1, axis=axis)], axis=axis)
    x_next = jnp.concatenate(
        [lax.slice_in_dim(x, 1, L, axis=axis),
         lax.slice_in_dim(x, L - 1, L, axis=axis)], axis=axis)
    even = 0.75 * x + 0.25 * x_prev
    odd = 0.75 * x + 0.25 * x_next
    y = jnp.stack([even, odd], axis=axis + 1)
    new_shape = list(x.shape)
    new_shape[axis] = 2 * L
    return y.reshape(new_shape)


def _reference_forward(x, w_pt, b):
    x_up = jnp.transpose(x, (0, 2, 3, 4, 1))
    for ax in (1, 2, 3):
        x_up = _upsample_axis_x2(x_up, ax)
    ref = lax.conv_general_dilated(
        x_up, jnp.transpose(w_pt, (2, 3, 4, 1, 0)),
        window_strides=(1, 1, 1), padding="SAME",
        dimension_numbers=("NDHWC", "DHWIO", "NDHWC"),
        precision=lax.Precision.HIGHEST)
    ref = jnp.maximum(ref + b[None, None, None, None, :], 0.0)
    return jnp.transpose(ref, (0, 4, 1, 2, 3))


if __name__ == "__main__":
    key = jax.random.PRNGKey(0)
    N, Cin, Cout = 2, 4, 8
    D = H = W = 8

    k1, k2, k3 = jax.random.split(key, 3)
    x = jax.random.normal(k1, (N, Cin, D, H, W), jnp.float32)
    # Conv3d default init: U(-1/sqrt(fan_in), 1/sqrt(fan_in)), fan_in = Cin*27
    bound = 1.0 / (Cin * 27) ** 0.5
    w_pt = jax.random.uniform(k2, (Cout, Cin, 3, 3, 3), jnp.float32, -bound, bound)
    b = jax.random.uniform(k3, (Cout,), jnp.float32, -bound, bound)

    y = upsampling_forward(x, w_pt, b, stride=2)
    y = jax.block_until_ready(y)
    assert y.shape == (N, Cout, 2 * D, 2 * H, 2 * W)
    assert bool(jnp.all(y >= 0.0))  # ReLU

    ref = _reference_forward(x, w_pt, b)
    max_err = float(jnp.max(jnp.abs(y - ref)))
    assert bool(jnp.allclose(y, ref, atol=2e-4, rtol=2e-4)), f"max err {max_err}"

    print("KERNEL_OK")
</pallas_src>

<mosaic_0001>
module attributes {stable_mosaic.version = 11 : i64} {
  func.func @_upconv_kernel(%arg0: i32, %arg1: i32, %arg2: memref<1x1x8x256xf32, #tpu.memory_space<vmem>>, %arg3: memref<1x1x8x256xf32, #tpu.memory_space<vmem>>, %arg4: memref<1x1x8x256xf32, #tpu.memory_space<vmem>>, %arg5: memref<1x1x8x256xf32, #tpu.memory_space<vmem>>, %arg6: memref<1x1x8x256xf32, #tpu.memory_space<vmem>>, %arg7: memref<1x1x8x256xf32, #tpu.memory_space<vmem>>, %arg8: memref<64x512xf32, #tpu.memory_space<vmem>>, %arg9: memref<64x1xf32, #tpu.memory_space<vmem>>, %arg10: memref<4x245xf32, #tpu.memory_space<vmem>>, %arg11: memref<1x1x64x512xf32, #tpu.memory_space<vmem>>, %arg12: memref<512x512xf32, #tpu.memory_space<vmem>>) attributes {dimension_semantics = [#tpu.dimension_semantics<parallel>, #tpu.dimension_semantics<parallel>], iteration_bounds = array<i64: 2, 2>, scalar_prefetch = 0 : i64, scratch_operands = 1 : i64, tpu.core_type = #tpu.core_type<tc>, window_params = [{transform_indices = @transform_0, window_bounds = array<i64: 1, 1, 8, 256>}, {transform_indices = @transform_1, window_bounds = array<i64: 1, 1, 8, 256>}, {transform_indices = @transform_2, window_bounds = array<i64: 1, 1, 8, 256>}, {transform_indices = @transform_3, window_bounds = array<i64: 1, 1, 8, 256>}, {transform_indices = @transform_4, window_bounds = array<i64: 1, 1, 8, 256>}, {transform_indices = @transform_5, window_bounds = array<i64: 1, 1, 8, 256>}, {pipeline_mode = #tpu.pipeline_mode<synchronous>, transform_indices = @transform_6, window_bounds = array<i64: 64, 512>}, {pipeline_mode = #tpu.pipeline_mode<synchronous>, transform_indices = @transform_7, window_bounds = array<i64: 64, 1>}, {pipeline_mode = #tpu.pipeline_mode<synchronous>, transform_indices = @transform_8, window_bounds = array<i64: 4, 245>}, {transform_indices = @transform_9, window_bounds = array<i64: 1, 1, 64, 512>}]} {
    %c0 = arith.constant 0 : index
    %c0_0 = arith.constant 0 : index
    %c0_1 = arith.constant 0 : index
    %c0_2 = arith.constant 0 : index
    %0 = vector.load %arg2[%c0, %c0_0, %c0_1, %c0_2] : memref<1x1x8x256xf32, #tpu.memory_space<vmem>>, vector<1x1x8x256xf32>
    %1 = vector.shape_cast %0 : vector<1x1x8x256xf32> to vector<8x256xf32>
    %c0_3 = arith.constant 0 : index
    %c0_4 = arith.constant 0 : index
    %c0_5 = arith.constant 0 : index
    %c0_6 = arith.constant 0 : index
    %2 = vector.load %arg3[%c0_3, %c0_4, %c0_5, %c0_6] : memref<1x1x8x256xf32, #tpu.memory_space<vmem>>, vector<1x1x8x256xf32>
    %3 = vector.shape_cast %2 : vector<1x1x8x256xf32> to vector<8x256xf32>
    %c0_7 = arith.constant 0 : index
    %c0_8 = arith.constant 0 : index
    %c0_9 = arith.constant 0 : index
    %c0_10 = arith.constant 0 : index
    %4 = vector.load %arg4[%c0_7, %c0_8, %c0_9, %c0_10] : memref<1x1x8x256xf32, #tpu.memory_space<vmem>>, vector<1x1x8x256xf32>
    %5 = vector.shape_cast %4 : vector<1x1x8x256xf32> to vector<8x256xf32>
    %c0_i32 = arith.constant 0 : i32
    %6 = arith.cmpi eq, %arg1, %c0_i32 : i32
    %cst = arith.constant 0.000000e+00 : f32
    %cst_11 = arith.constant 1.000000e+00 : f32
    %7 = arith.select %6, %cst, %cst_11 : f32
    %cst_12 = arith.constant 7.500000e-01 : f32
    %8 = arith.mulf %cst_12, %7 : f32
    %9 = vector.broadcast %8 : f32 to vector<8x256xf32>
    %10 = arith.mulf %9, %1 : vector<8x256xf32>
    %cst_13 = arith.constant 2.500000e-01 : f32
    %11 = arith.mulf %cst_13, %7 : f32
    %12 = vector.broadcast %11 : f32 to vector<8x256xf32>
    %13 = arith.mulf %12, %3 : vector<8x256xf32>
    %14 = arith.addf %10, %13 : vector<8x256xf32>
    %cst_14 = arith.constant 2.500000e-01 : f32
    %15 = vector.broadcast %cst_14 : f32 to vector<8x256xf32>
    %16 = arith.mulf %15, %1 : vector<8x256xf32>
    %cst_15 = arith.constant 7.500000e-01 : f32
    %17 = vector.broadcast %cst_15 : f32 to vector<8x256xf32>
    %18 = arith.mulf %17, %3 : vector<8x256xf32>
    %19 = arith.addf %16, %18 : vector<8x256xf32>
    %cst_16 = arith.constant 7.500000e-01 : f32
    %20 = vector.broadcast %cst_16 : f32 to vector<8x256xf32>
    %21 = arith.mulf %20, %3 : vector<8x256xf32>
    %cst_17 = arith.constant 2.500000e-01 : f32
    %22 = vector.broadcast %cst_17 : f32 to vector<8x256xf32>
    %23 = arith.mulf %22, %5 : vector<8x256xf32>
    %24 = arith.addf %21, %23 : vector<8x256xf32>
    %cst_18 = arith.constant 2.500000e-01 : f32
    %25 = vector.broadcast %cst_18 : f32 to vector<8x256xf32>
    %26 = arith.mulf %25, %3 : vector<8x256xf32>
    %cst_19 = arith.constant 7.500000e-01 : f32
    %27 = vector.broadcast %cst_19 : f32 to vector<8x256xf32>
    %28 = arith.mulf %27, %5 : vector<8x256xf32>
    %29 = arith.addf %26, %28 : vector<8x256xf32>
    %30 = vector.extract_strided_slice %14 {offsets = [0, 0], sizes = [8, 246], strides = [1, 1]} : vector<8x256xf32> to vector<8x246xf32>
    %31 = vector.extract_strided_slice %14 {offsets = [0, 10], sizes = [8, 246], strides = [1, 1]} : vector<8x256xf32> to vector<8x246xf32>
    %cst_20 = arith.constant 2.500000e-01 : f32
    %32 = vector.broadcast %cst_20 : f32 to vector<8x246xf32>
    %33 = arith.mulf %32, %30 : vector<8x246xf32>
    %cst_21 = arith.constant 7.500000e-01 : f32
    %34 = vector.broadcast %cst_21 : f32 to vector<8x246xf32>
    %35 = arith.mulf %34, %31 : vector<8x246xf32>
    %36 = arith.addf %33, %35 : vector<8x246xf32>
    %cst_22 = arith.constant 7.500000e-01 : f32
    %37 = vector.broadcast %cst_22 : f32 to vector<8x246xf32>
    %38 = arith.mulf %37, %30 : vector<8x246xf32>
    %cst_23 = arith.constant 2.500000e-01 : f32
    %39 = vector.broadcast %cst_23 : f32 to vector<8x246xf32>
    %40 = arith.mulf %39, %31 : vector<8x246xf32>
    %41 = arith.addf %38, %40 : vector<8x246xf32>
    %42 = vector.extract_strided_slice %36 {offsets = [0, 0], sizes = [8, 245], strides = [1, 1]} : vector<8x246xf32> to vector<8x245xf32>
    %43 = vector.extract_strided_slice %36 {offsets = [0, 1], sizes = [8, 245], strides = [1, 1]} : vector<8x246xf32> to vector<8x245xf32>
    %cst_24 = arith.constant 2.500000e-01 : f32
    %44 = vector.broadcast %cst_24 : f32 to vector<8x245xf32>
    %45 = arith.mulf %44, %42 : vector<8x245xf32>
    %cst_25 = arith.constant 7.500000e-01 : f32
    %46 = vector.broadcast %cst_25 : f32 to vector<8x245xf32>
    %47 = arith.mulf %46, %43 : vector<8x245xf32>
    %48 = arith.addf %45, %47 : vector<8x245xf32>
    %c0_26 = arith.constant 0 : index
    %c0_27 = arith.constant 0 : index
    %49 = vector.load %arg10[%c0_26, %c0_27] : memref<4x245xf32, #tpu.memory_space<vmem>>, vector<1x245xf32>
    %50 = vector.broadcast %49 : vector<1x245xf32> to vector<8x245xf32>
    %51 = arith.mulf %48, %50 : vector<8x245xf32>
    %cst_28 = arith.constant 7.500000e-01 : f32
    %52 = vector.broadcast %cst_28 : f32 to vector<8x245xf32>
    %53 = arith.mulf %52, %42 : vector<8x245xf32>
    %cst_29 = arith.constant 2.500000e-01 : f32
    %54 = vector.broadcast %cst_29 : f32 to vector<8x245xf32>
    %55 = arith.mulf %54, %43 : vector<8x245xf32>
    %56 = arith.addf %53, %55 : vector<8x245xf32>
    %c1 = arith.constant 1 : index
    %c0_30 = arith.constant 0 : index
    %57 = vector.load %arg10[%c1, %c0_30] : memref<4x245xf32, #tpu.memory_space<vmem>>, vector<1x245xf32>
    %58 = vector.broadcast %57 : vector<1x245xf32> to vector<8x245xf32>
    %59 = arith.mulf %56, %58 : vector<8x245xf32>
    %60 = vector.extract_strided_slice %51 {offsets = [0, 0], sizes = [8, 128], strides = [1, 1]} : vector<8x245xf32> to vector<8x128xf32>
    %c0_31 = arith.constant 0 : index
    %c0_32 = arith.constant 0 : index
    %61 = vector.load %arg12[%c0_31, %c0_32] : memref<512x512xf32, #tpu.memory_space<vmem>>, vector<8x128xf32>
    tpu.vector_store %arg12[%c0_31, %c0_32], %60 {strides = array<i32>} : memref<512x512xf32, #tpu.memory_space<vmem>>, vector<8x128xf32>,
    %62 = vector.extract_strided_slice %51 {offsets = [0, 1], sizes = [8, 128], strides = [1, 1]} : vector<8x245xf32> to vector<8x128xf32>
    %c32 = arith.constant 32 : index
    %c0_33 = arith.constant 0 : index
    %63 = vector.load %arg12[%c32, %c0_33] : memref<512x512xf32, #tpu.memory_space<vmem>>, vector<8x128xf32>
    tpu.vector_store %arg12[%c32, %c0_33], %62 {strides = array<i32>} : memref<512x512xf32, #tpu.memory_space<vmem>>, vector<8x128xf32>,
    %64 = vector.extract_strided_slice %51 {offsets = [0, 10], sizes = [8, 128], strides = [1, 1]} : vector<8x245xf32> to vector<8x128xf32>
    %c128 = arith.constant 128 : index
    %c0_34 = arith.constant 0 : index
    %65 = vector.load %arg12[%c128, %c0_34] : memref<512x512xf32, #tpu.memory_space<vmem>>, vector<8x128xf32>
    tpu.vector_store %arg12[%c128, %c0_34], %64 {strides = array<i32>} : memref<512x512xf32, #tpu.memory_space<vmem>>, vector<8x128xf32>,
    %66 = vector.extract_strided_slice %51 {offsets = [0, 11], sizes = [8, 128], strides = [1, 1]} : vector<8x245xf32> to vector<8x128xf32>
    %c160 = arith.constant 160 : index
    %c0_35 = arith.constant 0 : index
    %67 = vector.load %arg12[%c160, %c0_35] : memref<512x512xf32, #tpu.memory_space<vmem>>, vector<8x128xf32>
    tpu.vector_store %arg12[%c160, %c0_35], %66 {strides = array<i32>} : memref<512x512xf32, #tpu.memory_space<vmem>>, vector<8x128xf32>,
    %68 = vector.extract_strided_slice %59 {offsets = [0, 0], sizes = [8, 128], strides = [1, 1]} : vector<8x245xf32> to vector<8x128xf32>
    %c64 = arith.constant 64 : index
    %c0_36 = arith.constant 0 : index
    %69 = vector.load %arg12[%c64, %c0_36] : memref<512x512xf32, #tpu.memory_space<vmem>>, vector<8x128xf32>
    tpu.vector_store %arg12[%c64, %c0_36], %68 {strides = array<i32>} : memref<512x512xf32, #tpu.memory_space<vmem>>, vector<8x128xf32>,
    %70 = vector.extract_strided_slice %59 {offsets = [0, 1], sizes = [8, 128], strides = [1, 1]} : vector<8x245xf32> to vector<8x128xf32>
    %c96 = arith.constant 96 : index
    %c0_37 = arith.constant 0 : index
    %71 = vector.load %arg12[%c96, %c0_37] : memref<512x512xf32, #tpu.memory_space<vmem>>, vector<8x128xf32>
    tpu.vector_store %arg12[%c96, %c0_37], %70 {strides = array<i32>} : memref<512x512xf32, #tpu.memory_space<vmem>>, vector<8x128xf32>,
    %72 = vector.extract_strided_slice %59 {offsets = [0, 10], sizes = [8, 128], strides = [1, 1]} : vector<8x245xf32> to vector<8x128xf32>
    %c192 = arith.constant 192 : index
    %c0_38 = arith.constant 0 : index
    %73 = vector.load %arg12[%c192, %c0_38] : memref<512x512xf32, #tpu.memory_space<vmem>>, vector<8x128xf32>
    tpu.vector_store %arg12[%c192, %c0_38], %72 {strides = array<i32>} : memref<512x512xf32, #tpu.memory_space<vmem>>, vector<8x128xf32>,
    %74 = vector.extract_strided_slice %59 {offsets = [0, 11], sizes = [8, 128], strides = [1, 1]} : vector<8x245xf32> to vector<8x128xf32>
    %c224 = arith.constant 224 : index
    %c0_39 = arith.constant 0 : index
    %75 = vector.load %arg12[%c224, %c0_39] : memref<512x512xf32, #tpu.memory_space<vmem>>, vector<8x128xf32>
    tpu.vector_store %arg12[%c224, %c0_39], %74 {strides = array<i32>} : memref<512x512xf32, #tpu.memory_space<vmem>>, vector<8x128xf32>,
    %76 = vector.extract_strided_slice %41 {offsets = [0, 0], sizes = [8, 245], strides = [1, 1]} : vector<8x246xf32> to vector<8x245xf32>
    %77 = vector.extract_strided_slice %41 {offsets = [0, 1], sizes = [8, 245], strides = [1, 1]} : vector<8x246xf32> to vector<8x245xf32>
    %cst_40 = arith.constant 2.500000e-01 : f32
    %78 = vector.broadcast %cst_40 : f32 to vector<8x245xf32>
    %79 = arith.mulf %78, %76 : vector<8x245xf32>
    %cst_41 = arith.constant 7.500000e-01 : f32
    %80 = vector.broadcast %cst_41 : f32 to vector<8x245xf32>
    %81 = arith.mulf %80, %77 : vector<8x245xf32>
    %82 = arith.addf %79, %81 : vector<8x245xf32>
    %c2 = arith.constant 2 : index
    %c0_42 = arith.constant 0 : index
    %83 = vector.load %arg10[%c2, %c0_42] : memref<4x245xf32, #tpu.memory_space<vmem>>, vector<1x245xf32>
    %84 = vector.broadcast %83 : vector<1x245xf32> to vector<8x245xf32>
    %85 = arith.mulf %82, %84 : vector<8x245xf32>
    %cst_43 = arith.constant 7.500000e-01 : f32
    %86 = vector.broadcast %cst_43 : f32 to vector<8x245xf32>
    %87 = arith.mulf %86, %76 : vector<8x245xf32>
    %cst_44 = arith.constant 2.500000e-01 : f32
    %88 = vector.broadcast %cst_44 : f32 to vector<8x245xf32>
    %89 = arith.mulf %88, %77 : vector<8x245xf32>
    %90 = arith.addf %87, %89 : vector<8x245xf32>
    %c3 = arith.constant 3 : index
    %c0_45 = arith.constant 0 : index
    %91 = vector.load %arg10[%c3, %c0_45] : memref<4x245xf32, #tpu.memory_space<vmem>>, vector<1x245xf32>
    %92 = vector.broadcast %91 : vector<1x245xf32> to vector<8x245xf32>
    %93 = arith.mulf %90, %92 : vector<8x245xf32>
    %94 = vector.extract_strided_slice %85 {offsets = [0, 0], sizes = [8, 128], strides = [1, 1]} : vector<8x245xf32> to vector<8x128xf32>
    %c256 = arith.constant 256 : index
    %c0_46 = arith.constant 0 : index
    %95 = vector.load %arg12[%c256, %c0_46] : memref<512x512xf32, #tpu.memory_space<vmem>>, vector<8x128xf32>
    tpu.vector_store %arg12[%c256, %c0_46], %94 {strides = array<i32>} : memref<512x512xf32, #tpu.memory_space<vmem>>, vector<8x128xf32>,
    %96 = vector.extract_strided_slice %85 {offsets = [0, 1], sizes = [8, 128], strides = [1, 1]} : vector<8x245xf32> to vector<8x128xf32>
    %c288 = arith.constant 288 : index
    %c0_47 = arith.constant 0 : index
    %97 = vector.load %arg12[%c288, %c0_47] : memref<512x512xf32, #tpu.memory_space<vmem>>, vector<8x128xf32>
    tpu.vector_store %arg12[%c288, %c0_47], %96 {strides = array<i32>} : memref<512x512xf32, #tpu.memory_space<vmem>>, vector<8x128xf32>,
    %98 = vector.extract_strided_slice %85 {offsets = [0, 10], sizes = [8, 128], strides = [1, 1]} : vector<8x245xf32> to vector<8x128xf32>
    %c384 = arith.constant 384 : index
    %c0_48 = arith.constant 0 : index
    %99 = vector.load %arg12[%c384, %c0_48] : memref<512x512xf32, #tpu.memory_space<vmem>>, vector<8x128xf32>
    tpu.vector_store %arg12[%c384, %c0_48], %98 {strides = array<i32>} : memref<512x512xf32, #tpu.memory_space<vmem>>, vector<8x128xf32>,
    %100 = vector.extract_strided_slice %85 {offsets = [0, 11], sizes = [8, 128], strides = [1, 1]} : vector<8x245xf32> to vector<8x128xf32>
    %c416 = arith.constant 416 : index
    %c0_49 = arith.constant 0 : index
    %101 = vector.load %arg12[%c416, %c0_49] : memref<512x512xf32, #tpu.memory_space<vmem>>, vector<8x128xf32>
    tpu.vector_store %arg12[%c416, %c0_49], %100 {strides = array<i32>} : memref<512x512xf32, #tpu.memory_space<vmem>>, vector<8x128xf32>,
    %102 = vector.extract_strided_slice %93 {offsets = [0, 0], sizes = [8, 128], strides = [1, 1]} : vector<8x245xf32> to vector<8x128xf32>
    %c320 = arith.constant 320 : index
    %c0_50 = arith.constant 0 : index
    %103 = vector.load %arg12[%c320, %c0_50] : memref<512x512xf32, #tpu.memory_space<vmem>>, vector<8x128xf32>
    tpu.vector_store %arg12[%c320, %c0_50], %102 {strides = array<i32>} : memref<512x512xf32, #tpu.memory_space<vmem>>, vector<8x128xf32>,
    %104 = vector.extract_strided_slice %93 {offsets = [0, 1], sizes = [8, 128], strides = [1, 1]} : vector<8x245xf32> to vector<8x128xf32>
    %c352 = arith.constant 352 : index
    %c0_51 = arith.constant 0 : index
    %105 = vector.load %arg12[%c352, %c0_51] : memref<512x512xf32, #tpu.memory_space<vmem>>, vector<8x128xf32>
    tpu.vector_store %arg12[%c352, %c0_51], %104 {strides = array<i32>} : memref<512x512xf32, #tpu.memory_space<vmem>>, vector<8x128xf32>,
    %106 = vector.extract_strided_slice %93 {offsets = [0, 10], sizes = [8, 128], strides = [1, 1]} : vector<8x245xf32> to vector<8x128xf32>
    %c448 = arith.constant 448 : index
    %c0_52 = arith.constant 0 : index
    %107 = vector.load %arg12[%c448, %c0_52] : memref<512x512xf32, #tpu.memory_space<vmem>>, vector<8x128xf32>
    tpu.vector_store %arg12[%c448, %c0_52], %106 {strides = array<i32>} : memref<512x512xf32, #tpu.memory_space<vmem>>, vector<8x128xf32>,
    %108 = vector.extract_strided_slice %93 {offsets = [0, 11], sizes = [8, 128], strides = [1, 1]} : vector<8x245xf32> to vector<8x128xf32>
    %c480 = arith.constant 480 : index
    %c0_53 = arith.constant 0 : index
    %109 = vector.load %arg12[%c480, %c0_53] : memref<512x512xf32, #tpu.memory_space<vmem>>, vector<8x128xf32>
    tpu.vector_store %arg12[%c480, %c0_53], %108 {strides = array<i32>} : memref<512x512xf32, #tpu.memory_space<vmem>>, vector<8x128xf32>,
    %110 = vector.extract_strided_slice %19 {offsets = [0, 0], sizes = [8, 246], strides = [1, 1]} : vector<8x256xf32> to vector<8x246xf32>
    %111 = vector.extract_strided_slice %19 {offsets = [0, 10], sizes = [8, 246], strides = [1, 1]} : vector<8x256xf32> to vector<8x246xf32>
    %cst_54 = arith.constant 2.500000e-01 : f32
    %112 = vector.broadcast %cst_54 : f32 to vector<8x246xf32>
    %113 = arith.mulf %112, %110 : vector<8x246xf32>
    %cst_55 = arith.constant 7.500000e-01 : f32
    %114 = vector.broadcast %cst_55 : f32 to vector<8x246xf32>
    %115 = arith.mulf %114, %111 : vector<8x246xf32>
    %116 = arith.addf %113, %115 : vector<8x246xf32>
    %cst_56 = arith.constant 7.500000e-01 : f32
    %117 = vector.broadcast %cst_56 : f32 to vector<8x246xf32>
    %118 = arith.mulf %117, %110 : vector<8x246xf32>
    %cst_57 = arith.constant 2.500000e-01 : f32
    %119 = vector.broadcast %cst_57 : f32 to vector<8x246xf32>
    %120 = arith.mulf %119, %111 : vector<8x246xf32>
    %121 = arith.addf %118, %120 : vector<8x246xf32>
    %122 = vector.extract_strided_slice %116 {offsets = [0, 0], sizes = [8, 245], strides = [1, 1]} : vector<8x246xf32> to vector<8x245xf32>
    %123 = vector.extract_strided_slice %116 {offsets = [0, 1], sizes = [8, 245], strides = [1, 1]} : vector<8x246xf32> to vector<8x245xf32>
    %cst_58 = arith.constant 2.500000e-01 : f32
    %124 = vector.broadcast %cst_58 : f32 to vector<8x245xf32>
    %125 = arith.mulf %124, %122 : vector<8x245xf32>
    %cst_59 = arith.constant 7.500000e-01 : f32
    %126 = vector.broadcast %cst_59 : f32 to vector<8x245xf32>
    %127 = arith.mulf %126, %123 : vector<8x245xf32>
    %128 = arith.addf %125, %127 : vector<8x245xf32>
    %c0_60 = arith.constant 0 : index
    %c0_61 = arith.constant 0 : index
    %129 = vector.load %arg10[%c0_60, %c0_61] : memref<4x245xf32, #tpu.memory_space<vmem>>, vector<1x245xf32>
    %130 = vector.broadcast %129 : vector<1x245xf32> to vector<8x245xf32>
    %131 = arith.mulf %128, %130 : vector<8x245xf32>
    %cst_62 = arith.constant 7.500000e-01 : f32
    %132 = vector.broadcast %cst_62 : f32 to vector<8x245xf32>
    %133 = arith.mulf %132, %122 : vector<8x245xf32>
    %cst_63 = arith.constant 2.500000e-01 : f32
    %134 = vector.broadcast %cst_63 : f32 to vector<8x245xf32>
    %135 = arith.mulf %134, %123 : vector<8x245xf32>
    %136 = arith.addf %133, %135 : vector<8x245xf32>
    %c1_64 = arith.constant 1 : index
    %c0_65 = arith.constant 0 : index
    %137 = vector.load %arg10[%c1_64, %c0_65] : memref<4x245xf32, #tpu.memory_space<vmem>>, vector<1x245xf32>
    %138 = vector.broadcast %137 : vector<1x245xf32> to vector<8x245xf32>
    %139 = arith.mulf %136, %138 : vector<8x245xf32>
    %140 = vector.extract_strided_slice %131 {offsets = [0, 0], sizes = [8, 128], strides = [1, 1]} : vector<8x245xf32> to vector<8x128xf32>
    %c8 = arith.constant 8 : index
    %c0_66 = arith.constant 0 : index
    %141 = vector.load %arg12[%c8, %c0_66] : memref<512x512xf32, #tpu.memory_space<vmem>>, vector<8x128xf32>
    tpu.vector_store %arg12[%c8, %c0_66], %140 {strides = array<i32>} : memref<512x512xf32, #tpu.memory_space<vmem>>, vector<8x128xf32>,
    %142 = vector.extract_strided_slice %131 {offsets = [0, 1], sizes = [8, 128], strides = [1, 1]} : vector<8x245xf32> to vector<8x128xf32>
    %c40 = arith.constant 40 : index
    %c0_67 = arith.constant 0 : index
    %143 = vector.load %arg12[%c40, %c0_67] : memref<512x512xf32, #tpu.memory_space<vmem>>, vector<8x128xf32>
    tpu.vector_store %arg12[%c40, %c0_67], %142 {strides = array<i32>} : memref<512x512xf32, #tpu.memory_space<vmem>>, vector<8x128xf32>,
    %144 = vector.extract_strided_slice %131 {offsets = [0, 10], sizes = [8, 128], strides = [1, 1]} : vector<8x245xf32> to vector<8x128xf32>
    %c136 = arith.constant 136 : index
    %c0_68 = arith.constant 0 : index
    %145 = vector.load %arg12[%c136, %c0_68] : memref<512x512xf32, #tpu.memory_space<vmem>>, vector<8x128xf32>
    tpu.vector_store %arg12[%c136, %c0_68], %144 {strides = array<i32>} : memref<512x512xf32, #tpu.memory_space<vmem>>, vector<8x128xf32>,
    %146 = vector.extract_strided_slice %131 {offsets = [0, 11], sizes = [8, 128], strides = [1, 1]} : vector<8x245xf32> to vector<8x128xf32>
    %c168 = arith.constant 168 : index
    %c0_69 = arith.constant 0 : index
    %147 = vector.load %arg12[%c168, %c0_69] : memref<512x512xf32, #tpu.memory_space<vmem>>, vector<8x128xf32>
    tpu.vector_store %arg12[%c168, %c0_69], %146 {strides = array<i32>} : memref<512x512xf32, #tpu.memory_space<vmem>>, vector<8x128xf32>,
    %148 = vector.extract_strided_slice %139 {offsets = [0, 0], sizes = [8, 128], strides = [1, 1]} : vector<8x245xf32> to vector<8x128xf32>
    %c72 = arith.constant 72 : index
    %c0_70 = arith.constant 0 : index
    %149 = vector.load %arg12[%c72, %c0_70] : memref<512x512xf32, #tpu.memory_space<vmem>>, vector<8x128xf32>
    tpu.vector_store %arg12[%c72, %c0_70], %148 {strides = array<i32>} : memref<512x512xf32, #tpu.memory_space<vmem>>, vector<8x128xf32>,
    %150 = vector.extract_strided_slice %139 {offsets = [0, 1], sizes = [8, 128], strides = [1, 1]} : vector<8x245xf32> to vector<8x128xf32>
    %c104 = arith.constant 104 : index
    %c0_71 = arith.constant 0 : index
    %151 = vector.load %arg12[%c104, %c0_71] : memref<512x512xf32, #tpu.memory_space<vmem>>, vector<8x128xf32>
    tpu.vector_store %arg12[%c104, %c0_71], %150 {strides = array<i32>} : memref<512x512xf32, #tpu.memory_space<vmem>>, vector<8x128xf32>,
    %152 = vector.extract_strided_slice %139 {offsets = [0, 10], sizes = [8, 128], strides = [1, 1]} : vector<8x245xf32> to vector<8x128xf32>
    %c200 = arith.constant 200 : index
    %c0_72 = arith.constant 0 : index
    %153 = vector.load %arg12[%c200, %c0_72] : memref<512x512xf32, #tpu.memory_space<vmem>>, vector<8x128xf32>
    tpu.vector_store %arg12[%c200, %c0_72], %152 {strides = array<i32>} : memref<512x512xf32, #tpu.memory_space<vmem>>, vector<8x128xf32>,
    %154 = vector.extract_strided_slice %139 {offsets = [0, 11], sizes = [8, 128], strides = [1, 1]} : vector<8x245xf32> to vector<8x128xf32>
    %c232 = arith.constant 232 : index
    %c0_73 = arith.constant 0 : index
    %155 = vector.load %arg12[%c232, %c0_73] : memref<512x512xf32, #tpu.memory_space<vmem>>, vector<8x128xf32>
    tpu.vector_store %arg12[%c232, %c0_73], %154 {strides = array<i32>} : memref<512x512xf32, #tpu.memory_space<vmem>>, vector<8x128xf32>,
    %156 = vector.extract_strided_slice %121 {offsets = [0, 0], sizes = [8, 245], strides = [1, 1]} : vector<8x246xf32> to vector<8x245xf32>
    %157 = vector.extract_strided_slice %121 {offsets = [0, 1], sizes = [8, 245], strides = [1, 1]} : vector<8x246xf32> to vector<8x245xf32>
    %cst_74 = arith.constant 2.500000e-01 : f32
    %158 = vector.broadcast %cst_74 : f32 to vector<8x245xf32>
    %159 = arith.mulf %158, %156 : vector<8x245xf32>
    %cst_75 = arith.constant 7.500000e-01 : f32
    %160 = vector.broadcast %cst_75 : f32 to vector<8x245xf32>
    %161 = arith.mulf %160, %157 : vector<8x245xf32>
    %162 = arith.addf %159, %161 : vector<8x245xf32>
    %c2_76 = arith.constant 2 : index
    %c0_77 = arith.constant 0 : index
    %163 = vector.load %arg10[%c2_76, %c0_77] : memref<4x245xf32, #tpu.memory_space<vmem>>, vector<1x245xf32>
    %164 = vector.broadcast %163 : vector<1x245xf32> to vector<8x245xf32>
    %165 = arith.mulf %162, %164 : vector<8x245xf32>
    %cst_78 = arith.constant 7.500000e-01 : f32
    %166 = vector.broadcast %cst_78 : f32 to vector<8x245xf32>
    %167 = arith.mulf %166, %156 : vector<8x245xf32>
    %cst_79 = arith.constant 2.500000e-01 : f32
    %168 = vector.broadcast %cst_79 : f32 to vector<8x245xf32>
    %169 = arith.mulf %168, %157 : vector<8x245xf32>
    %170 = arith.addf %167, %169 : vector<8x245xf32>
    %c3_80 = arith.constant 3 : index
    %c0_81 = arith.constant 0 : index
    %171 = vector.load %arg10[%c3_80, %c0_81] : memref<4x245xf32, #tpu.memory_space<vmem>>, vector<1x245xf32>
    %172 = vector.broadcast %171 : vector<1x245xf32> to vector<8x245xf32>
    %173 = arith.mulf %170, %172 : vector<8x245xf32>
    %174 = vector.extract_strided_slice %165 {offsets = [0, 0], sizes = [8, 128], strides = [1, 1]} : vector<8x245xf32> to vector<8x128xf32>
    %c264 = arith.constant 264 : index
    %c0_82 = arith.constant 0 : index
    %175 = vector.load %arg12[%c264, %c0_82] : memref<512x512xf32, #tpu.memory_space<vmem>>, vector<8x128xf32>
    tpu.vector_store %arg12[%c264, %c0_82], %174 {strides = array<i32>} : memref<512x512xf32, #tpu.memory_space<vmem>>, vector<8x128xf32>,
    %176 = vector.extract_strided_slice %165 {offsets = [0, 1], sizes = [8, 128], strides = [1, 1]} : vector<8x245xf32> to vector<8x128xf32>
    %c296 = arith.constant 296 : index
    %c0_83 = arith.constant 0 : index
    %177 = vector.load %arg12[%c296, %c0_83] : memref<512x512xf32, #tpu.memory_space<vmem>>, vector<8x128xf32>
    tpu.vector_store %arg12[%c296, %c0_83], %176 {strides = array<i32>} : memref<512x512xf32, #tpu.memory_space<vmem>>, vector<8x128xf32>,
    %178 = vector.extract_strided_slice %165 {offsets = [0, 10], sizes = [8, 128], strides = [1, 1]} : vector<8x245xf32> to vector<8x128xf32>
    %c392 = arith.constant 392 : index
    %c0_84 = arith.constant 0 : index
    %179 = vector.load %arg12[%c392, %c0_84] : memref<512x512xf32, #tpu.memory_space<vmem>>, vector<8x128xf32>
    tpu.vector_store %arg12[%c392, %c0_84], %178 {strides = array<i32>} : memref<512x512xf32, #tpu.memory_space<vmem>>, vector<8x128xf32>,
    %180 = vector.extract_strided_slice %165 {offsets = [0, 11], sizes = [8, 128], strides = [1, 1]} : vector<8x245xf32> to vector<8x128xf32>
    %c424 = arith.constant 424 : index
    %c0_85 = arith.constant 0 : index
    %181 = vector.load %arg12[%c424, %c0_85] : memref<512x512xf32, #tpu.memory_space<vmem>>, vector<8x128xf32>
    tpu.vector_store %arg12[%c424, %c0_85], %180 {strides = array<i32>} : memref<512x512xf32, #tpu.memory_space<vmem>>, vector<8x128xf32>,
    %182 = vector.extract_strided_slice %173 {offsets = [0, 0], sizes = [8, 128], strides = [1, 1]} : vector<8x245xf32> to vector<8x128xf32>
    %c328 = arith.constant 328 : index
    %c0_86 = arith.constant 0 : index
    %183 = vector.load %arg12[%c328, %c0_86] : memref<512x512xf32, #tpu.memory_space<vmem>>, vector<8x128xf32>
    tpu.vector_store %arg12[%c328, %c0_86], %182 {strides = array<i32>} : memref<512x512xf32, #tpu.memory_space<vmem>>, vector<8x128xf32>,
    %184 = vector.extract_strided_slice %173 {offsets = [0, 1], sizes = [8, 128], strides = [1, 1]} : vector<8x245xf32> to vector<8x128xf32>
    %c360 = arith.constant 360 : index
    %c0_87 = arith.constant 0 : index
    %185 = vector.load %arg12[%c360, %c0_87] : memref<512x512xf32, #tpu.memory_space<vmem>>, vector<8x128xf32>
    tpu.vector_store %arg12[%c360, %c0_87], %184 {strides = array<i32>} : memref<512x512xf32, #tpu.memory_space<vmem>>, vector<8x128xf32>,
    %186 = vector.extract_strided_slice %173 {offsets = [0, 10], sizes = [8, 128], strides = [1, 1]} : vector<8x245xf32> to vector<8x128xf32>
    %c456 = arith.constant 456 : index
    %c0_88 = arith.constant 0 : index
    %187 = vector.load %arg12[%c456, %c0_88] : memref<512x512xf32, #tpu.memory_space<vmem>>, vector<8x128xf32>
    tpu.vector_store %arg12[%c456, %c0_88], %186 {strides = array<i32>} : memref<512x512xf32, #tpu.memory_space<vmem>>, vector<8x128xf32>,
    %188 = vector.extract_strided_slice %173 {offsets = [0, 11], sizes = [8, 128], strides = [1, 1]} : vector<8x245xf32> to vector<8x128xf32>
    %c488 = arith.constant 488 : index
    %c0_89 = arith.constant 0 : index
    %189 = vector.load %arg12[%c488, %c0_89] : memref<512x512xf32, #tpu.memory_space<vmem>>, vector<8x128xf32>
    tpu.vector_store %arg12[%c488, %c0_89], %188 {strides = array<i32>} : memref<512x512xf32, #tpu.memory_space<vmem>>, vector<8x128xf32>,
    %190 = vector.extract_strided_slice %24 {offsets = [0, 0], sizes = [8, 246], strides = [1, 1]} : vector<8x256xf32> to vector<8x246xf32>
    %191 = vector.extract_strided_slice %24 {offsets = [0, 10], sizes = [8, 246], strides = [1, 1]} : vector<8x256xf32> to vector<8x246xf32>
    %cst_90 = arith.constant 2.500000e-01 : f32
    %192 = vector.broadcast %cst_90 : f32 to vector<8x246xf32>
    %193 = arith.mulf %192, %190 : vector<8x246xf32>
    %cst_91 = arith.constant 7.500000e-01 : f32
    %194 = vector.broadcast %cst_91 : f32 to vector<8x246xf32>
    %195 = arith.mulf %194, %191 : vector<8x246xf32>
    %196 = arith.addf %193, %195 : vector<8x246xf32>
    %cst_92 = arith.constant 7.500000e-01 : f32
    %197 = vector.broadcast %cst_92 : f32 to vector<8x246xf32>
    %198 = arith.mulf %197, %190 : vector<8x246xf32>
    %cst_93 = arith.constant 2.500000e-01 : f32
    %199 = vector.broadcast %cst_93 : f32 to vector<8x246xf32>
    %200 = arith.mulf %199, %191 : vector<8x246xf32>
    %201 = arith.addf %198, %200 : vector<8x246xf32>
    %202 = vector.extract_strided_slice %196 {offsets = [0, 0], sizes = [8, 245], strides = [1, 1]} : vector<8x246xf32> to vector<8x245xf32>
    %203 = vector.extract_strided_slice %196 {offsets = [0, 1], sizes = [8, 245], strides = [1, 1]} : vector<8x246xf32> to vector<8x245xf32>
    %cst_94 = arith.constant 2.500000e-01 : f32
    %204 = vector.broadcast %cst_94 : f32 to vector<8x245xf32>
    %205 = arith.mulf %204, %202 : vector<8x245xf32>
    %cst_95 = arith.constant 7.500000e-01 : f32
    %206 = vector.broadcast %cst_95 : f32 to vector<8x245xf32>
    %207 = arith.mulf %206, %203 : vector<8x245xf32>
    %208 = arith.addf %205, %207 : vector<8x245xf32>
    %c0_96 = arith.constant 0 : index
    %c0_97 = arith.constant 0 : index
    %209 = vector.load %arg10[%c0_96, %c0_97] : memref<4x245xf32, #tpu.memory_space<vmem>>, vector<1x245xf32>
    %210 = vector.broadcast %209 : vector<1x245xf32> to vector<8x245xf32>
    %211 = arith.mulf %208, %210 : vector<8x245xf32>
    %cst_98 = arith.constant 7.500000e-01 : f32
    %212 = vector.broadcast %cst_98 : f32 to vector<8x245xf32>
    %213 = arith.mulf %212, %202 : vector<8x245xf32>
    %cst_99 = arith.constant 2.500000e-01 : f32
    %214 = vector.broadcast %cst_99 : f32 to vector<8x245xf32>
    %215 = arith.mulf %214, %203 : vector<8x245xf32>
    %216 = arith.addf %213, %215 : vector<8x245xf32>
    %c1_100 = arith.constant 1 : index
    %c0_101 = arith.constant 0 : index
    %217 = vector.load %arg10[%c1_100, %c0_101] : memref<4x245xf32, #tpu.memory_space<vmem>>, vector<1x245xf32>
    %218 = vector.broadcast %217 : vector<1x245xf32> to vector<8x245xf32>
    %219 = arith.mulf %216, %218 : vector<8x245xf32>
    %220 = vector.extract_strided_slice %211 {offsets = [0, 0], sizes = [8, 128], strides = [1, 1]} : vector<8x245xf32> to vector<8x128xf32>
    %c16 = arith.constant 16 : index
    %c0_102 = arith.constant 0 : index
    %221 = vector.load %arg12[%c16, %c0_102] : memref<512x512xf32, #tpu.memory_space<vmem>>, vector<8x128xf32>
    tpu.vector_store %arg12[%c16, %c0_102], %220 {strides = array<i32>} : memref<512x512xf32, #tpu.memory_space<vmem>>, vector<8x128xf32>,
    %222 = vector.extract_strided_slice %211 {offsets = [0, 1], sizes = [8, 128], strides = [1, 1]} : vector<8x245xf32> to vector<8x128xf32>
    %c48 = arith.constant 48 : index
    %c0_103 = arith.constant 0 : index
    %223 = vector.load %arg12[%c48, %c0_103] : memref<512x512xf32, #tpu.memory_space<vmem>>, vector<8x128xf32>
    tpu.vector_store %arg12[%c48, %c0_103], %222 {strides = array<i32>} : memref<512x512xf32, #tpu.memory_space<vmem>>, vector<8x128xf32>,
    %224 = vector.extract_strided_slice %211 {offsets = [0, 10], sizes = [8, 128], strides = [1, 1]} : vector<8x245xf32> to vector<8x128xf32>
    %c144 = arith.constant 144 : index
    %c0_104 = arith.constant 0 : index
    %225 = vector.load %arg12[%c144, %c0_104] : memref<512x512xf32, #tpu.memory_space<vmem>>, vector<8x128xf32>
    tpu.vector_store %arg12[%c144, %c0_104], %224 {strides = array<i32>} : memref<512x512xf32, #tpu.memory_space<vmem>>, vector<8x128xf32>,
    %226 = vector.extract_strided_slice %211 {offsets = [0, 11], sizes = [8, 128], strides = [1, 1]} : vector<8x245xf32> to vector<8x128xf32>
    %c176 = arith.constant 176 : index
    %c0_105 = arith.constant 0 : index
    %227 = vector.load %arg12[%c176, %c0_105] : memref<512x512xf32, #tpu.memory_space<vmem>>, vector<8x128xf32>
    tpu.vector_store %arg12[%c176, %c0_105], %226 {strides = array<i32>} : memref<512x512xf32, #tpu.memory_space<vmem>>, vector<8x128xf32>,
    %228 = vector.extract_strided_slice %219 {offsets = [0, 0], sizes = [8, 128], strides = [1, 1]} : vector<8x245xf32> to vector<8x128xf32>
    %c80 = arith.constant 80 : index
    %c0_106 = arith.constant 0 : index
    %229 = vector.load %arg12[%c80, %c0_106] : memref<512x512xf32, #tpu.memory_space<vmem>>, vector<8x128xf32>
    tpu.vector_store %arg12[%c80, %c0_106], %228 {strides = array<i32>} : memref<512x512xf32, #tpu.memory_space<vmem>>, vector<8x128xf32>,
    %230 = vector.extract_strided_slice %219 {offsets = [0, 1], sizes = [8, 128], strides = [1, 1]} : vector<8x245xf32> to vector<8x128xf32>
    %c112 = arith.constant 112 : index
    %c0_107 = arith.constant 0 : index
    %231 = vector.load %arg12[%c112, %c0_107] : memref<512x512xf32, #tpu.memory_space<vmem>>, vector<8x128xf32>
    tpu.vector_store %arg12[%c112, %c0_107], %230 {strides = array<i32>} : memref<512x512xf32, #tpu.memory_space<vmem>>, vector<8x128xf32>,
    %232 = vector.extract_strided_slice %219 {offsets = [0, 10], sizes = [8, 128], strides = [1, 1]} : vector<8x245xf32> to vector<8x128xf32>
    %c208 = arith.constant 208 : index
    %c0_108 = arith.constant 0 : index
    %233 = vector.load %arg12[%c208, %c0_108] : memref<512x512xf32, #tpu.memory_space<vmem>>, vector<8x128xf32>
    tpu.vector_store %arg12[%c208, %c0_108], %232 {strides = array<i32>} : memref<512x512xf32, #tpu.memory_space<vmem>>, vector<8x128xf32>,
    %234 = vector.extract_strided_slice %219 {offsets = [0, 11], sizes = [8, 128], strides = [1, 1]} : vector<8x245xf32> to vector<8x128xf32>
    %c240 = arith.constant 240 : index
    %c0_109 = arith.constant 0 : index
    %235 = vector.load %arg12[%c240, %c0_109] : memref<512x512xf32, #tpu.memory_space<vmem>>, vector<8x128xf32>
    tpu.vector_store %arg12[%c240, %c0_109], %234 {strides = array<i32>} : memref<512x512xf32, #tpu.memory_space<vmem>>, vector<8x128xf32>,
    %236 = vector.extract_strided_slice %201 {offsets = [0, 0], sizes = [8, 245], strides = [1, 1]} : vector<8x246xf32> to vector<8x245xf32>
    %237 = vector.extract_strided_slice %201 {offsets = [0, 1], sizes = [8, 245], strides = [1, 1]} : vector<8x246xf32> to vector<8x245xf32>
    %cst_110 = arith.constant 2.500000e-01 : f32
    %238 = vector.broadcast %cst_110 : f32 to vector<8x245xf32>
    %239 = arith.mulf %238, %236 : vector<8x245xf32>
    %cst_111 = arith.constant 7.500000e-01 : f32
    %240 = vector.broadcast %cst_111 : f32 to vector<8x245xf32>
    %241 = arith.mulf %240, %237 : vector<8x245xf32>
    %242 = arith.addf %239, %241 : vector<8x245xf32>
    %c2_112 = arith.constant 2 : index
    %c0_113 = arith.constant 0 : index
    %243 = vector.load %arg10[%c2_112, %c0_113] : memref<4x245xf32, #tpu.memory_space<vmem>>, vector<1x245xf32>
    %244 = vector.broadcast %243 : vector<1x245xf32> to vector<8x245xf32>
    %245 = arith.mulf %242, %244 : vector<8x245xf32>
    %cst_114 = arith.constant 7.500000e-01 : f32
    %246 = vector.broadcast %cst_114 : f32 to vector<8x245xf32>
    %247 = arith.mulf %246, %236 : vector<8x245xf32>
    %cst_115 = arith.constant 2.500000e-01 : f32
    %248 = vector.broadcast %cst_115 : f32 to vector<8x245xf32>
    %249 = arith.mulf %248, %237 : vector<8x245xf32>
    %250 = arith.addf %247, %249 : vector<8x245xf32>
    %c3_116 = arith.constant 3 : index
    %c0_117 = arith.constant 0 : index
    %251 = vector.load %arg10[%c3_116, %c0_117] : memref<4x245xf32, #tpu.memory_space<vmem>>, vector<1x245xf32>
    %252 = vector.broadcast %251 : vector<1x245xf32> to vector<8x245xf32>
    %253 = arith.mulf %250, %252 : vector<8x245xf32>
    %254 = vector.extract_strided_slice %245 {offsets = [0, 0], sizes = [8, 128], strides = [1, 1]} : vector<8x245xf32> to vector<8x128xf32>
    %c272 = arith.constant 272 : index
    %c0_118 = arith.constant 0 : index
    %255 = vector.load %arg12[%c272, %c0_118] : memref<512x512xf32, #tpu.memory_space<vmem>>, vector<8x128xf32>
    tpu.vector_store %arg12[%c272, %c0_118], %254 {strides = array<i32>} : memref<512x512xf32, #tpu.memory_space<vmem>>, vector<8x128xf32>,
    %256 = vector.extract_strided_slice %245 {offsets = [0, 1], sizes = [8, 128], strides = [1, 1]} : vector<8x245xf32> to vector<8x128xf32>
    %c304 = arith.constant 304 : index
    %c0_119 = arith.constant 0 : index
    %257 = vector.load %arg12[%c304, %c0_119] : memref<512x512xf32, #tpu.memory_space<vmem>>, vector<8x128xf32>
    tpu.vector_store %arg12[%c304, %c0_119], %256 {strides = array<i32>} : memref<512x512xf32, #tpu.memory_space<vmem>>, vector<8x128xf32>,
    %258 = vector.extract_strided_slice %245 {offsets = [0, 10], sizes = [8, 128], strides = [1, 1]} : vector<8x245xf32> to vector<8x128xf32>
    %c400 = arith.constant 400 : index
    %c0_120 = arith.constant 0 : index
    %259 = vector.load %arg12[%c400, %c0_120] : memref<512x512xf32, #tpu.memory_space<vmem>>, vector<8x128xf32>
    tpu.vector_store %arg12[%c400, %c0_120], %258 {strides = array<i32>} : memref<512x512xf32, #tpu.memory_space<vmem>>, vector<8x128xf32>,
    %260 = vector.extract_strided_slice %245 {offsets = [0, 11], sizes = [8, 128], strides = [1, 1]} : vector<8x245xf32> to vector<8x128xf32>
    %c432 = arith.constant 432 : index
    %c0_121 = arith.constant 0 : index
    %261 = vector.load %arg12[%c432, %c0_121] : memref<512x512xf32, #tpu.memory_space<vmem>>, vector<8x128xf32>
    tpu.vector_store %arg12[%c432, %c0_121], %260 {strides = array<i32>} : memref<512x512xf32, #tpu.memory_space<vmem>>, vector<8x128xf32>,
    %262 = vector.extract_strided_slice %253 {offsets = [0, 0], sizes = [8, 128], strides = [1, 1]} : vector<8x245xf32> to vector<8x128xf32>
    %c336 = arith.constant 336 : index
    %c0_122 = arith.constant 0 : index
    %263 = vector.load %arg12[%c336, %c0_122] : memref<512x512xf32, #tpu.memory_space<vmem>>, vector<8x128xf32>
    tpu.vector_store %arg12[%c336, %c0_122], %262 {strides = array<i32>} : memref<512x512xf32, #tpu.memory_space<vmem>>, vector<8x128xf32>,
    %264 = vector.extract_strided_slice %253 {offsets = [0, 1], sizes = [8, 128], strides = [1, 1]} : vector<8x245xf32> to vector<8x128xf32>
    %c368 = arith.constant 368 : index
    %c0_123 = arith.constant 0 : index
    %265 = vector.load %arg12[%c368, %c0_123] : memref<512x512xf32, #tpu.memory_space<vmem>>, vector<8x128xf32>
    tpu.vector_store %arg12[%c368, %c0_123], %264 {strides = array<i32>} : memref<512x512xf32, #tpu.memory_space<vmem>>, vector<8x128xf32>,
    %266 = vector.extract_strided_slice %253 {offsets = [0, 10], sizes = [8, 128], strides = [1, 1]} : vector<8x245xf32> to vector<8x128xf32>
    %c464 = arith.constant 464 : index
    %c0_124 = arith.constant 0 : index
    %267 = vector.load %arg12[%c464, %c0_124] : memref<512x512xf32, #tpu.memory_space<vmem>>, vector<8x128xf32>
    tpu.vector_store %arg12[%c464, %c0_124], %266 {strides = array<i32>} : memref<512x512xf32, #tpu.memory_space<vmem>>, vector<8x128xf32>,
    %268 = vector.extract_strided_slice %253 {offsets = [0, 11], sizes = [8, 128], strides = [1, 1]} : vector<8x245xf32> to vector<8x128xf32>
    %c496 = arith.constant 496 : index
    %c0_125 = arith.constant 0 : index
    %269 = vector.load %arg12[%c496, %c0_125] : memref<512x512xf32, #tpu.memory_space<vmem>>, vector<8x128xf32>
    tpu.vector_store %arg12[%c496, %c0_125], %268 {strides = array<i32>} : memref<512x512xf32, #tpu.memory_space<vmem>>, vector<8x128xf32>,
    %270 = vector.extract_strided_slice %29 {offsets = [0, 0], sizes = [8, 246], strides = [1, 1]} : vector<8x256xf32> to vector<8x246xf32>
    %271 = vector.extract_strided_slice %29 {offsets = [0, 10], sizes = [8, 246], strides = [1, 1]} : vector<8x256xf32> to vector<8x246xf32>
    %cst_126 = arith.constant 2.500000e-01 : f32
    %272 = vector.broadcast %cst_126 : f32 to vector<8x246xf32>
    %273 = arith.mulf %272, %270 : vector<8x246xf32>
    %cst_127 = arith.constant 7.500000e-01 : f32
    %274 = vector.broadcast %cst_127 : f32 to vector<8x246xf32>
    %275 = arith.mulf %274, %271 : vector<8x246xf32>
    %276 = arith.addf %273, %275 : vector<8x246xf32>
    %cst_128 = arith.constant 7.500000e-01 : f32
    %277 = vector.broadcast %cst_128 : f32 to vector<8x246xf32>
    %278 = arith.mulf %277, %270 : vector<8x246xf32>
    %cst_129 = arith.constant 2.500000e-01 : f32
    %279 = vector.broadcast %cst_129 : f32 to vector<8x246xf32>
    %280 = arith.mulf %279, %271 : vector<8x246xf32>
    %281 = arith.addf %278, %280 : vector<8x246xf32>
    %282 = vector.extract_strided_slice %276 {offsets = [0, 0], sizes = [8, 245], strides = [1, 1]} : vector<8x246xf32> to vector<8x245xf32>
    %283 = vector.extract_strided_slice %276 {offsets = [0, 1], sizes = [8, 245], strides = [1, 1]} : vector<8x246xf32> to vector<8x245xf32>
    %cst_130 = arith.constant 2.500000e-01 : f32
    %284 = vector.broadcast %cst_130 : f32 to vector<8x245xf32>
    %285 = arith.mulf %284, %282 : vector<8x245xf32>
    %cst_131 = arith.constant 7.500000e-01 : f32
    %286 = vector.broadcast %cst_131 : f32 to vector<8x245xf32>
    %287 = arith.mulf %286, %283 : vector<8x245xf32>
    %288 = arith.addf %285, %287 : vector<8x245xf32>
    %c0_132 = arith.constant 0 : index
    %c0_133 = arith.constant 0 : index
    %289 = vector.load %arg10[%c0_132, %c0_133] : memref<4x245xf32, #tpu.memory_space<vmem>>, vector<1x245xf32>
    %290 = vector.broadcast %289 : vector<1x245xf32> to vector<8x245xf32>
    %291 = arith.mulf %288, %290 : vector<8x245xf32>
    %cst_134 = arith.constant 7.500000e-01 : f32
    %292 = vector.broadcast %cst_134 : f32 to vector<8x245xf32>
    %293 = arith.mulf %292, %282 : vector<8x245xf32>
    %cst_135 = arith.constant 2.500000e-01 : f32
    %294 = vector.broadcast %cst_135 : f32 to vector<8x245xf32>
    %295 = arith.mulf %294, %283 : vector<8x245xf32>
    %296 = arith.addf %293, %295 : vector<8x245xf32>
    %c1_136 = arith.constant 1 : index
    %c0_137 = arith.constant 0 : index
    %297 = vector.load %arg10[%c1_136, %c0_137] : memref<4x245xf32, #tpu.memory_space<vmem>>, vector<1x245xf32>
    %298 = vector.broadcast %297 : vector<1x245xf32> to vector<8x245xf32>
    %299 = arith.mulf %296, %298 : vector<8x245xf32>
    %300 = vector.extract_strided_slice %291 {offsets = [0, 0], sizes = [8, 128], strides = [1, 1]} : vector<8x245xf32> to vector<8x128xf32>
    %c24 = arith.constant 24 : index
    %c0_138 = arith.constant 0 : index
    %301 = vector.load %arg12[%c24, %c0_138] : memref<512x512xf32, #tpu.memory_space<vmem>>, vector<8x128xf32>
    tpu.vector_store %arg12[%c24, %c0_138], %300 {strides = array<i32>} : memref<512x512xf32, #tpu.memory_space<vmem>>, vector<8x128xf32>,
    %302 = vector.extract_strided_slice %291 {offsets = [0, 1], sizes = [8, 128], strides = [1, 1]} : vector<8x245xf32> to vector<8x128xf32>
    %c56 = arith.constant 56 : index
    %c0_139 = arith.constant 0 : index
    %303 = vector.load %arg12[%c56, %c0_139] : memref<512x512xf32, #tpu.memory_space<vmem>>, vector<8x128xf32>
    tpu.vector_store %arg12[%c56, %c0_139], %302 {strides = array<i32>} : memref<512x512xf32, #tpu.memory_space<vmem>>, vector<8x128xf32>,
    %304 = vector.extract_strided_slice %291 {offsets = [0, 10], sizes = [8, 128], strides = [1, 1]} : vector<8x245xf32> to vector<8x128xf32>
    %c152 = arith.constant 152 : index
    %c0_140 = arith.constant 0 : index
    %305 = vector.load %arg12[%c152, %c0_140] : memref<512x512xf32, #tpu.memory_space<vmem>>, vector<8x128xf32>
    tpu.vector_store %arg12[%c152, %c0_140], %304 {strides = array<i32>} : memref<512x512xf32, #tpu.memory_space<vmem>>, vector<8x128xf32>,
    %306 = vector.extract_strided_slice %291 {offsets = [0, 11], sizes = [8, 128], strides = [1, 1]} : vector<8x245xf32> to vector<8x128xf32>
    %c184 = arith.constant 184 : index
    %c0_141 = arith.constant 0 : index
    %307 = vector.load %arg12[%c184, %c0_141] : memref<512x512xf32, #tpu.memory_space<vmem>>, vector<8x128xf32>
    tpu.vector_store %arg12[%c184, %c0_141], %306 {strides = array<i32>} : memref<512x512xf32, #tpu.memory_space<vmem>>, vector<8x128xf32>,
    %308 = vector.extract_strided_slice %299 {offsets = [0, 0], sizes = [8, 128], strides = [1, 1]} : vector<8x245xf32> to vector<8x128xf32>
    %c88 = arith.constant 88 : index
    %c0_142 = arith.constant 0 : index
    %309 = vector.load %arg12[%c88, %c0_142] : memref<512x512xf32, #tpu.memory_space<vmem>>, vector<8x128xf32>
    tpu.vector_store %arg12[%c88, %c0_142], %308 {strides = array<i32>} : memref<512x512xf32, #tpu.memory_space<vmem>>, vector<8x128xf32>,
    %310 = vector.extract_strided_slice %299 {offsets = [0, 1], sizes = [8, 128], strides = [1, 1]} : vector<8x245xf32> to vector<8x128xf32>
    %c120 = arith.constant 120 : index
    %c0_143 = arith.constant 0 : index
    %311 = vector.load %arg12[%c120, %c0_143] : memref<512x512xf32, #tpu.memory_space<vmem>>, vector<8x128xf32>
    tpu.vector_store %arg12[%c120, %c0_143], %310 {strides = array<i32>} : memref<512x512xf32, #tpu.memory_space<vmem>>, vector<8x128xf32>,
    %312 = vector.extract_strided_slice %299 {offsets = [0, 10], sizes = [8, 128], strides = [1, 1]} : vector<8x245xf32> to vector<8x128xf32>
    %c216 = arith.constant 216 : index
    %c0_144 = arith.constant 0 : index
    %313 = vector.load %arg12[%c216, %c0_144] : memref<512x512xf32, #tpu.memory_space<vmem>>, vector<8x128xf32>
    tpu.vector_store %arg12[%c216, %c0_144], %312 {strides = array<i32>} : memref<512x512xf32, #tpu.memory_space<vmem>>, vector<8x128xf32>,
    %314 = vector.extract_strided_slice %299 {offsets = [0, 11], sizes = [8, 128], strides = [1, 1]} : vector<8x245xf32> to vector<8x128xf32>
    %c248 = arith.constant 248 : index
    %c0_145 = arith.constant 0 : index
    %315 = vector.load %arg12[%c248, %c0_145] : memref<512x512xf32, #tpu.memory_space<vmem>>, vector<8x128xf32>
    tpu.vector_store %arg12[%c248, %c0_145], %314 {strides = array<i32>} : memref<512x512xf32, #tpu.memory_space<vmem>>, vector<8x128xf32>,
    %316 = vector.extract_strided_slice %281 {offsets = [0, 0], sizes = [8, 245], strides = [1, 1]} : vector<8x246xf32> to vector<8x245xf32>
    %317 = vector.extract_strided_slice %281 {offsets = [0, 1], sizes = [8, 245], strides = [1, 1]} : vector<8x246xf32> to vector<8x245xf32>
    %cst_146 = arith.constant 2.500000e-01 : f32
    %318 = vector.broadcast %cst_146 : f32 to vector<8x245xf32>
    %319 = arith.mulf %318, %316 : vector<8x245xf32>
    %cst_147 = arith.constant 7.500000e-01 : f32
    %320 = vector.broadcast %cst_147 : f32 to vector<8x245xf32>
    %321 = arith.mulf %320, %317 : vector<8x245xf32>
    %322 = arith.addf %319, %321 : vector<8x245xf32>
    %c2_148 = arith.constant 2 : index
    %c0_149 = arith.constant 0 : index
    %323 = vector.load %arg10[%c2_148, %c0_149] : memref<4x245xf32, #tpu.memory_space<vmem>>, vector<1x245xf32>
    %324 = vector.broadcast %323 : vector<1x245xf32> to vector<8x245xf32>
    %325 = arith.mulf %322, %324 : vector<8x245xf32>
    %cst_150 = arith.constant 7.500000e-01 : f32
    %326 = vector.broadcast %cst_150 : f32 to vector<8x245xf32>
    %327 = arith.mulf %326, %316 : vector<8x245xf32>
    %cst_151 = arith.constant 2.500000e-01 : f32
    %328 = vector.broadcast %cst_151 : f32 to vector<8x245xf32>
    %329 = arith.mulf %328, %317 : vector<8x245xf32>
    %330 = arith.addf %327, %329 : vector<8x245xf32>
    %c3_152 = arith.constant 3 : index
    %c0_153 = arith.constant 0 : index
    %331 = vector.load %arg10[%c3_152, %c0_153] : memref<4x245xf32, #tpu.memory_space<vmem>>, vector<1x245xf32>
    %332 = vector.broadcast %331 : vector<1x245xf32> to vector<8x245xf32>
    %333 = arith.mulf %330, %332 : vector<8x245xf32>
    %334 = vector.extract_strided_slice %325 {offsets = [0, 0], sizes = [8, 128], strides = [1, 1]} : vector<8x245xf32> to vector<8x128xf32>
    %c280 = arith.constant 280 : index
    %c0_154 = arith.constant 0 : index
    %335 = vector.load %arg12[%c280, %c0_154] : memref<512x512xf32, #tpu.memory_space<vmem>>, vector<8x128xf32>
    tpu.vector_store %arg12[%c280, %c0_154], %334 {strides = array<i32>} : memref<512x512xf32, #tpu.memory_space<vmem>>, vector<8x128xf32>,
    %336 = vector.extract_strided_slice %325 {offsets = [0, 1], sizes = [8, 128], strides = [1, 1]} : vector<8x245xf32> to vector<8x128xf32>
    %c312 = arith.constant 312 : index
    %c0_155 = arith.constant 0 : index
    %337 = vector.load %arg12[%c312, %c0_155] : memref<512x512xf32, #tpu.memory_space<vmem>>, vector<8x128xf32>
    tpu.vector_store %arg12[%c312, %c0_155], %336 {strides = array<i32>} : memref<512x512xf32, #tpu.memory_space<vmem>>, vector<8x128xf32>,
    %338 = vector.extract_strided_slice %325 {offsets = [0, 10], sizes = [8, 128], strides = [1, 1]} : vector<8x245xf32> to vector<8x128xf32>
    %c408 = arith.constant 408 : index
    %c0_156 = arith.constant 0 : index
    %339 = vector.load %arg12[%c408, %c0_156] : memref<512x512xf32, #tpu.memory_space<vmem>>, vector<8x128xf32>
    tpu.vector_store %arg12[%c408, %c0_156], %338 {strides = array<i32>} : memref<512x512xf32, #tpu.memory_space<vmem>>, vector<8x128xf32>,
    %340 = vector.extract_strided_slice %325 {offsets = [0, 11], sizes = [8, 128], strides = [1, 1]} : vector<8x245xf32> to vector<8x128xf32>
    %c440 = arith.constant 440 : index
    %c0_157 = arith.constant 0 : index
    %341 = vector.load %arg12[%c440, %c0_157] : memref<512x512xf32, #tpu.memory_space<vmem>>, vector<8x128xf32>
    tpu.vector_store %arg12[%c440, %c0_157], %340 {strides = array<i32>} : memref<512x512xf32, #tpu.memory_space<vmem>>, vector<8x128xf32>,
    %342 = vector.extract_strided_slice %333 {offsets = [0, 0], sizes = [8, 128], strides = [1, 1]} : vector<8x245xf32> to vector<8x128xf32>
    %c344 = arith.constant 344 : index
    %c0_158 = arith.constant 0 : index
    %343 = vector.load %arg12[%c344, %c0_158] : memref<512x512xf32, #tpu.memory_space<vmem>>, vector<8x128xf32>
    tpu.vector_store %arg12[%c344, %c0_158], %342 {strides = array<i32>} : memref<512x512xf32, #tpu.memory_space<vmem>>, vector<8x128xf32>,
    %344 = vector.extract_strided_slice %333 {offsets = [0, 1], sizes = [8, 128], strides = [1, 1]} : vector<8x245xf32> to vector<8x128xf32>
    %c376 = arith.constant 376 : index
    %c0_159 = arith.constant 0 : index
    %345 = vector.load %arg12[%c376, %c0_159] : memref<512x512xf32, #tpu.memory_space<vmem>>, vector<8x128xf32>
    tpu.vector_store %arg12[%c376, %c0_159], %344 {strides = array<i32>} : memref<512x512xf32, #tpu.memory_space<vmem>>, vector<8x128xf32>,
    %346 = vector.extract_strided_slice %333 {offsets = [0, 10], sizes = [8, 128], strides = [1, 1]} : vector<8x245xf32> to vector<8x128xf32>
    %c472 = arith.constant 472 : index
    %c0_160 = arith.constant 0 : index
    %347 = vector.load %arg12[%c472, %c0_160] : memref<512x512xf32, #tpu.memory_space<vmem>>, vector<8x128xf32>
    tpu.vector_store %arg12[%c472, %c0_160], %346 {strides = array<i32>} : memref<512x512xf32, #tpu.memory_space<vmem>>, vector<8x128xf32>,
    %348 = vector.extract_strided_slice %333 {offsets = [0, 11], sizes = [8, 128], strides = [1, 1]} : vector<8x245xf32> to vector<8x128xf32>
    %c504 = arith.constant 504 : index
    %c0_161 = arith.constant 0 : index
    %349 = vector.load %arg12[%c504, %c0_161] : memref<512x512xf32, #tpu.memory_space<vmem>>, vector<8x128xf32>
    tpu.vector_store %arg12[%c504, %c0_161], %348 {strides = array<i32>} : memref<512x512xf32, #tpu.memory_space<vmem>>, vector<8x128xf32>,
    %c0_162 = arith.constant 0 : index
    %c0_163 = arith.constant 0 : index
    %c0_164 = arith.constant 0 : index
    %c0_165 = arith.constant 0 : index
    %350 = vector.load %arg3[%c0_162, %c0_163, %c0_164, %c0_165] : memref<1x1x8x256xf32, #tpu.memory_space<vmem>>, vector<1x1x8x256xf32>
    %351 = vector.shape_cast %350 : vector<1x1x8x256xf32> to vector<8x256xf32>
    %c0_166 = arith.constant 0 : index
    %c0_167 = arith.constant 0 : index
    %c0_168 = arith.constant 0 : index
    %c0_169 = arith.constant 0 : index
    %352 = vector.load %arg4[%c0_166, %c0_167, %c0_168, %c0_169] : memref<1x1x8x256xf32, #tpu.memory_space<vmem>>, vector<1x1x8x256xf32>
    %353 = vector.shape_cast %352 : vector<1x1x8x256xf32> to vector<8x256xf32>
    %c0_170 = arith.constant 0 : index
    %c0_171 = arith.constant 0 : index
    %c0_172 = arith.constant 0 : index
    %c0_173 = arith.constant 0 : index
    %354 = vector.load %arg5[%c0_170, %c0_171, %c0_172, %c0_173] : memref<1x1x8x256xf32, #tpu.memory_space<vmem>>, vector<1x1x8x256xf32>
    %355 = vector.shape_cast %354 : vector<1x1x8x256xf32> to vector<8x256xf32>
    %cst_174 = arith.constant 7.500000e-01 : f32
    %356 = vector.broadcast %cst_174 : f32 to vector<8x256xf32>
    %357 = arith.mulf %356, %351 : vector<8x256xf32>
    %cst_175 = arith.constant 2.500000e-01 : f32
    %358 = vector.broadcast %cst_175 : f32 to vector<8x256xf32>
    %359 = arith.mulf %358, %353 : vector<8x256xf32>
    %360 = arith.addf %357, %359 : vector<8x256xf32>
    %cst_176 = arith.constant 2.500000e-01 : f32
    %361 = vector.broadcast %cst_176 : f32 to vector<8x256xf32>
    %362 = arith.mulf %361, %351 : vector<8x256xf32>
    %cst_177 = arith.constant 7.500000e-01 : f32
    %363 = vector.broadcast %cst_177 : f32 to vector<8x256xf32>
    %364 = arith.mulf %363, %353 : vector<8x256xf32>
    %365 = arith.addf %362, %364 : vector<8x256xf32>
    %cst_178 = arith.constant 7.500000e-01 : f32
    %366 = vector.broadcast %cst_178 : f32 to vector<8x256xf32>
    %367 = arith.mulf %366, %353 : vector<8x256xf32>
    %cst_179 = arith.constant 2.500000e-01 : f32
    %368 = vector.broadcast %cst_179 : f32 to vector<8x256xf32>
    %369 = arith.mulf %368, %355 : vector<8x256xf32>
    %370 = arith.addf %367, %369 : vector<8x256xf32>
    %cst_180 = arith.constant 2.500000e-01 : f32
    %371 = vector.broadcast %cst_180 : f32 to vector<8x256xf32>
    %372 = arith.mulf %371, %353 : vector<8x256xf32>
    %cst_181 = arith.constant 7.500000e-01 : f32
    %373 = vector.broadcast %cst_181 : f32 to vector<8x256xf32>
    %374 = arith.mulf %373, %355 : vector<8x256xf32>
    %375 = arith.addf %372, %374 : vector<8x256xf32>
    %376 = vector.extract_strided_slice %360 {offsets = [0, 0], sizes = [8, 246], strides = [1, 1]} : vector<8x256xf32> to vector<8x246xf32>
    %377 = vector.extract_strided_slice %360 {offsets = [0, 10], sizes = [8, 246], strides = [1, 1]} : vector<8x256xf32> to vector<8x246xf32>
    %cst_182 = arith.constant 2.500000e-01 : f32
    %378 = vector.broadcast %cst_182 : f32 to vector<8x246xf32>
    %379 = arith.mulf %378, %376 : vector<8x246xf32>
    %cst_183 = arith.constant 7.500000e-01 : f32
    %380 = vector.broadcast %cst_183 : f32 to vector<8x246xf32>
    %381 = arith.mulf %380, %377 : vector<8x246xf32>
    %382 = arith.addf %379, %381 : vector<8x246xf32>
    %cst_184 = arith.constant 7.500000e-01 : f32
    %383 = vector.broadcast %cst_184 : f32 to vector<8x246xf32>
    %384 = arith.mulf %383, %376 : vector<8x246xf32>
    %cst_185 = arith.constant 2.500000e-01 : f32
    %385 = vector.broadcast %cst_185 : f32 to vector<8x246xf32>
    %386 = arith.mulf %385, %377 : vector<8x246xf32>
    %387 = arith.addf %384, %386 : vector<8x246xf32>
    %388 = vector.extract_strided_slice %382 {offsets = [0, 0], sizes = [8, 245], strides = [1, 1]} : vector<8x246xf32> to vector<8x245xf32>
    %389 = vector.extract_strided_slice %382 {offsets = [0, 1], sizes = [8, 245], strides = [1, 1]} : vector<8x246xf32> to vector<8x245xf32>
    %cst_186 = arith.constant 2.500000e-01 : f32
    %390 = vector.broadcast %cst_186 : f32 to vector<8x245xf32>
    %391 = arith.mulf %390, %388 : vector<8x245xf32>
    %cst_187 = arith.constant 7.500000e-01 : f32
    %392 = vector.broadcast %cst_187 : f32 to vector<8x245xf32>
    %393 = arith.mulf %392, %389 : vector<8x245xf32>
    %394 = arith.addf %391, %393 : vector<8x245xf32>
    %c0_188 = arith.constant 0 : index
    %c0_189 = arith.constant 0 : index
    %395 = vector.load %arg10[%c0_188, %c0_189] : memref<4x245xf32, #tpu.memory_space<vmem>>, vector<1x245xf32>
    %396 = vector.broadcast %395 : vector<1x245xf32> to vector<8x245xf32>
    %397 = arith.mulf %394, %396 : vector<8x245xf32>
    %cst_190 = arith.constant 7.500000e-01 : f32
    %398 = vector.broadcast %cst_190 : f32 to vector<8x245xf32>
    %399 = arith.mulf %398, %388 : vector<8x245xf32>
    %cst_191 = arith.constant 2.500000e-01 : f32
    %400 = vector.broadcast %cst_191 : f32 to vector<8x245xf32>
    %401 = arith.mulf %400, %389 : vector<8x245xf32>
    %402 = arith.addf %399, %401 : vector<8x245xf32>
    %c1_192 = arith.constant 1 : index
    %c0_193 = arith.constant 0 : index
    %403 = vector.load %arg10[%c1_192, %c0_193] : memref<4x245xf32, #tpu.memory_space<vmem>>, vector<1x245xf32>
    %404 = vector.broadcast %403 : vector<1x245xf32> to vector<8x245xf32>
    %405 = arith.mulf %402, %404 : vector<8x245xf32>
    %406 = vector.extract_strided_slice %397 {offsets = [0, 0], sizes = [8, 128], strides = [1, 1]} : vector<8x245xf32> to vector<8x128xf32>
    %c0_194 = arith.constant 0 : index
    %c128_195 = arith.constant 128 : index
    %407 = vector.load %arg12[%c0_194, %c128_195] : memref<512x512xf32, #tpu.memory_space<vmem>>, vector<8x128xf32>
    tpu.vector_store %arg12[%c0_194, %c128_195], %406 {strides = array<i32>} : memref<512x512xf32, #tpu.memory_space<vmem>>, vector<8x128xf32>,
    %408 = vector.extract_strided_slice %397 {offsets = [0, 1], sizes = [8, 128], strides = [1, 1]} : vector<8x245xf32> to vector<8x128xf32>
    %c32_196 = arith.constant 32 : index
    %c128_197 = arith.constant 128 : index
    %409 = vector.load %arg12[%c32_196, %c128_197] : memref<512x512xf32, #tpu.memory_space<vmem>>, vector<8x128xf32>
    tpu.vector_store %arg12[%c32_196, %c128_197], %408 {strides = array<i32>} : memref<512x512xf32, #tpu.memory_space<vmem>>, vector<8x128xf32>,
    %410 = vector.extract_strided_slice %397 {offsets = [0, 10], sizes = [8, 128], strides = [1, 1]} : vector<8x245xf32> to vector<8x128xf32>
    %c128_198 = arith.constant 128 : index
    %c128_199 = arith.constant 128 : index
    %411 = vector.load %arg12[%c128_198, %c128_199] : memref<512x512xf32, #tpu.memory_space<vmem>>, vector<8x128xf32>
    tpu.vector_store %arg12[%c128_198, %c128_199], %410 {strides = array<i32>} : memref<512x512xf32, #tpu.memory_space<vmem>>, vector<8x128xf32>,
    %412 = vector.extract_strided_slice %397 {offsets = [0, 11], sizes = [8, 128], strides = [1, 1]} : vector<8x245xf32> to vector<8x128xf32>
    %c160_200 = arith.constant 160 : index
    %c128_201 = arith.constant 128 : index
    %413 = vector.load %arg12[%c160_200, %c128_201] : memref<512x512xf32, #tpu.memory_space<vmem>>, vector<8x128xf32>
    tpu.vector_store %arg12[%c160_200, %c128_201], %412 {strides = array<i32>} : memref<512x512xf32, #tpu.memory_space<vmem>>, vector<8x128xf32>,
    %414 = vector.extract_strided_slice %405 {offsets = [0, 0], sizes = [8, 128], strides = [1, 1]} : vector<8x245xf32> to vector<8x128xf32>
    %c64_202 = arith.constant 64 : index
    %c128_203 = arith.constant 128 : index
    %415 = vector.load %arg12[%c64_202, %c128_203] : memref<512x512xf32, #tpu.memory_space<vmem>>, vector<8x128xf32>
    tpu.vector_store %arg12[%c64_202, %c128_203], %414 {strides = array<i32>} : memref<512x512xf32, #tpu.memory_space<vmem>>, vector<8x128xf32>,
    %416 = vector.extract_strided_slice %405 {offsets = [0, 1], sizes = [8, 128], strides = [1, 1]} : vector<8x245xf32> to vector<8x128xf32>
    %c96_204 = arith.constant 96 : index
    %c128_205 = arith.constant 128 : index
    %417 = vector.load %arg12[%c96_204, %c128_205] : memref<512x512xf32, #tpu.memory_space<vmem>>, vector<8x128xf32>
    tpu.vector_store %arg12[%c96_204, %c128_205], %416 {strides = array<i32>} : memref<512x512xf32, #tpu.memory_space<vmem>>, vector<8x128xf32>,
    %418 = vector.extract_strided_slice %405 {offsets = [0, 10], sizes = [8, 128], strides = [1, 1]} : vector<8x245xf32> to vector<8x128xf32>
    %c192_206 = arith.constant 192 : index
    %c128_207 = arith.constant 128 : index
    %419 = vector.load %arg12[%c192_206, %c128_207] : memref<512x512xf32, #tpu.memory_space<vmem>>, vector<8x128xf32>
    tpu.vector_store %arg12[%c192_206, %c128_207], %418 {strides = array<i32>} : memref<512x512xf32, #tpu.memory_space<vmem>>, vector<8x128xf32>,
    %420 = vector.extract_strided_slice %405 {offsets = [0, 11], sizes = [8, 128], strides = [1, 1]} : vector<8x245xf32> to vector<8x128xf32>
    %c224_208 = arith.constant 224 : index
    %c128_209 = arith.constant 128 : index
    %421 = vector.load %arg12[%c224_208, %c128_209] : memref<512x512xf32, #tpu.memory_space<vmem>>, vector<8x128xf32>
    tpu.vector_store %arg12[%c224_208, %c128_209], %420 {strides = array<i32>} : memref<512x512xf32, #tpu.memory_space<vmem>>, vector<8x128xf32>,
    %422 = vector.extract_strided_slice %387 {offsets = [0, 0], sizes = [8, 245], strides = [1, 1]} : vector<8x246xf32> to vector<8x245xf32>
    %423 = vector.extract_strided_slice %387 {offsets = [0, 1], sizes = [8, 245], strides = [1, 1]} : vector<8x246xf32> to vector<8x245xf32>
    %cst_210 = arith.constant 2.500000e-01 : f32
    %424 = vector.broadcast %cst_210 : f32 to vector<8x245xf32>
    %425 = arith.mulf %424, %422 : vector<8x245xf32>
    %cst_211 = arith.constant 7.500000e-01 : f32
    %426 = vector.broadcast %cst_211 : f32 to vector<8x245xf32>
    %427 = arith.mulf %426, %423 : vector<8x245xf32>
    %428 = arith.addf %425, %427 : vector<8x245xf32>
    %c2_212 = arith.constant 2 : index
    %c0_213 = arith.constant 0 : index
    %429 = vector.load %arg10[%c2_212, %c0_213] : memref<4x245xf32, #tpu.memory_space<vmem>>, vector<1x245xf32>
    %430 = vector.broadcast %429 : vector<1x245xf32> to vector<8x245xf32>
    %431 = arith.mulf %428, %430 : vector<8x245xf32>
    %cst_214 = arith.constant 7.500000e-01 : f32
    %432 = vector.broadcast %cst_214 : f32 to vector<8x245xf32>
    %433 = arith.mulf %432, %422 : vector<8x245xf32>
    %cst_215 = arith.constant 2.500000e-01 : f32
    %434 = vector.broadcast %cst_215 : f32 to vector<8x245xf32>
    %435 = arith.mulf %434, %423 : vector<8x245xf32>
    %436 = arith.addf %433, %435 : vector<8x245xf32>
    %c3_216 = arith.constant 3 : index
    %c0_217 = arith.constant 0 : index
    %437 = vector.load %arg10[%c3_216, %c0_217] : memref<4x245xf32, #tpu.memory_space<vmem>>, vector<1x245xf32>
    %438 = vector.broadcast %437 : vector<1x245xf32> to vector<8x245xf32>
    %439 = arith.mulf %436, %438 : vector<8x245xf32>
    %440 = vector.extract_strided_slice %431 {offsets = [0, 0], sizes = [8, 128], strides = [1, 1]} : vector<8x245xf32> to vector<8x128xf32>
    %c256_218 = arith.constant 256 : index
    %c128_219 = arith.constant 128 : index
    %441 = vector.load %arg12[%c256_218, %c128_219] : memref<512x512xf32, #tpu.memory_space<vmem>>, vector<8x128xf32>
    tpu.vector_store %arg12[%c256_218, %c128_219], %440 {strides = array<i32>} : memref<512x512xf32, #tpu.memory_space<vmem>>, vector<8x128xf32>,
    %442 = vector.extract_strided_slice %431 {offsets = [0, 1], sizes = [8, 128], strides = [1, 1]} : vector<8x245xf32> to vector<8x128xf32>
    %c288_220 = arith.constant 288 : index
    %c128_221 = arith.constant 128 : index
    %443 = vector.load %arg12[%c288_220, %c128_221] : memref<512x512xf32, #tpu.memory_space<vmem>>, vector<8x128xf32>
    tpu.vector_store %arg12[%c288_220, %c128_221], %442 {strides = array<i32>} : memref<512x512xf32, #tpu.memory_space<vmem>>, vector<8x128xf32>,
    %444 = vector.extract_strided_slice %431 {offsets = [0, 10], sizes = [8, 128], strides = [1, 1]} : vector<8x245xf32> to vector<8x128xf32>
    %c384_222 = arith.constant 384 : index
    %c128_223 = arith.constant 128 : index
    %445 = vector.load %arg12[%c384_222, %c128_223] : memref<512x512xf32, #tpu.memory_space<vmem>>, vector<8x128xf32>
    tpu.vector_store %arg12[%c384_222, %c128_223], %444 {strides = array<i32>} : memref<512x512xf32, #tpu.memory_space<vmem>>, vector<8x128xf32>,
    %446 = vector.extract_strided_slice %431 {offsets = [0, 11], sizes = [8, 128], strides = [1, 1]} : vector<8x245xf32> to vector<8x128xf32>
    %c416_224 = arith.constant 416 : index
    %c128_225 = arith.constant 128 : index
    %447 = vector.load %arg12[%c416_224, %c128_225] : memref<512x512xf32, #tpu.memory_space<vmem>>, vector<8x128xf32>
    tpu.vector_store %arg12[%c416_224, %c128_225], %446 {strides = array<i32>} : memref<512x512xf32, #tpu.memory_space<vmem>>, vector<8x128xf32>,
    %448 = vector.extract_strided_slice %439 {offsets = [0, 0], sizes = [8, 128], strides = [1, 1]} : vector<8x245xf32> to vector<8x128xf32>
    %c320_226 = arith.constant 320 : index
    %c128_227 = arith.constant 128 : index
    %449 = vector.load %arg12[%c320_226, %c128_227] : memref<512x512xf32, #tpu.memory_space<vmem>>, vector<8x128xf32>
    tpu.vector_store %arg12[%c320_226, %c128_227], %448 {strides = array<i32>} : memref<512x512xf32, #tpu.memory_space<vmem>>, vector<8x128xf32>,
    %450 = vector.extract_strided_slice %439 {offsets = [0, 1], sizes = [8, 128], strides = [1, 1]} : vector<8x245xf32> to vector<8x128xf32>
    %c352_228 = arith.constant 352 : index
    %c128_229 = arith.constant 128 : index
    %451 = vector.load %arg12[%c352_228, %c128_229] : memref<512x512xf32, #tpu.memory_space<vmem>>, vector<8x128xf32>
    tpu.vector_store %arg12[%c352_228, %c128_229], %450 {strides = array<i32>} : memref<512x512xf32, #tpu.memory_space<vmem>>, vector<8x128xf32>,
    %452 = vector.extract_strided_slice %439 {offsets = [0, 10], sizes = [8, 128], strides = [1, 1]} : vector<8x245xf32> to vector<8x128xf32>
    %c448_230 = arith.constant 448 : index
    %c128_231 = arith.constant 128 : index
    %453 = vector.load %arg12[%c448_230, %c128_231] : memref<512x512xf32, #tpu.memory_space<vmem>>, vector<8x128xf32>
    tpu.vector_store %arg12[%c448_230, %c128_231], %452 {strides = array<i32>} : memref<512x512xf32, #tpu.memory_space<vmem>>, vector<8x128xf32>,
    %454 = vector.extract_strided_slice %439 {offsets = [0, 11], sizes = [8, 128], strides = [1, 1]} : vector<8x245xf32> to vector<8x128xf32>
    %c480_232 = arith.constant 480 : index
    %c128_233 = arith.constant 128 : index
    %455 = vector.load %arg12[%c480_232, %c128_233] : memref<512x512xf32, #tpu.memory_space<vmem>>, vector<8x128xf32>
    tpu.vector_store %arg12[%c480_232, %c128_233], %454 {strides = array<i32>} : memref<512x512xf32, #tpu.memory_space<vmem>>, vector<8x128xf32>,
    %456 = vector.extract_strided_slice %365 {offsets = [0, 0], sizes = [8, 246], strides = [1, 1]} : vector<8x256xf32> to vector<8x246xf32>
    %457 = vector.extract_strided_slice %365 {offsets = [0, 10], sizes = [8, 246], strides = [1, 1]} : vector<8x256xf32> to vector<8x246xf32>
    %cst_234 = arith.constant 2.500000e-01 : f32
    %458 = vector.broadcast %cst_234 : f32 to vector<8x246xf32>
    %459 = arith.mulf %458, %456 : vector<8x246xf32>
    %cst_235 = arith.constant 7.500000e-01 : f32
    %460 = vector.broadcast %cst_235 : f32 to vector<8x246xf32>
    %461 = arith.mulf %460, %457 : vector<8x246xf32>
    %462 = arith.addf %459, %461 : vector<8x246xf32>
    %cst_236 = arith.constant 7.500000e-01 : f32
    %463 = vector.broadcast %cst_236 : f32 to vector<8x246xf32>
    %464 = arith.mulf %463, %456 : vector<8x246xf32>
    %cst_237 = arith.constant 2.500000e-01 : f32
    %465 = vector.broadcast %cst_237 : f32 to vector<8x246xf32>
    %466 = arith.mulf %465, %457 : vector<8x246xf32>
    %467 = arith.addf %464, %466 : vector<8x246xf32>
    %468 = vector.extract_strided_slice %462 {offsets = [0, 0], sizes = [8, 245], strides = [1, 1]} : vector<8x246xf32> to vector<8x245xf32>
    %469 = vector.extract_strided_slice %462 {offsets = [0, 1], sizes = [8, 245], strides = [1, 1]} : vector<8x246xf32> to vector<8x245xf32>
    %cst_238 = arith.constant 2.500000e-01 : f32
    %470 = vector.broadcast %cst_238 : f32 to vector<8x245xf32>
    %471 = arith.mulf %470, %468 : vector<8x245xf32>
    %cst_239 = arith.constant 7.500000e-01 : f32
    %472 = vector.broadcast %cst_239 : f32 to vector<8x245xf32>
    %473 = arith.mulf %472, %469 : vector<8x245xf32>
    %474 = arith.addf %471, %473 : vector<8x245xf32>
    %c0_240 = arith.constant 0 : index
    %c0_241 = arith.constant 0 : index
    %475 = vector.load %arg10[%c0_240, %c0_241] : memref<4x245xf32, #tpu.memory_space<vmem>>, vector<1x245xf32>
    %476 = vector.broadcast %475 : vector<1x245xf32> to vector<8x245xf32>
    %477 = arith.mulf %474, %476 : vector<8x245xf32>
    %cst_242 = arith.constant 7.500000e-01 : f32
    %478 = vector.broadcast %cst_242 : f32 to vector<8x245xf32>
    %479 = arith.mulf %478, %468 : vector<8x245xf32>
    %cst_243 = arith.constant 2.500000e-01 : f32
    %480 = vector.broadcast %cst_243 : f32 to vector<8x245xf32>
    %481 = arith.mulf %480, %469 : vector<8x245xf32>
    %482 = arith.addf %479, %481 : vector<8x245xf32>
    %c1_244 = arith.constant 1 : index
    %c0_245 = arith.constant 0 : index
    %483 = vector.load %arg10[%c1_244, %c0_245] : memref<4x245xf32, #tpu.memory_space<vmem>>, vector<1x245xf32>
    %484 = vector.broadcast %483 : vector<1x245xf32> to vector<8x245xf32>
    %485 = arith.mulf %482, %484 : vector<8x245xf32>
    %486 = vector.extract_strided_slice %477 {offsets = [0, 0], sizes = [8, 128], strides = [1, 1]} : vector<8x245xf32> to vector<8x128xf32>
    %c8_246 = arith.constant 8 : index
    %c128_247 = arith.constant 128 : index
    %487 = vector.load %arg12[%c8_246, %c128_247] : memref<512x512xf32, #tpu.memory_space<vmem>>, vector<8x128xf32>
    tpu.vector_store %arg12[%c8_246, %c128_247], %486 {strides = array<i32>} : memref<512x512xf32, #tpu.memory_space<vmem>>, vector<8x128xf32>,
    %488 = vector.extract_strided_slice %477 {offsets = [0, 1], sizes = [8, 128], strides = [1, 1]} : vector<8x245xf32> to vector<8x128xf32>
    %c40_248 = arith.constant 40 : index
    %c128_249 = arith.constant 128 : index
    %489 = vector.load %arg12[%c40_248, %c128_249] : memref<512x512xf32, #tpu.memory_space<vmem>>, vector<8x128xf32>
    tpu.vector_store %arg12[%c40_248, %c128_249], %488 {strides = array<i32>} : memref<512x512xf32, #tpu.memory_space<vmem>>, vector<8x128xf32>,
    %490 = vector.extract_strided_slice %477 {offsets = [0, 10], sizes = [8, 128], strides = [1, 1]} : vector<8x245xf32> to vector<8x128xf32>
    %c136_250 = arith.constant 136 : index
    %c128_251 = arith.constant 128 : index
    %491 = vector.load %arg12[%c136_250, %c128_251] : memref<512x512xf32, #tpu.memory_space<vmem>>, vector<8x128xf32>
    tpu.vector_store %arg12[%c136_250, %c128_251], %490 {strides = array<i32>} : memref<512x512xf32, #tpu.memory_space<vmem>>, vector<8x128xf32>,
    %492 = vector.extract_strided_slice %477 {offsets = [0, 11], sizes = [8, 128], strides = [1, 1]} : vector<8x245xf32> to vector<8x128xf32>
    %c168_252 = arith.constant 168 : index
    %c128_253 = arith.constant 128 : index
    %493 = vector.load %arg12[%c168_252, %c128_253] : memref<512x512xf32, #tpu.memory_space<vmem>>, vector<8x128xf32>
    tpu.vector_store %arg12[%c168_252, %c128_253], %492 {strides = array<i32>} : memref<512x512xf32, #tpu.memory_space<vmem>>, vector<8x128xf32>,
    %494 = vector.extract_strided_slice %485 {offsets = [0, 0], sizes = [8, 128], strides = [1, 1]} : vector<8x245xf32> to vector<8x128xf32>
    %c72_254 = arith.constant 72 : index
    %c128_255 = arith.constant 128 : index
    %495 = vector.load %arg12[%c72_254, %c128_255] : memref<512x512xf32, #tpu.memory_space<vmem>>, vector<8x128xf32>
    tpu.vector_store %arg12[%c72_254, %c128_255], %494 {strides = array<i32>} : memref<512x512xf32, #tpu.memory_space<vmem>>, vector<8x128xf32>,
    %496 = vector.extract_strided_slice %485 {offsets = [0, 1], sizes = [8, 128], strides = [1, 1]} : vector<8x245xf32> to vector<8x128xf32>
    %c104_256 = arith.constant 104 : index
    %c128_257 = arith.constant 128 : index
    %497 = vector.load %arg12[%c104_256, %c128_257] : memref<512x512xf32, #tpu.memory_space<vmem>>, vector<8x128xf32>
    tpu.vector_store %arg12[%c104_256, %c128_257], %496 {strides = array<i32>} : memref<512x512xf32, #tpu.memory_space<vmem>>, vector<8x128xf32>,
    %498 = vector.extract_strided_slice %485 {offsets = [0, 10], sizes = [8, 128], strides = [1, 1]} : vector<8x245xf32> to vector<8x128xf32>
    %c200_258 = arith.constant 200 : index
    %c128_259 = arith.constant 128 : index
    %499 = vector.load %arg12[%c200_258, %c128_259] : memref<512x512xf32, #tpu.memory_space<vmem>>, vector<8x128xf32>
    tpu.vector_store %arg12[%c200_258, %c128_259], %498 {strides = array<i32>} : memref<512x512xf32, #tpu.memory_space<vmem>>, vector<8x128xf32>,
    %500 = vector.extract_strided_slice %485 {offsets = [0, 11], sizes = [8, 128], strides = [1, 1]} : vector<8x245xf32> to vector<8x128xf32>
    %c232_260 = arith.constant 232 : index
    %c128_261 = arith.constant 128 : index
    %501 = vector.load %arg12[%c232_260, %c128_261] : memref<512x512xf32, #tpu.memory_space<vmem>>, vector<8x128xf32>
    tpu.vector_store %arg12[%c232_260, %c128_261], %500 {strides = array<i32>} : memref<512x512xf32, #tpu.memory_space<vmem>>, vector<8x128xf32>,
    %502 = vector.extract_strided_slice %467 {offsets = [0, 0], sizes = [8, 245], strides = [1, 1]} : vector<8x246xf32> to vector<8x245xf32>
    %503 = vector.extract_strided_slice %467 {offsets = [0, 1], sizes = [8, 245], strides = [1, 1]} : vector<8x246xf32> to vector<8x245xf32>
    %cst_262 = arith.constant 2.500000e-01 : f32
    %504 = vector.broadcast %cst_262 : f32 to vector<8x245xf32>
    %505 = arith.mulf %504, %502 : vector<8x245xf32>
    %cst_263 = arith.constant 7.500000e-01 : f32
    %506 = vector.broadcast %cst_263 : f32 to vector<8x245xf32>
    %507 = arith.mulf %506, %503 : vector<8x245xf32>
    %508 = arith.addf %505, %507 : vector<8x245xf32>
    %c2_264 = arith.constant 2 : index
    %c0_265 = arith.constant 0 : index
    %509 = vector.load %arg10[%c2_264, %c0_265] : memref<4x245xf32, #tpu.memory_space<vmem>>, vector<1x245xf32>
    %510 = vector.broadcast %509 : vector<1x245xf32> to vector<8x245xf32>
    %511 = arith.mulf %508, %510 : vector<8x245xf32>
    %cst_266 = arith.constant 7.500000e-01 : f32
    %512 = vector.broadcast %cst_266 : f32 to vector<8x245xf32>
    %513 = arith.mulf %512, %502 : vector<8x245xf32>
    %cst_267 = arith.constant 2.500000e-01 : f32
    %514 = vector.broadcast %cst_267 : f32 to vector<8x245xf32>
    %515 = arith.mulf %514, %503 : vector<8x245xf32>
    %516 = arith.addf %513, %515 : vector<8x245xf32>
    %c3_268 = arith.constant 3 : index
    %c0_269 = arith.constant 0 : index
    %517 = vector.load %arg10[%c3_268, %c0_269] : memref<4x245xf32, #tpu.memory_space<vmem>>, vector<1x245xf32>
    %518 = vector.broadcast %517 : vector<1x245xf32> to vector<8x245xf32>
    %519 = arith.mulf %516, %518 : vector<8x245xf32>
    %520 = vector.extract_strided_slice %511 {offsets = [0, 0], sizes = [8, 128], strides = [1, 1]} : vector<8x245xf32> to vector<8x128xf32>
    %c264_270 = arith.constant 264 : index
    %c128_271 = arith.constant 128 : index
    %521 = vector.load %arg12[%c264_270, %c128_271] : memref<512x512xf32, #tpu.memory_space<vmem>>, vector<8x128xf32>
    tpu.vector_store %arg12[%c264_270, %c128_271], %520 {strides = array<i32>} : memref<512x512xf32, #tpu.memory_space<vmem>>, vector<8x128xf32>,
    %522 = vector.extract_strided_slice %511 {offsets = [0, 1], sizes = [8, 128], strides = [1, 1]} : vector<8x245xf32> to vector<8x128xf32>
    %c296_272 = arith.constant 296 : index
    %c128_273 = arith.constant 128 : index
    %523 = vector.load %arg12[%c296_272, %c128_273] : memref<512x512xf32, #tpu.memory_space<vmem>>, vector<8x128xf32>
    tpu.vector_store %arg12[%c296_272, %c128_273], %522 {strides = array<i32>} : memref<512x512xf32, #tpu.memory_space<vmem>>, vector<8x128xf32>,
    %524 = vector.extract_strided_slice %511 {offsets = [0, 10], sizes = [8, 128], strides = [1, 1]} : vector<8x245xf32> to vector<8x128xf32>
    %c392_274 = arith.constant 392 : index
    %c128_275 = arith.constant 128 : index
    %525 = vector.load %arg12[%c392_274, %c128_275] : memref<512x512xf32, #tpu.memory_space<vmem>>, vector<8x128xf32>
    tpu.vector_store %arg12[%c392_274, %c128_275], %524 {strides = array<i32>} : memref<512x512xf32, #tpu.memory_space<vmem>>, vector<8x128xf32>,
    %526 = vector.extract_strided_slice %511 {offsets = [0, 11], sizes = [8, 128], strides = [1, 1]} : vector<8x245xf32> to vector<8x128xf32>
    %c424_276 = arith.constant 424 : index
    %c128_277 = arith.constant 128 : index
    %527 = vector.load %arg12[%c424_276, %c128_277] : memref<512x512xf32, #tpu.memory_space<vmem>>, vector<8x128xf32>
    tpu.vector_store %arg12[%c424_276, %c128_277], %526 {strides = array<i32>} : memref<512x512xf32, #tpu.memory_space<vmem>>, vector<8x128xf32>,
    %528 = vector.extract_strided_slice %519 {offsets = [0, 0], sizes = [8, 128], strides = [1, 1]} : vector<8x245xf32> to vector<8x128xf32>
    %c328_278 = arith.constant 328 : index
    %c128_279 = arith.constant 128 : index
    %529 = vector.load %arg12[%c328_278, %c128_279] : memref<512x512xf32, #tpu.memory_space<vmem>>, vector<8x128xf32>
    tpu.vector_store %arg12[%c328_278, %c128_279], %528 {strides = array<i32>} : memref<512x512xf32, #tpu.memory_space<vmem>>, vector<8x128xf32>,
    %530 = vector.extract_strided_slice %519 {offsets = [0, 1], sizes = [8, 128], strides = [1, 1]} : vector<8x245xf32> to vector<8x128xf32>
    %c360_280 = arith.constant 360 : index
    %c128_281 = arith.constant 128 : index
    %531 = vector.load %arg12[%c360_280, %c128_281] : memref<512x512xf32, #tpu.memory_space<vmem>>, vector<8x128xf32>
    tpu.vector_store %arg12[%c360_280, %c128_281], %530 {strides = array<i32>} : memref<512x512xf32, #tpu.memory_space<vmem>>, vector<8x128xf32>,
    %532 = vector.extract_strided_slice %519 {offsets = [0, 10], sizes = [8, 128], strides = [1, 1]} : vector<8x245xf32> to vector<8x128xf32>
    %c456_282 = arith.constant 456 : index
    %c128_283 = arith.constant 128 : index
    %533 = vector.load %arg12[%c456_282, %c128_283] : memref<512x512xf32, #tpu.memory_space<vmem>>, vector<8x128xf32>
    tpu.vector_store %arg12[%c456_282, %c128_283], %532 {strides = array<i32>} : memref<512x512xf32, #tpu.memory_space<vmem>>, vector<8x128xf32>,
    %534 = vector.extract_strided_slice %519 {offsets = [0, 11], sizes = [8, 128], strides = [1, 1]} : vector<8x245xf32> to vector<8x128xf32>
    %c488_284 = arith.constant 488 : index
    %c128_285 = arith.constant 128 : index
    %535 = vector.load %arg12[%c488_284, %c128_285] : memref<512x512xf32, #tpu.memory_space<vmem>>, vector<8x128xf32>
    tpu.vector_store %arg12[%c488_284, %c128_285], %534 {strides = array<i32>} : memref<512x512xf32, #tpu.memory_space<vmem>>, vector<8x128xf32>,
    %536 = vector.extract_strided_slice %370 {offsets = [0, 0], sizes = [8, 246], strides = [1, 1]} : vector<8x256xf32> to vector<8x246xf32>
    %537 = vector.extract_strided_slice %370 {offsets = [0, 10], sizes = [8, 246], strides = [1, 1]} : vector<8x256xf32> to vector<8x246xf32>
    %cst_286 = arith.constant 2.500000e-01 : f32
    %538 = vector.broadcast %cst_286 : f32 to vector<8x246xf32>
    %539 = arith.mulf %538, %536 : vector<8x246xf32>
    %cst_287 = arith.constant 7.500000e-01 : f32
    %540 = vector.broadcast %cst_287 : f32 to vector<8x246xf32>
    %541 = arith.mulf %540, %537 : vector<8x246xf32>
    %542 = arith.addf %539, %541 : vector<8x246xf32>
    %cst_288 = arith.constant 7.500000e-01 : f32
    %543 = vector.broadcast %cst_288 : f32 to vector<8x246xf32>
    %544 = arith.mulf %543, %536 : vector<8x246xf32>
    %cst_289 = arith.constant 2.500000e-01 : f32
    %545 = vector.broadcast %cst_289 : f32 to vector<8x246xf32>
    %546 = arith.mulf %545, %537 : vector<8x246xf32>
    %547 = arith.addf %544, %546 : vector<8x246xf32>
    %548 = vector.extract_strided_slice %542 {offsets = [0, 0], sizes = [8, 245], strides = [1, 1]} : vector<8x246xf32> to vector<8x245xf32>
    %549 = vector.extract_strided_slice %542 {offsets = [0, 1], sizes = [8, 245], strides = [1, 1]} : vector<8x246xf32> to vector<8x245xf32>
    %cst_290 = arith.constant 2.500000e-01 : f32
    %550 = vector.broadcast %cst_290 : f32 to vector<8x245xf32>
    %551 = arith.mulf %550, %548 : vector<8x245xf32>
    %cst_291 = arith.constant 7.500000e-01 : f32
    %552 = vector.broadcast %cst_291 : f32 to vector<8x245xf32>
    %553 = arith.mulf %552, %549 : vector<8x245xf32>
    %554 = arith.addf %551, %553 : vector<8x245xf32>
    %c0_292 = arith.constant 0 : index
    %c0_293 = arith.constant 0 : index
    %555 = vector.load %arg10[%c0_292, %c0_293] : memref<4x245xf32, #tpu.memory_space<vmem>>, vector<1x245xf32>
    %556 = vector.broadcast %555 : vector<1x245xf32> to vector<8x245xf32>
    %557 = arith.mulf %554, %556 : vector<8x245xf32>
    %cst_294 = arith.constant 7.500000e-01 : f32
    %558 = vector.broadcast %cst_294 : f32 to vector<8x245xf32>
    %559 = arith.mulf %558, %548 : vector<8x245xf32>
    %cst_295 = arith.constant 2.500000e-01 : f32
    %560 = vector.broadcast %cst_295 : f32 to vector<8x245xf32>
    %561 = arith.mulf %560, %549 : vector<8x245xf32>
    %562 = arith.addf %559, %561 : vector<8x245xf32>
    %c1_296 = arith.constant 1 : index
    %c0_297 = arith.constant 0 : index
    %563 = vector.load %arg10[%c1_296, %c0_297] : memref<4x245xf32, #tpu.memory_space<vmem>>, vector<1x245xf32>
    %564 = vector.broadcast %563 : vector<1x245xf32> to vector<8x245xf32>
    %565 = arith.mulf %562, %564 : vector<8x245xf32>
    %566 = vector.extract_strided_slice %557 {offsets = [0, 0], sizes = [8, 128], strides = [1, 1]} : vector<8x245xf32> to vector<8x128xf32>
    %c16_298 = arith.constant 16 : index
    %c128_299 = arith.constant 128 : index
    %567 = vector.load %arg12[%c16_298, %c128_299] : memref<512x512xf32, #tpu.memory_space<vmem>>, vector<8x128xf32>
    tpu.vector_store %arg12[%c16_298, %c128_299], %566 {strides = array<i32>} : memref<512x512xf32, #tpu.memory_space<vmem>>, vector<8x128xf32>,
    %568 = vector.extract_strided_slice %557 {offsets = [0, 1], sizes = [8, 128], strides = [1, 1]} : vector<8x245xf32> to vector<8x128xf32>
    %c48_300 = arith.constant 48 : index
    %c128_301 = arith.constant 128 : index
    %569 = vector.load %arg12[%c48_300, %c128_301] : memref<512x512xf32, #tpu.memory_space<vmem>>, vector<8x128xf32>
    tpu.vector_store %arg12[%c48_300, %c128_301], %568 {strides = array<i32>} : memref<512x512xf32, #tpu.memory_space<vmem>>, vector<8x128xf32>,
    %570 = vector.extract_strided_slice %557 {offsets = [0, 10], sizes = [8, 128], strides = [1, 1]} : vector<8x245xf32> to vector<8x128xf32>
    %c144_302 = arith.constant 144 : index
    %c128_303 = arith.constant 128 : index
    %571 = vector.load %arg12[%c144_302, %c128_303] : memref<512x512xf32, #tpu.memory_space<vmem>>, vector<8x128xf32>
    tpu.vector_store %arg12[%c144_302, %c128_303], %570 {strides = array<i32>} : memref<512x512xf32, #tpu.memory_space<vmem>>, vector<8x128xf32>,
    %572 = vector.extract_strided_slice %557 {offsets = [0, 11], sizes = [8, 128], strides = [1, 1]} : vector<8x245xf32> to vector<8x128xf32>
    %c176_304 = arith.constant 176 : index
    %c128_305 = arith.constant 128 : index
    %573 = vector.load %arg12[%c176_304, %c128_305] : memref<512x512xf32, #tpu.memory_space<vmem>>, vector<8x128xf32>
    tpu.vector_store %arg12[%c176_304, %c128_305], %572 {strides = array<i32>} : memref<512x512xf32, #tpu.memory_space<vmem>>, vector<8x128xf32>,
    %574 = vector.extract_strided_slice %565 {offsets = [0, 0], sizes = [8, 128], strides = [1, 1]} : vector<8x245xf32> to vector<8x128xf32>
    %c80_306 = arith.constant 80 : index
    %c128_307 = arith.constant 128 : index
    %575 = vector.load %arg12[%c80_306, %c128_307] : memref<512x512xf32, #tpu.memory_space<vmem>>, vector<8x128xf32>
    tpu.vector_store %arg12[%c80_306, %c128_307], %574 {strides = array<i32>} : memref<512x512xf32, #tpu.memory_space<vmem>>, vector<8x128xf32>,
    %576 = vector.extract_strided_slice %565 {offsets = [0, 1], sizes = [8, 128], strides = [1, 1]} : vector<8x245xf32> to vector<8x128xf32>
    %c112_308 = arith.constant 112 : index
    %c128_309 = arith.constant 128 : index
    %577 = vector.load %arg12[%c112_308, %c128_309] : memref<512x512xf32, #tpu.memory_space<vmem>>, vector<8x128xf32>
    tpu.vector_store %arg12[%c112_308, %c128_309], %576 {strides = array<i32>} : memref<512x512xf32, #tpu.memory_space<vmem>>, vector<8x128xf32>,
    %578 = vector.extract_strided_slice %565 {offsets = [0, 10], sizes = [8, 128], strides = [1, 1]} : vector<8x245xf32> to vector<8x128xf32>
    %c208_310 = arith.constant 208 : index
    %c128_311 = arith.constant 128 : index
    %579 = vector.load %arg12[%c208_310, %c128_311] : memref<512x512xf32, #tpu.memory_space<vmem>>, vector<8x128xf32>
    tpu.vector_store %arg12[%c208_310, %c128_311], %578 {strides = array<i32>} : memref<512x512xf32, #tpu.memory_space<vmem>>, vector<8x128xf32>,
    %580 = vector.extract_strided_slice %565 {offsets = [0, 11], sizes = [8, 128], strides = [1, 1]} : vector<8x245xf32> to vector<8x128xf32>
    %c240_312 = arith.constant 240 : index
    %c128_313 = arith.constant 128 : index
    %581 = vector.load %arg12[%c240_312, %c128_313] : memref<512x512xf32, #tpu.memory_space<vmem>>, vector<8x128xf32>
    tpu.vector_store %arg12[%c240_312, %c128_313], %580 {strides = array<i32>} : memref<512x512xf32, #tpu.memory_space<vmem>>, vector<8x128xf32>,
    %582 = vector.extract_strided_slice %547 {offsets = [0, 0], sizes = [8, 245], strides = [1, 1]} : vector<8x246xf32> to vector<8x245xf32>
    %583 = vector.extract_strided_slice %547 {offsets = [0, 1], sizes = [8, 245], strides = [1, 1]} : vector<8x246xf32> to vector<8x245xf32>
    %cst_314 = arith.constant 2.500000e-01 : f32
    %584 = vector.broadcast %cst_314 : f32 to vector<8x245xf32>
    %585 = arith.mulf %584, %582 : vector<8x245xf32>
    %cst_315 = arith.constant 7.500000e-01 : f32
    %586 = vector.broadcast %cst_315 : f32 to vector<8x245xf32>
    %587 = arith.mulf %586, %583 : vector<8x245xf32>
    %588 = arith.addf %585, %587 : vector<8x245xf32>
    %c2_316 = arith.constant 2 : index
    %c0_317 = arith.constant 0 : index
    %589 = vector.load %arg10[%c2_316, %c0_317] : memref<4x245xf32, #tpu.memory_space<vmem>>, vector<1x245xf32>
    %590 = vector.broadcast %589 : vector<1x245xf32> to vector<8x245xf32>
    %591 = arith.mulf %588, %590 : vector<8x245xf32>
    %cst_318 = arith.constant 7.500000e-01 : f32
    %592 = vector.broadcast %cst_318 : f32 to vector<8x245xf32>
    %593 = arith.mulf %592, %582 : vector<8x245xf32>
    %cst_319 = arith.constant 2.500000e-01 : f32
    %594 = vector.broadcast %cst_319 : f32 to vector<8x245xf32>
    %595 = arith.mulf %594, %583 : vector<8x245xf32>
    %596 = arith.addf %593, %595 : vector<8x245xf32>
    %c3_320 = arith.constant 3 : index
    %c0_321 = arith.constant 0 : index
    %597 = vector.load %arg10[%c3_320, %c0_321] : memref<4x245xf32, #tpu.memory_space<vmem>>, vector<1x245xf32>
    %598 = vector.broadcast %597 : vector<1x245xf32> to vector<8x245xf32>
    %599 = arith.mulf %596, %598 : vector<8x245xf32>
    %600 = vector.extract_strided_slice %591 {offsets = [0, 0], sizes = [8, 128], strides = [1, 1]} : vector<8x245xf32> to vector<8x128xf32>
    %c272_322 = arith.constant 272 : index
    %c128_323 = arith.constant 128 : index
    %601 = vector.load %arg12[%c272_322, %c128_323] : memref<512x512xf32, #tpu.memory_space<vmem>>, vector<8x128xf32>
    tpu.vector_store %arg12[%c272_322, %c128_323], %600 {strides = array<i32>} : memref<512x512xf32, #tpu.memory_space<vmem>>, vector<8x128xf32>,
    %602 = vector.extract_strided_slice %591 {offsets = [0, 1], sizes = [8, 128], strides = [1, 1]} : vector<8x245xf32> to vector<8x128xf32>
    %c304_324 = arith.constant 304 : index
    %c128_325 = arith.constant 128 : index
    %603 = vector.load %arg12[%c304_324, %c128_325] : memref<512x512xf32, #tpu.memory_space<vmem>>, vector<8x128xf32>
    tpu.vector_store %arg12[%c304_324, %c128_325], %602 {strides = array<i32>} : memref<512x512xf32, #tpu.memory_space<vmem>>, vector<8x128xf32>,
    %604 = vector.extract_strided_slice %591 {offsets = [0, 10], sizes = [8, 128], strides = [1, 1]} : vector<8x245xf32> to vector<8x128xf32>
    %c400_326 = arith.constant 400 : index
    %c128_327 = arith.constant 128 : index
    %605 = vector.load %arg12[%c400_326, %c128_327] : memref<512x512xf32, #tpu.memory_space<vmem>>, vector<8x128xf32>
    tpu.vector_store %arg12[%c400_326, %c128_327], %604 {strides = array<i32>} : memref<512x512xf32, #tpu.memory_space<vmem>>, vector<8x128xf32>,
    %606 = vector.extract_strided_slice %591 {offsets = [0, 11], sizes = [8, 128], strides = [1, 1]} : vector<8x245xf32> to vector<8x128xf32>
    %c432_328 = arith.constant 432 : index
    %c128_329 = arith.constant 128 : index
    %607 = vector.load %arg12[%c432_328, %c128_329] : memref<512x512xf32, #tpu.memory_space<vmem>>, vector<8x128xf32>
    tpu.vector_store %arg12[%c432_328, %c128_329], %606 {strides = array<i32>} : memref<512x512xf32, #tpu.memory_space<vmem>>, vector<8x128xf32>,
    %608 = vector.extract_strided_slice %599 {offsets = [0, 0], sizes = [8, 128], strides = [1, 1]} : vector<8x245xf32> to vector<8x128xf32>
    %c336_330 = arith.constant 336 : index
    %c128_331 = arith.constant 128 : index
    %609 = vector.load %arg12[%c336_330, %c128_331] : memref<512x512xf32, #tpu.memory_space<vmem>>, vector<8x128xf32>
    tpu.vector_store %arg12[%c336_330, %c128_331], %608 {strides = array<i32>} : memref<512x512xf32, #tpu.memory_space<vmem>>, vector<8x128xf32>,
    %610 = vector.extract_strided_slice %599 {offsets = [0, 1], sizes = [8, 128], strides = [1, 1]} : vector<8x245xf32> to vector<8x128xf32>
    %c368_332 = arith.constant 368 : index
    %c128_333 = arith.constant 128 : index
    %611 = vector.load %arg12[%c368_332, %c128_333] : memref<512x512xf32, #tpu.memory_space<vmem>>, vector<8x128xf32>
    tpu.vector_store %arg12[%c368_332, %c128_333], %610 {strides = array<i32>} : memref<512x512xf32, #tpu.memory_space<vmem>>, vector<8x128xf32>,
    %612 = vector.extract_strided_slice %599 {offsets = [0, 10], sizes = [8, 128], strides = [1, 1]} : vector<8x245xf32> to vector<8x128xf32>
    %c464_334 = arith.constant 464 : index
    %c128_335 = arith.constant 128 : index
    %613 = vector.load %arg12[%c464_334, %c128_335] : memref<512x512xf32, #tpu.memory_space<vmem>>, vector<8x128xf32>
    tpu.vector_store %arg12[%c464_334, %c128_335], %612 {strides = array<i32>} : memref<512x512xf32, #tpu.memory_space<vmem>>, vector<8x128xf32>,
    %614 = vector.extract_strided_slice %599 {offsets = [0, 11], sizes = [8, 128], strides = [1, 1]} : vector<8x245xf32> to vector<8x128xf32>
    %c496_336 = arith.constant 496 : index
    %c128_337 = arith.constant 128 : index
    %615 = vector.load %arg12[%c496_336, %c128_337] : memref<512x512xf32, #tpu.memory_space<vmem>>, vector<8x128xf32>
    tpu.vector_store %arg12[%c496_336, %c128_337], %614 {strides = array<i32>} : memref<512x512xf32, #tpu.memory_space<vmem>>, vector<8x128xf32>,
    %616 = vector.extract_strided_slice %375 {offsets = [0, 0], sizes = [8, 246], strides = [1, 1]} : vector<8x256xf32> to vector<8x246xf32>
    %617 = vector.extract_strided_slice %375 {offsets = [0, 10], sizes = [8, 246], strides = [1, 1]} : vector<8x256xf32> to vector<8x246xf32>
    %cst_338 = arith.constant 2.500000e-01 : f32
    %618 = vector.broadcast %cst_338 : f32 to vector<8x246xf32>
    %619 = arith.mulf %618, %616 : vector<8x246xf32>
    %cst_339 = arith.constant 7.500000e-01 : f32
    %620 = vector.broadcast %cst_339 : f32 to vector<8x246xf32>
    %621 = arith.mulf %620, %617 : vector<8x246xf32>
    %622 = arith.addf %619, %621 : vector<8x246xf32>
    %cst_340 = arith.constant 7.500000e-01 : f32
    %623 = vector.broadcast %cst_340 : f32 to vector<8x246xf32>
    %624 = arith.mulf %623, %616 : vector<8x246xf32>
    %cst_341 = arith.constant 2.500000e-01 : f32
    %625 = vector.broadcast %cst_341 : f32 to vector<8x246xf32>
    %626 = arith.mulf %625, %617 : vector<8x246xf32>
    %627 = arith.addf %624, %626 : vector<8x246xf32>
    %628 = vector.extract_strided_slice %622 {offsets = [0, 0], sizes = [8, 245], strides = [1, 1]} : vector<8x246xf32> to vector<8x245xf32>
    %629 = vector.extract_strided_slice %622 {offsets = [0, 1], sizes = [8, 245], strides = [1, 1]} : vector<8x246xf32> to vector<8x245xf32>
    %cst_342 = arith.constant 2.500000e-01 : f32
    %630 = vector.broadcast %cst_342 : f32 to vector<8x245xf32>
    %631 = arith.mulf %630, %628 : vector<8x245xf32>
    %cst_343 = arith.constant 7.500000e-01 : f32
    %632 = vector.broadcast %cst_343 : f32 to vector<8x245xf32>
    %633 = arith.mulf %632, %629 : vector<8x245xf32>
    %634 = arith.addf %631, %633 : vector<8x245xf32>
    %c0_344 = arith.constant 0 : index
    %c0_345 = arith.constant 0 : index
    %635 = vector.load %arg10[%c0_344, %c0_345] : memref<4x245xf32, #tpu.memory_space<vmem>>, vector<1x245xf32>
    %636 = vector.broadcast %635 : vector<1x245xf32> to vector<8x245xf32>
    %637 = arith.mulf %634, %636 : vector<8x245xf32>
    %cst_346 = arith.constant 7.500000e-01 : f32
    %638 = vector.broadcast %cst_346 : f32 to vector<8x245xf32>
    %639 = arith.mulf %638, %628 : vector<8x245xf32>
    %cst_347 = arith.constant 2.500000e-01 : f32
    %640 = vector.broadcast %cst_347 : f32 to vector<8x245xf32>
    %641 = arith.mulf %640, %629 : vector<8x245xf32>
    %642 = arith.addf %639, %641 : vector<8x245xf32>
    %c1_348 = arith.constant 1 : index
    %c0_349 = arith.constant 0 : index
    %643 = vector.load %arg10[%c1_348, %c0_349] : memref<4x245xf32, #tpu.memory_space<vmem>>, vector<1x245xf32>
    %644 = vector.broadcast %643 : vector<1x245xf32> to vector<8x245xf32>
    %645 = arith.mulf %642, %644 : vector<8x245xf32>
    %646 = vector.extract_strided_slice %637 {offsets = [0, 0], sizes = [8, 128], strides = [1, 1]} : vector<8x245xf32> to vector<8x128xf32>
    %c24_350 = arith.constant 24 : index
    %c128_351 = arith.constant 128 : index
    %647 = vector.load %arg12[%c24_350, %c128_351] : memref<512x512xf32, #tpu.memory_space<vmem>>, vector<8x128xf32>
    tpu.vector_store %arg12[%c24_350, %c128_351], %646 {strides = array<i32>} : memref<512x512xf32, #tpu.memory_space<vmem>>, vector<8x128xf32>,
    %648 = vector.extract_strided_slice %637 {offsets = [0, 1], sizes = [8, 128], strides = [1, 1]} : vector<8x245xf32> to vector<8x128xf32>
    %c56_352 = arith.constant 56 : index
    %c128_353 = arith.constant 128 : index
    %649 = vector.load %arg12[%c56_352, %c128_353] : memref<512x512xf32, #tpu.memory_space<vmem>>, vector<8x128xf32>
    tpu.vector_store %arg12[%c56_352, %c128_353], %648 {strides = array<i32>} : memref<512x512xf32, #tpu.memory_space<vmem>>, vector<8x128xf32>,
    %650 = vector.extract_strided_slice %637 {offsets = [0, 10], sizes = [8, 128], strides = [1, 1]} : vector<8x245xf32> to vector<8x128xf32>
    %c152_354 = arith.constant 152 : index
    %c128_355 = arith.constant 128 : index
    %651 = vector.load %arg12[%c152_354, %c128_355] : memref<512x512xf32, #tpu.memory_space<vmem>>, vector<8x128xf32>
    tpu.vector_store %arg12[%c152_354, %c128_355], %650 {strides = array<i32>} : memref<512x512xf32, #tpu.memory_space<vmem>>, vector<8x128xf32>,
    %652 = vector.extract_strided_slice %637 {offsets = [0, 11], sizes = [8, 128], strides = [1, 1]} : vector<8x245xf32> to vector<8x128xf32>
    %c184_356 = arith.constant 184 : index
    %c128_357 = arith.constant 128 : index
    %653 = vector.load %arg12[%c184_356, %c128_357] : memref<512x512xf32, #tpu.memory_space<vmem>>, vector<8x128xf32>
    tpu.vector_store %arg12[%c184_356, %c128_357], %652 {strides = array<i32>} : memref<512x512xf32, #tpu.memory_space<vmem>>, vector<8x128xf32>,
    %654 = vector.extract_strided_slice %645 {offsets = [0, 0], sizes = [8, 128], strides = [1, 1]} : vector<8x245xf32> to vector<8x128xf32>
    %c88_358 = arith.constant 88 : index
    %c128_359 = arith.constant 128 : index
    %655 = vector.load %arg12[%c88_358, %c128_359] : memref<512x512xf32, #tpu.memory_space<vmem>>, vector<8x128xf32>
    tpu.vector_store %arg12[%c88_358, %c128_359], %654 {strides = array<i32>} : memref<512x512xf32, #tpu.memory_space<vmem>>, vector<8x128xf32>,
    %656 = vector.extract_strided_slice %645 {offsets = [0, 1], sizes = [8, 128], strides = [1, 1]} : vector<8x245xf32> to vector<8x128xf32>
    %c120_360 = arith.constant 120 : index
    %c128_361 = arith.constant 128 : index
    %657 = vector.load %arg12[%c120_360, %c128_361] : memref<512x512xf32, #tpu.memory_space<vmem>>, vector<8x128xf32>
    tpu.vector_store %arg12[%c120_360, %c128_361], %656 {strides = array<i32>} : memref<512x512xf32, #tpu.memory_space<vmem>>, vector<8x128xf32>,
    %658 = vector.extract_strided_slice %645 {offsets = [0, 10], sizes = [8, 128], strides = [1, 1]} : vector<8x245xf32> to vector<8x128xf32>
    %c216_362 = arith.constant 216 : index
    %c128_363 = arith.constant 128 : index
    %659 = vector.load %arg12[%c216_362, %c128_363] : memref<512x512xf32, #tpu.memory_space<vmem>>, vector<8x128xf32>
    tpu.vector_store %arg12[%c216_362, %c128_363], %658 {strides = array<i32>} : memref<512x512xf32, #tpu.memory_space<vmem>>, vector<8x128xf32>,
    %660 = vector.extract_strided_slice %645 {offsets = [0, 11], sizes = [8, 128], strides = [1, 1]} : vector<8x245xf32> to vector<8x128xf32>
    %c248_364 = arith.constant 248 : index
    %c128_365 = arith.constant 128 : index
    %661 = vector.load %arg12[%c248_364, %c128_365] : memref<512x512xf32, #tpu.memory_space<vmem>>, vector<8x128xf32>
    tpu.vector_store %arg12[%c248_364, %c128_365], %660 {strides = array<i32>} : memref<512x512xf32, #tpu.memory_space<vmem>>, vector<8x128xf32>,
    %662 = vector.extract_strided_slice %627 {offsets = [0, 0], sizes = [8, 245], strides = [1, 1]} : vector<8x246xf32> to vector<8x245xf32>
    %663 = vector.extract_strided_slice %627 {offsets = [0, 1], sizes = [8, 245], strides = [1, 1]} : vector<8x246xf32> to vector<8x245xf32>
    %cst_366 = arith.constant 2.500000e-01 : f32
    %664 = vector.broadcast %cst_366 : f32 to vector<8x245xf32>
    %665 = arith.mulf %664, %662 : vector<8x245xf32>
    %cst_367 = arith.constant 7.500000e-01 : f32
    %666 = vector.broadcast %cst_367 : f32 to vector<8x245xf32>
    %667 = arith.mulf %666, %663 : vector<8x245xf32>
    %668 = arith.addf %665, %667 : vector<8x245xf32>
    %c2_368 = arith.constant 2 : index
    %c0_369 = arith.constant 0 : index
    %669 = vector.load %arg10[%c2_368, %c0_369] : memref<4x245xf32, #tpu.memory_space<vmem>>, vector<1x245xf32>
    %670 = vector.broadcast %669 : vector<1x245xf32> to vector<8x245xf32>
    %671 = arith.mulf %668, %670 : vector<8x245xf32>
    %cst_370 = arith.constant 7.500000e-01 : f32
    %672 = vector.broadcast %cst_370 : f32 to vector<8x245xf32>
    %673 = arith.mulf %672, %662 : vector<8x245xf32>
    %cst_371 = arith.constant 2.500000e-01 : f32
    %674 = vector.broadcast %cst_371 : f32 to vector<8x245xf32>
    %675 = arith.mulf %674, %663 : vector<8x245xf32>
    %676 = arith.addf %673, %675 : vector<8x245xf32>
    %c3_372 = arith.constant 3 : index
    %c0_373 = arith.constant 0 : index
    %677 = vector.load %arg10[%c3_372, %c0_373] : memref<4x245xf32, #tpu.memory_space<vmem>>, vector<1x245xf32>
    %678 = vector.broadcast %677 : vector<1x245xf32> to vector<8x245xf32>
    %679 = arith.mulf %676, %678 : vector<8x245xf32>
    %680 = vector.extract_strided_slice %671 {offsets = [0, 0], sizes = [8, 128], strides = [1, 1]} : vector<8x245xf32> to vector<8x128xf32>
    %c280_374 = arith.constant 280 : index
    %c128_375 = arith.constant 128 : index
    %681 = vector.load %arg12[%c280_374, %c128_375] : memref<512x512xf32, #tpu.memory_space<vmem>>, vector<8x128xf32>
    tpu.vector_store %arg12[%c280_374, %c128_375], %680 {strides = array<i32>} : memref<512x512xf32, #tpu.memory_space<vmem>>, vector<8x128xf32>,
    %682 = vector.extract_strided_slice %671 {offsets = [0, 1], sizes = [8, 128], strides = [1, 1]} : vector<8x245xf32> to vector<8x128xf32>
    %c312_376 = arith.constant 312 : index
    %c128_377 = arith.constant 128 : index
    %683 = vector.load %arg12[%c312_376, %c128_377] : memref<512x512xf32, #tpu.memory_space<vmem>>, vector<8x128xf32>
    tpu.vector_store %arg12[%c312_376, %c128_377], %682 {strides = array<i32>} : memref<512x512xf32, #tpu.memory_space<vmem>>, vector<8x128xf32>,
    %684 = vector.extract_strided_slice %671 {offsets = [0, 10], sizes = [8, 128], strides = [1, 1]} : vector<8x245xf32> to vector<8x128xf32>
    %c408_378 = arith.constant 408 : index
    %c128_379 = arith.constant 128 : index
    %685 = vector.load %arg12[%c408_378, %c128_379] : memref<512x512xf32, #tpu.memory_space<vmem>>, vector<8x128xf32>
    tpu.vector_store %arg12[%c408_378, %c128_379], %684 {strides = array<i32>} : memref<512x512xf32, #tpu.memory_space<vmem>>, vector<8x128xf32>,
    %686 = vector.extract_strided_slice %671 {offsets = [0, 11], sizes = [8, 128], strides = [1, 1]} : vector<8x245xf32> to vector<8x128xf32>
    %c440_380 = arith.constant 440 : index
    %c128_381 = arith.constant 128 : index
    %687 = vector.load %arg12[%c440_380, %c128_381] : memref<512x512xf32, #tpu.memory_space<vmem>>, vector<8x128xf32>
    tpu.vector_store %arg12[%c440_380, %c128_381], %686 {strides = array<i32>} : memref<512x512xf32, #tpu.memory_space<vmem>>, vector<8x128xf32>,
    %688 = vector.extract_strided_slice %679 {offsets = [0, 0], sizes = [8, 128], strides = [1, 1]} : vector<8x245xf32> to vector<8x128xf32>
    %c344_382 = arith.constant 344 : index
    %c128_383 = arith.constant 128 : index
    %689 = vector.load %arg12[%c344_382, %c128_383] : memref<512x512xf32, #tpu.memory_space<vmem>>, vector<8x128xf32>
    tpu.vector_store %arg12[%c344_382, %c128_383], %688 {strides = array<i32>} : memref<512x512xf32, #tpu.memory_space<vmem>>, vector<8x128xf32>,
    %690 = vector.extract_strided_slice %679 {offsets = [0, 1], sizes = [8, 128], strides = [1, 1]} : vector<8x245xf32> to vector<8x128xf32>
    %c376_384 = arith.constant 376 : index
    %c128_385 = arith.constant 128 : index
    %691 = vector.load %arg12[%c376_384, %c128_385] : memref<512x512xf32, #tpu.memory_space<vmem>>, vector<8x128xf32>
    tpu.vector_store %arg12[%c376_384, %c128_385], %690 {strides = array<i32>} : memref<512x512xf32, #tpu.memory_space<vmem>>, vector<8x128xf32>,
    %692 = vector.extract_strided_slice %679 {offsets = [0, 10], sizes = [8, 128], strides = [1, 1]} : vector<8x245xf32> to vector<8x128xf32>
    %c472_386 = arith.constant 472 : index
    %c128_387 = arith.constant 128 : index
    %693 = vector.load %arg12[%c472_386, %c128_387] : memref<512x512xf32, #tpu.memory_space<vmem>>, vector<8x128xf32>
    tpu.vector_store %arg12[%c472_386, %c128_387], %692 {strides = array<i32>} : memref<512x512xf32, #tpu.memory_space<vmem>>, vector<8x128xf32>,
    %694 = vector.extract_strided_slice %679 {offsets = [0, 11], sizes = [8, 128], strides = [1, 1]} : vector<8x245xf32> to vector<8x128xf32>
    %c504_388 = arith.constant 504 : index
    %c128_389 = arith.constant 128 : index
    %695 = vector.load %arg12[%c504_388, %c128_389] : memref<512x512xf32, #tpu.memory_space<vmem>>, vector<8x128xf32>
    tpu.vector_store %arg12[%c504_388, %c128_389], %694 {strides = array<i32>} : memref<512x512xf32, #tpu.memory_space<vmem>>, vector<8x128xf32>,
    %c0_390 = arith.constant 0 : index
    %c0_391 = arith.constant 0 : index
    %c0_392 = arith.constant 0 : index
    %c0_393 = arith.constant 0 : index
    %696 = vector.load %arg4[%c0_390, %c0_391, %c0_392, %c0_393] : memref<1x1x8x256xf32, #tpu.memory_space<vmem>>, vector<1x1x8x256xf32>
    %697 = vector.shape_cast %696 : vector<1x1x8x256xf32> to vector<8x256xf32>
    %c0_394 = arith.constant 0 : index
    %c0_395 = arith.constant 0 : index
    %c0_396 = arith.constant 0 : index
    %c0_397 = arith.constant 0 : index
    %698 = vector.load %arg5[%c0_394, %c0_395, %c0_396, %c0_397] : memref<1x1x8x256xf32, #tpu.memory_space<vmem>>, vector<1x1x8x256xf32>
    %699 = vector.shape_cast %698 : vector<1x1x8x256xf32> to vector<8x256xf32>
    %c0_398 = arith.constant 0 : index
    %c0_399 = arith.constant 0 : index
    %c0_400 = arith.constant 0 : index
    %c0_401 = arith.constant 0 : index
    %700 = vector.load %arg6[%c0_398, %c0_399, %c0_400, %c0_401] : memref<1x1x8x256xf32, #tpu.memory_space<vmem>>, vector<1x1x8x256xf32>
    %701 = vector.shape_cast %700 : vector<1x1x8x256xf32> to vector<8x256xf32>
    %cst_402 = arith.constant 7.500000e-01 : f32
    %702 = vector.broadcast %cst_402 : f32 to vector<8x256xf32>
    %703 = arith.mulf %702, %697 : vector<8x256xf32>
    %cst_403 = arith.constant 2.500000e-01 : f32
    %704 = vector.broadcast %cst_403 : f32 to vector<8x256xf32>
    %705 = arith.mulf %704, %699 : vector<8x256xf32>
    %706 = arith.addf %703, %705 : vector<8x256xf32>
    %cst_404 = arith.constant 2.500000e-01 : f32
    %707 = vector.broadcast %cst_404 : f32 to vector<8x256xf32>
    %708 = arith.mulf %707, %697 : vector<8x256xf32>
    %cst_405 = arith.constant 7.500000e-01 : f32
    %709 = vector.broadcast %cst_405 : f32 to vector<8x256xf32>
    %710 = arith.mulf %709, %699 : vector<8x256xf32>
    %711 = arith.addf %708, %710 : vector<8x256xf32>
    %cst_406 = arith.constant 7.500000e-01 : f32
    %712 = vector.broadcast %cst_406 : f32 to vector<8x256xf32>
    %713 = arith.mulf %712, %699 : vector<8x256xf32>
    %cst_407 = arith.constant 2.500000e-01 : f32
    %714 = vector.broadcast %cst_407 : f32 to vector<8x256xf32>
    %715 = arith.mulf %714, %701 : vector<8x256xf32>
    %716 = arith.addf %713, %715 : vector<8x256xf32>
    %cst_408 = arith.constant 2.500000e-01 : f32
    %717 = vector.broadcast %cst_408 : f32 to vector<8x256xf32>
    %718 = arith.mulf %717, %699 : vector<8x256xf32>
    %cst_409 = arith.constant 7.500000e-01 : f32
    %719 = vector.broadcast %cst_409 : f32 to vector<8x256xf32>
    %720 = arith.mulf %719, %701 : vector<8x256xf32>
    %721 = arith.addf %718, %720 : vector<8x256xf32>
    %722 = vector.extract_strided_slice %706 {offsets = [0, 0], sizes = [8, 246], strides = [1, 1]} : vector<8x256xf32> to vector<8x246xf32>
    %723 = vector.extract_strided_slice %706 {offsets = [0, 10], sizes = [8, 246], strides = [1, 1]} : vector<8x256xf32> to vector<8x246xf32>
    %cst_410 = arith.constant 2.500000e-01 : f32
    %724 = vector.broadcast %cst_410 : f32 to vector<8x246xf32>
    %725 = arith.mulf %724, %722 : vector<8x246xf32>
    %cst_411 = arith.constant 7.500000e-01 : f32
    %726 = vector.broadcast %cst_411 : f32 to vector<8x246xf32>
    %727 = arith.mulf %726, %723 : vector<8x246xf32>
    %728 = arith.addf %725, %727 : vector<8x246xf32>
    %cst_412 = arith.constant 7.500000e-01 : f32
    %729 = vector.broadcast %cst_412 : f32 to vector<8x246xf32>
    %730 = arith.mulf %729, %722 : vector<8x246xf32>
    %cst_413 = arith.constant 2.500000e-01 : f32
    %731 = vector.broadcast %cst_413 : f32 to vector<8x246xf32>
    %732 = arith.mulf %731, %723 : vector<8x246xf32>
    %733 = arith.addf %730, %732 : vector<8x246xf32>
    %734 = vector.extract_strided_slice %728 {offsets = [0, 0], sizes = [8, 245], strides = [1, 1]} : vector<8x246xf32> to vector<8x245xf32>
    %735 = vector.extract_strided_slice %728 {offsets = [0, 1], sizes = [8, 245], strides = [1, 1]} : vector<8x246xf32> to vector<8x245xf32>
    %cst_414 = arith.constant 2.500000e-01 : f32
    %736 = vector.broadcast %cst_414 : f32 to vector<8x245xf32>
    %737 = arith.mulf %736, %734 : vector<8x245xf32>
    %cst_415 = arith.constant 7.500000e-01 : f32
    %738 = vector.broadcast %cst_415 : f32 to vector<8x245xf32>
    %739 = arith.mulf %738, %735 : vector<8x245xf32>
    %740 = arith.addf %737, %739 : vector<8x245xf32>
    %c0_416 = arith.constant 0 : index
    %c0_417 = arith.constant 0 : index
    %741 = vector.load %arg10[%c0_416, %c0_417] : memref<4x245xf32, #tpu.memory_space<vmem>>, vector<1x245xf32>
    %742 = vector.broadcast %741 : vector<1x245xf32> to vector<8x245xf32>
    %743 = arith.mulf %740, %742 : vector<8x245xf32>
    %cst_418 = arith.constant 7.500000e-01 : f32
    %744 = vector.broadcast %cst_418 : f32 to vector<8x245xf32>
    %745 = arith.mulf %744, %734 : vector<8x245xf32>
    %cst_419 = arith.constant 2.500000e-01 : f32
    %746 = vector.broadcast %cst_419 : f32 to vector<8x245xf32>
    %747 = arith.mulf %746, %735 : vector<8x245xf32>
    %748 = arith.addf %745, %747 : vector<8x245xf32>
    %c1_420 = arith.constant 1 : index
    %c0_421 = arith.constant 0 : index
    %749 = vector.load %arg10[%c1_420, %c0_421] : memref<4x245xf32, #tpu.memory_space<vmem>>, vector<1x245xf32>
    %750 = vector.broadcast %749 : vector<1x245xf32> to vector<8x245xf32>
    %751 = arith.mulf %748, %750 : vector<8x245xf32>
    %752 = vector.extract_strided_slice %743 {offsets = [0, 0], sizes = [8, 128], strides = [1, 1]} : vector<8x245xf32> to vector<8x128xf32>
    %c0_422 = arith.constant 0 : index
    %c256_423 = arith.constant 256 : index
    %753 = vector.load %arg12[%c0_422, %c256_423] : memref<512x512xf32, #tpu.memory_space<vmem>>, vector<8x128xf32>
    tpu.vector_store %arg12[%c0_422, %c256_423], %752 {strides = array<i32>} : memref<512x512xf32, #tpu.memory_space<vmem>>, vector<8x128xf32>,
    %754 = vector.extract_strided_slice %743 {offsets = [0, 1], sizes = [8, 128], strides = [1, 1]} : vector<8x245xf32> to vector<8x128xf32>
    %c32_424 = arith.constant 32 : index
    %c256_425 = arith.constant 256 : index
    %755 = vector.load %arg12[%c32_424, %c256_425] : memref<512x512xf32, #tpu.memory_space<vmem>>, vector<8x128xf32>
    tpu.vector_store %arg12[%c32_424, %c256_425], %754 {strides = array<i32>} : memref<512x512xf32, #tpu.memory_space<vmem>>, vector<8x128xf32>,
    %756 = vector.extract_strided_slice %743 {offsets = [0, 10], sizes = [8, 128], strides = [1, 1]} : vector<8x245xf32> to vector<8x128xf32>
    %c128_426 = arith.constant 128 : index
    %c256_427 = arith.constant 256 : index
    %757 = vector.load %arg12[%c128_426, %c256_427] : memref<512x512xf32, #tpu.memory_space<vmem>>, vector<8x128xf32>
    tpu.vector_store %arg12[%c128_426, %c256_427], %756 {strides = array<i32>} : memref<512x512xf32, #tpu.memory_space<vmem>>, vector<8x128xf32>,
    %758 = vector.extract_strided_slice %743 {offsets = [0, 11], sizes = [8, 128], strides = [1, 1]} : vector<8x245xf32> to vector<8x128xf32>
    %c160_428 = arith.constant 160 : index
    %c256_429 = arith.constant 256 : index
    %759 = vector.load %arg12[%c160_428, %c256_429] : memref<512x512xf32, #tpu.memory_space<vmem>>, vector<8x128xf32>
    tpu.vector_store %arg12[%c160_428, %c256_429], %758 {strides = array<i32>} : memref<512x512xf32, #tpu.memory_space<vmem>>, vector<8x128xf32>,
    %760 = vector.extract_strided_slice %751 {offsets = [0, 0], sizes = [8, 128], strides = [1, 1]} : vector<8x245xf32> to vector<8x128xf32>
    %c64_430 = arith.constant 64 : index
    %c256_431 = arith.constant 256 : index
    %761 = vector.load %arg12[%c64_430, %c256_431] : memref<512x512xf32, #tpu.memory_space<vmem>>, vector<8x128xf32>
    tpu.vector_store %arg12[%c64_430, %c256_431], %760 {strides = array<i32>} : memref<512x512xf32, #tpu.memory_space<vmem>>, vector<8x128xf32>,
    %762 = vector.extract_strided_slice %751 {offsets = [0, 1], sizes = [8, 128], strides = [1, 1]} : vector<8x245xf32> to vector<8x128xf32>
    %c96_432 = arith.constant 96 : index
    %c256_433 = arith.constant 256 : index
    %763 = vector.load %arg12[%c96_432, %c256_433] : memref<512x512xf32, #tpu.memory_space<vmem>>, vector<8x128xf32>
    tpu.vector_store %arg12[%c96_432, %c256_433], %762 {strides = array<i32>} : memref<512x512xf32, #tpu.memory_space<vmem>>, vector<8x128xf32>,
    %764 = vector.extract_strided_slice %751 {offsets = [0, 10], sizes = [8, 128], strides = [1, 1]} : vector<8x245xf32> to vector<8x128xf32>
    %c192_434 = arith.constant 192 : index
    %c256_435 = arith.constant 256 : index
    %765 = vector.load %arg12[%c192_434, %c256_435] : memref<512x512xf32, #tpu.memory_space<vmem>>, vector<8x128xf32>
    tpu.vector_store %arg12[%c192_434, %c256_435], %764 {strides = array<i32>} : memref<512x512xf32, #tpu.memory_space<vmem>>, vector<8x128xf32>,
    %766 = vector.extract_strided_slice %751 {offsets = [0, 11], sizes = [8, 128], strides = [1, 1]} : vector<8x245xf32> to vector<8x128xf32>
    %c224_436 = arith.constant 224 : index
    %c256_437 = arith.constant 256 : index
    %767 = vector.load %arg12[%c224_436, %c256_437] : memref<512x512xf32, #tpu.memory_space<vmem>>, vector<8x128xf32>
    tpu.vector_store %arg12[%c224_436, %c256_437], %766 {strides = array<i32>} : memref<512x512xf32, #tpu.memory_space<vmem>>, vector<8x128xf32>,
    %768 = vector.extract_strided_slice %733 {offsets = [0, 0], sizes = [8, 245], strides = [1, 1]} : vector<8x246xf32> to vector<8x245xf32>
    %769 = vector.extract_strided_slice %733 {offsets = [0, 1], sizes = [8, 245], strides = [1, 1]} : vector<8x246xf32> to vector<8x245xf32>
    %cst_438 = arith.constant 2.500000e-01 : f32
    %770 = vector.broadcast %cst_438 : f32 to vector<8x245xf32>
    %771 = arith.mulf %770, %768 : vector<8x245xf32>
    %cst_439 = arith.constant 7.500000e-01 : f32
    %772 = vector.broadcast %cst_439 : f32 to vector<8x245xf32>
    %773 = arith.mulf %772, %769 : vector<8x245xf32>
    %774 = arith.addf %771, %773 : vector<8x245xf32>
    %c2_440 = arith.constant 2 : index
    %c0_441 = arith.constant 0 : index
    %775 = vector.load %arg10[%c2_440, %c0_441] : memref<4x245xf32, #tpu.memory_space<vmem>>, vector<1x245xf32>
    %776 = vector.broadcast %775 : vector<1x245xf32> to vector<8x245xf32>
    %777 = arith.mulf %774, %776 : vector<8x245xf32>
    %cst_442 = arith.constant 7.500000e-01 : f32
    %778 = vector.broadcast %cst_442 : f32 to vector<8x245xf32>
    %779 = arith.mulf %778, %768 : vector<8x245xf32>
    %cst_443 = arith.constant 2.500000e-01 : f32
    %780 = vector.broadcast %cst_443 : f32 to vector<8x245xf32>
    %781 = arith.mulf %780, %769 : vector<8x245xf32>
    %782 = arith.addf %779, %781 : vector<8x245xf32>
    %c3_444 = arith.constant 3 : index
    %c0_445 = arith.constant 0 : index
    %783 = vector.load %arg10[%c3_444, %c0_445] : memref<4x245xf32, #tpu.memory_space<vmem>>, vector<1x245xf32>
    %784 = vector.broadcast %783 : vector<1x245xf32> to vector<8x245xf32>
    %785 = arith.mulf %782, %784 : vector<8x245xf32>
    %786 = vector.extract_strided_slice %777 {offsets = [0, 0], sizes = [8, 128], strides = [1, 1]} : vector<8x245xf32> to vector<8x128xf32>
    %c256_446 = arith.constant 256 : index
    %c256_447 = arith.constant 256 : index
    %787 = vector.load %arg12[%c256_446, %c256_447] : memref<512x512xf32, #tpu.memory_space<vmem>>, vector<8x128xf32>
    tpu.vector_store %arg12[%c256_446, %c256_447], %786 {strides = array<i32>} : memref<512x512xf32, #tpu.memory_space<vmem>>, vector<8x128xf32>,
    %788 = vector.extract_strided_slice %777 {offsets = [0, 1], sizes = [8, 128], strides = [1, 1]} : vector<8x245xf32> to vector<8x128xf32>
    %c288_448 = arith.constant 288 : index
    %c256_449 = arith.constant 256 : index
    %789 = vector.load %arg12[%c288_448, %c256_449] : memref<512x512xf32, #tpu.memory_space<vmem>>, vector<8x128xf32>
    tpu.vector_store %arg12[%c288_448, %c256_449], %788 {strides = array<i32>} : memref<512x512xf32, #tpu.memory_space<vmem>>, vector<8x128xf32>,
    %790 = vector.extract_strided_slice %777 {offsets = [0, 10], sizes = [8, 128], strides = [1, 1]} : vector<8x245xf32> to vector<8x128xf32>
    %c384_450 = arith.constant 384 : index
    %c256_451 = arith.constant 256 : index
    %791 = vector.load %arg12[%c384_450, %c256_451] : memref<512x512xf32, #tpu.memory_space<vmem>>, vector<8x128xf32>
    tpu.vector_store %arg12[%c384_450, %c256_451], %790 {strides = array<i32>} : memref<512x512xf32, #tpu.memory_space<vmem>>, vector<8x128xf32>,
    %792 = vector.extract_strided_slice %777 {offsets = [0, 11], sizes = [8, 128], strides = [1, 1]} : vector<8x245xf32> to vector<8x128xf32>
    %c416_452 = arith.constant 416 : index
    %c256_453 = arith.constant 256 : index
    %793 = vector.load %arg12[%c416_452, %c256_453] : memref<512x512xf32, #tpu.memory_space<vmem>>, vector<8x128xf32>
    tpu.vector_store %arg12[%c416_452, %c256_453], %792 {strides = array<i32>} : memref<512x512xf32, #tpu.memory_space<vmem>>, vector<8x128xf32>,
    %794 = vector.extract_strided_slice %785 {offsets = [0, 0], sizes = [8, 128], strides = [1, 1]} : vector<8x245xf32> to vector<8x128xf32>
    %c320_454 = arith.constant 320 : index
    %c256_455 = arith.constant 256 : index
    %795 = vector.load %arg12[%c320_454, %c256_455] : memref<512x512xf32, #tpu.memory_space<vmem>>, vector<8x128xf32>
    tpu.vector_store %arg12[%c320_454, %c256_455], %794 {strides = array<i32>} : memref<512x512xf32, #tpu.memory_space<vmem>>, vector<8x128xf32>,
    %796 = vector.extract_strided_slice %785 {offsets = [0, 1], sizes = [8, 128], strides = [1, 1]} : vector<8x245xf32> to vector<8x128xf32>
    %c352_456 = arith.constant 352 : index
    %c256_457 = arith.constant 256 : index
    %797 = vector.load %arg12[%c352_456, %c256_457] : memref<512x512xf32, #tpu.memory_space<vmem>>, vector<8x128xf32>
    tpu.vector_store %arg12[%c352_456, %c256_457], %796 {strides = array<i32>} : memref<512x512xf32, #tpu.memory_space<vmem>>, vector<8x128xf32>,
    %798 = vector.extract_strided_slice %785 {offsets = [0, 10], sizes = [8, 128], strides = [1, 1]} : vector<8x245xf32> to vector<8x128xf32>
    %c448_458 = arith.constant 448 : index
    %c256_459 = arith.constant 256 : index
    %799 = vector.load %arg12[%c448_458, %c256_459] : memref<512x512xf32, #tpu.memory_space<vmem>>, vector<8x128xf32>
    tpu.vector_store %arg12[%c448_458, %c256_459], %798 {strides = array<i32>} : memref<512x512xf32, #tpu.memory_space<vmem>>, vector<8x128xf32>,
    %800 = vector.extract_strided_slice %785 {offsets = [0, 11], sizes = [8, 128], strides = [1, 1]} : vector<8x245xf32> to vector<8x128xf32>
    %c480_460 = arith.constant 480 : index
    %c256_461 = arith.constant 256 : index
    %801 = vector.load %arg12[%c480_460, %c256_461] : memref<512x512xf32, #tpu.memory_space<vmem>>, vector<8x128xf32>
    tpu.vector_store %arg12[%c480_460, %c256_461], %800 {strides = array<i32>} : memref<512x512xf32, #tpu.memory_space<vmem>>, vector<8x128xf32>,
    %802 = vector.extract_strided_slice %711 {offsets = [0, 0], sizes = [8, 246], strides = [1, 1]} : vector<8x256xf32> to vector<8x246xf32>
    %803 = vector.extract_strided_slice %711 {offsets = [0, 10], sizes = [8, 246], strides = [1, 1]} : vector<8x256xf32> to vector<8x246xf32>
    %cst_462 = arith.constant 2.500000e-01 : f32
    %804 = vector.broadcast %cst_462 : f32 to vector<8x246xf32>
    %805 = arith.mulf %804, %802 : vector<8x246xf32>
    %cst_463 = arith.constant 7.500000e-01 : f32
    %806 = vector.broadcast %cst_463 : f32 to vector<8x246xf32>
    %807 = arith.mulf %806, %803 : vector<8x246xf32>
    %808 = arith.addf %805, %807 : vector<8x246xf32>
    %cst_464 = arith.constant 7.500000e-01 : f32
    %809 = vector.broadcast %cst_464 : f32 to vector<8x246xf32>
    %810 = arith.mulf %809, %802 : vector<8x246xf32>
    %cst_465 = arith.constant 2.500000e-01 : f32
    %811 = vector.broadcast %cst_465 : f32 to vector<8x246xf32>
    %812 = arith.mulf %811, %803 : vector<8x246xf32>
    %813 = arith.addf %810, %812 : vector<8x246xf32>
    %814 = vector.extract_strided_slice %808 {offsets = [0, 0], sizes = [8, 245], strides = [1, 1]} : vector<8x246xf32> to vector<8x245xf32>
    %815 = vector.extract_strided_slice %808 {offsets = [0, 1], sizes = [8, 245], strides = [1, 1]} : vector<8x246xf32> to vector<8x245xf32>
    %cst_466 = arith.constant 2.500000e-01 : f32
    %816 = vector.broadcast %cst_466 : f32 to vector<8x245xf32>
    %817 = arith.mulf %816, %814 : vector<8x245xf32>
    %cst_467 = arith.constant 7.500000e-01 : f32
    %818 = vector.broadcast %cst_467 : f32 to vector<8x245xf32>
    %819 = arith.mulf %818, %815 : vector<8x245xf32>
    %820 = arith.addf %817, %819 : vector<8x245xf32>
    %c0_468 = arith.constant 0 : index
    %c0_469 = arith.constant 0 : index
    %821 = vector.load %arg10[%c0_468, %c0_469] : memref<4x245xf32, #tpu.memory_space<vmem>>, vector<1x245xf32>
    %822 = vector.broadcast %821 : vector<1x245xf32> to vector<8x245xf32>
    %823 = arith.mulf %820, %822 : vector<8x245xf32>
    %cst_470 = arith.constant 7.500000e-01 : f32
    %824 = vector.broadcast %cst_470 : f32 to vector<8x245xf32>
    %825 = arith.mulf %824, %814 : vector<8x245xf32>
    %cst_471 = arith.constant 2.500000e-01 : f32
    %826 = vector.broadcast %cst_471 : f32 to vector<8x245xf32>
    %827 = arith.mulf %826, %815 : vector<8x245xf32>
    %828 = arith.addf %825, %827 : vector<8x245xf32>
    %c1_472 = arith.constant 1 : index
    %c0_473 = arith.constant 0 : index
    %829 = vector.load %arg10[%c1_472, %c0_473] : memref<4x245xf32, #tpu.memory_space<vmem>>, vector<1x245xf32>
    %830 = vector.broadcast %829 : vector<1x245xf32> to vector<8x245xf32>
    %831 = arith.mulf %828, %830 : vector<8x245xf32>
    %832 = vector.extract_strided_slice %823 {offsets = [0, 0], sizes = [8, 128], strides = [1, 1]} : vector<8x245xf32> to vector<8x128xf32>
    %c8_474 = arith.constant 8 : index
    %c256_475 = arith.constant 256 : index
    %833 = vector.load %arg12[%c8_474, %c256_475] : memref<512x512xf32, #tpu.memory_space<vmem>>, vector<8x128xf32>
    tpu.vector_store %arg12[%c8_474, %c256_475], %832 {strides = array<i32>} : memref<512x512xf32, #tpu.memory_space<vmem>>, vector<8x128xf32>,
    %834 = vector.extract_strided_slice %823 {offsets = [0, 1], sizes = [8, 128], strides = [1, 1]} : vector<8x245xf32> to vector<8x128xf32>
    %c40_476 = arith.constant 40 : index
    %c256_477 = arith.constant 256 : index
    %835 = vector.load %arg12[%c40_476, %c256_477] : memref<512x512xf32, #tpu.memory_space<vmem>>, vector<8x128xf32>
    tpu.vector_store %arg12[%c40_476, %c256_477], %834 {strides = array<i32>} : memref<512x512xf32, #tpu.memory_space<vmem>>, vector<8x128xf32>,
    %836 = vector.extract_strided_slice %823 {offsets = [0, 10], sizes = [8, 128], strides = [1, 1]} : vector<8x245xf32> to vector<8x128xf32>
    %c136_478 = arith.constant 136 : index
    %c256_479 = arith.constant 256 : index
    %837 = vector.load %arg12[%c136_478, %c256_479] : memref<512x512xf32, #tpu.memory_space<vmem>>, vector<8x128xf32>
    tpu.vector_store %arg12[%c136_478, %c256_479], %836 {strides = array<i32>} : memref<512x512xf32, #tpu.memory_space<vmem>>, vector<8x128xf32>,
    %838 = vector.extract_strided_slice %823 {offsets = [0, 11], sizes = [8, 128], strides = [1, 1]} : vector<8x245xf32> to vector<8x128xf32>
    %c168_480 = arith.constant 168 : index
    %c256_481 = arith.constant 256 : index
    %839 = vector.load %arg12[%c168_480, %c256_481] : memref<512x512xf32, #tpu.memory_space<vmem>>, vector<8x128xf32>
    tpu.vector_store %arg12[%c168_480, %c256_481], %838 {strides = array<i32>} : memref<512x512xf32, #tpu.memory_space<vmem>>, vector<8x128xf32>,
    %840 = vector.extract_strided_slice %831 {offsets = [0, 0], sizes = [8, 128], strides = [1, 1]} : vector<8x245xf32> to vector<8x128xf32>
    %c72_482 = arith.constant 72 : index
    %c256_483 = arith.constant 256 : index
    %841 = vector.load %arg12[%c72_482, %c256_483] : memref<512x512xf32, #tpu.memory_space<vmem>>, vector<8x128xf32>
    tpu.vector_store %arg12[%c72_482, %c256_483], %840 {strides = array<i32>} : memref<512x512xf32, #tpu.memory_space<vmem>>, vector<8x128xf32>,
    %842 = vector.extract_strided_slice %831 {offsets = [0, 1], sizes = [8, 128], strides = [1, 1]} : vector<8x245xf32> to vector<8x128xf32>
    %c104_484 = arith.constant 104 : index
    %c256_485 = arith.constant 256 : index
    %843 = vector.load %arg12[%c104_484, %c256_485] : memref<512x512xf32, #tpu.memory_space<vmem>>, vector<8x128xf32>
    tpu.vector_store %arg12[%c104_484, %c256_485], %842 {strides = array<i32>} : memref<512x512xf32, #tpu.memory_space<vmem>>, vector<8x128xf32>,
    %844 = vector.extract_strided_slice %831 {offsets = [0, 10], sizes = [8, 128], strides = [1, 1]} : vector<8x245xf32> to vector<8x128xf32>
    %c200_486 = arith.constant 200 : index
    %c256_487 = arith.constant 256 : index
    %845 = vector.load %arg12[%c200_486, %c256_487] : memref<512x512xf32, #tpu.memory_space<vmem>>, vector<8x128xf32>
    tpu.vector_store %arg12[%c200_486, %c256_487], %844 {strides = array<i32>} : memref<512x512xf32, #tpu.memory_space<vmem>>, vector<8x128xf32>,
    %846 = vector.extract_strided_slice %831 {offsets = [0, 11], sizes = [8, 128], strides = [1, 1]} : vector<8x245xf32> to vector<8x128xf32>
    %c232_488 = arith.constant 232 : index
    %c256_489 = arith.constant 256 : index
    %847 = vector.load %arg12[%c232_488, %c256_489] : memref<512x512xf32, #tpu.memory_space<vmem>>, vector<8x128xf32>
    tpu.vector_store %arg12[%c232_488, %c256_489], %846 {strides = array<i32>} : memref<512x512xf32, #tpu.memory_space<vmem>>, vector<8x128xf32>,
    %848 = vector.extract_strided_slice %813 {offsets = [0, 0], sizes = [8, 245], strides = [1, 1]} : vector<8x246xf32> to vector<8x245xf32>
    %849 = vector.extract_strided_slice %813 {offsets = [0, 1], sizes = [8, 245], strides = [1, 1]} : vector<8x246xf32> to vector<8x245xf32>
    %cst_490 = arith.constant 2.500000e-01 : f32
    %850 = vector.broadcast %cst_490 : f32 to vector<8x245xf32>
    %851 = arith.mulf %850, %848 : vector<8x245xf32>
    %cst_491 = arith.constant 7.500000e-01 : f32
    %852 = vector.broadcast %cst_491 : f32 to vector<8x245xf32>
    %853 = arith.mulf %852, %849 : vector<8x245xf32>
    %854 = arith.addf %851, %853 : vector<8x245xf32>
    %c2_492 = arith.constant 2 : index
    %c0_493 = arith.constant 0 : index
    %855 = vector.load %arg10[%c2_492, %c0_493] : memref<4x245xf32, #tpu.memory_space<vmem>>, vector<1x245xf32>
    %856 = vector.broadcast %855 : vector<1x245xf32> to vector<8x245xf32>
    %857 = arith.mulf %854, %856 : vector<8x245xf32>
    %cst_494 = arith.constant 7.500000e-01 : f32
    %858 = vector.broadcast %cst_494 : f32 to vector<8x245xf32>
    %859 = arith.mulf %858, %848 : vector<8x245xf32>
    %cst_495 = arith.constant 2.500000e-01 : f32
    %860 = vector.broadcast %cst_495 : f32 to vector<8x245xf32>
    %861 = arith.mulf %860, %849 : vector<8x245xf32>
    %862 = arith.addf %859, %861 : vector<8x245xf32>
    %c3_496 = arith.constant 3 : index
    %c0_497 = arith.constant 0 : index
    %863 = vector.load %arg10[%c3_496, %c0_497] : memref<4x245xf32, #tpu.memory_space<vmem>>, vector<1x245xf32>
    %864 = vector.broadcast %863 : vector<1x245xf32> to vector<8x245xf32>
    %865 = arith.mulf %862, %864 : vector<8x245xf32>
    %866 = vector.extract_strided_slice %857 {offsets = [0, 0], sizes = [8, 128], strides = [1, 1]} : vector<8x245xf32> to vector<8x128xf32>
    %c264_498 = arith.constant 264 : index
    %c256_499 = arith.constant 256 : index
    %867 = vector.load %arg12[%c264_498, %c256_499] : memref<512x512xf32, #tpu.memory_space<vmem>>, vector<8x128xf32>
    tpu.vector_store %arg12[%c264_498, %c256_499], %866 {strides = array<i32>} : memref<512x512xf32, #tpu.memory_space<vmem>>, vector<8x128xf32>,
    %868 = vector.extract_strided_slice %857 {offsets = [0, 1], sizes = [8, 128], strides = [1, 1]} : vector<8x245xf32> to vector<8x128xf32>
    %c296_500 = arith.constant 296 : index
    %c256_501 = arith.constant 256 : index
    %869 = vector.load %arg12[%c296_500, %c256_501] : memref<512x512xf32, #tpu.memory_space<vmem>>, vector<8x128xf32>
    tpu.vector_store %arg12[%c296_500, %c256_501], %868 {strides = array<i32>} : memref<512x512xf32, #tpu.memory_space<vmem>>, vector<8x128xf32>,
    %870 = vector.extract_strided_slice %857 {offsets = [0, 10], sizes = [8, 128], strides = [1, 1]} : vector<8x245xf32> to vector<8x128xf32>
    %c392_502 = arith.constant 392 : index
    %c256_503 = arith.constant 256 : index
    %871 = vector.load %arg12[%c392_502, %c256_503] : memref<512x512xf32, #tpu.memory_space<vmem>>, vector<8x128xf32>
    tpu.vector_store %arg12[%c392_502, %c256_503], %870 {strides = array<i32>} : memref<512x512xf32, #tpu.memory_space<vmem>>, vector<8x128xf32>,
    %872 = vector.extract_strided_slice %857 {offsets = [0, 11], sizes = [8, 128], strides = [1, 1]} : vector<8x245xf32> to vector<8x128xf32>
    %c424_504 = arith.constant 424 : index
    %c256_505 = arith.constant 256 : index
    %873 = vector.load %arg12[%c424_504, %c256_505] : memref<512x512xf32, #tpu.memory_space<vmem>>, vector<8x128xf32>
    tpu.vector_store %arg12[%c424_504, %c256_505], %872 {strides = array<i32>} : memref<512x512xf32, #tpu.memory_space<vmem>>, vector<8x128xf32>,
    %874 = vector.extract_strided_slice %865 {offsets = [0, 0], sizes = [8, 128], strides = [1, 1]} : vector<8x245xf32> to vector<8x128xf32>
    %c328_506 = arith.constant 328 : index
    %c256_507 = arith.constant 256 : index
    %875 = vector.load %arg12[%c328_506, %c256_507] : memref<512x512xf32, #tpu.memory_space<vmem>>, vector<8x128xf32>
    tpu.vector_store %arg12[%c328_506, %c256_507], %874 {strides = array<i32>} : memref<512x512xf32, #tpu.memory_space<vmem>>, vector<8x128xf32>,
    %876 = vector.extract_strided_slice %865 {offsets = [0, 1], sizes = [8, 128], strides = [1, 1]} : vector<8x245xf32> to vector<8x128xf32>
    %c360_508 = arith.constant 360 : index
    %c256_509 = arith.constant 256 : index
    %877 = vector.load %arg12[%c360_508, %c256_509] : memref<512x512xf32, #tpu.memory_space<vmem>>, vector<8x128xf32>
    tpu.vector_store %arg12[%c360_508, %c256_509], %876 {strides = array<i32>} : memref<512x512xf32, #tpu.memory_space<vmem>>, vector<8x128xf32>,
    %878 = vector.extract_strided_slice %865 {offsets = [0, 10], sizes = [8, 128], strides = [1, 1]} : vector<8x245xf32> to vector<8x128xf32>
    %c456_510 = arith.constant 456 : index
    %c256_511 = arith.constant 256 : index
    %879 = vector.load %arg12[%c456_510, %c256_511] : memref<512x512xf32, #tpu.memory_space<vmem>>, vector<8x128xf32>
    tpu.vector_store %arg12[%c456_510, %c256_511], %878 {strides = array<i32>} : memref<512x512xf32, #tpu.memory_space<vmem>>, vector<8x128xf32>,
    %880 = vector.extract_strided_slice %865 {offsets = [0, 11], sizes = [8, 128], strides = [1, 1]} : vector<8x245xf32> to vector<8x128xf32>
    %c488_512 = arith.constant 488 : index
    %c256_513 = arith.constant 256 : index
    %881 = vector.load %arg12[%c488_512, %c256_513] : memref<512x512xf32, #tpu.memory_space<vmem>>, vector<8x128xf32>
    tpu.vector_store %arg12[%c488_512, %c256_513], %880 {strides = array<i32>} : memref<512x512xf32, #tpu.memory_space<vmem>>, vector<8x128xf32>,
    %882 = vector.extract_strided_slice %716 {offsets = [0, 0], sizes = [8, 246], strides = [1, 1]} : vector<8x256xf32> to vector<8x246xf32>
    %883 = vector.extract_strided_slice %716 {offsets = [0, 10], sizes = [8, 246], strides = [1, 1]} : vector<8x256xf32> to vector<8x246xf32>
    %cst_514 = arith.constant 2.500000e-01 : f32
    %884 = vector.broadcast %cst_514 : f32 to vector<8x246xf32>
    %885 = arith.mulf %884, %882 : vector<8x246xf32>
    %cst_515 = arith.constant 7.500000e-01 : f32
    %886 = vector.broadcast %cst_515 : f32 to vector<8x246xf32>
    %887 = arith.mulf %886, %883 : vector<8x246xf32>
    %888 = arith.addf %885, %887 : vector<8x246xf32>
    %cst_516 = arith.constant 7.500000e-01 : f32
    %889 = vector.broadcast %cst_516 : f32 to vector<8x246xf32>
    %890 = arith.mulf %889, %882 : vector<8x246xf32>
    %cst_517 = arith.constant 2.500000e-01 : f32
    %891 = vector.broadcast %cst_517 : f32 to vector<8x246xf32>
    %892 = arith.mulf %891, %883 : vector<8x246xf32>
    %893 = arith.addf %890, %892 : vector<8x246xf32>
    %894 = vector.extract_strided_slice %888 {offsets = [0, 0], sizes = [8, 245], strides = [1, 1]} : vector<8x246xf32> to vector<8x245xf32>
    %895 = vector.extract_strided_slice %888 {offsets = [0, 1], sizes = [8, 245], strides = [1, 1]} : vector<8x246xf32> to vector<8x245xf32>
    %cst_518 = arith.constant 2.500000e-01 : f32
    %896 = vector.broadcast %cst_518 : f32 to vector<8x245xf32>
    %897 = arith.mulf %896, %894 : vector<8x245xf32>
    %cst_519 = arith.constant 7.500000e-01 : f32
    %898 = vector.broadcast %cst_519 : f32 to vector<8x245xf32>
    %899 = arith.mulf %898, %895 : vector<8x245xf32>
    %900 = arith.addf %897, %899 : vector<8x245xf32>
    %c0_520 = arith.constant 0 : index
    %c0_521 = arith.constant 0 : index
    %901 = vector.load %arg10[%c0_520, %c0_521] : memref<4x245xf32, #tpu.memory_space<vmem>>, vector<1x245xf32>
    %902 = vector.broadcast %901 : vector<1x245xf32> to vector<8x245xf32>
    %903 = arith.mulf %900, %902 : vector<8x245xf32>
    %cst_522 = arith.constant 7.500000e-01 : f32
    %904 = vector.broadcast %cst_522 : f32 to vector<8x245xf32>
    %905 = arith.mulf %904, %894 : vector<8x245xf32>
    %cst_523 = arith.constant 2.500000e-01 : f32
    %906 = vector.broadcast %cst_523 : f32 to vector<8x245xf32>
    %907 = arith.mulf %906, %895 : vector<8x245xf32>
    %908 = arith.addf %905, %907 : vector<8x245xf32>
    %c1_524 = arith.constant 1 : index
    %c0_525 = arith.constant 0 : index
    %909 = vector.load %arg10[%c1_524, %c0_525] : memref<4x245xf32, #tpu.memory_space<vmem>>, vector<1x245xf32>
    %910 = vector.broadcast %909 : vector<1x245xf32> to vector<8x245xf32>
    %911 = arith.mulf %908, %910 : vector<8x245xf32>
    %912 = vector.extract_strided_slice %903 {offsets = [0, 0], sizes = [8, 128], strides = [1, 1]} : vector<8x245xf32> to vector<8x128xf32>
    %c16_526 = arith.constant 16 : index
    %c256_527 = arith.constant 256 : index
    %913 = vector.load %arg12[%c16_526, %c256_527] : memref<512x512xf32, #tpu.memory_space<vmem>>, vector<8x128xf32>
    tpu.vector_store %arg12[%c16_526, %c256_527], %912 {strides = array<i32>} : memref<512x512xf32, #tpu.memory_space<vmem>>, vector<8x128xf32>,
    %914 = vector.extract_strided_slice %903 {offsets = [0, 1], sizes = [8, 128], strides = [1, 1]} : vector<8x245xf32> to vector<8x128xf32>
    %c48_528 = arith.constant 48 : index
    %c256_529 = arith.constant 256 : index
    %915 = vector.load %arg12[%c48_528, %c256_529] : memref<512x512xf32, #tpu.memory_space<vmem>>, vector<8x128xf32>
    tpu.vector_store %arg12[%c48_528, %c256_529], %914 {strides = array<i32>} : memref<512x512xf32, #tpu.memory_space<vmem>>, vector<8x128xf32>,
    %916 = vector.extract_strided_slice %903 {offsets = [0, 10], sizes = [8, 128], strides = [1, 1]} : vector<8x245xf32> to vector<8x128xf32>
    %c144_530 = arith.constant 144 : index
    %c256_531 = arith.constant 256 : index
    %917 = vector.load %arg12[%c144_530, %c256_531] : memref<512x512xf32, #tpu.memory_space<vmem>>, vector<8x128xf32>
    tpu.vector_store %arg12[%c144_530, %c256_531], %916 {strides = array<i32>} : memref<512x512xf32, #tpu.memory_space<vmem>>, vector<8x128xf32>,
    %918 = vector.extract_strided_slice %903 {offsets = [0, 11], sizes = [8, 128], strides = [1, 1]} : vector<8x245xf32> to vector<8x128xf32>
    %c176_532 = arith.constant 176 : index
    %c256_533 = arith.constant 256 : index
    %919 = vector.load %arg12[%c176_532, %c256_533] : memref<512x512xf32, #tpu.memory_space<vmem>>, vector<8x128xf32>
    tpu.vector_store %arg12[%c176_532, %c256_533], %918 {strides = array<i32>} : memref<512x512xf32, #tpu.memory_space<vmem>>, vector<8x128xf32>,
    %920 = vector.extract_strided_slice %911 {offsets = [0, 0], sizes = [8, 128], strides = [1, 1]} : vector<8x245xf32> to vector<8x128xf32>
    %c80_534 = arith.constant 80 : index
    %c256_535 = arith.constant 256 : index
    %921 = vector.load %arg12[%c80_534, %c256_535] : memref<512x512xf32, #tpu.memory_space<vmem>>, vector<8x128xf32>
    tpu.vector_store %arg12[%c80_534, %c256_535], %920 {strides = array<i32>} : memref<512x512xf32, #tpu.memory_space<vmem>>, vector<8x128xf32>,
    %922 = vector.extract_strided_slice %911 {offsets = [0, 1], sizes = [8, 128], strides = [1, 1]} : vector<8x245xf32> to vector<8x128xf32>
    %c112_536 = arith.constant 112 : index
    %c256_537 = arith.constant 256 : index
    %923 = vector.load %arg12[%c112_536, %c256_537] : memref<512x512xf32, #tpu.memory_space<vmem>>, vector<8x128xf32>
    tpu.vector_store %arg12[%c112_536, %c256_537], %922 {strides = array<i32>} : memref<512x512xf32, #tpu.memory_space<vmem>>, vector<8x128xf32>,
    %924 = vector.extract_strided_slice %911 {offsets = [0, 10], sizes = [8, 128], strides = [1, 1]} : vector<8x245xf32> to vector<8x128xf32>
    %c208_538 = arith.constant 208 : index
    %c256_539 = arith.constant 256 : index
    %925 = vector.load %arg12[%c208_538, %c256_539] : memref<512x512xf32, #tpu.memory_space<vmem>>, vector<8x128xf32>
    tpu.vector_store %arg12[%c208_538, %c256_539], %924 {strides = array<i32>} : memref<512x512xf32, #tpu.memory_space<vmem>>, vector<8x128xf32>,
    %926 = vector.extract_strided_slice %911 {offsets = [0, 11], sizes = [8, 128], strides = [1, 1]} : vector<8x245xf32> to vector<8x128xf32>
    %c240_540 = arith.constant 240 : index
    %c256_541 = arith.constant 256 : index
    %927 = vector.load %arg12[%c240_540, %c256_541] : memref<512x512xf32, #tpu.memory_space<vmem>>, vector<8x128xf32>
    tpu.vector_store %arg12[%c240_540, %c256_541], %926 {strides = array<i32>} : memref<512x512xf32, #tpu.memory_space<vmem>>, vector<8x128xf32>,
    %928 = vector.extract_strided_slice %893 {offsets = [0, 0], sizes = [8, 245], strides = [1, 1]} : vector<8x246xf32> to vector<8x245xf32>
    %929 = vector.extract_strided_slice %893 {offsets = [0, 1], sizes = [8, 245], strides = [1, 1]} : vector<8x246xf32> to vector<8x245xf32>
    %cst_542 = arith.constant 2.500000e-01 : f32
    %930 = vector.broadcast %cst_542 : f32 to vector<8x245xf32>
    %931 = arith.mulf %930, %928 : vector<8x245xf32>
    %cst_543 = arith.constant 7.500000e-01 : f32
    %932 = vector.broadcast %cst_543 : f32 to vector<8x245xf32>
    %933 = arith.mulf %932, %929 : vector<8x245xf32>
    %934 = arith.addf %931, %933 : vector<8x245xf32>
    %c2_544 = arith.constant 2 : index
    %c0_545 = arith.constant 0 : index
    %935 = vector.load %arg10[%c2_544, %c0_545] : memref<4x245xf32, #tpu.memory_space<vmem>>, vector<1x245xf32>
    %936 = vector.broadcast %935 : vector<1x245xf32> to vector<8x245xf32>
    %937 = arith.mulf %934, %936 : vector<8x245xf32>
    %cst_546 = arith.constant 7.500000e-01 : f32
    %938 = vector.broadcast %cst_546 : f32 to vector<8x245xf32>
    %939 = arith.mulf %938, %928 : vector<8x245xf32>
    %cst_547 = arith.constant 2.500000e-01 : f32
    %940 = vector.broadcast %cst_547 : f32 to vector<8x245xf32>
    %941 = arith.mulf %940, %929 : vector<8x245xf32>
    %942 = arith.addf %939, %941 : vector<8x245xf32>
    %c3_548 = arith.constant 3 : index
    %c0_549 = arith.constant 0 : index
    %943 = vector.load %arg10[%c3_548, %c0_549] : memref<4x245xf32, #tpu.memory_space<vmem>>, vector<1x245xf32>
    %944 = vector.broadcast %943 : vector<1x245xf32> to vector<8x245xf32>
    %945 = arith.mulf %942, %944 : vector<8x245xf32>
    %946 = vector.extract_strided_slice %937 {offsets = [0, 0], sizes = [8, 128], strides = [1, 1]} : vector<8x245xf32> to vector<8x128xf32>
    %c272_550 = arith.constant 272 : index
    %c256_551 = arith.constant 256 : index
    %947 = vector.load %arg12[%c272_550, %c256_551] : memref<512x512xf32, #tpu.memory_space<vmem>>, vector<8x128xf32>
    tpu.vector_store %arg12[%c272_550, %c256_551], %946 {strides = array<i32>} : memref<512x512xf32, #tpu.memory_space<vmem>>, vector<8x128xf32>,
    %948 = vector.extract_strided_slice %937 {offsets = [0, 1], sizes = [8, 128], strides = [1, 1]} : vector<8x245xf32> to vector<8x128xf32>
    %c304_552 = arith.constant 304 : index
    %c256_553 = arith.constant 256 : index
    %949 = vector.load %arg12[%c304_552, %c256_553] : memref<512x512xf32, #tpu.memory_space<vmem>>, vector<8x128xf32>
    tpu.vector_store %arg12[%c304_552, %c256_553], %948 {strides = array<i32>} : memref<512x512xf32, #tpu.memory_space<vmem>>, vector<8x128xf32>,
    %950 = vector.extract_strided_slice %937 {offsets = [0, 10], sizes = [8, 128], strides = [1, 1]} : vector<8x245xf32> to vector<8x128xf32>
    %c400_554 = arith.constant 400 : index
    %c256_555 = arith.constant 256 : index
    %951 = vector.load %arg12[%c400_554, %c256_555] : memref<512x512xf32, #tpu.memory_space<vmem>>, vector<8x128xf32>
    tpu.vector_store %arg12[%c400_554, %c256_555], %950 {strides = array<i32>} : memref<512x512xf32, #tpu.memory_space<vmem>>, vector<8x128xf32>,
    %952 = vector.extract_strided_slice %937 {offsets = [0, 11], sizes = [8, 128], strides = [1, 1]} : vector<8x245xf32> to vector<8x128xf32>
    %c432_556 = arith.constant 432 : index
    %c256_557 = arith.constant 256 : index
    %953 = vector.load %arg12[%c432_556, %c256_557] : memref<512x512xf32, #tpu.memory_space<vmem>>, vector<8x128xf32>
    tpu.vector_store %arg12[%c432_556, %c256_557], %952 {strides = array<i32>} : memref<512x512xf32, #tpu.memory_space<vmem>>, vector<8x128xf32>,
    %954 = vector.extract_strided_slice %945 {offsets = [0, 0], sizes = [8, 128], strides = [1, 1]} : vector<8x245xf32> to vector<8x128xf32>
    %c336_558 = arith.constant 336 : index
    %c256_559 = arith.constant 256 : index
    %955 = vector.load %arg12[%c336_558, %c256_559] : memref<512x512xf32, #tpu.memory_space<vmem>>, vector<8x128xf32>
    tpu.vector_store %arg12[%c336_558, %c256_559], %954 {strides = array<i32>} : memref<512x512xf32, #tpu.memory_space<vmem>>, vector<8x128xf32>,
    %956 = vector.extract_strided_slice %945 {offsets = [0, 1], sizes = [8, 128], strides = [1, 1]} : vector<8x245xf32> to vector<8x128xf32>
    %c368_560 = arith.constant 368 : index
    %c256_561 = arith.constant 256 : index
    %957 = vector.load %arg12[%c368_560, %c256_561] : memref<512x512xf32, #tpu.memory_space<vmem>>, vector<8x128xf32>
    tpu.vector_store %arg12[%c368_560, %c256_561], %956 {strides = array<i32>} : memref<512x512xf32, #tpu.memory_space<vmem>>, vector<8x128xf32>,
    %958 = vector.extract_strided_slice %945 {offsets = [0, 10], sizes = [8, 128], strides = [1, 1]} : vector<8x245xf32> to vector<8x128xf32>
    %c464_562 = arith.constant 464 : index
    %c256_563 = arith.constant 256 : index
    %959 = vector.load %arg12[%c464_562, %c256_563] : memref<512x512xf32, #tpu.memory_space<vmem>>, vector<8x128xf32>
    tpu.vector_store %arg12[%c464_562, %c256_563], %958 {strides = array<i32>} : memref<512x512xf32, #tpu.memory_space<vmem>>, vector<8x128xf32>,
    %960 = vector.extract_strided_slice %945 {offsets = [0, 11], sizes = [8, 128], strides = [1, 1]} : vector<8x245xf32> to vector<8x128xf32>
    %c496_564 = arith.constant 496 : index
    %c256_565 = arith.constant 256 : index
    %961 = vector.load %arg12[%c496_564, %c256_565] : memref<512x512xf32, #tpu.memory_space<vmem>>, vector<8x128xf32>
    tpu.vector_store %arg12[%c496_564, %c256_565], %960 {strides = array<i32>} : memref<512x512xf32, #tpu.memory_space<vmem>>, vector<8x128xf32>,
    %962 = vector.extract_strided_slice %721 {offsets = [0, 0], sizes = [8, 246], strides = [1, 1]} : vector<8x256xf32> to vector<8x246xf32>
    %963 = vector.extract_strided_slice %721 {offsets = [0, 10], sizes = [8, 246], strides = [1, 1]} : vector<8x256xf32> to vector<8x246xf32>
    %cst_566 = arith.constant 2.500000e-01 : f32
    %964 = vector.broadcast %cst_566 : f32 to vector<8x246xf32>
    %965 = arith.mulf %964, %962 : vector<8x246xf32>
    %cst_567 = arith.constant 7.500000e-01 : f32
    %966 = vector.broadcast %cst_567 : f32 to vector<8x246xf32>
    %967 = arith.mulf %966, %963 : vector<8x246xf32>
    %968 = arith.addf %965, %967 : vector<8x246xf32>
    %cst_568 = arith.constant 7.500000e-01 : f32
    %969 = vector.broadcast %cst_568 : f32 to vector<8x246xf32>
    %970 = arith.mulf %969, %962 : vector<8x246xf32>
    %cst_569 = arith.constant 2.500000e-01 : f32
    %971 = vector.broadcast %cst_569 : f32 to vector<8x246xf32>
    %972 = arith.mulf %971, %963 : vector<8x246xf32>
    %973 = arith.addf %970, %972 : vector<8x246xf32>
    %974 = vector.extract_strided_slice %968 {offsets = [0, 0], sizes = [8, 245], strides = [1, 1]} : vector<8x246xf32> to vector<8x245xf32>
    %975 = vector.extract_strided_slice %968 {offsets = [0, 1], sizes = [8, 245], strides = [1, 1]} : vector<8x246xf32> to vector<8x245xf32>
    %cst_570 = arith.constant 2.500000e-01 : f32
    %976 = vector.broadcast %cst_570 : f32 to vector<8x245xf32>
    %977 = arith.mulf %976, %974 : vector<8x245xf32>
    %cst_571 = arith.constant 7.500000e-01 : f32
    %978 = vector.broadcast %cst_571 : f32 to vector<8x245xf32>
    %979 = arith.mulf %978, %975 : vector<8x245xf32>
    %980 = arith.addf %977, %979 : vector<8x245xf32>
    %c0_572 = arith.constant 0 : index
    %c0_573 = arith.constant 0 : index
    %981 = vector.load %arg10[%c0_572, %c0_573] : memref<4x245xf32, #tpu.memory_space<vmem>>, vector<1x245xf32>
    %982 = vector.broadcast %981 : vector<1x245xf32> to vector<8x245xf32>
    %983 = arith.mulf %980, %982 : vector<8x245xf32>
    %cst_574 = arith.constant 7.500000e-01 : f32
    %984 = vector.broadcast %cst_574 : f32 to vector<8x245xf32>
    %985 = arith.mulf %984, %974 : vector<8x245xf32>
    %cst_575 = arith.constant 2.500000e-01 : f32
    %986 = vector.broadcast %cst_575 : f32 to vector<8x245xf32>
    %987 = arith.mulf %986, %975 : vector<8x245xf32>
    %988 = arith.addf %985, %987 : vector<8x245xf32>
    %c1_576 = arith.constant 1 : index
    %c0_577 = arith.constant 0 : index
    %989 = vector.load %arg10[%c1_576, %c0_577] : memref<4x245xf32, #tpu.memory_space<vmem>>, vector<1x245xf32>
    %990 = vector.broadcast %989 : vector<1x245xf32> to vector<8x245xf32>
    %991 = arith.mulf %988, %990 : vector<8x245xf32>
    %992 = vector.extract_strided_slice %983 {offsets = [0, 0], sizes = [8, 128], strides = [1, 1]} : vector<8x245xf32> to vector<8x128xf32>
    %c24_578 = arith.constant 24 : index
    %c256_579 = arith.constant 256 : index
    %993 = vector.load %arg12[%c24_578, %c256_579] : memref<512x512xf32, #tpu.memory_space<vmem>>, vector<8x128xf32>
    tpu.vector_store %arg12[%c24_578, %c256_579], %992 {strides = array<i32>} : memref<512x512xf32, #tpu.memory_space<vmem>>, vector<8x128xf32>,
    %994 = vector.extract_strided_slice %983 {offsets = [0, 1], sizes = [8, 128], strides = [1, 1]} : vector<8x245xf32> to vector<8x128xf32>
    %c56_580 = arith.constant 56 : index
    %c256_581 = arith.constant 256 : index
    %995 = vector.load %arg12[%c56_580, %c256_581] : memref<512x512xf32, #tpu.memory_space<vmem>>, vector<8x128xf32>
    tpu.vector_store %arg12[%c56_580, %c256_581], %994 {strides = array<i32>} : memref<512x512xf32, #tpu.memory_space<vmem>>, vector<8x128xf32>,
    %996 = vector.extract_strided_slice %983 {offsets = [0, 10], sizes = [8, 128], strides = [1, 1]} : vector<8x245xf32> to vector<8x128xf32>
    %c152_582 = arith.constant 152 : index
    %c256_583 = arith.constant 256 : index
    %997 = vector.load %arg12[%c152_582, %c256_583] : memref<512x512xf32, #tpu.memory_space<vmem>>, vector<8x128xf32>
    tpu.vector_store %arg12[%c152_582, %c256_583], %996 {strides = array<i32>} : memref<512x512xf32, #tpu.memory_space<vmem>>, vector<8x128xf32>,
    %998 = vector.extract_strided_slice %983 {offsets = [0, 11], sizes = [8, 128], strides = [1, 1]} : vector<8x245xf32> to vector<8x128xf32>
    %c184_584 = arith.constant 184 : index
    %c256_585 = arith.constant 256 : index
    %999 = vector.load %arg12[%c184_584, %c256_585] : memref<512x512xf32, #tpu.memory_space<vmem>>, vector<8x128xf32>
    tpu.vector_store %arg12[%c184_584, %c256_585], %998 {strides = array<i32>} : memref<512x512xf32, #tpu.memory_space<vmem>>, vector<8x128xf32>,
    %1000 = vector.extract_strided_slice %991 {offsets = [0, 0], sizes = [8, 128], strides = [1, 1]} : vector<8x245xf32> to vector<8x128xf32>
    %c88_586 = arith.constant 88 : index
    %c256_587 = arith.constant 256 : index
    %1001 = vector.load %arg12[%c88_586, %c256_587] : memref<512x512xf32, #tpu.memory_space<vmem>>, vector<8x128xf32>
    tpu.vector_store %arg12[%c88_586, %c256_587], %1000 {strides = array<i32>} : memref<512x512xf32, #tpu.memory_space<vmem>>, vector<8x128xf32>,
    %1002 = vector.extract_strided_slice %991 {offsets = [0, 1], sizes = [8, 128], strides = [1, 1]} : vector<8x245xf32> to vector<8x128xf32>
    %c120_588 = arith.constant 120 : index
    %c256_589 = arith.constant 256 : index
    %1003 = vector.load %arg12[%c120_588, %c256_589] : memref<512x512xf32, #tpu.memory_space<vmem>>, vector<8x128xf32>
    tpu.vector_store %arg12[%c120_588, %c256_589], %1002 {strides = array<i32>} : memref<512x512xf32, #tpu.memory_space<vmem>>, vector<8x128xf32>,
    %1004 = vector.extract_strided_slice %991 {offsets = [0, 10], sizes = [8, 128], strides = [1, 1]} : vector<8x245xf32> to vector<8x128xf32>
    %c216_590 = arith.constant 216 : index
    %c256_591 = arith.constant 256 : index
    %1005 = vector.load %arg12[%c216_590, %c256_591] : memref<512x512xf32, #tpu.memory_space<vmem>>, vector<8x128xf32>
    tpu.vector_store %arg12[%c216_590, %c256_591], %1004 {strides = array<i32>} : memref<512x512xf32, #tpu.memory_space<vmem>>, vector<8x128xf32>,
    %1006 = vector.extract_strided_slice %991 {offsets = [0, 11], sizes = [8, 128], strides = [1, 1]} : vector<8x245xf32> to vector<8x128xf32>
    %c248_592 = arith.constant 248 : index
    %c256_593 = arith.constant 256 : index
    %1007 = vector.load %arg12[%c248_592, %c256_593] : memref<512x512xf32, #tpu.memory_space<vmem>>, vector<8x128xf32>
    tpu.vector_store %arg12[%c248_592, %c256_593], %1006 {strides = array<i32>} : memref<512x512xf32, #tpu.memory_space<vmem>>, vector<8x128xf32>,
    %1008 = vector.extract_strided_slice %973 {offsets = [0, 0], sizes = [8, 245], strides = [1, 1]} : vector<8x246xf32> to vector<8x245xf32>
    %1009 = vector.extract_strided_slice %973 {offsets = [0, 1], sizes = [8, 245], strides = [1, 1]} : vector<8x246xf32> to vector<8x245xf32>
    %cst_594 = arith.constant 2.500000e-01 : f32
    %1010 = vector.broadcast %cst_594 : f32 to vector<8x245xf32>
    %1011 = arith.mulf %1010, %1008 : vector<8x245xf32>
    %cst_595 = arith.constant 7.500000e-01 : f32
    %1012 = vector.broadcast %cst_595 : f32 to vector<8x245xf32>
    %1013 = arith.mulf %1012, %1009 : vector<8x245xf32>
    %1014 = arith.addf %1011, %1013 : vector<8x245xf32>
    %c2_596 = arith.constant 2 : index
    %c0_597 = arith.constant 0 : index
    %1015 = vector.load %arg10[%c2_596, %c0_597] : memref<4x245xf32, #tpu.memory_space<vmem>>, vector<1x245xf32>
    %1016 = vector.broadcast %1015 : vector<1x245xf32> to vector<8x245xf32>
    %1017 = arith.mulf %1014, %1016 : vector<8x245xf32>
    %cst_598 = arith.constant 7.500000e-01 : f32
    %1018 = vector.broadcast %cst_598 : f32 to vector<8x245xf32>
    %1019 = arith.mulf %1018, %1008 : vector<8x245xf32>
    %cst_599 = arith.constant 2.500000e-01 : f32
    %1020 = vector.broadcast %cst_599 : f32 to vector<8x245xf32>
    %1021 = arith.mulf %1020, %1009 : vector<8x245xf32>
    %1022 = arith.addf %1019, %1021 : vector<8x245xf32>
    %c3_600 = arith.constant 3 : index
    %c0_601 = arith.constant 0 : index
    %1023 = vector.load %arg10[%c3_600, %c0_601] : memref<4x245xf32, #tpu.memory_space<vmem>>, vector<1x245xf32>
    %1024 = vector.broadcast %1023 : vector<1x245xf32> to vector<8x245xf32>
    %1025 = arith.mulf %1022, %1024 : vector<8x245xf32>
    %1026 = vector.extract_strided_slice %1017 {offsets = [0, 0], sizes = [8, 128], strides = [1, 1]} : vector<8x245xf32> to vector<8x128xf32>
    %c280_602 = arith.constant 280 : index
    %c256_603 = arith.constant 256 : index
    %1027 = vector.load %arg12[%c280_602, %c256_603] : memref<512x512xf32, #tpu.memory_space<vmem>>, vector<8x128xf32>
    tpu.vector_store %arg12[%c280_602, %c256_603], %1026 {strides = array<i32>} : memref<512x512xf32, #tpu.memory_space<vmem>>, vector<8x128xf32>,
    %1028 = vector.extract_strided_slice %1017 {offsets = [0, 1], sizes = [8, 128], strides = [1, 1]} : vector<8x245xf32> to vector<8x128xf32>
    %c312_604 = arith.constant 312 : index
    %c256_605 = arith.constant 256 : index
    %1029 = vector.load %arg12[%c312_604, %c256_605] : memref<512x512xf32, #tpu.memory_space<vmem>>, vector<8x128xf32>
    tpu.vector_store %arg12[%c312_604, %c256_605], %1028 {strides = array<i32>} : memref<512x512xf32, #tpu.memory_space<vmem>>, vector<8x128xf32>,
    %1030 = vector.extract_strided_slice %1017 {offsets = [0, 10], sizes = [8, 128], strides = [1, 1]} : vector<8x245xf32> to vector<8x128xf32>
    %c408_606 = arith.constant 408 : index
    %c256_607 = arith.constant 256 : index
    %1031 = vector.load %arg12[%c408_606, %c256_607] : memref<512x512xf32, #tpu.memory_space<vmem>>, vector<8x128xf32>
    tpu.vector_store %arg12[%c408_606, %c256_607], %1030 {strides = array<i32>} : memref<512x512xf32, #tpu.memory_space<vmem>>, vector<8x128xf32>,
    %1032 = vector.extract_strided_slice %1017 {offsets = [0, 11], sizes = [8, 128], strides = [1, 1]} : vector<8x245xf32> to vector<8x128xf32>
    %c440_608 = arith.constant 440 : index
    %c256_609 = arith.constant 256 : index
    %1033 = vector.load %arg12[%c440_608, %c256_609] : memref<512x512xf32, #tpu.memory_space<vmem>>, vector<8x128xf32>
    tpu.vector_store %arg12[%c440_608, %c256_609], %1032 {strides = array<i32>} : memref<512x512xf32, #tpu.memory_space<vmem>>, vector<8x128xf32>,
    %1034 = vector.extract_strided_slice %1025 {offsets = [0, 0], sizes = [8, 128], strides = [1, 1]} : vector<8x245xf32> to vector<8x128xf32>
    %c344_610 = arith.constant 344 : index
    %c256_611 = arith.constant 256 : index
    %1035 = vector.load %arg12[%c344_610, %c256_611] : memref<512x512xf32, #tpu.memory_space<vmem>>, vector<8x128xf32>
    tpu.vector_store %arg12[%c344_610, %c256_611], %1034 {strides = array<i32>} : memref<512x512xf32, #tpu.memory_space<vmem>>, vector<8x128xf32>,
    %1036 = vector.extract_strided_slice %1025 {offsets = [0, 1], sizes = [8, 128], strides = [1, 1]} : vector<8x245xf32> to vector<8x128xf32>
    %c376_612 = arith.constant 376 : index
    %c256_613 = arith.constant 256 : index
    %1037 = vector.load %arg12[%c376_612, %c256_613] : memref<512x512xf32, #tpu.memory_space<vmem>>, vector<8x128xf32>
    tpu.vector_store %arg12[%c376_612, %c256_613], %1036 {strides = array<i32>} : memref<512x512xf32, #tpu.memory_space<vmem>>, vector<8x128xf32>,
    %1038 = vector.extract_strided_slice %1025 {offsets = [0, 10], sizes = [8, 128], strides = [1, 1]} : vector<8x245xf32> to vector<8x128xf32>
    %c472_614 = arith.constant 472 : index
    %c256_615 = arith.constant 256 : index
    %1039 = vector.load %arg12[%c472_614, %c256_615] : memref<512x512xf32, #tpu.memory_space<vmem>>, vector<8x128xf32>
    tpu.vector_store %arg12[%c472_614, %c256_615], %1038 {strides = array<i32>} : memref<512x512xf32, #tpu.memory_space<vmem>>, vector<8x128xf32>,
    %1040 = vector.extract_strided_slice %1025 {offsets = [0, 11], sizes = [8, 128], strides = [1, 1]} : vector<8x245xf32> to vector<8x128xf32>
    %c504_616 = arith.constant 504 : index
    %c256_617 = arith.constant 256 : index
    %1041 = vector.load %arg12[%c504_616, %c256_617] : memref<512x512xf32, #tpu.memory_space<vmem>>, vector<8x128xf32>
    tpu.vector_store %arg12[%c504_616, %c256_617], %1040 {strides = array<i32>} : memref<512x512xf32, #tpu.memory_space<vmem>>, vector<8x128xf32>,
    %c0_618 = arith.constant 0 : index
    %c0_619 = arith.constant 0 : index
    %c0_620 = arith.constant 0 : index
    %c0_621 = arith.constant 0 : index
    %1042 = vector.load %arg5[%c0_618, %c0_619, %c0_620, %c0_621] : memref<1x1x8x256xf32, #tpu.memory_space<vmem>>, vector<1x1x8x256xf32>
    %1043 = vector.shape_cast %1042 : vector<1x1x8x256xf32> to vector<8x256xf32>
    %c0_622 = arith.constant 0 : index
    %c0_623 = arith.constant 0 : index
    %c0_624 = arith.constant 0 : index
    %c0_625 = arith.constant 0 : index
    %1044 = vector.load %arg6[%c0_622, %c0_623, %c0_624, %c0_625] : memref<1x1x8x256xf32, #tpu.memory_space<vmem>>, vector<1x1x8x256xf32>
    %1045 = vector.shape_cast %1044 : vector<1x1x8x256xf32> to vector<8x256xf32>
    %c0_626 = arith.constant 0 : index
    %c0_627 = arith.constant 0 : index
    %c0_628 = arith.constant 0 : index
    %c0_629 = arith.constant 0 : index
    %1046 = vector.load %arg7[%c0_626, %c0_627, %c0_628, %c0_629] : memref<1x1x8x256xf32, #tpu.memory_space<vmem>>, vector<1x1x8x256xf32>
    %1047 = vector.shape_cast %1046 : vector<1x1x8x256xf32> to vector<8x256xf32>
    %cst_630 = arith.constant 7.500000e-01 : f32
    %1048 = vector.broadcast %cst_630 : f32 to vector<8x256xf32>
    %1049 = arith.mulf %1048, %1043 : vector<8x256xf32>
    %cst_631 = arith.constant 2.500000e-01 : f32
    %1050 = vector.broadcast %cst_631 : f32 to vector<8x256xf32>
    %1051 = arith.mulf %1050, %1045 : vector<8x256xf32>
    %1052 = arith.addf %1049, %1051 : vector<8x256xf32>
    %cst_632 = arith.constant 2.500000e-01 : f32
    %1053 = vector.broadcast %cst_632 : f32 to vector<8x256xf32>
    %1054 = arith.mulf %1053, %1043 : vector<8x256xf32>
    %cst_633 = arith.constant 7.500000e-01 : f32
    %1055 = vector.broadcast %cst_633 : f32 to vector<8x256xf32>
    %1056 = arith.mulf %1055, %1045 : vector<8x256xf32>
    %1057 = arith.addf %1054, %1056 : vector<8x256xf32>
    %cst_634 = arith.constant 7.500000e-01 : f32
    %1058 = vector.broadcast %cst_634 : f32 to vector<8x256xf32>
    %1059 = arith.mulf %1058, %1045 : vector<8x256xf32>
    %cst_635 = arith.constant 2.500000e-01 : f32
    %1060 = vector.broadcast %cst_635 : f32 to vector<8x256xf32>
    %1061 = arith.mulf %1060, %1047 : vector<8x256xf32>
    %1062 = arith.addf %1059, %1061 : vector<8x256xf32>
    %c1_i32 = arith.constant 1 : i32
    %1063 = arith.cmpi eq, %arg1, %c1_i32 : i32
    %cst_636 = arith.constant 0.000000e+00 : f32
    %cst_637 = arith.constant 1.000000e+00 : f32
    %1064 = arith.select %1063, %cst_636, %cst_637 : f32
    %cst_638 = arith.constant 2.500000e-01 : f32
    %1065 = arith.mulf %cst_638, %1064 : f32
    %1066 = vector.broadcast %1065 : f32 to vector<8x256xf32>
    %1067 = arith.mulf %1066, %1045 : vector<8x256xf32>
    %cst_639 = arith.constant 7.500000e-01 : f32
    %1068 = arith.mulf %cst_639, %1064 : f32
    %1069 = vector.broadcast %1068 : f32 to vector<8x256xf32>
    %1070 = arith.mulf %1069, %1047 : vector<8x256xf32>
    %1071 = arith.addf %1067, %1070 : vector<8x256xf32>
    %1072 = vector.extract_strided_slice %1052 {offsets = [0, 0], sizes = [8, 246], strides = [1, 1]} : vector<8x256xf32> to vector<8x246xf32>
    %1073 = vector.extract_strided_slice %1052 {offsets = [0, 10], sizes = [8, 246], strides = [1, 1]} : vector<8x256xf32> to vector<8x246xf32>
    %cst_640 = arith.constant 2.500000e-01 : f32
    %1074 = vector.broadcast %cst_640 : f32 to vector<8x246xf32>
    %1075 = arith.mulf %1074, %1072 : vector<8x246xf32>
    %cst_641 = arith.constant 7.500000e-01 : f32
    %1076 = vector.broadcast %cst_641 : f32 to vector<8x246xf32>
    %1077 = arith.mulf %1076, %1073 : vector<8x246xf32>
    %1078 = arith.addf %1075, %1077 : vector<8x246xf32>
    %cst_642 = arith.constant 7.500000e-01 : f32
    %1079 = vector.broadcast %cst_642 : f32 to vector<8x246xf32>
    %1080 = arith.mulf %1079, %1072 : vector<8x246xf32>
    %cst_643 = arith.constant 2.500000e-01 : f32
    %1081 = vector.broadcast %cst_643 : f32 to vector<8x246xf32>
    %1082 = arith.mulf %1081, %1073 : vector<8x246xf32>
    %1083 = arith.addf %1080, %1082 : vector<8x246xf32>
    %1084 = vector.extract_strided_slice %1078 {offsets = [0, 0], sizes = [8, 245], strides = [1, 1]} : vector<8x246xf32> to vector<8x245xf32>
    %1085 = vector.extract_strided_slice %1078 {offsets = [0, 1], sizes = [8, 245], strides = [1, 1]} : vector<8x246xf32> to vector<8x245xf32>
    %cst_644 = arith.constant 2.500000e-01 : f32
    %1086 = vector.broadcast %cst_644 : f32 to vector<8x245xf32>
    %1087 = arith.mulf %1086, %1084 : vector<8x245xf32>
    %cst_645 = arith.constant 7.500000e-01 : f32
    %1088 = vector.broadcast %cst_645 : f32 to vector<8x245xf32>
    %1089 = arith.mulf %1088, %1085 : vector<8x245xf32>
    %1090 = arith.addf %1087, %1089 : vector<8x245xf32>
    %c0_646 = arith.constant 0 : index
    %c0_647 = arith.constant 0 : index
    %1091 = vector.load %arg10[%c0_646, %c0_647] : memref<4x245xf32, #tpu.memory_space<vmem>>, vector<1x245xf32>
    %1092 = vector.broadcast %1091 : vector<1x245xf32> to vector<8x245xf32>
    %1093 = arith.mulf %1090, %1092 : vector<8x245xf32>
    %cst_648 = arith.constant 7.500000e-01 : f32
    %1094 = vector.broadcast %cst_648 : f32 to vector<8x245xf32>
    %1095 = arith.mulf %1094, %1084 : vector<8x245xf32>
    %cst_649 = arith.constant 2.500000e-01 : f32
    %1096 = vector.broadcast %cst_649 : f32 to vector<8x245xf32>
    %1097 = arith.mulf %1096, %1085 : vector<8x245xf32>
    %1098 = arith.addf %1095, %1097 : vector<8x245xf32>
    %c1_650 = arith.constant 1 : index
    %c0_651 = arith.constant 0 : index
    %1099 = vector.load %arg10[%c1_650, %c0_651] : memref<4x245xf32, #tpu.memory_space<vmem>>, vector<1x245xf32>
    %1100 = vector.broadcast %1099 : vector<1x245xf32> to vector<8x245xf32>
    %1101 = arith.mulf %1098, %1100 : vector<8x245xf32>
    %1102 = vector.extract_strided_slice %1093 {offsets = [0, 0], sizes = [8, 128], strides = [1, 1]} : vector<8x245xf32> to vector<8x128xf32>
    %c0_652 = arith.constant 0 : index
    %c384_653 = arith.constant 384 : index
    %1103 = vector.load %arg12[%c0_652, %c384_653] : memref<512x512xf32, #tpu.memory_space<vmem>>, vector<8x128xf32>
    tpu.vector_store %arg12[%c0_652, %c384_653], %1102 {strides = array<i32>} : memref<512x512xf32, #tpu.memory_space<vmem>>, vector<8x128xf32>,
    %1104 = vector.extract_strided_slice %1093 {offsets = [0, 1], sizes = [8, 128], strides = [1, 1]} : vector<8x245xf32> to vector<8x128xf32>
    %c32_654 = arith.constant 32 : index
    %c384_655 = arith.constant 384 : index
    %1105 = vector.load %arg12[%c32_654, %c384_655] : memref<512x512xf32, #tpu.memory_space<vmem>>, vector<8x128xf32>
    tpu.vector_store %arg12[%c32_654, %c384_655], %1104 {strides = array<i32>} : memref<512x512xf32, #tpu.memory_space<vmem>>, vector<8x128xf32>,
    %1106 = vector.extract_strided_slice %1093 {offsets = [0, 10], sizes = [8, 128], strides = [1, 1]} : vector<8x245xf32> to vector<8x128xf32>
    %c128_656 = arith.constant 128 : index
    %c384_657 = arith.constant 384 : index
    %1107 = vector.load %arg12[%c128_656, %c384_657] : memref<512x512xf32, #tpu.memory_space<vmem>>, vector<8x128xf32>
    tpu.vector_store %arg12[%c128_656, %c384_657], %1106 {strides = array<i32>} : memref<512x512xf32, #tpu.memory_space<vmem>>, vector<8x128xf32>,
    %1108 = vector.extract_strided_slice %1093 {offsets = [0, 11], sizes = [8, 128], strides = [1, 1]} : vector<8x245xf32> to vector<8x128xf32>
    %c160_658 = arith.constant 160 : index
    %c384_659 = arith.constant 384 : index
    %1109 = vector.load %arg12[%c160_658, %c384_659] : memref<512x512xf32, #tpu.memory_space<vmem>>, vector<8x128xf32>
    tpu.vector_store %arg12[%c160_658, %c384_659], %1108 {strides = array<i32>} : memref<512x512xf32, #tpu.memory_space<vmem>>, vector<8x128xf32>,
    %1110 = vector.extract_strided_slice %1101 {offsets = [0, 0], sizes = [8, 128], strides = [1, 1]} : vector<8x245xf32> to vector<8x128xf32>
    %c64_660 = arith.constant 64 : index
    %c384_661 = arith.constant 384 : index
    %1111 = vector.load %arg12[%c64_660, %c384_661] : memref<512x512xf32, #tpu.memory_space<vmem>>, vector<8x128xf32>
    tpu.vector_store %arg12[%c64_660, %c384_661], %1110 {strides = array<i32>} : memref<512x512xf32, #tpu.memory_space<vmem>>, vector<8x128xf32>,
    %1112 = vector.extract_strided_slice %1101 {offsets = [0, 1], sizes = [8, 128], strides = [1, 1]} : vector<8x245xf32> to vector<8x128xf32>
    %c96_662 = arith.constant 96 : index
    %c384_663 = arith.constant 384 : index
    %1113 = vector.load %arg12[%c96_662, %c384_663] : memref<512x512xf32, #tpu.memory_space<vmem>>, vector<8x128xf32>
    tpu.vector_store %arg12[%c96_662, %c384_663], %1112 {strides = array<i32>} : memref<512x512xf32, #tpu.memory_space<vmem>>, vector<8x128xf32>,
    %1114 = vector.extract_strided_slice %1101 {offsets = [0, 10], sizes = [8, 128], strides = [1, 1]} : vector<8x245xf32> to vector<8x128xf32>
    %c192_664 = arith.constant 192 : index
    %c384_665 = arith.constant 384 : index
    %1115 = vector.load %arg12[%c192_664, %c384_665] : memref<512x512xf32, #tpu.memory_space<vmem>>, vector<8x128xf32>
    tpu.vector_store %arg12[%c192_664, %c384_665], %1114 {strides = array<i32>} : memref<512x512xf32, #tpu.memory_space<vmem>>, vector<8x128xf32>,
    %1116 = vector.extract_strided_slice %1101 {offsets = [0, 11], sizes = [8, 128], strides = [1, 1]} : vector<8x245xf32> to vector<8x128xf32>
    %c224_666 = arith.constant 224 : index
    %c384_667 = arith.constant 384 : index
    %1117 = vector.load %arg12[%c224_666, %c384_667] : memref<512x512xf32, #tpu.memory_space<vmem>>, vector<8x128xf32>
    tpu.vector_store %arg12[%c224_666, %c384_667], %1116 {strides = array<i32>} : memref<512x512xf32, #tpu.memory_space<vmem>>, vector<8x128xf32>,
    %1118 = vector.extract_strided_slice %1083 {offsets = [0, 0], sizes = [8, 245], strides = [1, 1]} : vector<8x246xf32> to vector<8x245xf32>
    %1119 = vector.extract_strided_slice %1083 {offsets = [0, 1], sizes = [8, 245], strides = [1, 1]} : vector<8x246xf32> to vector<8x245xf32>
    %cst_668 = arith.constant 2.500000e-01 : f32
    %1120 = vector.broadcast %cst_668 : f32 to vector<8x245xf32>
    %1121 = arith.mulf %1120, %1118 : vector<8x245xf32>
    %cst_669 = arith.constant 7.500000e-01 : f32
    %1122 = vector.broadcast %cst_669 : f32 to vector<8x245xf32>
    %1123 = arith.mulf %1122, %1119 : vector<8x245xf32>
    %1124 = arith.addf %1121, %1123 : vector<8x245xf32>
    %c2_670 = arith.constant 2 : index
    %c0_671 = arith.constant 0 : index
    %1125 = vector.load %arg10[%c2_670, %c0_671] : memref<4x245xf32, #tpu.memory_space<vmem>>, vector<1x245xf32>
    %1126 = vector.broadcast %1125 : vector<1x245xf32> to vector<8x245xf32>
    %1127 = arith.mulf %1124, %1126 : vector<8x245xf32>
    %cst_672 = arith.constant 7.500000e-01 : f32
    %1128 = vector.broadcast %cst_672 : f32 to vector<8x245xf32>
    %1129 = arith.mulf %1128, %1118 : vector<8x245xf32>
    %cst_673 = arith.constant 2.500000e-01 : f32
    %1130 = vector.broadcast %cst_673 : f32 to vector<8x245xf32>
    %1131 = arith.mulf %1130, %1119 : vector<8x245xf32>
    %1132 = arith.addf %1129, %1131 : vector<8x245xf32>
    %c3_674 = arith.constant 3 : index
    %c0_675 = arith.constant 0 : index
    %1133 = vector.load %arg10[%c3_674, %c0_675] : memref<4x245xf32, #tpu.memory_space<vmem>>, vector<1x245xf32>
    %1134 = vector.broadcast %1133 : vector<1x245xf32> to vector<8x245xf32>
    %1135 = arith.mulf %1132, %1134 : vector<8x245xf32>
    %1136 = vector.extract_strided_slice %1127 {offsets = [0, 0], sizes = [8, 128], strides = [1, 1]} : vector<8x245xf32> to vector<8x128xf32>
    %c256_676 = arith.constant 256 : index
    %c384_677 = arith.constant 384 : index
    %1137 = vector.load %arg12[%c256_676, %c384_677] : memref<512x512xf32, #tpu.memory_space<vmem>>, vector<8x128xf32>
    tpu.vector_store %arg12[%c256_676, %c384_677], %1136 {strides = array<i32>} : memref<512x512xf32, #tpu.memory_space<vmem>>, vector<8x128xf32>,
    %1138 = vector.extract_strided_slice %1127 {offsets = [0, 1], sizes = [8, 128], strides = [1, 1]} : vector<8x245xf32> to vector<8x128xf32>
    %c288_678 = arith.constant 288 : index
    %c384_679 = arith.constant 384 : index
    %1139 = vector.load %arg12[%c288_678, %c384_679] : memref<512x512xf32, #tpu.memory_space<vmem>>, vector<8x128xf32>
    tpu.vector_store %arg12[%c288_678, %c384_679], %1138 {strides = array<i32>} : memref<512x512xf32, #tpu.memory_space<vmem>>, vector<8x128xf32>,
    %1140 = vector.extract_strided_slice %1127 {offsets = [0, 10], sizes = [8, 128], strides = [1, 1]} : vector<8x245xf32> to vector<8x128xf32>
    %c384_680 = arith.constant 384 : index
    %c384_681 = arith.constant 384 : index
    %1141 = vector.load %arg12[%c384_680, %c384_681] : memref<512x512xf32, #tpu.memory_space<vmem>>, vector<8x128xf32>
    tpu.vector_store %arg12[%c384_680, %c384_681], %1140 {strides = array<i32>} : memref<512x512xf32, #tpu.memory_space<vmem>>, vector<8x128xf32>,
    %1142 = vector.extract_strided_slice %1127 {offsets = [0, 11], sizes = [8, 128], strides = [1, 1]} : vector<8x245xf32> to vector<8x128xf32>
    %c416_682 = arith.constant 416 : index
    %c384_683 = arith.constant 384 : index
    %1143 = vector.load %arg12[%c416_682, %c384_683] : memref<512x512xf32, #tpu.memory_space<vmem>>, vector<8x128xf32>
    tpu.vector_store %arg12[%c416_682, %c384_683], %1142 {strides = array<i32>} : memref<512x512xf32, #tpu.memory_space<vmem>>, vector<8x128xf32>,
    %1144 = vector.extract_strided_slice %1135 {offsets = [0, 0], sizes = [8, 128], strides = [1, 1]} : vector<8x245xf32> to vector<8x128xf32>
    %c320_684 = arith.constant 320 : index
    %c384_685 = arith.constant 384 : index
    %1145 = vector.load %arg12[%c320_684, %c384_685] : memref<512x512xf32, #tpu.memory_space<vmem>>, vector<8x128xf32>
    tpu.vector_store %arg12[%c320_684, %c384_685], %1144 {strides = array<i32>} : memref<512x512xf32, #tpu.memory_space<vmem>>, vector<8x128xf32>,
    %1146 = vector.extract_strided_slice %1135 {offsets = [0, 1], sizes = [8, 128], strides = [1, 1]} : vector<8x245xf32> to vector<8x128xf32>
    %c352_686 = arith.constant 352 : index
    %c384_687 = arith.constant 384 : index
    %1147 = vector.load %arg12[%c352_686, %c384_687] : memref<512x512xf32, #tpu.memory_space<vmem>>, vector<8x128xf32>
    tpu.vector_store %arg12[%c352_686, %c384_687], %1146 {strides = array<i32>} : memref<512x512xf32, #tpu.memory_space<vmem>>, vector<8x128xf32>,
    %1148 = vector.extract_strided_slice %1135 {offsets = [0, 10], sizes = [8, 128], strides = [1, 1]} : vector<8x245xf32> to vector<8x128xf32>
    %c448_688 = arith.constant 448 : index
    %c384_689 = arith.constant 384 : index
    %1149 = vector.load %arg12[%c448_688, %c384_689] : memref<512x512xf32, #tpu.memory_space<vmem>>, vector<8x128xf32>
    tpu.vector_store %arg12[%c448_688, %c384_689], %1148 {strides = array<i32>} : memref<512x512xf32, #tpu.memory_space<vmem>>, vector<8x128xf32>,
    %1150 = vector.extract_strided_slice %1135 {offsets = [0, 11], sizes = [8, 128], strides = [1, 1]} : vector<8x245xf32> to vector<8x128xf32>
    %c480_690 = arith.constant 480 : index
    %c384_691 = arith.constant 384 : index
    %1151 = vector.load %arg12[%c480_690, %c384_691] : memref<512x512xf32, #tpu.memory_space<vmem>>, vector<8x128xf32>
    tpu.vector_store %arg12[%c480_690, %c384_691], %1150 {strides = array<i32>} : memref<512x512xf32, #tpu.memory_space<vmem>>, vector<8x128xf32>,
    %1152 = vector.extract_strided_slice %1057 {offsets = [0, 0], sizes = [8, 246], strides = [1, 1]} : vector<8x256xf32> to vector<8x246xf32>
    %1153 = vector.extract_strided_slice %1057 {offsets = [0, 10], sizes = [8, 246], strides = [1, 1]} : vector<8x256xf32> to vector<8x246xf32>
    %cst_692 = arith.constant 2.500000e-01 : f32
    %1154 = vector.broadcast %cst_692 : f32 to vector<8x246xf32>
    %1155 = arith.mulf %1154, %1152 : vector<8x246xf32>
    %cst_693 = arith.constant 7.500000e-01 : f32
    %1156 = vector.broadcast %cst_693 : f32 to vector<8x246xf32>
    %1157 = arith.mulf %1156, %1153 : vector<8x246xf32>
    %1158 = arith.addf %1155, %1157 : vector<8x246xf32>
    %cst_694 = arith.constant 7.500000e-01 : f32
    %1159 = vector.broadcast %cst_694 : f32 to vector<8x246xf32>
    %1160 = arith.mulf %1159, %1152 : vector<8x246xf32>
    %cst_695 = arith.constant 2.500000e-01 : f32
    %1161 = vector.broadcast %cst_695 : f32 to vector<8x246xf32>
    %1162 = arith.mulf %1161, %1153 : vector<8x246xf32>
    %1163 = arith.addf %1160, %1162 : vector<8x246xf32>
    %1164 = vector.extract_strided_slice %1158 {offsets = [0, 0], sizes = [8, 245], strides = [1, 1]} : vector<8x246xf32> to vector<8x245xf32>
    %1165 = vector.extract_strided_slice %1158 {offsets = [0, 1], sizes = [8, 245], strides = [1, 1]} : vector<8x246xf32> to vector<8x245xf32>
    %cst_696 = arith.constant 2.500000e-01 : f32
    %1166 = vector.broadcast %cst_696 : f32 to vector<8x245xf32>
    %1167 = arith.mulf %1166, %1164 : vector<8x245xf32>
    %cst_697 = arith.constant 7.500000e-01 : f32
    %1168 = vector.broadcast %cst_697 : f32 to vector<8x245xf32>
    %1169 = arith.mulf %1168, %1165 : vector<8x245xf32>
    %1170 = arith.addf %1167, %1169 : vector<8x245xf32>
    %c0_698 = arith.constant 0 : index
    %c0_699 = arith.constant 0 : index
    %1171 = vector.load %arg10[%c0_698, %c0_699] : memref<4x245xf32, #tpu.memory_space<vmem>>, vector<1x245xf32>
    %1172 = vector.broadcast %1171 : vector<1x245xf32> to vector<8x245xf32>
    %1173 = arith.mulf %1170, %1172 : vector<8x245xf32>
    %cst_700 = arith.constant 7.500000e-01 : f32
    %1174 = vector.broadcast %cst_700 : f32 to vector<8x245xf32>
    %1175 = arith.mulf %1174, %1164 : vector<8x245xf32>
    %cst_701 = arith.constant 2.500000e-01 : f32
    %1176 = vector.broadcast %cst_701 : f32 to vector<8x245xf32>
    %1177 = arith.mulf %1176, %1165 : vector<8x245xf32>
    %1178 = arith.addf %1175, %1177 : vector<8x245xf32>
    %c1_702 = arith.constant 1 : index
    %c0_703 = arith.constant 0 : index
    %1179 = vector.load %arg10[%c1_702, %c0_703] : memref<4x245xf32, #tpu.memory_space<vmem>>, vector<1x245xf32>
    %1180 = vector.broadcast %1179 : vector<1x245xf32> to vector<8x245xf32>
    %1181 = arith.mulf %1178, %1180 : vector<8x245xf32>
    %1182 = vector.extract_strided_slice %1173 {offsets = [0, 0], sizes = [8, 128], strides = [1, 1]} : vector<8x245xf32> to vector<8x128xf32>
    %c8_704 = arith.constant 8 : index
    %c384_705 = arith.constant 384 : index
    %1183 = vector.load %arg12[%c8_704, %c384_705] : memref<512x512xf32, #tpu.memory_space<vmem>>, vector<8x128xf32>
    tpu.vector_store %arg12[%c8_704, %c384_705], %1182 {strides = array<i32>} : memref<512x512xf32, #tpu.memory_space<vmem>>, vector<8x128xf32>,
    %1184 = vector.extract_strided_slice %1173 {offsets = [0, 1], sizes = [8, 128], strides = [1, 1]} : vector<8x245xf32> to vector<8x128xf32>
    %c40_706 = arith.constant 40 : index
    %c384_707 = arith.constant 384 : index
    %1185 = vector.load %arg12[%c40_706, %c384_707] : memref<512x512xf32, #tpu.memory_space<vmem>>, vector<8x128xf32>
    tpu.vector_store %arg12[%c40_706, %c384_707], %1184 {strides = array<i32>} : memref<512x512xf32, #tpu.memory_space<vmem>>, vector<8x128xf32>,
    %1186 = vector.extract_strided_slice %1173 {offsets = [0, 10], sizes = [8, 128], strides = [1, 1]} : vector<8x245xf32> to vector<8x128xf32>
    %c136_708 = arith.constant 136 : index
    %c384_709 = arith.constant 384 : index
    %1187 = vector.load %arg12[%c136_708, %c384_709] : memref<512x512xf32, #tpu.memory_space<vmem>>, vector<8x128xf32>
    tpu.vector_store %arg12[%c136_708, %c384_709], %1186 {strides = array<i32>} : memref<512x512xf32, #tpu.memory_space<vmem>>, vector<8x128xf32>,
    %1188 = vector.extract_strided_slice %1173 {offsets = [0, 11], sizes = [8, 128], strides = [1, 1]} : vector<8x245xf32> to vector<8x128xf32>
    %c168_710 = arith.constant 168 : index
    %c384_711 = arith.constant 384 : index
    %1189 = vector.load %arg12[%c168_710, %c384_711] : memref<512x512xf32, #tpu.memory_space<vmem>>, vector<8x128xf32>
    tpu.vector_store %arg12[%c168_710, %c384_711], %1188 {strides = array<i32>} : memref<512x512xf32, #tpu.memory_space<vmem>>, vector<8x128xf32>,
    %1190 = vector.extract_strided_slice %1181 {offsets = [0, 0], sizes = [8, 128], strides = [1, 1]} : vector<8x245xf32> to vector<8x128xf32>
    %c72_712 = arith.constant 72 : index
    %c384_713 = arith.constant 384 : index
    %1191 = vector.load %arg12[%c72_712, %c384_713] : memref<512x512xf32, #tpu.memory_space<vmem>>, vector<8x128xf32>
    tpu.vector_store %arg12[%c72_712, %c384_713], %1190 {strides = array<i32>} : memref<512x512xf32, #tpu.memory_space<vmem>>, vector<8x128xf32>,
    %1192 = vector.extract_strided_slice %1181 {offsets = [0, 1], sizes = [8, 128], strides = [1, 1]} : vector<8x245xf32> to vector<8x128xf32>
    %c104_714 = arith.constant 104 : index
    %c384_715 = arith.constant 384 : index
    %1193 = vector.load %arg12[%c104_714, %c384_715] : memref<512x512xf32, #tpu.memory_space<vmem>>, vector<8x128xf32>
    tpu.vector_store %arg12[%c104_714, %c384_715], %1192 {strides = array<i32>} : memref<512x512xf32, #tpu.memory_space<vmem>>, vector<8x128xf32>,
    %1194 = vector.extract_strided_slice %1181 {offsets = [0, 10], sizes = [8, 128], strides = [1, 1]} : vector<8x245xf32> to vector<8x128xf32>
    %c200_716 = arith.constant 200 : index
    %c384_717 = arith.constant 384 : index
    %1195 = vector.load %arg12[%c200_716, %c384_717] : memref<512x512xf32, #tpu.memory_space<vmem>>, vector<8x128xf32>
    tpu.vector_store %arg12[%c200_716, %c384_717], %1194 {strides = array<i32>} : memref<512x512xf32, #tpu.memory_space<vmem>>, vector<8x128xf32>,
    %1196 = vector.extract_strided_slice %1181 {offsets = [0, 11], sizes = [8, 128], strides = [1, 1]} : vector<8x245xf32> to vector<8x128xf32>
    %c232_718 = arith.constant 232 : index
    %c384_719 = arith.constant 384 : index
    %1197 = vector.load %arg12[%c232_718, %c384_719] : memref<512x512xf32, #tpu.memory_space<vmem>>, vector<8x128xf32>
    tpu.vector_store %arg12[%c232_718, %c384_719], %1196 {strides = array<i32>} : memref<512x512xf32, #tpu.memory_space<vmem>>, vector<8x128xf32>,
    %1198 = vector.extract_strided_slice %1163 {offsets = [0, 0], sizes = [8, 245], strides = [1, 1]} : vector<8x246xf32> to vector<8x245xf32>
    %1199 = vector.extract_strided_slice %1163 {offsets = [0, 1], sizes = [8, 245], strides = [1, 1]} : vector<8x246xf32> to vector<8x245xf32>
    %cst_720 = arith.constant 2.500000e-01 : f32
    %1200 = vector.broadcast %cst_720 : f32 to vector<8x245xf32>
    %1201 = arith.mulf %1200, %1198 : vector<8x245xf32>
    %cst_721 = arith.constant 7.500000e-01 : f32
    %1202 = vector.broadcast %cst_721 : f32 to vector<8x245xf32>
    %1203 = arith.mulf %1202, %1199 : vector<8x245xf32>
    %1204 = arith.addf %1201, %1203 : vector<8x245xf32>
    %c2_722 = arith.constant 2 : index
    %c0_723 = arith.constant 0 : index
    %1205 = vector.load %arg10[%c2_722, %c0_723] : memref<4x245xf32, #tpu.memory_space<vmem>>, vector<1x245xf32>
    %1206 = vector.broadcast %1205 : vector<1x245xf32> to vector<8x245xf32>
    %1207 = arith.mulf %1204, %1206 : vector<8x245xf32>
    %cst_724 = arith.constant 7.500000e-01 : f32
    %1208 = vector.broadcast %cst_724 : f32 to vector<8x245xf32>
    %1209 = arith.mulf %1208, %1198 : vector<8x245xf32>
    %cst_725 = arith.constant 2.500000e-01 : f32
    %1210 = vector.broadcast %cst_725 : f32 to vector<8x245xf32>
    %1211 = arith.mulf %1210, %1199 : vector<8x245xf32>
    %1212 = arith.addf %1209, %1211 : vector<8x245xf32>
    %c3_726 = arith.constant 3 : index
    %c0_727 = arith.constant 0 : index
    %1213 = vector.load %arg10[%c3_726, %c0_727] : memref<4x245xf32, #tpu.memory_space<vmem>>, vector<1x245xf32>
    %1214 = vector.broadcast %1213 : vector<1x245xf32> to vector<8x245xf32>
    %1215 = arith.mulf %1212, %1214 : vector<8x245xf32>
    %1216 = vector.extract_strided_slice %1207 {offsets = [0, 0], sizes = [8, 128], strides = [1, 1]} : vector<8x245xf32> to vector<8x128xf32>
    %c264_728 = arith.constant 264 : index
    %c384_729 = arith.constant 384 : index
    %1217 = vector.load %arg12[%c264_728, %c384_729] : memref<512x512xf32, #tpu.memory_space<vmem>>, vector<8x128xf32>
    tpu.vector_store %arg12[%c264_728, %c384_729], %1216 {strides = array<i32>} : memref<512x512xf32, #tpu.memory_space<vmem>>, vector<8x128xf32>,
    %1218 = vector.extract_strided_slice %1207 {offsets = [0, 1], sizes = [8, 128], strides = [1, 1]} : vector<8x245xf32> to vector<8x128xf32>
    %c296_730 = arith.constant 296 : index
    %c384_731 = arith.constant 384 : index
    %1219 = vector.load %arg12[%c296_730, %c384_731] : memref<512x512xf32, #tpu.memory_space<vmem>>, vector<8x128xf32>
    tpu.vector_store %arg12[%c296_730, %c384_731], %1218 {strides = array<i32>} : memref<512x512xf32, #tpu.memory_space<vmem>>, vector<8x128xf32>,
    %1220 = vector.extract_strided_slice %1207 {offsets = [0, 10], sizes = [8, 128], strides = [1, 1]} : vector<8x245xf32> to vector<8x128xf32>
    %c392_732 = arith.constant 392 : index
    %c384_733 = arith.constant 384 : index
    %1221 = vector.load %arg12[%c392_732, %c384_733] : memref<512x512xf32, #tpu.memory_space<vmem>>, vector<8x128xf32>
    tpu.vector_store %arg12[%c392_732, %c384_733], %1220 {strides = array<i32>} : memref<512x512xf32, #tpu.memory_space<vmem>>, vector<8x128xf32>,
    %1222 = vector.extract_strided_slice %1207 {offsets = [0, 11], sizes = [8, 128], strides = [1, 1]} : vector<8x245xf32> to vector<8x128xf32>
    %c424_734 = arith.constant 424 : index
    %c384_735 = arith.constant 384 : index
    %1223 = vector.load %arg12[%c424_734, %c384_735] : memref<512x512xf32, #tpu.memory_space<vmem>>, vector<8x128xf32>
    tpu.vector_store %arg12[%c424_734, %c384_735], %1222 {strides = array<i32>} : memref<512x512xf32, #tpu.memory_space<vmem>>, vector<8x128xf32>,
    %1224 = vector.extract_strided_slice %1215 {offsets = [0, 0], sizes = [8, 128], strides = [1, 1]} : vector<8x245xf32> to vector<8x128xf32>
    %c328_736 = arith.constant 328 : index
    %c384_737 = arith.constant 384 : index
    %1225 = vector.load %arg12[%c328_736, %c384_737] : memref<512x512xf32, #tpu.memory_space<vmem>>, vector<8x128xf32>
    tpu.vector_store %arg12[%c328_736, %c384_737], %1224 {strides = array<i32>} : memref<512x512xf32, #tpu.memory_space<vmem>>, vector<8x128xf32>,
    %1226 = vector.extract_strided_slice %1215 {offsets = [0, 1], sizes = [8, 128], strides = [1, 1]} : vector<8x245xf32> to vector<8x128xf32>
    %c360_738 = arith.constant 360 : index
    %c384_739 = arith.constant 384 : index
    %1227 = vector.load %arg12[%c360_738, %c384_739] : memref<512x512xf32, #tpu.memory_space<vmem>>, vector<8x128xf32>
    tpu.vector_store %arg12[%c360_738, %c384_739], %1226 {strides = array<i32>} : memref<512x512xf32, #tpu.memory_space<vmem>>, vector<8x128xf32>,
    %1228 = vector.extract_strided_slice %1215 {offsets = [0, 10], sizes = [8, 128], strides = [1, 1]} : vector<8x245xf32> to vector<8x128xf32>
    %c456_740 = arith.constant 456 : index
    %c384_741 = arith.constant 384 : index
    %1229 = vector.load %arg12[%c456_740, %c384_741] : memref<512x512xf32, #tpu.memory_space<vmem>>, vector<8x128xf32>
    tpu.vector_store %arg12[%c456_740, %c384_741], %1228 {strides = array<i32>} : memref<512x512xf32, #tpu.memory_space<vmem>>, vector<8x128xf32>,
    %1230 = vector.extract_strided_slice %1215 {offsets = [0, 11], sizes = [8, 128], strides = [1, 1]} : vector<8x245xf32> to vector<8x128xf32>
    %c488_742 = arith.constant 488 : index
    %c384_743 = arith.constant 384 : index
    %1231 = vector.load %arg12[%c488_742, %c384_743] : memref<512x512xf32, #tpu.memory_space<vmem>>, vector<8x128xf32>
    tpu.vector_store %arg12[%c488_742, %c384_743], %1230 {strides = array<i32>} : memref<512x512xf32, #tpu.memory_space<vmem>>, vector<8x128xf32>,
    %1232 = vector.extract_strided_slice %1062 {offsets = [0, 0], sizes = [8, 246], strides = [1, 1]} : vector<8x256xf32> to vector<8x246xf32>
    %1233 = vector.extract_strided_slice %1062 {offsets = [0, 10], sizes = [8, 246], strides = [1, 1]} : vector<8x256xf32> to vector<8x246xf32>
    %cst_744 = arith.constant 2.500000e-01 : f32
    %1234 = vector.broadcast %cst_744 : f32 to vector<8x246xf32>
    %1235 = arith.mulf %1234, %1232 : vector<8x246xf32>
    %cst_745 = arith.constant 7.500000e-01 : f32
    %1236 = vector.broadcast %cst_745 : f32 to vector<8x246xf32>
    %1237 = arith.mulf %1236, %1233 : vector<8x246xf32>
    %1238 = arith.addf %1235, %1237 : vector<8x246xf32>
    %cst_746 = arith.constant 7.500000e-01 : f32
    %1239 = vector.broadcast %cst_746 : f32 to vector<8x246xf32>
    %1240 = arith.mulf %1239, %1232 : vector<8x246xf32>
    %cst_747 = arith.constant 2.500000e-01 : f32
    %1241 = vector.broadcast %cst_747 : f32 to vector<8x246xf32>
    %1242 = arith.mulf %1241, %1233 : vector<8x246xf32>
    %1243 = arith.addf %1240, %1242 : vector<8x246xf32>
    %1244 = vector.extract_strided_slice %1238 {offsets = [0, 0], sizes = [8, 245], strides = [1, 1]} : vector<8x246xf32> to vector<8x245xf32>
    %1245 = vector.extract_strided_slice %1238 {offsets = [0, 1], sizes = [8, 245], strides = [1, 1]} : vector<8x246xf32> to vector<8x245xf32>
    %cst_748 = arith.constant 2.500000e-01 : f32
    %1246 = vector.broadcast %cst_748 : f32 to vector<8x245xf32>
    %1247 = arith.mulf %1246, %1244 : vector<8x245xf32>
    %cst_749 = arith.constant 7.500000e-01 : f32
    %1248 = vector.broadcast %cst_749 : f32 to vector<8x245xf32>
    %1249 = arith.mulf %1248, %1245 : vector<8x245xf32>
    %1250 = arith.addf %1247, %1249 : vector<8x245xf32>
    %c0_750 = arith.constant 0 : index
    %c0_751 = arith.constant 0 : index
    %1251 = vector.load %arg10[%c0_750, %c0_751] : memref<4x245xf32, #tpu.memory_space<vmem>>, vector<1x245xf32>
    %1252 = vector.broadcast %1251 : vector<1x245xf32> to vector<8x245xf32>
    %1253 = arith.mulf %1250, %1252 : vector<8x245xf32>
    %cst_752 = arith.constant 7.500000e-01 : f32
    %1254 = vector.broadcast %cst_752 : f32 to vector<8x245xf32>
    %1255 = arith.mulf %1254, %1244 : vector<8x245xf32>
    %cst_753 = arith.constant 2.500000e-01 : f32
    %1256 = vector.broadcast %cst_753 : f32 to vector<8x245xf32>
    %1257 = arith.mulf %1256, %1245 : vector<8x245xf32>
    %1258 = arith.addf %1255, %1257 : vector<8x245xf32>
    %c1_754 = arith.constant 1 : index
    %c0_755 = arith.constant 0 : index
    %1259 = vector.load %arg10[%c1_754, %c0_755] : memref<4x245xf32, #tpu.memory_space<vmem>>, vector<1x245xf32>
    %1260 = vector.broadcast %1259 : vector<1x245xf32> to vector<8x245xf32>
    %1261 = arith.mulf %1258, %1260 : vector<8x245xf32>
    %1262 = vector.extract_strided_slice %1253 {offsets = [0, 0], sizes = [8, 128], strides = [1, 1]} : vector<8x245xf32> to vector<8x128xf32>
    %c16_756 = arith.constant 16 : index
    %c384_757 = arith.constant 384 : index
    %1263 = vector.load %arg12[%c16_756, %c384_757] : memref<512x512xf32, #tpu.memory_space<vmem>>, vector<8x128xf32>
    tpu.vector_store %arg12[%c16_756, %c384_757], %1262 {strides = array<i32>} : memref<512x512xf32, #tpu.memory_space<vmem>>, vector<8x128xf32>,
    %1264 = vector.extract_strided_slice %1253 {offsets = [0, 1], sizes = [8, 128], strides = [1, 1]} : vector<8x245xf32> to vector<8x128xf32>
    %c48_758 = arith.constant 48 : index
    %c384_759 = arith.constant 384 : index
    %1265 = vector.load %arg12[%c48_758, %c384_759] : memref<512x512xf32, #tpu.memory_space<vmem>>, vector<8x128xf32>
    tpu.vector_store %arg12[%c48_758, %c384_759], %1264 {strides = array<i32>} : memref<512x512xf32, #tpu.memory_space<vmem>>, vector<8x128xf32>,
    %1266 = vector.extract_strided_slice %1253 {offsets = [0, 10], sizes = [8, 128], strides = [1, 1]} : vector<8x245xf32> to vector<8x128xf32>
    %c144_760 = arith.constant 144 : index
    %c384_761 = arith.constant 384 : index
    %1267 = vector.load %arg12[%c144_760, %c384_761] : memref<512x512xf32, #tpu.memory_space<vmem>>, vector<8x128xf32>
    tpu.vector_store %arg12[%c144_760, %c384_761], %1266 {strides = array<i32>} : memref<512x512xf32, #tpu.memory_space<vmem>>, vector<8x128xf32>,
    %1268 = vector.extract_strided_slice %1253 {offsets = [0, 11], sizes = [8, 128], strides = [1, 1]} : vector<8x245xf32> to vector<8x128xf32>
    %c176_762 = arith.constant 176 : index
    %c384_763 = arith.constant 384 : index
    %1269 = vector.load %arg12[%c176_762, %c384_763] : memref<512x512xf32, #tpu.memory_space<vmem>>, vector<8x128xf32>
    tpu.vector_store %arg12[%c176_762, %c384_763], %1268 {strides = array<i32>} : memref<512x512xf32, #tpu.memory_space<vmem>>, vector<8x128xf32>,
    %1270 = vector.extract_strided_slice %1261 {offsets = [0, 0], sizes = [8, 128], strides = [1, 1]} : vector<8x245xf32> to vector<8x128xf32>
    %c80_764 = arith.constant 80 : index
    %c384_765 = arith.constant 384 : index
    %1271 = vector.load %arg12[%c80_764, %c384_765] : memref<512x512xf32, #tpu.memory_space<vmem>>, vector<8x128xf32>
    tpu.vector_store %arg12[%c80_764, %c384_765], %1270 {strides = array<i32>} : memref<512x512xf32, #tpu.memory_space<vmem>>, vector<8x128xf32>,
    %1272 = vector.extract_strided_slice %1261 {offsets = [0, 1], sizes = [8, 128], strides = [1, 1]} : vector<8x245xf32> to vector<8x128xf32>
    %c112_766 = arith.constant 112 : index
    %c384_767 = arith.constant 384 : index
    %1273 = vector.load %arg12[%c112_766, %c384_767] : memref<512x512xf32, #tpu.memory_space<vmem>>, vector<8x128xf32>
    tpu.vector_store %arg12[%c112_766, %c384_767], %1272 {strides = array<i32>} : memref<512x512xf32, #tpu.memory_space<vmem>>, vector<8x128xf32>,
    %1274 = vector.extract_strided_slice %1261 {offsets = [0, 10], sizes = [8, 128], strides = [1, 1]} : vector<8x245xf32> to vector<8x128xf32>
    %c208_768 = arith.constant 208 : index
    %c384_769 = arith.constant 384 : index
    %1275 = vector.load %arg12[%c208_768, %c384_769] : memref<512x512xf32, #tpu.memory_space<vmem>>, vector<8x128xf32>
    tpu.vector_store %arg12[%c208_768, %c384_769], %1274 {strides = array<i32>} : memref<512x512xf32, #tpu.memory_space<vmem>>, vector<8x128xf32>,
    %1276 = vector.extract_strided_slice %1261 {offsets = [0, 11], sizes = [8, 128], strides = [1, 1]} : vector<8x245xf32> to vector<8x128xf32>
    %c240_770 = arith.constant 240 : index
    %c384_771 = arith.constant 384 : index
    %1277 = vector.load %arg12[%c240_770, %c384_771] : memref<512x512xf32, #tpu.memory_space<vmem>>, vector<8x128xf32>
    tpu.vector_store %arg12[%c240_770, %c384_771], %1276 {strides = array<i32>} : memref<512x512xf32, #tpu.memory_space<vmem>>, vector<8x128xf32>,
    %1278 = vector.extract_strided_slice %1243 {offsets = [0, 0], sizes = [8, 245], strides = [1, 1]} : vector<8x246xf32> to vector<8x245xf32>
    %1279 = vector.extract_strided_slice %1243 {offsets = [0, 1], sizes = [8, 245], strides = [1, 1]} : vector<8x246xf32> to vector<8x245xf32>
    %cst_772 = arith.constant 2.500000e-01 : f32
    %1280 = vector.broadcast %cst_772 : f32 to vector<8x245xf32>
    %1281 = arith.mulf %1280, %1278 : vector<8x245xf32>
    %cst_773 = arith.constant 7.500000e-01 : f32
    %1282 = vector.broadcast %cst_773 : f32 to vector<8x245xf32>
    %1283 = arith.mulf %1282, %1279 : vector<8x245xf32>
    %1284 = arith.addf %1281, %1283 : vector<8x245xf32>
    %c2_774 = arith.constant 2 : index
    %c0_775 = arith.constant 0 : index
    %1285 = vector.load %arg10[%c2_774, %c0_775] : memref<4x245xf32, #tpu.memory_space<vmem>>, vector<1x245xf32>
    %1286 = vector.broadcast %1285 : vector<1x245xf32> to vector<8x245xf32>
    %1287 = arith.mulf %1284, %1286 : vector<8x245xf32>
    %cst_776 = arith.constant 7.500000e-01 : f32
    %1288 = vector.broadcast %cst_776 : f32 to vector<8x245xf32>
    %1289 = arith.mulf %1288, %1278 : vector<8x245xf32>
    %cst_777 = arith.constant 2.500000e-01 : f32
    %1290 = vector.broadcast %cst_777 : f32 to vector<8x245xf32>
    %1291 = arith.mulf %1290, %1279 : vector<8x245xf32>
    %1292 = arith.addf %1289, %1291 : vector<8x245xf32>
    %c3_778 = arith.constant 3 : index
    %c0_779 = arith.constant 0 : index
    %1293 = vector.load %arg10[%c3_778, %c0_779] : memref<4x245xf32, #tpu.memory_space<vmem>>, vector<1x245xf32>
    %1294 = vector.broadcast %1293 : vector<1x245xf32> to vector<8x245xf32>
    %1295 = arith.mulf %1292, %1294 : vector<8x245xf32>
    %1296 = vector.extract_strided_slice %1287 {offsets = [0, 0], sizes = [8, 128], strides = [1, 1]} : vector<8x245xf32> to vector<8x128xf32>
    %c272_780 = arith.constant 272 : index
    %c384_781 = arith.constant 384 : index
    %1297 = vector.load %arg12[%c272_780, %c384_781] : memref<512x512xf32, #tpu.memory_space<vmem>>, vector<8x128xf32>
    tpu.vector_store %arg12[%c272_780, %c384_781], %1296 {strides = array<i32>} : memref<512x512xf32, #tpu.memory_space<vmem>>, vector<8x128xf32>,
    %1298 = vector.extract_strided_slice %1287 {offsets = [0, 1], sizes = [8, 128], strides = [1, 1]} : vector<8x245xf32> to vector<8x128xf32>
    %c304_782 = arith.constant 304 : index
    %c384_783 = arith.constant 384 : index
    %1299 = vector.load %arg12[%c304_782, %c384_783] : memref<512x512xf32, #tpu.memory_space<vmem>>, vector<8x128xf32>
    tpu.vector_store %arg12[%c304_782, %c384_783], %1298 {strides = array<i32>} : memref<512x512xf32, #tpu.memory_space<vmem>>, vector<8x128xf32>,
    %1300 = vector.extract_strided_slice %1287 {offsets = [0, 10], sizes = [8, 128], strides = [1, 1]} : vector<8x245xf32> to vector<8x128xf32>
    %c400_784 = arith.constant 400 : index
    %c384_785 = arith.constant 384 : index
    %1301 = vector.load %arg12[%c400_784, %c384_785] : memref<512x512xf32, #tpu.memory_space<vmem>>, vector<8x128xf32>
    tpu.vector_store %arg12[%c400_784, %c384_785], %1300 {strides = array<i32>} : memref<512x512xf32, #tpu.memory_space<vmem>>, vector<8x128xf32>,
    %1302 = vector.extract_strided_slice %1287 {offsets = [0, 11], sizes = [8, 128], strides = [1, 1]} : vector<8x245xf32> to vector<8x128xf32>
    %c432_786 = arith.constant 432 : index
    %c384_787 = arith.constant 384 : index
    %1303 = vector.load %arg12[%c432_786, %c384_787] : memref<512x512xf32, #tpu.memory_space<vmem>>, vector<8x128xf32>
    tpu.vector_store %arg12[%c432_786, %c384_787], %1302 {strides = array<i32>} : memref<512x512xf32, #tpu.memory_space<vmem>>, vector<8x128xf32>,
    %1304 = vector.extract_strided_slice %1295 {offsets = [0, 0], sizes = [8, 128], strides = [1, 1]} : vector<8x245xf32> to vector<8x128xf32>
    %c336_788 = arith.constant 336 : index
    %c384_789 = arith.constant 384 : index
    %1305 = vector.load %arg12[%c336_788, %c384_789] : memref<512x512xf32, #tpu.memory_space<vmem>>, vector<8x128xf32>
    tpu.vector_store %arg12[%c336_788, %c384_789], %1304 {strides = array<i32>} : memref<512x512xf32, #tpu.memory_space<vmem>>, vector<8x128xf32>,
    %1306 = vector.extract_strided_slice %1295 {offsets = [0, 1], sizes = [8, 128], strides = [1, 1]} : vector<8x245xf32> to vector<8x128xf32>
    %c368_790 = arith.constant 368 : index
    %c384_791 = arith.constant 384 : index
    %1307 = vector.load %arg12[%c368_790, %c384_791] : memref<512x512xf32, #tpu.memory_space<vmem>>, vector<8x128xf32>
    tpu.vector_store %arg12[%c368_790, %c384_791], %1306 {strides = array<i32>} : memref<512x512xf32, #tpu.memory_space<vmem>>, vector<8x128xf32>,
    %1308 = vector.extract_strided_slice %1295 {offsets = [0, 10], sizes = [8, 128], strides = [1, 1]} : vector<8x245xf32> to vector<8x128xf32>
    %c464_792 = arith.constant 464 : index
    %c384_793 = arith.constant 384 : index
    %1309 = vector.load %arg12[%c464_792, %c384_793] : memref<512x512xf32, #tpu.memory_space<vmem>>, vector<8x128xf32>
    tpu.vector_store %arg12[%c464_792, %c384_793], %1308 {strides = array<i32>} : memref<512x512xf32, #tpu.memory_space<vmem>>, vector<8x128xf32>,
    %1310 = vector.extract_strided_slice %1295 {offsets = [0, 11], sizes = [8, 128], strides = [1, 1]} : vector<8x245xf32> to vector<8x128xf32>
    %c496_794 = arith.constant 496 : index
    %c384_795 = arith.constant 384 : index
    %1311 = vector.load %arg12[%c496_794, %c384_795] : memref<512x512xf32, #tpu.memory_space<vmem>>, vector<8x128xf32>
    tpu.vector_store %arg12[%c496_794, %c384_795], %1310 {strides = array<i32>} : memref<512x512xf32, #tpu.memory_space<vmem>>, vector<8x128xf32>,
    %1312 = vector.extract_strided_slice %1071 {offsets = [0, 0], sizes = [8, 246], strides = [1, 1]} : vector<8x256xf32> to vector<8x246xf32>
    %1313 = vector.extract_strided_slice %1071 {offsets = [0, 10], sizes = [8, 246], strides = [1, 1]} : vector<8x256xf32> to vector<8x246xf32>
    %cst_796 = arith.constant 2.500000e-01 : f32
    %1314 = vector.broadcast %cst_796 : f32 to vector<8x246xf32>
    %1315 = arith.mulf %1314, %1312 : vector<8x246xf32>
    %cst_797 = arith.constant 7.500000e-01 : f32
    %1316 = vector.broadcast %cst_797 : f32 to vector<8x246xf32>
    %1317 = arith.mulf %1316, %1313 : vector<8x246xf32>
    %1318 = arith.addf %1315, %1317 : vector<8x246xf32>
    %cst_798 = arith.constant 7.500000e-01 : f32
    %1319 = vector.broadcast %cst_798 : f32 to vector<8x246xf32>
    %1320 = arith.mulf %1319, %1312 : vector<8x246xf32>
    %cst_799 = arith.constant 2.500000e-01 : f32
    %1321 = vector.broadcast %cst_799 : f32 to vector<8x246xf32>
    %1322 = arith.mulf %1321, %1313 : vector<8x246xf32>
    %1323 = arith.addf %1320, %1322 : vector<8x246xf32>
    %1324 = vector.extract_strided_slice %1318 {offsets = [0, 0], sizes = [8, 245], strides = [1, 1]} : vector<8x246xf32> to vector<8x245xf32>
    %1325 = vector.extract_strided_slice %1318 {offsets = [0, 1], sizes = [8, 245], strides = [1, 1]} : vector<8x246xf32> to vector<8x245xf32>
    %cst_800 = arith.constant 2.500000e-01 : f32
    %1326 = vector.broadcast %cst_800 : f32 to vector<8x245xf32>
    %1327 = arith.mulf %1326, %1324 : vector<8x245xf32>
    %cst_801 = arith.constant 7.500000e-01 : f32
    %1328 = vector.broadcast %cst_801 : f32 to vector<8x245xf32>
    %1329 = arith.mulf %1328, %1325 : vector<8x245xf32>
    %1330 = arith.addf %1327, %1329 : vector<8x245xf32>
    %c0_802 = arith.constant 0 : index
    %c0_803 = arith.constant 0 : index
    %1331 = vector.load %arg10[%c0_802, %c0_803] : memref<4x245xf32, #tpu.memory_space<vmem>>, vector<1x245xf32>
    %1332 = vector.broadcast %1331 : vector<1x245xf32> to vector<8x245xf32>
    %1333 = arith.mulf %1330, %1332 : vector<8x245xf32>
    %cst_804 = arith.constant 7.500000e-01 : f32
    %1334 = vector.broadcast %cst_804 : f32 to vector<8x245xf32>
    %1335 = arith.mulf %1334, %1324 : vector<8x245xf32>
    %cst_805 = arith.constant 2.500000e-01 : f32
    %1336 = vector.broadcast %cst_805 : f32 to vector<8x245xf32>
    %1337 = arith.mulf %1336, %1325 : vector<8x245xf32>
    %1338 = arith.addf %1335, %1337 : vector<8x245xf32>
    %c1_806 = arith.constant 1 : index
    %c0_807 = arith.constant 0 : index
    %1339 = vector.load %arg10[%c1_806, %c0_807] : memref<4x245xf32, #tpu.memory_space<vmem>>, vector<1x245xf32>
    %1340 = vector.broadcast %1339 : vector<1x245xf32> to vector<8x245xf32>
    %1341 = arith.mulf %1338, %1340 : vector<8x245xf32>
    %1342 = vector.extract_strided_slice %1333 {offsets = [0, 0], sizes = [8, 128], strides = [1, 1]} : vector<8x245xf32> to vector<8x128xf32>
    %c24_808 = arith.constant 24 : index
    %c384_809 = arith.constant 384 : index
    %1343 = vector.load %arg12[%c24_808, %c384_809] : memref<512x512xf32, #tpu.memory_space<vmem>>, vector<8x128xf32>
    tpu.vector_store %arg12[%c24_808, %c384_809], %1342 {strides = array<i32>} : memref<512x512xf32, #tpu.memory_space<vmem>>, vector<8x128xf32>,
    %1344 = vector.extract_strided_slice %1333 {offsets = [0, 1], sizes = [8, 128], strides = [1, 1]} : vector<8x245xf32> to vector<8x128xf32>
    %c56_810 = arith.constant 56 : index
    %c384_811 = arith.constant 384 : index
    %1345 = vector.load %arg12[%c56_810, %c384_811] : memref<512x512xf32, #tpu.memory_space<vmem>>, vector<8x128xf32>
    tpu.vector_store %arg12[%c56_810, %c384_811], %1344 {strides = array<i32>} : memref<512x512xf32, #tpu.memory_space<vmem>>, vector<8x128xf32>,
    %1346 = vector.extract_strided_slice %1333 {offsets = [0, 10], sizes = [8, 128], strides = [1, 1]} : vector<8x245xf32> to vector<8x128xf32>
    %c152_812 = arith.constant 152 : index
    %c384_813 = arith.constant 384 : index
    %1347 = vector.load %arg12[%c152_812, %c384_813] : memref<512x512xf32, #tpu.memory_space<vmem>>, vector<8x128xf32>
    tpu.vector_store %arg12[%c152_812, %c384_813], %1346 {strides = array<i32>} : memref<512x512xf32, #tpu.memory_space<vmem>>, vector<8x128xf32>,
    %1348 = vector.extract_strided_slice %1333 {offsets = [0, 11], sizes = [8, 128], strides = [1, 1]} : vector<8x245xf32> to vector<8x128xf32>
    %c184_814 = arith.constant 184 : index
    %c384_815 = arith.constant 384 : index
    %1349 = vector.load %arg12[%c184_814, %c384_815] : memref<512x512xf32, #tpu.memory_space<vmem>>, vector<8x128xf32>
    tpu.vector_store %arg12[%c184_814, %c384_815], %1348 {strides = array<i32>} : memref<512x512xf32, #tpu.memory_space<vmem>>, vector<8x128xf32>,
    %1350 = vector.extract_strided_slice %1341 {offsets = [0, 0], sizes = [8, 128], strides = [1, 1]} : vector<8x245xf32> to vector<8x128xf32>
    %c88_816 = arith.constant 88 : index
    %c384_817 = arith.constant 384 : index
    %1351 = vector.load %arg12[%c88_816, %c384_817] : memref<512x512xf32, #tpu.memory_space<vmem>>, vector<8x128xf32>
    tpu.vector_store %arg12[%c88_816, %c384_817], %1350 {strides = array<i32>} : memref<512x512xf32, #tpu.memory_space<vmem>>, vector<8x128xf32>,
    %1352 = vector.extract_strided_slice %1341 {offsets = [0, 1], sizes = [8, 128], strides = [1, 1]} : vector<8x245xf32> to vector<8x128xf32>
    %c120_818 = arith.constant 120 : index
    %c384_819 = arith.constant 384 : index
    %1353 = vector.load %arg12[%c120_818, %c384_819] : memref<512x512xf32, #tpu.memory_space<vmem>>, vector<8x128xf32>
    tpu.vector_store %arg12[%c120_818, %c384_819], %1352 {strides = array<i32>} : memref<512x512xf32, #tpu.memory_space<vmem>>, vector<8x128xf32>,
    %1354 = vector.extract_strided_slice %1341 {offsets = [0, 10], sizes = [8, 128], strides = [1, 1]} : vector<8x245xf32> to vector<8x128xf32>
    %c216_820 = arith.constant 216 : index
    %c384_821 = arith.constant 384 : index
    %1355 = vector.load %arg12[%c216_820, %c384_821] : memref<512x512xf32, #tpu.memory_space<vmem>>, vector<8x128xf32>
    tpu.vector_store %arg12[%c216_820, %c384_821], %1354 {strides = array<i32>} : memref<512x512xf32, #tpu.memory_space<vmem>>, vector<8x128xf32>,
    %1356 = vector.extract_strided_slice %1341 {offsets = [0, 11], sizes = [8, 128], strides = [1, 1]} : vector<8x245xf32> to vector<8x128xf32>
    %c248_822 = arith.constant 248 : index
    %c384_823 = arith.constant 384 : index
    %1357 = vector.load %arg12[%c248_822, %c384_823] : memref<512x512xf32, #tpu.memory_space<vmem>>, vector<8x128xf32>
    tpu.vector_store %arg12[%c248_822, %c384_823], %1356 {strides = array<i32>} : memref<512x512xf32, #tpu.memory_space<vmem>>, vector<8x128xf32>,
    %1358 = vector.extract_strided_slice %1323 {offsets = [0, 0], sizes = [8, 245], strides = [1, 1]} : vector<8x246xf32> to vector<8x245xf32>
    %1359 = vector.extract_strided_slice %1323 {offsets = [0, 1], sizes = [8, 245], strides = [1, 1]} : vector<8x246xf32> to vector<8x245xf32>
    %cst_824 = arith.constant 2.500000e-01 : f32
    %1360 = vector.broadcast %cst_824 : f32 to vector<8x245xf32>
    %1361 = arith.mulf %1360, %1358 : vector<8x245xf32>
    %cst_825 = arith.constant 7.500000e-01 : f32
    %1362 = vector.broadcast %cst_825 : f32 to vector<8x245xf32>
    %1363 = arith.mulf %1362, %1359 : vector<8x245xf32>
    %1364 = arith.addf %1361, %1363 : vector<8x245xf32>
    %c2_826 = arith.constant 2 : index
    %c0_827 = arith.constant 0 : index
    %1365 = vector.load %arg10[%c2_826, %c0_827] : memref<4x245xf32, #tpu.memory_space<vmem>>, vector<1x245xf32>
    %1366 = vector.broadcast %1365 : vector<1x245xf32> to vector<8x245xf32>
    %1367 = arith.mulf %1364, %1366 : vector<8x245xf32>
    %cst_828 = arith.constant 7.500000e-01 : f32
    %1368 = vector.broadcast %cst_828 : f32 to vector<8x245xf32>
    %1369 = arith.mulf %1368, %1358 : vector<8x245xf32>
    %cst_829 = arith.constant 2.500000e-01 : f32
    %1370 = vector.broadcast %cst_829 : f32 to vector<8x245xf32>
    %1371 = arith.mulf %1370, %1359 : vector<8x245xf32>
    %1372 = arith.addf %1369, %1371 : vector<8x245xf32>
    %c3_830 = arith.constant 3 : index
    %c0_831 = arith.constant 0 : index
    %1373 = vector.load %arg10[%c3_830, %c0_831] : memref<4x245xf32, #tpu.memory_space<vmem>>, vector<1x245xf32>
    %1374 = vector.broadcast %1373 : vector<1x245xf32> to vector<8x245xf32>
    %1375 = arith.mulf %1372, %1374 : vector<8x245xf32>
    %1376 = vector.extract_strided_slice %1367 {offsets = [0, 0], sizes = [8, 128], strides = [1, 1]} : vector<8x245xf32> to vector<8x128xf32>
    %c280_832 = arith.constant 280 : index
    %c384_833 = arith.constant 384 : index
    %1377 = vector.load %arg12[%c280_832, %c384_833] : memref<512x512xf32, #tpu.memory_space<vmem>>, vector<8x128xf32>
    tpu.vector_store %arg12[%c280_832, %c384_833], %1376 {strides = array<i32>} : memref<512x512xf32, #tpu.memory_space<vmem>>, vector<8x128xf32>,
    %1378 = vector.extract_strided_slice %1367 {offsets = [0, 1], sizes = [8, 128], strides = [1, 1]} : vector<8x245xf32> to vector<8x128xf32>
    %c312_834 = arith.constant 312 : index
    %c384_835 = arith.constant 384 : index
    %1379 = vector.load %arg12[%c312_834, %c384_835] : memref<512x512xf32, #tpu.memory_space<vmem>>, vector<8x128xf32>
    tpu.vector_store %arg12[%c312_834, %c384_835], %1378 {strides = array<i32>} : memref<512x512xf32, #tpu.memory_space<vmem>>, vector<8x128xf32>,
    %1380 = vector.extract_strided_slice %1367 {offsets = [0, 10], sizes = [8, 128], strides = [1, 1]} : vector<8x245xf32> to vector<8x128xf32>
    %c408_836 = arith.constant 408 : index
    %c384_837 = arith.constant 384 : index
    %1381 = vector.load %arg12[%c408_836, %c384_837] : memref<512x512xf32, #tpu.memory_space<vmem>>, vector<8x128xf32>
    tpu.vector_store %arg12[%c408_836, %c384_837], %1380 {strides = array<i32>} : memref<512x512xf32, #tpu.memory_space<vmem>>, vector<8x128xf32>,
    %1382 = vector.extract_strided_slice %1367 {offsets = [0, 11], sizes = [8, 128], strides = [1, 1]} : vector<8x245xf32> to vector<8x128xf32>
    %c440_838 = arith.constant 440 : index
    %c384_839 = arith.constant 384 : index
    %1383 = vector.load %arg12[%c440_838, %c384_839] : memref<512x512xf32, #tpu.memory_space<vmem>>, vector<8x128xf32>
    tpu.vector_store %arg12[%c440_838, %c384_839], %1382 {strides = array<i32>} : memref<512x512xf32, #tpu.memory_space<vmem>>, vector<8x128xf32>,
    %1384 = vector.extract_strided_slice %1375 {offsets = [0, 0], sizes = [8, 128], strides = [1, 1]} : vector<8x245xf32> to vector<8x128xf32>
    %c344_840 = arith.constant 344 : index
    %c384_841 = arith.constant 384 : index
    %1385 = vector.load %arg12[%c344_840, %c384_841] : memref<512x512xf32, #tpu.memory_space<vmem>>, vector<8x128xf32>
    tpu.vector_store %arg12[%c344_840, %c384_841], %1384 {strides = array<i32>} : memref<512x512xf32, #tpu.memory_space<vmem>>, vector<8x128xf32>,
    %1386 = vector.extract_strided_slice %1375 {offsets = [0, 1], sizes = [8, 128], strides = [1, 1]} : vector<8x245xf32> to vector<8x128xf32>
    %c376_842 = arith.constant 376 : index
    %c384_843 = arith.constant 384 : index
    %1387 = vector.load %arg12[%c376_842, %c384_843] : memref<512x512xf32, #tpu.memory_space<vmem>>, vector<8x128xf32>
    tpu.vector_store %arg12[%c376_842, %c384_843], %1386 {strides = array<i32>} : memref<512x512xf32, #tpu.memory_space<vmem>>, vector<8x128xf32>,
    %1388 = vector.extract_strided_slice %1375 {offsets = [0, 10], sizes = [8, 128], strides = [1, 1]} : vector<8x245xf32> to vector<8x128xf32>
    %c472_844 = arith.constant 472 : index
    %c384_845 = arith.constant 384 : index
    %1389 = vector.load %arg12[%c472_844, %c384_845] : memref<512x512xf32, #tpu.memory_space<vmem>>, vector<8x128xf32>
    tpu.vector_store %arg12[%c472_844, %c384_845], %1388 {strides = array<i32>} : memref<512x512xf32, #tpu.memory_space<vmem>>, vector<8x128xf32>,
    %1390 = vector.extract_strided_slice %1375 {offsets = [0, 11], sizes = [8, 128], strides = [1, 1]} : vector<8x245xf32> to vector<8x128xf32>
    %c504_846 = arith.constant 504 : index
    %c384_847 = arith.constant 384 : index
    %1391 = vector.load %arg12[%c504_846, %c384_847] : memref<512x512xf32, #tpu.memory_space<vmem>>, vector<8x128xf32>
    tpu.vector_store %arg12[%c504_846, %c384_847], %1390 {strides = array<i32>} : memref<512x512xf32, #tpu.memory_space<vmem>>, vector<8x128xf32>,
    %c0_848 = arith.constant 0 : index
    %c0_849 = arith.constant 0 : index
    %1392 = vector.load %arg8[%c0_848, %c0_849] : memref<64x512xf32, #tpu.memory_space<vmem>>, vector<64x512xf32>
    %c0_850 = arith.constant 0 : index
    %c0_851 = arith.constant 0 : index
    %1393 = vector.load %arg12[%c0_850, %c0_851] : memref<512x512xf32, #tpu.memory_space<vmem>>, vector<512x512xf32>
    %cst_852 = arith.constant dense<0.000000e+00> : vector<64x512xf32>
    %1394 = tpu.matmul %1392, %1393, %cst_852 {dimension_numbers = #tpu.dot_dimension_numbers<[1], [0], [0], [1], [0, 0, 1, 1], [], []>} : vector<64x512xf32>, vector<512x512xf32>, vector<64x512xf32> -> vector<64x512xf32>
    %c0_853 = arith.constant 0 : index
    %c0_854 = arith.constant 0 : index
    %1395 = vector.load %arg9[%c0_853, %c0_854] : memref<64x1xf32, #tpu.memory_space<vmem>>, vector<64x1xf32>
    %1396 = vector.broadcast %1395 : vector<64x1xf32> to vector<64x512xf32>
    %1397 = arith.addf %1394, %1396 : vector<64x512xf32>
    %cst_855 = arith.constant 0.000000e+00 : f32
    %1398 = vector.broadcast %cst_855 : f32 to vector<64x512xf32>
    %1399 = arith.maximumf %1397, %1398 : vector<64x512xf32>
    %c0_856 = arith.constant 0 : index
    %c0_857 = arith.constant 0 : index
    %c0_858 = arith.constant 0 : index
    %c0_859 = arith.constant 0 : index
    %1400 = vector.load %arg11[%c0_856, %c0_857, %c0_858, %c0_859] : memref<1x1x64x512xf32, #tpu.memory_space<vmem>>, vector<1x1x64x512xf32>
    %1401 = vector.shape_cast %1400 : vector<1x1x64x512xf32> to vector<64x512xf32>
    %1402 = vector.shape_cast %1399 : vector<64x512xf32> to vector<1x1x64x512xf32>
    tpu.vector_store %arg11[%c0_856, %c0_857, %c0_858, %c0_859], %1402 {strides = array<i32>} : memref<1x1x64x512xf32, #tpu.memory_space<vmem>>, vector<1x1x64x512xf32>,
    return
  }
  func.func @transform_0(%arg0: i32, %arg1: i32) -> (i32, i32, i32, i32) {
    %c4_i32 = arith.constant 4 : i32
    %0 = arith.muli %arg1, %c4_i32 : i32
    %c0_i32 = arith.constant 0 : i32
    %1 = arith.addi %0, %c0_i32 : i32
    %c0_i32_0 = arith.constant 0 : i32
    %c0_i32_1 = arith.constant 0 : i32
    %c0_i32_2 = arith.constant 0 : i32
    return %arg0, %1, %c0_i32_0, %c0_i32_1 : i32, i32, i32, i32
  }
  func.func @transform_1(%arg0: i32, %arg1: i32) -> (i32, i32, i32, i32) {
    %c4_i32 = arith.constant 4 : i32
    %0 = arith.muli %arg1, %c4_i32 : i32
    %c1_i32 = arith.constant 1 : i32
    %1 = arith.addi %0, %c1_i32 : i32
    %c0_i32 = arith.constant 0 : i32
    %c0_i32_0 = arith.constant 0 : i32
    %c0_i32_1 = arith.constant 0 : i32
    return %arg0, %1, %c0_i32, %c0_i32_0 : i32, i32, i32, i32
  }
  func.func @transform_2(%arg0: i32, %arg1: i32) -> (i32, i32, i32, i32) {
    %c4_i32 = arith.constant 4 : i32
    %0 = arith.muli %arg1, %c4_i32 : i32
    %c2_i32 = arith.constant 2 : i32
    %1 = arith.addi %0, %c2_i32 : i32
    %c0_i32 = arith.constant 0 : i32
    %c0_i32_0 = arith.constant 0 : i32
    %c0_i32_1 = arith.constant 0 : i32
    return %arg0, %1, %c0_i32, %c0_i32_0 : i32, i32, i32, i32
  }
  func.func @transform_3(%arg0: i32, %arg1: i32) -> (i32, i32, i32, i32) {
    %c4_i32 = arith.constant 4 : i32
    %0 = arith.muli %arg1, %c4_i32 : i32
    %c3_i32 = arith.constant 3 : i32
    %1 = arith.addi %0, %c3_i32 : i32
    %c0_i32 = arith.constant 0 : i32
    %c0_i32_0 = arith.constant 0 : i32
    %c0_i32_1 = arith.constant 0 : i32
    return %arg0, %1, %c0_i32, %c0_i32_0 : i32, i32, i32, i32
  }
  func.func @transform_4(%arg0: i32, %arg1: i32) -> (i32, i32, i32, i32) {
    %c4_i32 = arith.constant 4 : i32
    %0 = arith.muli %arg1, %c4_i32 : i32
    %c4_i32_0 = arith.constant 4 : i32
    %1 = arith.addi %0, %c4_i32_0 : i32
    %c0_i32 = arith.constant 0 : i32
    %c0_i32_1 = arith.constant 0 : i32
    %c0_i32_2 = arith.constant 0 : i32
    return %arg0, %1, %c0_i32, %c0_i32_1 : i32, i32, i32, i32
  }
  func.func @transform_5(%arg0: i32, %arg1: i32) -> (i32, i32, i32, i32) {
    %c4_i32 = arith.constant 4 : i32
    %0 = arith.muli %arg1, %c4_i32 : i32
    %c5_i32 = arith.constant 5 : i32
    %1 = arith.addi %0, %c5_i32 : i32
    %c0_i32 = arith.constant 0 : i32
    %c0_i32_0 = arith.constant 0 : i32
    %c0_i32_1 = arith.constant 0 : i32
    return %arg0, %1, %c0_i32, %c0_i32_0 : i32, i32, i32, i32
  }
  func.func @transform_6(%arg0: i32, %arg1: i32) -> (i32, i32) {
    %c0_i32 = arith.constant 0 : i32
    %c0_i32_0 = arith.constant 0 : i32
    %c0_i32_1 = arith.constant 0 : i32
    return %c0_i32, %c0_i32_0 : i32, i32
  }
  func.func @transform_7(%arg0: i32, %arg1: i32) -> (i32, i32) {
    %c0_i32 = arith.constant 0 : i32
    %c0_i32_0 = arith.constant 0 : i32
    %c0_i32_1 = arith.constant 0 : i32
    return %c0_i32, %c0_i32_0 : i32, i32
  }
  func.func @transform_8(%arg0: i32, %arg1: i32) -> (i32, i32) {
    %c0_i32 = arith.constant 0 : i32
    %c0_i32_0 = arith.constant 0 : i32
    %c0_i32_1 = arith.constant 0 : i32
    return %c0_i32, %c0_i32_0 : i32, i32
  }
  func.func @transform_9(%arg0: i32, %arg1: i32) -> (i32, i32, i32, i32) {
    %c0_i32 = arith.constant 0 : i32
    %c0_i32_0 = arith.constant 0 : i32
    %c0_i32_1 = arith.constant 0 : i32
    return %arg0, %arg1, %c0_i32, %c0_i32_0 : i32, i32, i32, i32
  }
}

</mosaic_0001>

<llo_original>
// kernel: tile.8
$region0: #{tile.8}
  #allocation2 [shape = 's32[1]{0}', space=sflag, size = 0x4, scoped, tag = 'scoped memory for tile.8']
  %s0 = inlined_call_operand.hbm [shape: f32[8], index: 0, kind: input, shape index: {}]
  %s1 = inlined_call_operand.vmem [shape: f32[8,8], index: 1, kind: output, shape index: {}]
  $region1: #{tile.8} parent=0
    #allocation0 [shape = 'u8[512]{0}', space=vmem, size = 0x400, scoped, tag = 'operand span for operand 0']
    #allocation1 [shape = 's32[1]{0}', space=sflag, size = 0x4, scoped, tag = 'scoped memory for tile.8']
    %2 = vsyncpa [#allocation1], 0
    // Predicated region
    $region2: #{tile.8} parent=1 // pred_check
      _
    $region3: #{tile.8} parent=1 // pred_check_branch
      %4 = sbr.rel (0) target = $region5
    $region4: #{tile.8} parent=1 // pred_region
      %s6 = ssub.s32 16, 16
      %7 = vsyncadd [#allocation1], %s6
      %s9 = sshll.u32 [#allocation0], 4
      %s10 = int_to_ptr.vmem [resolvable:$true] %s9
      %12 = dma.hbm_to_vmem [thread:$0]  %s0, 16, %s10, [#allocation1]
    $region5: #{tile.8} parent=1 // pred_fallthru
      _
    // Predicated region
    $region6: #{tile.8} parent=1 // pred_check
      _
    $region7: #{tile.8} parent=1 // pred_check_branch
      %14 = sbr.rel (0) target = $region9
    $region8: #{tile.8} parent=1 // pred_region
      %15 = dma.done [#allocation1], 16
    $region9: #{tile.8} parent=1 // pred_fallthru
      _
    %v16 = vld [vmem:[#allocation0] ss:$0 sm:$0xff]
    %17 = vst [vmem:[%s1] sm:$0xff] %v16
    %18 = vsyncpa [#allocation1], 1

// kernel: tile.0
$region0: #{tile.0}
  %s0 = inlined_call_operand.vmem [shape: f32[8,8], index: 0, kind: input, shape index: {}]
  %s1 = inlined_call_operand.vmem [shape: f32[64,1], index: 1, kind: output, shape index: {}]
  %v2 = vld [vmem:[%s0] sm:$0xff]
  %vm3 = vcmask 7168
  %4 = vst.msk [vmem:[%s1] ss:$8 sm:$0xf] %vm3, %v2
  %5 = vst.msk [vmem:[%s1] ss:$8 sm:$0xf0] %vm3, %v2
  %v6 = vld [vmem:[%s0] sm:$0xff]
  %7 = vrot.lane.b32.xlu0 %v6, 127
  %v8 = vpop.permute.xlu0 %7
  %vm9 = vcmask 7168
  %s10 = scalar_lea.vmem %s1, 1
  %11 = vst.msk [vmem:[%s10] ss:$8 sm:$0xf] %vm9, %v8
  %s12 = scalar_lea.vmem %s1, 1
  %13 = vst.msk [vmem:[%s12] ss:$8 sm:$0xf0] %vm9, %v8
  %v14 = vld [vmem:[%s0] sm:$0xff]
  %15 = vrot.lane.b32.xlu0 %v14, 126
  %v16 = vpop.permute.xlu0 %15
  %vm17 = vcmask 7168
  %s18 = scalar_lea.vmem %s1, 2
  %19 = vst.msk [vmem:[%s18] ss:$8 sm:$0xf] %vm17, %v16
  %s20 = scalar_lea.vmem %s1, 2
  %21 = vst.msk [vmem:[%s20] ss:$8 sm:$0xf0] %vm17, %v16
  %v22 = vld [vmem:[%s0] sm:$0xff]
  %23 = vrot.lane.b32.xlu0 %v22, 125
  %v24 = vpop.permute.xlu0 %23
  %vm25 = vcmask 7168
  %s26 = scalar_lea.vmem %s1, 3
  %27 = vst.msk [vmem:[%s26] ss:$8 sm:$0xf] %vm25, %v24
  %s28 = scalar_lea.vmem %s1, 3
  %29 = vst.msk [vmem:[%s28] ss:$8 sm:$0xf0] %vm25, %v24
  %v30 = vld [vmem:[%s0] sm:$0xff]
  %31 = vrot.lane.b32.xlu0 %v30, 124
  %v32 = vpop.permute.xlu0 %31
  %vm33 = vcmask 7168
  %s34 = scalar_lea.vmem %s1, 4
  %35 = vst.msk [vmem:[%s34] ss:$8 sm:$0xf] %vm33, %v32
  %s36 = scalar_lea.vmem %s1, 4
  %37 = vst.msk [vmem:[%s36] ss:$8 sm:$0xf0] %vm33, %v32
  %v38 = vld [vmem:[%s0] sm:$0xff]
  %39 = vrot.lane.b32.xlu0 %v38, 123
  %v40 = vpop.permute.xlu0 %39
  %vm41 = vcmask 7168
  %s42 = scalar_lea.vmem %s1, 5
  %43 = vst.msk [vmem:[%s42] ss:$8 sm:$0xf] %vm41, %v40
  %s44 = scalar_lea.vmem %s1, 5
  %45 = vst.msk [vmem:[%s44] ss:$8 sm:$0xf0] %vm41, %v40
  %v46 = vld [vmem:[%s0] sm:$0xff]
  %47 = vrot.lane.b32.xlu0 %v46, 122
  %v48 = vpop.permute.xlu0 %47
  %vm49 = vcmask 7168
  %s50 = scalar_lea.vmem %s1, 6
  %51 = vst.msk [vmem:[%s50] ss:$8 sm:$0xf] %vm49, %v48
  %s52 = scalar_lea.vmem %s1, 6
  %53 = vst.msk [vmem:[%s52] ss:$8 sm:$0xf0] %vm49, %v48
  %v54 = vld [vmem:[%s0] sm:$0xff]
  %55 = vrot.lane.b32.xlu0 %v54, 121
  %v56 = vpop.permute.xlu0 %55
  %vm57 = vcmask 7168
  %s58 = scalar_lea.vmem %s1, 7
  %59 = vst.msk [vmem:[%s58] ss:$8 sm:$0xf] %vm57, %v56
  %s60 = scalar_lea.vmem %s1, 7
  %61 = vst.msk [vmem:[%s60] ss:$8 sm:$0xf0] %vm57, %v56

// kernel: _upsampling_forward.1
$region0: #{_upsampling_forward.1}
  #allocation0 [shape = 'u32[]', space=smem, size = 0x4, offset = 0x4, fixed_abs, tag = 'smem constant byte address 0x4 - core index']
  #allocation1 [shape = 'u32[144,128]{1,0:T(1,128)}', space=vmem, size = 0x12000, scoped, tag = 'internal scratch']
  #allocation2 [shape = 'f32[512,512]{1,0:T(8,128)}', space=vmem, size = 0x100000, scoped, tag = 'scratch operand']
  %s0 = inlined_call_operand.vmem [shape: f32[2,10,8,256], index: 0, kind: input, shape index: {}, may-alias: {0,1,2,3,4,5}]
  %s1 = inlined_call_operand.vmem [shape: f32[2,10,8,256], index: 1, kind: input, shape index: {}, may-alias: {0,1,2,3,4,5}]
  %s2 = inlined_call_operand.vmem [shape: f32[2,10,8,256], index: 2, kind: input, shape index: {}, may-alias: {0,1,2,3,4,5}]
  %s3 = inlined_call_operand.vmem [shape: f32[2,10,8,256], index: 3, kind: input, shape index: {}, may-alias: {0,1,2,3,4,5}]
  %s4 = inlined_call_operand.vmem [shape: f32[2,10,8,256], index: 4, kind: input, shape index: {}, may-alias: {0,1,2,3,4,5}]
  %s5 = inlined_call_operand.vmem [shape: f32[2,10,8,256], index: 5, kind: input, shape index: {}, may-alias: {0,1,2,3,4,5}]
  %s6 = inlined_call_operand.vmem [shape: f32[64,512], index: 6, kind: input, shape index: {}]
  %s7 = inlined_call_operand.vmem [shape: f32[64,1], index: 7, kind: input, shape index: {}]
  %s8 = inlined_call_operand.vmem [shape: f32[4,245], index: 8, kind: input, shape index: {}]
  %s9 = inlined_call_operand.vmem [shape: f32[2,2,64,512], index: 9, kind: output, shape index: {}]
  %s10 = sld [smem:[#allocation0]]
  $region69: #{_upsampling_forward.1} parent=0
    _
  %s12 = ssub.s32 1, %s10
  %s13 = scalar_select 0, %s12, %s10
  loop: start=0, step=1, limit=6
  $region2: #{_upsampling_forward.1} parent=0 // loop_pre_header
    _
  $region3: #{_upsampling_forward.1} parent=0 // loop_header
    %s15 = sphi 0, %s19
    %p16 = scmp.ge.s32.totalorder %s15, 6
    %s22 = sphi 0, %s34
    %s23 = sphi 0, %s30
    %s24 = sphi 0, %s22
    %s25 = sphi 0, %s23
    %s26 = sphi 0, %s24
    %s27 = sphi 0, %s25
    %s41 = sphi 0, %s43
    %s44 = sphi 0, %s41
    %s45 = sphi 0, %s44
    %s61 = sphi 0, %s45
    %s73 = sphi 0, %s75
    %s76 = sphi 0, %s73
    %s77 = sphi 0, %s76
    %s93 = sphi 0, %s77
    %s105 = sphi 0, %s107
    %s108 = sphi 0, %s105
    %s109 = sphi 0, %s108
    %s125 = sphi 0, %s109
    %s137 = sphi 0, %s139
    %s140 = sphi 0, %s137
    %s141 = sphi 0, %s140
    %s157 = sphi 0, %s141
    %s169 = sphi 0, %s171
    %s172 = sphi 0, %s169
    %s173 = sphi 0, %s172
    %s189 = sphi 0, %s173
    %s201 = sphi 0, %s203
    %s204 = sphi 0, %s201
    %s205 = sphi 0, %s204
    %s221 = sphi 0, %s205
    %s225 = sphi 0, %s225
    %s227 = sphi 0, %s225
    %s228 = sphi 0, %s227
    %s242 = sphi 0, %s228
    %s246 = sphi 0, %s246
    %s248 = sphi 0, %s246
    %s249 = sphi 0, %s248
    %s263 = sphi 0, %s249
    %s267 = sphi 0, %s267
    %s269 = sphi 0, %s267
    %s270 = sphi 0, %s269
    %s284 = sphi 0, %s270
    %s292 = sphi 0, %s294
    %s295 = sphi 0, %s292
    %s296 = sphi 0, %s295
    %s312 = sphi 0, %s296
  $region4: #{_upsampling_forward.1} parent=0 // loop_header_branch
    %18 = sbr.rel (%p16) target = $region8
  $region5: #{_upsampling_forward.1} parent=0 // loop_body
    %s20 = ssub.s32 %s15, 1
    %s21 = ssub.s32 %s15, 2
    %s28 = sadd.s32 1, %s23
    %p29 = scmp.ge.s32.totalorder %s28, 2
    %s30 = scalar_select %p29, 0, %s28
    %s31 = sadd.s32 1, %s22
    %s32 = scalar_select %p29, %s31, %s22
    %p33 = scmp.ge.s32.totalorder %s32, 2
    %s34 = scalar_select %p33, 0, %s32
    %s35 = smul.u32 %s23, 4
    %s36 = smul.u32 %s30, 4
    %s37 = ssub.s32 %s22, %s34
    %s38 = ssub.s32 %s35, %s36
    %s39 = sor.u32 %s37, %s38
    %p40 = scmp.eq.s32.totalorder %s39, 0
    %s42 = sadd.s32 %s41, 1
    %s43 = scalar_select %p40, %s41, %s42
    %p46 = pneg %p40
    %p47 = scmp.eq.s32.totalorder %s15, 3
    %p48 = por %p46, %p47
    %p49 = scmp.ne.s32.totalorder %s41, %s44
    %p50 = scmp.eq.s32.totalorder %s15, 0
    %p51 = por %p49, %p50
    %p52 = scmp.ne.s32.totalorder %s41, %s44
    %p53 = scmp.eq.s32.totalorder %s20, 3
    %p54 = por %p52, %p53
    %p55 = scmp.ne.s32.totalorder %s44, %s45
    %p56 = scmp.eq.s32.totalorder %s20, 0
    %p57 = por %p55, %p56
    %p58 = scmp.ne.s32.totalorder %s44, %s45
    %p59 = scmp.eq.s32.totalorder %s21, 3
    %p60 = por %p58, %p59
    %p62 = scmp.ne.s32.totalorder %s45, %s61
    %p63 = scmp.eq.s32.totalorder %s21, 0
    %p64 = por %p62, %p63
    %s65 = smul.u32 %s23, 4
    %s66 = sadd.s32 %s65, 1
    %s67 = smul.u32 %s30, 4
    %s68 = sadd.s32 %s67, 1
    %s69 = ssub.s32 %s22, %s34
    %s70 = ssub.s32 %s66, %s68
    %s71 = sor.u32 %s69, %s70
    %p72 = scmp.eq.s32.totalorder %s71, 0
    %s74 = sadd.s32 %s73, 1
    %s75 = scalar_select %p72, %s73, %s74
    %p78 = pneg %p72
    %p79 = scmp.eq.s32.totalorder %s15, 3
    %p80 = por %p78, %p79
    %p81 = scmp.ne.s32.totalorder %s73, %s76
    %p82 = scmp.eq.s32.totalorder %s15, 0
    %p83 = por %p81, %p82
    %p84 = scmp.ne.s32.totalorder %s73, %s76
    %p85 = scmp.eq.s32.totalorder %s20, 3
    %p86 = por %p84, %p85
    %p87 = scmp.ne.s32.totalorder %s76, %s77
    %p88 = scmp.eq.s32.totalorder %s20, 0
    %p89 = por %p87, %p88
    %p90 = scmp.ne.s32.totalorder %s76, %s77
    %p91 = scmp.eq.s32.totalorder %s21, 3
    %p92 = por %p90, %p91
    %p94 = scmp.ne.s32.totalorder %s77, %s93
    %p95 = scmp.eq.s32.totalorder %s21, 0
    %p96 = por %p94, %p95
    %s97 = smul.u32 %s23, 4
    %s98 = sadd.s32 %s97, 2
    %s99 = smul.u32 %s30, 4
    %s100 = sadd.s32 %s99, 2
    %s101 = ssub.s32 %s22, %s34
    %s102 = ssub.s32 %s98, %s100
    %s103 = sor.u32 %s101, %s102
    %p104 = scmp.eq.s32.totalorder %s103, 0
    %s106 = sadd.s32 %s105, 1
    %s107 = scalar_select %p104, %s105, %s106
    %p110 = pneg %p104
    %p111 = scmp.eq.s32.totalorder %s15, 3
    %p112 = por %p110, %p111
    %p113 = scmp.ne.s32.totalorder %s105, %s108
    %p114 = scmp.eq.s32.totalorder %s15, 0
    %p115 = por %p113, %p114
    %p116 = scmp.ne.s32.totalorder %s105, %s108
    %p117 = scmp.eq.s32.totalorder %s20, 3
    %p118 = por %p116, %p117
    %p119 = scmp.ne.s32.totalorder %s108, %s109
    %p120 = scmp.eq.s32.totalorder %s20, 0
    %p121 = por %p119, %p120
    %p122 = scmp.ne.s32.totalorder %s108, %s109
    %p123 = scmp.eq.s32.totalorder %s21, 3
    %p124 = por %p122, %p123
    %p126 = scmp.ne.s32.totalorder %s109, %s125
    %p127 = scmp.eq.s32.totalorder %s21, 0
    %p128 = por %p126, %p127
    %s129 = smul.u32 %s23, 4
    %s130 = sadd.s32 %s129, 3
    %s131 = smul.u32 %s30, 4
    %s132 = sadd.s32 %s131, 3
    %s133 = ssub.s32 %s22, %s34
    %s134 = ssub.s32 %s130, %s132
    %s135 = sor.u32 %s133, %s134
    %p136 = scmp.eq.s32.totalorder %s135, 0
    %s138 = sadd.s32 %s137, 1
    %s139 = scalar_select %p136, %s137, %s138
    %p142 = pneg %p136
    %p143 = scmp.eq.s32.totalorder %s15, 3
    %p144 = por %p142, %p143
    %p145 = scmp.ne.s32.totalorder %s137, %s140
    %p146 = scmp.eq.s32.totalorder %s15, 0
    %p147 = por %p145, %p146
    %p148 = scmp.ne.s32.totalorder %s137, %s140
    %p149 = scmp.eq.s32.totalorder %s20, 3
    %p150 = por %p148, %p149
    %p151 = scmp.ne.s32.totalorder %s140, %s141
    %p152 = scmp.eq.s32.totalorder %s20, 0
    %p153 = por %p151, %p152
    %p154 = scmp.ne.s32.totalorder %s140, %s141
    %p155 = scmp.eq.s32.totalorder %s21, 3
    %p156 = por %p154, %p155
    %p158 = scmp.ne.s32.totalorder %s141, %s157
    %p159 = scmp.eq.s32.totalorder %s21, 0
    %p160 = por %p158, %p159
    %s161 = smul.u32 %s23, 4
    %s162 = sadd.s32 %s161, 4
    %s163 = smul.u32 %s30, 4
    %s164 = sadd.s32 %s163, 4
    %s165 = ssub.s32 %s22, %s34
    %s166 = ssub.s32 %s162, %s164
    %s167 = sor.u32 %s165, %s166
    %p168 = scmp.eq.s32.totalorder %s167, 0
    %s170 = sadd.s32 %s169, 1
    %s171 = scalar_select %p168, %s169, %s170
    %p174 = pneg %p168
    %p175 = scmp.eq.s32.totalorder %s15, 3
    %p176 = por %p174, %p175
    %p177 = scmp.ne.s32.totalorder %s169, %s172
    %p178 = scmp.eq.s32.totalorder %s15, 0
    %p179 = por %p177, %p178
    %p180 = scmp.ne.s32.totalorder %s169, %s172
    %p181 = scmp.eq.s32.totalorder %s20, 3
    %p182 = por %p180, %p181
    %p183 = scmp.ne.s32.totalorder %s172, %s173
    %p184 = scmp.eq.s32.totalorder %s20, 0
    %p185 = por %p183, %p184
    %p186 = scmp.ne.s32.totalorder %s172, %s173
    %p187 = scmp.eq.s32.totalorder %s21, 3
    %p188 = por %p186, %p187
    %p190 = scmp.ne.s32.totalorder %s173, %s189
    %p191 = scmp.eq.s32.totalorder %s21, 0
    %p192 = por %p190, %p191
    %s193 = smul.u32 %s23, 4
    %s194 = sadd.s32 %s193, 5
    %s195 = smul.u32 %s30, 4
    %s196 = sadd.s32 %s195, 5
    %s197 = ssub.s32 %s22, %s34
    %s198 = ssub.s32 %s194, %s196
    %s199 = sor.u32 %s197, %s198
    %p200 = scmp.eq.s32.totalorder %s199, 0
    %s202 = sadd.s32 %s201, 1
    %s203 = scalar_select %p200, %s201, %s202
    %p206 = pneg %p200
    %p207 = scmp.eq.s32.totalorder %s15, 3
    %p208 = por %p206, %p207
    %p209 = scmp.ne.s32.totalorder %s201, %s204
    %p210 = scmp.eq.s32.totalorder %s15, 0
    %p211 = por %p209, %p210
    %p212 = scmp.ne.s32.totalorder %s201, %s204
    %p213 = scmp.eq.s32.totalorder %s20, 3
    %p214 = por %p212, %p213
    %p215 = scmp.ne.s32.totalorder %s204, %s205
    %p216 = scmp.eq.s32.totalorder %s20, 0
    %p217 = por %p215, %p216
    %p218 = scmp.ne.s32.totalorder %s204, %s205
    %p219 = scmp.eq.s32.totalorder %s21, 3
    %p220 = por %p218, %p219
    %p222 = scmp.ne.s32.totalorder %s205, %s221
    %p223 = scmp.eq.s32.totalorder %s21, 0
    %p224 = por %p222, %p223
    %s226 = sadd.s32 %s225, 1
    %p229 = scmp.eq.s32.totalorder %s15, 3
    %p230 = scmp.ne.s32.totalorder %s225, %s227
    %p231 = scmp.eq.s32.totalorder %s15, 0
    %p232 = por %p230, %p231
    %p233 = scmp.ne.s32.totalorder %s225, %s227
    %p234 = scmp.eq.s32.totalorder %s20, 3
    %p235 = por %p233, %p234
    %p236 = scmp.ne.s32.totalorder %s227, %s228
    %p237 = scmp.eq.s32.totalorder %s20, 0
    %p238 = por %p236, %p237
    %p239 = scmp.ne.s32.totalorder %s227, %s228
    %p240 = scmp.eq.s32.totalorder %s21, 3
    %p241 = por %p239, %p240
    %p243 = scmp.ne.s32.totalorder %s228, %s242
    %p244 = scmp.eq.s32.totalorder %s21, 0
    %p245 = por %p243, %p244
    %s247 = sadd.s32 %s246, 1
    %p250 = scmp.eq.s32.totalorder %s15, 3
    %p251 = scmp.ne.s32.totalorder %s246, %s248
    %p252 = scmp.eq.s32.totalorder %s15, 0
    %p253 = por %p251, %p252
    %p254 = scmp.ne.s32.totalorder %s246, %s248
    %p255 = scmp.eq.s32.totalorder %s20, 3
    %p256 = por %p254, %p255
    %p257 = scmp.ne.s32.totalorder %s248, %s249
    %p258 = scmp.eq.s32.totalorder %s20, 0
    %p259 = por %p257, %p258
    %p260 = scmp.ne.s32.totalorder %s248, %s249
    %p261 = scmp.eq.s32.totalorder %s21, 3
    %p262 = por %p260, %p261
    %p264 = scmp.ne.s32.totalorder %s249, %s263
    %p265 = scmp.eq.s32.totalorder %s21, 0
    %p266 = por %p264, %p265
    %s268 = sadd.s32 %s267, 1
    %p271 = scmp.eq.s32.totalorder %s15, 3
    %p272 = scmp.ne.s32.totalorder %s267, %s269
    %p273 = scmp.eq.s32.totalorder %s15, 0
    %p274 = por %p272, %p273
    %p275 = scmp.ne.s32.totalorder %s267, %s269
    %p276 = scmp.eq.s32.totalorder %s20, 3
    %p277 = por %p275, %p276
    %p278 = scmp.ne.s32.totalorder %s269, %s270
    %p279 = scmp.eq.s32.totalorder %s20, 0
    %p280 = por %p278, %p279
    %p281 = scmp.ne.s32.totalorder %s269, %s270
    %p282 = scmp.eq.s32.totalorder %s21, 3
    %p283 = por %p281, %p282
    %p285 = scmp.ne.s32.totalorder %s270, %s284
    %p286 = scmp.eq.s32.totalorder %s21, 0
    %p287 = por %p285, %p286
    %s288 = ssub.s32 %s22, %s34
    %s289 = ssub.s32 %s23, %s30
    %s290 = sor.u32 %s288, %s289
    %p291 = scmp.eq.s32.totalorder %s290, 0
    %s293 = sadd.s32 %s292, 1
    %s294 = scalar_select %p291, %s292, %s293
    %p297 = pneg %p291
    %p298 = scmp.eq.s32.totalorder %s15, 3
    %p299 = por %p297, %p298
    %p300 = scmp.ne.s32.totalorder %s292, %s295
    %p301 = scmp.eq.s32.totalorder %s15, 0
    %p302 = por %p300, %p301
    %p303 = scmp.ne.s32.totalorder %s292, %s295
    %p304 = scmp.eq.s32.totalorder %s20, 3
    %p305 = por %p303, %p304
    %p306 = scmp.ne.s32.totalorder %s295, %s296
    %p307 = scmp.eq.s32.totalorder %s20, 0
    %p308 = por %p306, %p307
    %p309 = scmp.ne.s32.totalorder %s295, %s296
    %p310 = scmp.eq.s32.totalorder %s21, 3
    %p311 = por %p309, %p310
    %p313 = scmp.ne.s32.totalorder %s296, %s312
    %p314 = scmp.eq.s32.totalorder %s21, 0
    %p315 = por %p313, %p314
    %p316 = scmp.le.s32.totalorder 1, %s15
    %p317 = scmp.lt.s32.totalorder %s15, 5
    %p318 = pnand %p316, %p317
    %p319 = pneg %p318
    // Predicated region
    $region9: #{_upsampling_forward.1} parent=5 // pred_check
      _
    $region10: #{_upsampling_forward.1} parent=5 // pred_check_branch
      %321 = sbr.rel (%p318) target = $region12
    $region11: #{_upsampling_forward.1} parent=5 // pred_region
      %s322 = ssub.s32 %s15, 1
      // Predicated region
      $region13: #{_upsampling_forward.1} parent=11 // pred_check
        %p323 = pneg %p238
      $region14: #{_upsampling_forward.1} parent=11 // pred_check_branch
        %325 = sbr.rel (%p323) target = $region16
      $region15: #{_upsampling_forward.1} parent=11 // pred_region
        _
      $region16: #{_upsampling_forward.1} parent=11 // pred_fallthru
        _
      // Predicated region
      $region17: #{_upsampling_forward.1} parent=11 // pred_check
        %p326 = pneg %p259
      $region18: #{_upsampling_forward.1} parent=11 // pred_check_branch
        %328 = sbr.rel (%p326) target = $region20
      $region19: #{_upsampling_forward.1} parent=11 // pred_region
        _
      $region20: #{_upsampling_forward.1} parent=11 // pred_fallthru
        _
      // Predicated region
      $region21: #{_upsampling_forward.1} parent=11 // pred_check
        %p329 = pneg %p280
      $region22: #{_upsampling_forward.1} parent=11 // pred_check_branch
        %331 = sbr.rel (%p329) target = $region24
      $region23: #{_upsampling_forward.1} parent=11 // pred_region
        _
      $region24: #{_upsampling_forward.1} parent=11 // pred_fallthru
        _
    $region12: #{_upsampling_forward.1} parent=5 // pred_fallthru
      _
    %p332 = scmp.lt.s32.totalorder %s15, 4
    // Predicated region
    $region25: #{_upsampling_forward.1} parent=5 // pred_check
      %p333 = pneg %p332
    $region26: #{_upsampling_forward.1} parent=5 // pred_check_branch
      %335 = sbr.rel (%p333) target = $region28
    $region27: #{_upsampling_forward.1} parent=5 // pred_region
      // Predicated region
      $region29: #{_upsampling_forward.1} parent=27 // pred_check
        %p336 = pneg %p51
      $region30: #{_upsampling_forward.1} parent=27 // pred_check_branch
        %338 = sbr.rel (%p336) target = $region32
      $region31: #{_upsampling_forward.1} parent=27 // pred_region
        %s339 = smul.u32 %s23, 4
        %p340 = scmp.lt.s32.totalorder %s22, 1
        %s341 = scalar_select %p340, %s22, 1
        %p342 = scmp.lt.s32.totalorder %s339, 9
        %s343 = scalar_select %p342, %s339, 9
        %s344 = smul.addr %s343, 2
        %s345 = smul.addr %s341, 20
        %s346 = sadd.s32 %s344, %s345
        %s347 = smul.addr %s346, 8
        %s348 = scalar_lea.vmem %s0, %s347
        %s349 = smul.u32 %s23, 4
      $region32: #{_upsampling_forward.1} parent=27 // pred_fallthru
        _
      // Predicated region
      $region33: #{_upsampling_forward.1} parent=27 // pred_check
        %p350 = pneg %p83
      $region34: #{_upsampling_forward.1} parent=27 // pred_check_branch
        %352 = sbr.rel (%p350) target = $region36
      $region35: #{_upsampling_forward.1} parent=27 // pred_region
        %s353 = smul.u32 %s23, 4
        %s354 = sadd.s32 %s353, 1
        %p355 = scmp.lt.s32.totalorder %s22, 1
        %s356 = scalar_select %p355, %s22, 1
        %p357 = scmp.lt.s32.totalorder %s354, 9
        %s358 = scalar_select %p357, %s354, 9
        %s359 = smul.addr %s358, 2
        %s360 = smul.addr %s356, 20
        %s361 = sadd.s32 %s359, %s360
        %s362 = smul.addr %s361, 8
        %s363 = scalar_lea.vmem %s1, %s362
        %s364 = smul.u32 %s23, 4
        %s365 = sadd.s32 %s364, 1
      $region36: #{_upsampling_forward.1} parent=27 // pred_fallthru
        _
      // Predicated region
      $region37: #{_upsampling_forward.1} parent=27 // pred_check
        %p366 = pneg %p115
      $region38: #{_upsampling_forward.1} parent=27 // pred_check_branch
        %368 = sbr.rel (%p366) target = $region40
      $region39: #{_upsampling_forward.1} parent=27 // pred_region
        %s369 = smul.u32 %s23, 4
        %s370 = sadd.s32 %s369, 2
        %p371 = scmp.lt.s32.totalorder %s22, 1
        %s372 = scalar_select %p371, %s22, 1
        %p373 = scmp.lt.s32.totalorder %s370, 9
        %s374 = scalar_select %p373, %s370, 9
        %s375 = smul.addr %s374, 2
        %s376 = smul.addr %s372, 20
        %s377 = sadd.s32 %s375, %s376
        %s378 = smul.addr %s377, 8
        %s379 = scalar_lea.vmem %s2, %s378
        %s380 = smul.u32 %s23, 4
        %s381 = sadd.s32 %s380, 2
      $region40: #{_upsampling_forward.1} parent=27 // pred_fallthru
        _
      // Predicated region
      $region41: #{_upsampling_forward.1} parent=27 // pred_check
        %p382 = pneg %p147
      $region42: #{_upsampling_forward.1} parent=27 // pred_check_branch
        %384 = sbr.rel (%p382) target = $region44
      $region43: #{_upsampling_forward.1} parent=27 // pred_region
        %s385 = smul.u32 %s23, 4
        %s386 = sadd.s32 %s385, 3
        %p387 = scmp.lt.s32.totalorder %s22, 1
        %s388 = scalar_select %p387, %s22, 1
        %p389 = scmp.lt.s32.totalorder %s386, 9
        %s390 = scalar_select %p389, %s386, 9
        %s391 = smul.addr %s390, 2
        %s392 = smul.addr %s388, 20
        %s393 = sadd.s32 %s391, %s392
        %s394 = smul.addr %s393, 8
        %s395 = scalar_lea.vmem %s3, %s394
        %s396 = smul.u32 %s23, 4
        %s397 = sadd.s32 %s396, 3
      $region44: #{_upsampling_forward.1} parent=27 // pred_fallthru
        _
      // Predicated region
      $region45: #{_upsampling_forward.1} parent=27 // pred_check
        %p398 = pneg %p179
      $region46: #{_upsampling_forward.1} parent=27 // pred_check_branch
        %400 = sbr.rel (%p398) target = $region48
      $region47: #{_upsampling_forward.1} parent=27 // pred_region
        %s401 = smul.u32 %s23, 4
        %s402 = sadd.s32 %s401, 4
        %p403 = scmp.lt.s32.totalorder %s22, 1
        %s404 = scalar_select %p403, %s22, 1
        %p405 = scmp.lt.s32.totalorder %s402, 9
        %s406 = scalar_select %p405, %s402, 9
        %s407 = smul.addr %s406, 2
        %s408 = smul.addr %s404, 20
        %s409 = sadd.s32 %s407, %s408
        %s410 = smul.addr %s409, 8
        %s411 = scalar_lea.vmem %s4, %s410
        %s412 = smul.u32 %s23, 4
        %s413 = sadd.s32 %s412, 4
      $region48: #{_upsampling_forward.1} parent=27 // pred_fallthru
        _
      // Predicated region
      $region49: #{_upsampling_forward.1} parent=27 // pred_check
        %p414 = pneg %p211
      $region50: #{_upsampling_forward.1} parent=27 // pred_check_branch
        %416 = sbr.rel (%p414) target = $region52
      $region51: #{_upsampling_forward.1} parent=27 // pred_region
        %s417 = smul.u32 %s23, 4
        %s418 = sadd.s32 %s417, 5
        %p419 = scmp.lt.s32.totalorder %s22, 1
        %s420 = scalar_select %p419, %s22, 1
        %p421 = scmp.lt.s32.totalorder %s418, 9
        %s422 = scalar_select %p421, %s418, 9
        %s423 = smul.addr %s422, 2
        %s424 = smul.addr %s420, 20
        %s425 = sadd.s32 %s423, %s424
        %s426 = smul.addr %s425, 8
        %s427 = scalar_lea.vmem %s5, %s426
        %s428 = smul.u32 %s23, 4
        %s429 = sadd.s32 %s428, 5
      $region52: #{_upsampling_forward.1} parent=27 // pred_fallthru
        _
    $region28: #{_upsampling_forward.1} parent=5 // pred_fallthru
      _
    %p430 = scmp.le.s32.totalorder 1, %s15
    %p431 = scmp.lt.s32.totalorder %s15, 5
    %p432 = pnand %p430, %p431
    %p433 = pneg %p432
    // Predicated region
    $region53: #{_upsampling_forward.1} parent=5 // pred_check
      _
    $region54: #{_upsampling_forward.1} parent=5 // pred_check_branch
      %435 = sbr.rel (%p432) target = $region56
    $region55: #{_upsampling_forward.1} parent=5 // pred_region
      %s436 = ssub.s32 %s15, 1
      %s437 = smul.u32 %s25, 4
      %p438 = scmp.lt.s32.totalorder %s24, 1
      %s439 = scalar_select %p438, %s24, 1
      %p440 = scmp.lt.s32.totalorder %s437, 9
      %s441 = scalar_select %p440, %s437, 9
      %s442 = smul.addr %s441, 2
      %s443 = smul.addr %s439, 20
      %s444 = sadd.s32 %s442, %s443
      %s445 = smul.addr %s444, 8
      %s446 = scalar_lea.vmem %s0, %s445
      %p447 = pneg %p57
      %p448 = pneg %p54
      %s449 = smul.u32 %s25, 4
      %s450 = sadd.s32 %s449, 1
      %p451 = scmp.lt.s32.totalorder %s24, 1
      %s452 = scalar_select %p451, %s24, 1
      %p453 = scmp.lt.s32.totalorder %s450, 9
      %s454 = scalar_select %p453, %s450, 9
      %s455 = smul.addr %s454, 2
      %s456 = smul.addr %s452, 20
      %s457 = sadd.s32 %s455, %s456
      %s458 = smul.addr %s457, 8
      %s459 = scalar_lea.vmem %s1, %s458
      %p460 = pneg %p89
      %p461 = pneg %p86
      %s462 = smul.u32 %s25, 4
      %s463 = sadd.s32 %s462, 2
      %p464 = scmp.lt.s32.totalorder %s24, 1
      %s465 = scalar_select %p464, %s24, 1
      %p466 = scmp.lt.s32.totalorder %s463, 9
      %s467 = scalar_select %p466, %s463, 9
      %s468 = smul.addr %s467, 2
      %s469 = smul.addr %s465, 20
      %s470 = sadd.s32 %s468, %s469
      %s471 = smul.addr %s470, 8
      %s472 = scalar_lea.vmem %s2, %s471
      %p473 = pneg %p121
      %p474 = pneg %p118
      %s475 = smul.u32 %s25, 4
      %s476 = sadd.s32 %s475, 3
      %p477 = scmp.lt.s32.totalorder %s24, 1
      %s478 = scalar_select %p477, %s24, 1
      %p479 = scmp.lt.s32.totalorder %s476, 9
      %s480 = scalar_select %p479, %s476, 9
      %s481 = smul.addr %s480, 2
      %s482 = smul.addr %s478, 20
      %s483 = sadd.s32 %s481, %s482
      %s484 = smul.addr %s483, 8
      %s485 = scalar_lea.vmem %s3, %s484
      %p486 = pneg %p153
      %p487 = pneg %p150
      %s488 = smul.u32 %s25, 4
      %s489 = sadd.s32 %s488, 4
      %p490 = scmp.lt.s32.totalorder %s24, 1
      %s491 = scalar_select %p490, %s24, 1
      %p492 = scmp.lt.s32.totalorder %s489, 9
      %s493 = scalar_select %p492, %s489, 9
      %s494 = smul.addr %s493, 2
      %s495 = smul.addr %s491, 20
      %s496 = sadd.s32 %s494, %s495
      %s497 = smul.addr %s496, 8
      %s498 = scalar_lea.vmem %s4, %s497
      %p499 = pneg %p185
      %p500 = pneg %p182
      %s501 = smul.u32 %s25, 4
      %s502 = sadd.s32 %s501, 5
      %p503 = scmp.lt.s32.totalorder %s24, 1
      %s504 = scalar_select %p503, %s24, 1
      %p505 = scmp.lt.s32.totalorder %s502, 9
      %s506 = scalar_select %p505, %s502, 9
      %s507 = smul.addr %s506, 2
      %s508 = smul.addr %s504, 20
      %s509 = sadd.s32 %s507, %s508
      %s510 = smul.addr %s509, 8
      %s511 = scalar_lea.vmem %s5, %s510
      %p512 = pneg %p217
      %p513 = pneg %p214
      %p514 = pneg %p238
      %p515 = pneg %p235
      %p516 = pneg %p259
      %p517 = pneg %p256
      %p518 = pneg %p280
      %p519 = pneg %p277
      %p520 = pneg %p308
      %p521 = pneg %p305
      %p522 = scmp.lt.s32.totalorder %s24, 1
      %s523 = scalar_select %p522, %s24, 1
      %p524 = scmp.lt.s32.totalorder %s25, 1
      %s525 = scalar_select %p524, %s25, 1
      %s526 = smul.addr %s525, 32
      %s527 = smul.addr %s523, 64
      %s528 = sadd.s32 %s526, %s527
      %s529 = smul.addr %s528, 8
      %s530 = scalar_lea.vmem %s9, %s529
      %s531 = smul.u32 %s25, 4
      %p532 = scmp.lt.s32.totalorder %s24, 1
      %s533 = scalar_select %p532, %s24, 1
      %p534 = scmp.lt.s32.totalorder %s531, 9
      %s535 = scalar_select %p534, %s531, 9
      %s536 = smul.addr %s535, 2
      %s537 = smul.addr %s533, 20
      %s538 = sadd.s32 %s536, %s537
      %s539 = smul.addr %s538, 8
      %s540 = scalar_lea.vmem %s0, %s539
      %s541 = smul.u32 %s25, 4
      %s542 = smul.u32 %s25, 4
      %s543 = sadd.s32 %s542, 1
      %p544 = scmp.lt.s32.totalorder %s24, 1
      %s545 = scalar_select %p544, %s24, 1
      %p546 = scmp.lt.s32.totalorder %s543, 9
      %s547 = scalar_select %p546, %s543, 9
      %s548 = smul.addr %s547, 2
      %s549 = smul.addr %s545, 20
      %s550 = sadd.s32 %s548, %s549
      %s551 = smul.addr %s550, 8
      %s552 = scalar_lea.vmem %s1, %s551
      %s553 = smul.u32 %s25, 4
      %s554 = sadd.s32 %s553, 1
      %s555 = smul.u32 %s25, 4
      %s556 = sadd.s32 %s555, 2
      %p557 = scmp.lt.s32.totalorder %s24, 1
      %s558 = scalar_select %p557, %s24, 1
      %p559 = scmp.lt.s32.totalorder %s556, 9
      %s560 = scalar_select %p559, %s556, 9
      %s561 = smul.addr %s560, 2
      %s562 = smul.addr %s558, 20
      %s563 = sadd.s32 %s561, %s562
      %s564 = smul.addr %s563, 8
      %s565 = scalar_lea.vmem %s2, %s564
      %s566 = smul.u32 %s25, 4
      %s567 = sadd.s32 %s566, 2
      %s568 = smul.u32 %s25, 4
      %s569 = sadd.s32 %s568, 3
      %p570 = scmp.lt.s32.totalorder %s24, 1
      %s571 = scalar_select %p570, %s24, 1
      %p572 = scmp.lt.s32.totalorder %s569, 9
      %s573 = scalar_select %p572, %s569, 9
      %s574 = smul.addr %s573, 2
      %s575 = smul.addr %s571, 20
      %s576 = sadd.s32 %s574, %s575
      %s577 = smul.addr %s576, 8
      %s578 = scalar_lea.vmem %s3, %s577
      %s579 = smul.u32 %s25, 4
      %s580 = sadd.s32 %s579, 3
      %s581 = smul.u32 %s25, 4
      %s582 = sadd.s32 %s581, 4
      %p583 = scmp.lt.s32.totalorder %s24, 1
      %s584 = scalar_select %p583, %s24, 1
      %p585 = scmp.lt.s32.totalorder %s582, 9
      %s586 = scalar_select %p585, %s582, 9
      %s587 = smul.addr %s586, 2
      %s588 = smul.addr %s584, 20
      %s589 = sadd.s32 %s587, %s588
      %s590 = smul.addr %s589, 8
      %s591 = scalar_lea.vmem %s4, %s590
      %s592 = smul.u32 %s25, 4
      %s593 = sadd.s32 %s592, 4
      %s594 = smul.u32 %s25, 4
      %s595 = sadd.s32 %s594, 5
      %p596 = scmp.lt.s32.totalorder %s24, 1
      %s597 = scalar_select %p596, %s24, 1
      %p598 = scmp.lt.s32.totalorder %s595, 9
      %s599 = scalar_select %p598, %s595, 9
      %s600 = smul.addr %s599, 2
      %s601 = smul.addr %s597, 20
      %s602 = sadd.s32 %s600, %s601
      %s603 = smul.addr %s602, 8
      %s604 = scalar_lea.vmem %s5, %s603
      %s605 = smul.u32 %s25, 4
      %s606 = sadd.s32 %s605, 5
      %p607 = scmp.lt.s32.totalorder %s24, 1
      %s608 = scalar_select %p607, %s24, 1
      %p609 = scmp.lt.s32.totalorder %s25, 1
      %s610 = scalar_select %p609, %s25, 1
      %s611 = smul.addr %s610, 32
      %s612 = smul.addr %s608, 64
      %s613 = sadd.s32 %s611, %s612
      %s614 = smul.addr %s613, 8
      %s615 = scalar_lea.vmem %s9, %s614
      %v616 = vld [vmem:[%s540] sm:$0xff]
      %v617 = vld [vmem:[%s540 + $0x8] sm:$0xff]
      %v618 = vld [vmem:[%s552] sm:$0xff]
      %v619 = vld [vmem:[%s552 + $0x8] sm:$0xff]
      %v620 = vld [vmem:[%s565] sm:$0xff]
      %v621 = vld [vmem:[%s565 + $0x8] sm:$0xff]
      %p622 = scmp.eq.s32.totalorder %s25, 0
      %s623 = scalar_select %p622, 0.0, 1.0
      %s624 = smul.f32 %s623, 0.75
      %v625 = vstv %s624
      %v626 = vmul.f32 %v625, %v616
      %v627 = vmul.f32 %v625, %v617
      %s628 = smul.f32 %s623, 0.25
      %v629 = vstv %s628
      %v630 = vmul.f32 %v629, %v618
      %v631 = vmul.f32 %v629, %v619
      %v632 = vadd.f32 %v626, %v630
      %v633 = vadd.f32 %v627, %v631
      %v634 = vmul.f32 %v616, 0.25
      %v635 = vmul.f32 %v617, 0.25
      %v636 = vmul.f32 %v618, 0.75
      %v637 = vmul.f32 %v619, 0.75
      %v638 = vadd.f32 %v634, %v636
      %v639 = vadd.f32 %v635, %v637
      %v640 = vmul.f32 %v620, 0.25
      %v641 = vmul.f32 %v621, 0.25
      %v642 = vadd.f32 %v636, %v640
      %v643 = vadd.f32 %v637, %v641
      %v644 = vmul.f32 %v618, 0.25
      %v645 = vmul.f32 %v619, 0.25
      %v646 = vmul.f32 %v620, 0.75
      %v647 = vmul.f32 %v621, 0.75
      %v648 = vadd.f32 %v644, %v646
      %v649 = vadd.f32 %v645, %v647
      %v650 = vmul.f32 %v632, 0.25
      %v651 = vmul.f32 %v633, 0.25
      %v652 = vmul.f32 %v632, 0.75
      %v653 = vmul.f32 %v633, 0.75
      %656 = vrot.lane.b32.xlu0 %v652, 118
      %v657 = vpop.permute.xlu0 %656
      %658 = vrot.lane.b32.xlu0 %v653, 118
      %v659 = vpop.permute.xlu0 %658
      %vm660 = vcmask 965632
      %v661 = vsel %vm660, %v657, %v659
      %v664 = vadd.f32 %v650, %v661
      %v665 = vadd.f32 %v651, %v659
      %668 = vrot.lane.b32.xlu0 %v650, 118
      %v669 = vpop.permute.xlu0 %668
      %670 = vrot.lane.b32.xlu0 %v651, 118
      %v671 = vpop.permute.xlu0 %670
      %v672 = vsel %vm660, %v669, %v671
      %v675 = vadd.f32 %v652, %v672
      %v676 = vadd.f32 %v653, %v671
      %v677 = vmul.f32 %v664, 0.25
      %v678 = vmul.f32 %v665, 0.25
      %v679 = vmul.f32 %v664, 0.75
      %v680 = vmul.f32 %v665, 0.75
      %683 = vrot.lane.b32.xlu0 %v679, 127
      %v684 = vpop.permute.xlu0 %683
      %685 = vrot.lane.b32.xlu0 %v680, 127
      %v686 = vpop.permute.xlu0 %685
      %vm687 = vcmask 1039360
      %v688 = vsel %vm687, %v684, %v686
      %v691 = vadd.f32 %v677, %v688
      %v692 = vadd.f32 %v678, %v686
      %v693 = vld [vmem:[%s8] ss:$4 sm:$0x3]
      %v695 = vlaneseq
      %v696 = vshrl.u32 %v695, 7
      %v697 = vsub.s32 0, %v696
      %v698 = vrot.slane %v693, %v697
      %v699 = vlaneseq
      %v700 = vshrl.u32 %v699, 7
      %v701 = vsub.s32 1, %v700
      %v702 = vrot.slane %v693, %v701
      %v705 = vmul.f32 %v691, %v698
      %v706 = vmul.f32 %v692, %v702
      %709 = vrot.lane.b32.xlu0 %v677, 127
      %v710 = vpop.permute.xlu0 %709
      %711 = vrot.lane.b32.xlu0 %v678, 127
      %v712 = vpop.permute.xlu0 %711
      %v713 = vsel %vm687, %v710, %v712
      %v716 = vadd.f32 %v679, %v713
      %v717 = vadd.f32 %v680, %v712
      %s718 = scalar_lea.vmem %s8, 1
      %v719 = vld [vmem:[%s718] ss:$4 sm:$0x3]
      %v721 = vlaneseq
      %v722 = vshrl.u32 %v721, 7
      %v723 = vsub.s32 0, %v722
      %v724 = vrot.slane %v719, %v723
      %v725 = vlaneseq
      %v726 = vshrl.u32 %v725, 7
      %v727 = vsub.s32 1, %v726
      %v728 = vrot.slane %v719, %v727
      %v731 = vmul.f32 %v716, %v724
      %v732 = vmul.f32 %v717, %v728
      %733 = vst [vmem:[#allocation2] sm:$0xff] %v705
      %736 = vrot.lane.b32.xlu0 %v705, 127
      %v737 = vpop.permute.xlu0 %736
      %738 = vrot.lane.b32.xlu0 %v706, 127
      %v739 = vpop.permute.xlu0 %738
      %v740 = vsel %vm687, %v737, %v739
      %742 = vst [vmem:[#allocation2 + $0x80] sm:$0xff] %v740
      %743 = vrot.lane.b32.xlu0 %v705, 118
      %v744 = vpop.permute.xlu0 %743
      %745 = vrot.lane.b32.xlu0 %v706, 118
      %v746 = vpop.permute.xlu0 %745
      %v747 = vsel %vm660, %v744, %v746
      %749 = vst [vmem:[#allocation2 + $0x200] sm:$0xff] %v747
      %750 = vrot.lane.b32.xlu0 %v705, 117
      %v751 = vpop.permute.xlu0 %750
      %752 = vrot.lane.b32.xlu0 %v706, 117
      %v753 = vpop.permute.xlu0 %752
      %vm754 = vcmask 957440
      %v755 = vsel %vm754, %v751, %v753
      %757 = vst [vmem:[#allocation2 + $0x280] sm:$0xff] %v755
      %758 = vst [vmem:[#allocation2 + $0x100] sm:$0xff] %v731
      %761 = vrot.lane.b32.xlu0 %v731, 127
      %v762 = vpop.permute.xlu0 %761
      %763 = vrot.lane.b32.xlu0 %v732, 127
      %v764 = vpop.permute.xlu0 %763
      %v765 = vsel %vm687, %v762, %v764
      %767 = vst [vmem:[#allocation2 + $0x180] sm:$0xff] %v765
      %768 = vrot.lane.b32.xlu0 %v731, 118
      %v769 = vpop.permute.xlu0 %768
      %770 = vrot.lane.b32.xlu0 %v732, 118
      %v771 = vpop.permute.xlu0 %770
      %v772 = vsel %vm660, %v769, %v771
      %774 = vst [vmem:[#allocation2 + $0x300] sm:$0xff] %v772
      %775 = vrot.lane.b32.xlu0 %v731, 117
      %v776 = vpop.permute.xlu0 %775
      %777 = vrot.lane.b32.xlu0 %v732, 117
      %v778 = vpop.permute.xlu0 %777
      %v779 = vsel %vm754, %v776, %v778
      %781 = vst [vmem:[#allocation2 + $0x380] sm:$0xff] %v779
      %v782 = vmul.f32 %v675, 0.25
      %v783 = vmul.f32 %v676, 0.25
      %v784 = vmul.f32 %v675, 0.75
      %v785 = vmul.f32 %v676, 0.75
      %788 = vrot.lane.b32.xlu0 %v784, 127
      %v789 = vpop.permute.xlu0 %788
      %790 = vrot.lane.b32.xlu0 %v785, 127
      %v791 = vpop.permute.xlu0 %790
      %v792 = vsel %vm687, %v789, %v791
      %v795 = vadd.f32 %v782, %v792
      %v796 = vadd.f32 %v783, %v791
      %s797 = scalar_lea.vmem %s8, 2
      %v798 = vld [vmem:[%s797] ss:$4 sm:$0x3]
      %v800 = vlaneseq
      %v801 = vshrl.u32 %v800, 7
      %v802 = vsub.s32 0, %v801
      %v803 = vrot.slane %v798, %v802
      %v804 = vlaneseq
      %v805 = vshrl.u32 %v804, 7
      %v806 = vsub.s32 1, %v805
      %v807 = vrot.slane %v798, %v806
      %v810 = vmul.f32 %v795, %v803
      %v811 = vmul.f32 %v796, %v807
      %814 = vrot.lane.b32.xlu0 %v782, 127
      %v815 = vpop.permute.xlu0 %814
      %816 = vrot.lane.b32.xlu0 %v783, 127
      %v817 = vpop.permute.xlu0 %816
      %v818 = vsel %vm687, %v815, %v817
      %v821 = vadd.f32 %v784, %v818
      %v822 = vadd.f32 %v785, %v817
      %s823 = scalar_lea.vmem %s8, 3
      %v824 = vld [vmem:[%s823] ss:$4 sm:$0x3]
      %v826 = vlaneseq
      %v827 = vshrl.u32 %v826, 7
      %v828 = vsub.s32 0, %v827
      %v829 = vrot.slane %v824, %v828
      %v830 = vlaneseq
      %v831 = vshrl.u32 %v830, 7
      %v832 = vsub.s32 1, %v831
      %v833 = vrot.slane %v824, %v832
      %v836 = vmul.f32 %v821, %v829
      %v837 = vmul.f32 %v822, %v833
      %838 = vst [vmem:[#allocation2 + $0x400] sm:$0xff] %v810
      %841 = vrot.lane.b32.xlu0 %v810, 127
      %v842 = vpop.permute.xlu0 %841
      %843 = vrot.lane.b32.xlu0 %v811, 127
      %v844 = vpop.permute.xlu0 %843
      %v845 = vsel %vm687, %v842, %v844
      %847 = vst [vmem:[#allocation2 + $0x480] sm:$0xff] %v845
      %848 = vrot.lane.b32.xlu0 %v810, 118
      %v849 = vpop.permute.xlu0 %848
      %850 = vrot.lane.b32.xlu0 %v811, 118
      %v851 = vpop.permute.xlu0 %850
      %v852 = vsel %vm660, %v849, %v851
      %854 = vst [vmem:[#allocation2 + $0x600] sm:$0xff] %v852
      %855 = vrot.lane.b32.xlu0 %v810, 117
      %v856 = vpop.permute.xlu0 %855
      %857 = vrot.lane.b32.xlu0 %v811, 117
      %v858 = vpop.permute.xlu0 %857
      %v859 = vsel %vm754, %v856, %v858
      %861 = vst [vmem:[#allocation2 + $0x680] sm:$0xff] %v859
      %862 = vst [vmem:[#allocation2 + $0x500] sm:$0xff] %v836
      %865 = vrot.lane.b32.xlu0 %v836, 127
      %v866 = vpop.permute.xlu0 %865
      %867 = vrot.lane.b32.xlu0 %v837, 127
      %v868 = vpop.permute.xlu0 %867
      %v869 = vsel %vm687, %v866, %v868
      %871 = vst [vmem:[#allocation2 + $0x580] sm:$0xff] %v869
      %872 = vrot.lane.b32.xlu0 %v836, 118
      %v873 = vpop.permute.xlu0 %872
      %874 = vrot.lane.b32.xlu0 %v837, 118
      %v875 = vpop.permute.xlu0 %874
      %v876 = vsel %vm660, %v873, %v875
      %878 = vst [vmem:[#allocation2 + $0x700] sm:$0xff] %v876
      %879 = vrot.lane.b32.xlu0 %v836, 117
      %v880 = vpop.permute.xlu0 %879
      %881 = vrot.lane.b32.xlu0 %v837, 117
      %v882 = vpop.permute.xlu0 %881
      %v883 = vsel %vm754, %v880, %v882
      %885 = vst [vmem:[#allocation2 + $0x780] sm:$0xff] %v883
      %v886 = vmul.f32 %v638, 0.25
      %v887 = vmul.f32 %v639, 0.25
      %v888 = vmul.f32 %v638, 0.75
      %v889 = vmul.f32 %v639, 0.75
      %892 = vrot.lane.b32.xlu0 %v888, 118
      %v893 = vpop.permute.xlu0 %892
      %894 = vrot.lane.b32.xlu0 %v889, 118
      %v895 = vpop.permute.xlu0 %894
      %v896 = vsel %vm660, %v893, %v895
      %v899 = vadd.f32 %v886, %v896
      %v900 = vadd.f32 %v887, %v895
      %903 = vrot.lane.b32.xlu0 %v886, 118
      %v904 = vpop.permute.xlu0 %903
      %905 = vrot.lane.b32.xlu0 %v887, 118
      %v906 = vpop.permute.xlu0 %905
      %v907 = vsel %vm660, %v904, %v906
      %v910 = vadd.f32 %v888, %v907
      %v911 = vadd.f32 %v889, %v906
      %v912 = vmul.f32 %v899, 0.25
      %v913 = vmul.f32 %v900, 0.25
      %v914 = vmul.f32 %v899, 0.75
      %v915 = vmul.f32 %v900, 0.75
      %918 = vrot.lane.b32.xlu0 %v914, 127
      %v919 = vpop.permute.xlu0 %918
      %920 = vrot.lane.b32.xlu0 %v915, 127
      %v921 = vpop.permute.xlu0 %920
      %v922 = vsel %vm687, %v919, %v921
      %v925 = vadd.f32 %v912, %v922
      %v926 = vadd.f32 %v913, %v921
      %v927 = vld [vmem:[%s8] ss:$4 sm:$0x3]
      %v929 = vlaneseq
      %v930 = vshrl.u32 %v929, 7
      %v931 = vsub.s32 0, %v930
      %v932 = vrot.slane %v927, %v931
      %v933 = vlaneseq
      %v934 = vshrl.u32 %v933, 7
      %v935 = vsub.s32 1, %v934
      %v936 = vrot.slane %v927, %v935
      %v939 = vmul.f32 %v925, %v932
      %v940 = vmul.f32 %v926, %v936
      %943 = vrot.lane.b32.xlu0 %v912, 127
      %v944 = vpop.permute.xlu0 %943
      %945 = vrot.lane.b32.xlu0 %v913, 127
      %v946 = vpop.permute.xlu0 %945
      %v947 = vsel %vm687, %v944, %v946
      %v950 = vadd.f32 %v914, %v947
      %v951 = vadd.f32 %v915, %v946
      %v952 = vld [vmem:[%s718] ss:$4 sm:$0x3]
      %v954 = vlaneseq
      %v955 = vshrl.u32 %v954, 7
      %v956 = vsub.s32 0, %v955
      %v957 = vrot.slane %v952, %v956
      %v958 = vlaneseq
      %v959 = vshrl.u32 %v958, 7
      %v960 = vsub.s32 1, %v959
      %v961 = vrot.slane %v952, %v960
      %v964 = vmul.f32 %v950, %v957
      %v965 = vmul.f32 %v951, %v961
      %966 = vst [vmem:[#allocation2 + $0x20] sm:$0xff] %v939
      %969 = vrot.lane.b32.xlu0 %v939, 127
      %v970 = vpop.permute.xlu0 %969
      %971 = vrot.lane.b32.xlu0 %v940, 127
      %v972 = vpop.permute.xlu0 %971
      %v973 = vsel %vm687, %v970, %v972
      %975 = vst [vmem:[#allocation2 + $0xa0] sm:$0xff] %v973
      %976 = vrot.lane.b32.xlu0 %v939, 118
      %v977 = vpop.permute.xlu0 %976
      %978 = vrot.lane.b32.xlu0 %v940, 118
      %v979 = vpop.permute.xlu0 %978
      %v980 = vsel %vm660, %v977, %v979
      %982 = vst [vmem:[#allocation2 + $0x220] sm:$0xff] %v980
      %983 = vrot.lane.b32.xlu0 %v939, 117
      %v984 = vpop.permute.xlu0 %983
      %985 = vrot.lane.b32.xlu0 %v940, 117
      %v986 = vpop.permute.xlu0 %985
      %v987 = vsel %vm754, %v984, %v986
      %989 = vst [vmem:[#allocation2 + $0x2a0] sm:$0xff] %v987
      %990 = vst [vmem:[#allocation2 + $0x120] sm:$0xff] %v964
      %993 = vrot.lane.b32.xlu0 %v964, 127
      %v994 = vpop.permute.xlu0 %993
      %995 = vrot.lane.b32.xlu0 %v965, 127
      %v996 = vpop.permute.xlu0 %995
      %v997 = vsel %vm687, %v994, %v996
      %999 = vst [vmem:[#allocation2 + $0x1a0] sm:$0xff] %v997
      %1000 = vrot.lane.b32.xlu0 %v964, 118
      %v1001 = vpop.permute.xlu0 %1000
      %1002 = vrot.lane.b32.xlu0 %v965, 118
      %v1003 = vpop.permute.xlu0 %1002
      %v1004 = vsel %vm660, %v1001, %v1003
      %1006 = vst [vmem:[#allocation2 + $0x320] sm:$0xff] %v1004
      %1007 = vrot.lane.b32.xlu0 %v964, 117
      %v1008 = vpop.permute.xlu0 %1007
      %1009 = vrot.lane.b32.xlu0 %v965, 117
      %v1010 = vpop.permute.xlu0 %1009
      %v1011 = vsel %vm754, %v1008, %v1010
      %1013 = vst [vmem:[#allocation2 + $0x3a0] sm:$0xff] %v1011
      %v1014 = vmul.f32 %v910, 0.25
      %v1015 = vmul.f32 %v911, 0.25
      %v1016 = vmul.f32 %v910, 0.75
      %v1017 = vmul.f32 %v911, 0.75
      %1020 = vrot.lane.b32.xlu0 %v1016, 127
      %v1021 = vpop.permute.xlu0 %1020
      %1022 = vrot.lane.b32.xlu0 %v1017, 127
      %v1023 = vpop.permute.xlu0 %1022
      %v1024 = vsel %vm687, %v1021, %v1023
      %v1027 = vadd.f32 %v1014, %v1024
      %v1028 = vadd.f32 %v1015, %v1023
      %v1029 = vld [vmem:[%s797] ss:$4 sm:$0x3]
      %v1031 = vlaneseq
      %v1032 = vshrl.u32 %v1031, 7
      %v1033 = vsub.s32 0, %v1032
      %v1034 = vrot.slane %v1029, %v1033
      %v1035 = vlaneseq
      %v1036 = vshrl.u32 %v1035, 7
      %v1037 = vsub.s32 1, %v1036
      %v1038 = vrot.slane %v1029, %v1037
      %v1041 = vmul.f32 %v1027, %v1034
      %v1042 = vmul.f32 %v1028, %v1038
      %1045 = vrot.lane.b32.xlu0 %v1014, 127
      %v1046 = vpop.permute.xlu0 %1045
      %1047 = vrot.lane.b32.xlu0 %v1015, 127
      %v1048 = vpop.permute.xlu0 %1047
      %v1049 = vsel %vm687, %v1046, %v1048
      %v1052 = vadd.f32 %v1016, %v1049
      %v1053 = vadd.f32 %v1017, %v1048
      %v1054 = vld [vmem:[%s823] ss:$4 sm:$0x3]
      %v1056 = vlaneseq
      %v1057 = vshrl.u32 %v1056, 7
      %v1058 = vsub.s32 0, %v1057
      %v1059 = vrot.slane %v1054, %v1058
      %v1060 = vlaneseq
      %v1061 = vshrl.u32 %v1060, 7
      %v1062 = vsub.s32 1, %v1061
      %v1063 = vrot.slane %v1054, %v1062
      %v1066 = vmul.f32 %v1052, %v1059
      %v1067 = vmul.f32 %v1053, %v1063
      %1068 = vst [vmem:[#allocation2 + $0x420] sm:$0xff] %v1041
      %1071 = vrot.lane.b32.xlu0 %v1041, 127
      %v1072 = vpop.permute.xlu0 %1071
      %1073 = vrot.lane.b32.xlu0 %v1042, 127
      %v1074 = vpop.permute.xlu0 %1073
      %v1075 = vsel %vm687, %v1072, %v1074
      %1077 = vst [vmem:[#allocation2 + $0x4a0] sm:$0xff] %v1075
      %1078 = vrot.lane.b32.xlu0 %v1041, 118
      %v1079 = vpop.permute.xlu0 %1078
      %1080 = vrot.lane.b32.xlu0 %v1042, 118
      %v1081 = vpop.permute.xlu0 %1080
      %v1082 = vsel %vm660, %v1079, %v1081
      %1084 = vst [vmem:[#allocation2 + $0x620] sm:$0xff] %v1082
      %1085 = vrot.lane.b32.xlu0 %v1041, 117
      %v1086 = vpop.permute.xlu0 %1085
      %1087 = vrot.lane.b32.xlu0 %v1042, 117
      %v1088 = vpop.permute.xlu0 %1087
      %v1089 = vsel %vm754, %v1086, %v1088
      %1091 = vst [vmem:[#allocation2 + $0x6a0] sm:$0xff] %v1089
      %1092 = vst [vmem:[#allocation2 + $0x520] sm:$0xff] %v1066
      %1095 = vrot.lane.b32.xlu0 %v1066, 127
      %v1096 = vpop.permute.xlu0 %1095
      %1097 = vrot.lane.b32.xlu0 %v1067, 127
      %v1098 = vpop.permute.xlu0 %1097
      %v1099 = vsel %vm687, %v1096, %v1098
      %1101 = vst [vmem:[#allocation2 + $0x5a0] sm:$0xff] %v1099
      %1102 = vrot.lane.b32.xlu0 %v1066, 118
      %v1103 = vpop.permute.xlu0 %1102
      %1104 = vrot.lane.b32.xlu0 %v1067, 118
      %v1105 = vpop.permute.xlu0 %1104
      %v1106 = vsel %vm660, %v1103, %v1105
      %1108 = vst [vmem:[#allocation2 + $0x720] sm:$0xff] %v1106
      %1109 = vrot.lane.b32.xlu0 %v1066, 117
      %v1110 = vpop.permute.xlu0 %1109
      %1111 = vrot.lane.b32.xlu0 %v1067, 117
      %v1112 = vpop.permute.xlu0 %1111
      %v1113 = vsel %vm754, %v1110, %v1112
      %1115 = vst [vmem:[#allocation2 + $0x7a0] sm:$0xff] %v1113
      %v1116 = vmul.f32 %v642, 0.25
      %v1117 = vmul.f32 %v643, 0.25
      %v1118 = vmul.f32 %v642, 0.75
      %v1119 = vmul.f32 %v643, 0.75
      %1122 = vrot.lane.b32.xlu0 %v1118, 118
      %v1123 = vpop.permute.xlu0 %1122
      %1124 = vrot.lane.b32.xlu0 %v1119, 118
      %v1125 = vpop.permute.xlu0 %1124
      %v1126 = vsel %vm660, %v1123, %v1125
      %v1129 = vadd.f32 %v1116, %v1126
      %v1130 = vadd.f32 %v1117, %v1125
      %1133 = vrot.lane.b32.xlu0 %v1116, 118
      %v1134 = vpop.permute.xlu0 %1133
      %1135 = vrot.lane.b32.xlu0 %v1117, 118
      %v1136 = vpop.permute.xlu0 %1135
      %v1137 = vsel %vm660, %v1134, %v1136
      %v1140 = vadd.f32 %v1118, %v1137
      %v1141 = vadd.f32 %v1119, %v1136
      %v1142 = vmul.f32 %v1129, 0.25
      %v1143 = vmul.f32 %v1130, 0.25
      %v1144 = vmul.f32 %v1129, 0.75
      %v1145 = vmul.f32 %v1130, 0.75
      %1148 = vrot.lane.b32.xlu0 %v1144, 127
      %v1149 = vpop.permute.xlu0 %1148
      %1150 = vrot.lane.b32.xlu0 %v1145, 127
      %v1151 = vpop.permute.xlu0 %1150
      %v1152 = vsel %vm687, %v1149, %v1151
      %v1155 = vadd.f32 %v1142, %v1152
      %v1156 = vadd.f32 %v1143, %v1151
      %v1157 = vld [vmem:[%s8] ss:$4 sm:$0x3]
      %v1159 = vlaneseq
      %v1160 = vshrl.u32 %v1159, 7
      %v1161 = vsub.s32 0, %v1160
      %v1162 = vrot.slane %v1157, %v1161
      %v1163 = vlaneseq
      %v1164 = vshrl.u32 %v1163, 7
      %v1165 = vsub.s32 1, %v1164
      %v1166 = vrot.slane %v1157, %v1165
      %v1169 = vmul.f32 %v1155, %v1162
      %v1170 = vmul.f32 %v1156, %v1166
      %1173 = vrot.lane.b32.xlu0 %v1142, 127
      %v1174 = vpop.permute.xlu0 %1173
      %1175 = vrot.lane.b32.xlu0 %v1143, 127
      %v1176 = vpop.permute.xlu0 %1175
      %v1177 = vsel %vm687, %v1174, %v1176
      %v1180 = vadd.f32 %v1144, %v1177
      %v1181 = vadd.f32 %v1145, %v1176
      %v1182 = vld [vmem:[%s718] ss:$4 sm:$0x3]
      %v1184 = vlaneseq
      %v1185 = vshrl.u32 %v1184, 7
      %v1186 = vsub.s32 0, %v1185
      %v1187 = vrot.slane %v1182, %v1186
      %v1188 = vlaneseq
      %v1189 = vshrl.u32 %v1188, 7
      %v1190 = vsub.s32 1, %v1189
      %v1191 = vrot.slane %v1182, %v1190
      %v1194 = vmul.f32 %v1180, %v1187
      %v1195 = vmul.f32 %v1181, %v1191
      %1196 = vst [vmem:[#allocation2 + $0x40] sm:$0xff] %v1169
      %1199 = vrot.lane.b32.xlu0 %v1169, 127
      %v1200 = vpop.permute.xlu0 %1199
      %1201 = vrot.lane.b32.xlu0 %v1170, 127
      %v1202 = vpop.permute.xlu0 %1201
      %v1203 = vsel %vm687, %v1200, %v1202
      %1205 = vst [vmem:[#allocation2 + $0xc0] sm:$0xff] %v1203
      %1206 = vrot.lane.b32.xlu0 %v1169, 118
      %v1207 = vpop.permute.xlu0 %1206
      %1208 = vrot.lane.b32.xlu0 %v1170, 118
      %v1209 = vpop.permute.xlu0 %1208
      %v1210 = vsel %vm660, %v1207, %v1209
      %1212 = vst [vmem:[#allocation2 + $0x240] sm:$0xff] %v1210
      %1213 = vrot.lane.b32.xlu0 %v1169, 117
      %v1214 = vpop.permute.xlu0 %1213
      %1215 = vrot.lane.b32.xlu0 %v1170, 117
      %v1216 = vpop.permute.xlu0 %1215
      %v1217 = vsel %vm754, %v1214, %v1216
      %1219 = vst [vmem:[#allocation2 + $0x2c0] sm:$0xff] %v1217
      %1220 = vst [vmem:[#allocation2 + $0x140] sm:$0xff] %v1194
      %1223 = vrot.lane.b32.xlu0 %v1194, 127
      %v1224 = vpop.permute.xlu0 %1223
      %1225 = vrot.lane.b32.xlu0 %v1195, 127
      %v1226 = vpop.permute.xlu0 %1225
      %v1227 = vsel %vm687, %v1224, %v1226
      %1229 = vst [vmem:[#allocation2 + $0x1c0] sm:$0xff] %v1227
      %1230 = vrot.lane.b32.xlu0 %v1194, 118
      %v1231 = vpop.permute.xlu0 %1230
      %1232 = vrot.lane.b32.xlu0 %v1195, 118
      %v1233 = vpop.permute.xlu0 %1232
      %v1234 = vsel %vm660, %v1231, %v1233
      %1236 = vst [vmem:[#allocation2 + $0x340] sm:$0xff] %v1234
      %1237 = vrot.lane.b32.xlu0 %v1194, 117
      %v1238 = vpop.permute.xlu0 %1237
      %1239 = vrot.lane.b32.xlu0 %v1195, 117
      %v1240 = vpop.permute.xlu0 %1239
      %v1241 = vsel %vm754, %v1238, %v1240
      %1243 = vst [vmem:[#allocation2 + $0x3c0] sm:$0xff] %v1241
      %v1244 = vmul.f32 %v1140, 0.25
      %v1245 = vmul.f32 %v1141, 0.25
      %v1246 = vmul.f32 %v1140, 0.75
      %v1247 = vmul.f32 %v1141, 0.75
      %1250 = vrot.lane.b32.xlu0 %v1246, 127
      %v1251 = vpop.permute.xlu0 %1250
      %1252 = vrot.lane.b32.xlu0 %v1247, 127
      %v1253 = vpop.permute.xlu0 %1252
      %v1254 = vsel %vm687, %v1251, %v1253
      %v1257 = vadd.f32 %v1244, %v1254
      %v1258 = vadd.f32 %v1245, %v1253
      %v1259 = vld [vmem:[%s797] ss:$4 sm:$0x3]
      %v1261 = vlaneseq
      %v1262 = vshrl.u32 %v1261, 7
      %v1263 = vsub.s32 0, %v1262
      %v1264 = vrot.slane %v1259, %v1263
      %v1265 = vlaneseq
      %v1266 = vshrl.u32 %v1265, 7
      %v1267 = vsub.s32 1, %v1266
      %v1268 = vrot.slane %v1259, %v1267
      %v1271 = vmul.f32 %v1257, %v1264
      %v1272 = vmul.f32 %v1258, %v1268
      %1275 = vrot.lane.b32.xlu0 %v1244, 127
      %v1276 = vpop.permute.xlu0 %1275
      %1277 = vrot.lane.b32.xlu0 %v1245, 127
      %v1278 = vpop.permute.xlu0 %1277
      %v1279 = vsel %vm687, %v1276, %v1278
      %v1282 = vadd.f32 %v1246, %v1279
      %v1283 = vadd.f32 %v1247, %v1278
      %v1284 = vld [vmem:[%s823] ss:$4 sm:$0x3]
      %v1286 = vlaneseq
      %v1287 = vshrl.u32 %v1286, 7
      %v1288 = vsub.s32 0, %v1287
      %v1289 = vrot.slane %v1284, %v1288
      %v1290 = vlaneseq
      %v1291 = vshrl.u32 %v1290, 7
      %v1292 = vsub.s32 1, %v1291
      %v1293 = vrot.slane %v1284, %v1292
      %v1296 = vmul.f32 %v1282, %v1289
      %v1297 = vmul.f32 %v1283, %v1293
      %1298 = vst [vmem:[#allocation2 + $0x440] sm:$0xff] %v1271
      %1301 = vrot.lane.b32.xlu0 %v1271, 127
      %v1302 = vpop.permute.xlu0 %1301
      %1303 = vrot.lane.b32.xlu0 %v1272, 127
      %v1304 = vpop.permute.xlu0 %1303
      %v1305 = vsel %vm687, %v1302, %v1304
      %1307 = vst [vmem:[#allocation2 + $0x4c0] sm:$0xff] %v1305
      %1308 = vrot.lane.b32.xlu0 %v1271, 118
      %v1309 = vpop.permute.xlu0 %1308
      %1310 = vrot.lane.b32.xlu0 %v1272, 118
      %v1311 = vpop.permute.xlu0 %1310
      %v1312 = vsel %vm660, %v1309, %v1311
      %1314 = vst [vmem:[#allocation2 + $0x640] sm:$0xff] %v1312
      %1315 = vrot.lane.b32.xlu0 %v1271, 117
      %v1316 = vpop.permute.xlu0 %1315
      %1317 = vrot.lane.b32.xlu0 %v1272, 117
      %v1318 = vpop.permute.xlu0 %1317
      %v1319 = vsel %vm754, %v1316, %v1318
      %1321 = vst [vmem:[#allocation2 + $0x6c0] sm:$0xff] %v1319
      %1322 = vst [vmem:[#allocation2 + $0x540] sm:$0xff] %v1296
      %1325 = vrot.lane.b32.xlu0 %v1296, 127
      %v1326 = vpop.permute.xlu0 %1325
      %1327 = vrot.lane.b32.xlu0 %v1297, 127
      %v1328 = vpop.permute.xlu0 %1327
      %v1329 = vsel %vm687, %v1326, %v1328
      %1331 = vst [vmem:[#allocation2 + $0x5c0] sm:$0xff] %v1329
      %1332 = vrot.lane.b32.xlu0 %v1296, 118
      %v1333 = vpop.permute.xlu0 %1332
      %1334 = vrot.lane.b32.xlu0 %v1297, 118
      %v1335 = vpop.permute.xlu0 %1334
      %v1336 = vsel %vm660, %v1333, %v1335
      %1338 = vst [vmem:[#allocation2 + $0x740] sm:$0xff] %v1336
      %1339 = vrot.lane.b32.xlu0 %v1296, 117
      %v1340 = vpop.permute.xlu0 %1339
      %1341 = vrot.lane.b32.xlu0 %v1297, 117
      %v1342 = vpop.permute.xlu0 %1341
      %v1343 = vsel %vm754, %v1340, %v1342
      %1345 = vst [vmem:[#allocation2 + $0x7c0] sm:$0xff] %v1343
      %v1346 = vmul.f32 %v648, 0.25
      %v1347 = vmul.f32 %v649, 0.25
      %v1348 = vmul.f32 %v648, 0.75
      %v1349 = vmul.f32 %v649, 0.75
      %1352 = vrot.lane.b32.xlu0 %v1348, 118
      %v1353 = vpop.permute.xlu0 %1352
      %1354 = vrot.lane.b32.xlu0 %v1349, 118
      %v1355 = vpop.permute.xlu0 %1354
      %v1356 = vsel %vm660, %v1353, %v1355
      %v1359 = vadd.f32 %v1346, %v1356
      %v1360 = vadd.f32 %v1347, %v1355
      %1363 = vrot.lane.b32.xlu0 %v1346, 118
      %v1364 = vpop.permute.xlu0 %1363
      %1365 = vrot.lane.b32.xlu0 %v1347, 118
      %v1366 = vpop.permute.xlu0 %1365
      %v1367 = vsel %vm660, %v1364, %v1366
      %v1370 = vadd.f32 %v1348, %v1367
      %v1371 = vadd.f32 %v1349, %v1366
      %v1372 = vmul.f32 %v1359, 0.25
      %v1373 = vmul.f32 %v1360, 0.25
      %v1374 = vmul.f32 %v1359, 0.75
      %v1375 = vmul.f32 %v1360, 0.75
      %1378 = vrot.lane.b32.xlu0 %v1374, 127
      %v1379 = vpop.permute.xlu0 %1378
      %1380 = vrot.lane.b32.xlu0 %v1375, 127
      %v1381 = vpop.permute.xlu0 %1380
      %v1382 = vsel %vm687, %v1379, %v1381
      %v1385 = vadd.f32 %v1372, %v1382
      %v1386 = vadd.f32 %v1373, %v1381
      %v1387 = vld [vmem:[%s8] ss:$4 sm:$0x3]
      %v1389 = vlaneseq
      %v1390 = vshrl.u32 %v1389, 7
      %v1391 = vsub.s32 0, %v1390
      %v1392 = vrot.slane %v1387, %v1391
      %v1393 = vlaneseq
      %v1394 = vshrl.u32 %v1393, 7
      %v1395 = vsub.s32 1, %v1394
      %v1396 = vrot.slane %v1387, %v1395
      %v1399 = vmul.f32 %v1385, %v1392
      %v1400 = vmul.f32 %v1386, %v1396
      %1403 = vrot.lane.b32.xlu0 %v1372, 127
      %v1404 = vpop.permute.xlu0 %1403
      %1405 = vrot.lane.b32.xlu0 %v1373, 127
      %v1406 = vpop.permute.xlu0 %1405
      %v1407 = vsel %vm687, %v1404, %v1406
      %v1410 = vadd.f32 %v1374, %v1407
      %v1411 = vadd.f32 %v1375, %v1406
      %v1412 = vld [vmem:[%s718] ss:$4 sm:$0x3]
      %v1414 = vlaneseq
      %v1415 = vshrl.u32 %v1414, 7
      %v1416 = vsub.s32 0, %v1415
      %v1417 = vrot.slane %v1412, %v1416
      %v1418 = vlaneseq
      %v1419 = vshrl.u32 %v1418, 7
      %v1420 = vsub.s32 1, %v1419
      %v1421 = vrot.slane %v1412, %v1420
      %v1424 = vmul.f32 %v1410, %v1417
      %v1425 = vmul.f32 %v1411, %v1421
      %1426 = vst [vmem:[#allocation2 + $0x60] sm:$0xff] %v1399
      %1429 = vrot.lane.b32.xlu0 %v1399, 127
      %v1430 = vpop.permute.xlu0 %1429
      %1431 = vrot.lane.b32.xlu0 %v1400, 127
      %v1432 = vpop.permute.xlu0 %1431
      %v1433 = vsel %vm687, %v1430, %v1432
      %1435 = vst [vmem:[#allocation2 + $0xe0] sm:$0xff] %v1433
      %1436 = vrot.lane.b32.xlu0 %v1399, 118
      %v1437 = vpop.permute.xlu0 %1436
      %1438 = vrot.lane.b32.xlu0 %v1400, 118
      %v1439 = vpop.permute.xlu0 %1438
      %v1440 = vsel %vm660, %v1437, %v1439
      %1442 = vst [vmem:[#allocation2 + $0x260] sm:$0xff] %v1440
      %1443 = vrot.lane.b32.xlu0 %v1399, 117
      %v1444 = vpop.permute.xlu0 %1443
      %1445 = vrot.lane.b32.xlu0 %v1400, 117
      %v1446 = vpop.permute.xlu0 %1445
      %v1447 = vsel %vm754, %v1444, %v1446
      %1449 = vst [vmem:[#allocation2 + $0x2e0] sm:$0xff] %v1447
      %1450 = vst [vmem:[#allocation2 + $0x160] sm:$0xff] %v1424
      %1453 = vrot.lane.b32.xlu0 %v1424, 127
      %v1454 = vpop.permute.xlu0 %1453
      %1455 = vrot.lane.b32.xlu0 %v1425, 127
      %v1456 = vpop.permute.xlu0 %1455
      %v1457 = vsel %vm687, %v1454, %v1456
      %1459 = vst [vmem:[#allocation2 + $0x1e0] sm:$0xff] %v1457
      %1460 = vrot.lane.b32.xlu0 %v1424, 118
      %v1461 = vpop.permute.xlu0 %1460
      %1462 = vrot.lane.b32.xlu0 %v1425, 118
      %v1463 = vpop.permute.xlu0 %1462
      %v1464 = vsel %vm660, %v1461, %v1463
      %1466 = vst [vmem:[#allocation2 + $0x360] sm:$0xff] %v1464
      %1467 = vrot.lane.b32.xlu0 %v1424, 117
      %v1468 = vpop.permute.xlu0 %1467
      %1469 = vrot.lane.b32.xlu0 %v1425, 117
      %v1470 = vpop.permute.xlu0 %1469
      %v1471 = vsel %vm754, %v1468, %v1470
      %1473 = vst [vmem:[#allocation2 + $0x3e0] sm:$0xff] %v1471
      %v1474 = vmul.f32 %v1370, 0.25
      %v1475 = vmul.f32 %v1371, 0.25
      %v1476 = vmul.f32 %v1370, 0.75
      %v1477 = vmul.f32 %v1371, 0.75
      %1480 = vrot.lane.b32.xlu0 %v1476, 127
      %v1481 = vpop.permute.xlu0 %1480
      %1482 = vrot.lane.b32.xlu0 %v1477, 127
      %v1483 = vpop.permute.xlu0 %1482
      %v1484 = vsel %vm687, %v1481, %v1483
      %v1487 = vadd.f32 %v1474, %v1484
      %v1488 = vadd.f32 %v1475, %v1483
      %v1489 = vld [vmem:[%s797] ss:$4 sm:$0x3]
      %v1491 = vlaneseq
      %v1492 = vshrl.u32 %v1491, 7
      %v1493 = vsub.s32 0, %v1492
      %v1494 = vrot.slane %v1489, %v1493
      %v1495 = vlaneseq
      %v1496 = vshrl.u32 %v1495, 7
      %v1497 = vsub.s32 1, %v1496
      %v1498 = vrot.slane %v1489, %v1497
      %v1501 = vmul.f32 %v1487, %v1494
      %v1502 = vmul.f32 %v1488, %v1498
      %1505 = vrot.lane.b32.xlu0 %v1474, 127
      %v1506 = vpop.permute.xlu0 %1505
      %1507 = vrot.lane.b32.xlu0 %v1475, 127
      %v1508 = vpop.permute.xlu0 %1507
      %v1509 = vsel %vm687, %v1506, %v1508
      %v1512 = vadd.f32 %v1476, %v1509
      %v1513 = vadd.f32 %v1477, %v1508
      %v1514 = vld [vmem:[%s823] ss:$4 sm:$0x3]
      %v1516 = vlaneseq
      %v1517 = vshrl.u32 %v1516, 7
      %v1518 = vsub.s32 0, %v1517
      %v1519 = vrot.slane %v1514, %v1518
      %v1520 = vlaneseq
      %v1521 = vshrl.u32 %v1520, 7
      %v1522 = vsub.s32 1, %v1521
      %v1523 = vrot.slane %v1514, %v1522
      %v1526 = vmul.f32 %v1512, %v1519
      %v1527 = vmul.f32 %v1513, %v1523
      %1528 = vst [vmem:[#allocation2 + $0x460] sm:$0xff] %v1501
      %1531 = vrot.lane.b32.xlu0 %v1501, 127
      %v1532 = vpop.permute.xlu0 %1531
      %1533 = vrot.lane.b32.xlu0 %v1502, 127
      %v1534 = vpop.permute.xlu0 %1533
      %v1535 = vsel %vm687, %v1532, %v1534
      %1537 = vst [vmem:[#allocation2 + $0x4e0] sm:$0xff] %v1535
      %1538 = vrot.lane.b32.xlu0 %v1501, 118
      %v1539 = vpop.permute.xlu0 %1538
      %1540 = vrot.lane.b32.xlu0 %v1502, 118
      %v1541 = vpop.permute.xlu0 %1540
      %v1542 = vsel %vm660, %v1539, %v1541
      %1544 = vst [vmem:[#allocation2 + $0x660] sm:$0xff] %v1542
      %1545 = vrot.lane.b32.xlu0 %v1501, 117
      %v1546 = vpop.permute.xlu0 %1545
      %1547 = vrot.lane.b32.xlu0 %v1502, 117
      %v1548 = vpop.permute.xlu0 %1547
      %v1549 = vsel %vm754, %v1546, %v1548
      %1551 = vst [vmem:[#allocation2 + $0x6e0] sm:$0xff] %v1549
      %1552 = vst [vmem:[#allocation2 + $0x560] sm:$0xff] %v1526
      %1555 = vrot.lane.b32.xlu0 %v1526, 127
      %v1556 = vpop.permute.xlu0 %1555
      %1557 = vrot.lane.b32.xlu0 %v1527, 127
      %v1558 = vpop.permute.xlu0 %1557
      %v1559 = vsel %vm687, %v1556, %v1558
      %1561 = vst [vmem:[#allocation2 + $0x5e0] sm:$0xff] %v1559
      %1562 = vrot.lane.b32.xlu0 %v1526, 118
      %v1563 = vpop.permute.xlu0 %1562
      %1564 = vrot.lane.b32.xlu0 %v1527, 118
      %v1565 = vpop.permute.xlu0 %1564
      %v1566 = vsel %vm660, %v1563, %v1565
      %1568 = vst [vmem:[#allocation2 + $0x760] sm:$0xff] %v1566
      %1569 = vrot.lane.b32.xlu0 %v1526, 117
      %v1570 = vpop.permute.xlu0 %1569
      %1571 = vrot.lane.b32.xlu0 %v1527, 117
      %v1572 = vpop.permute.xlu0 %1571
      %v1573 = vsel %vm754, %v1570, %v1572
      %1575 = vst [vmem:[#allocation2 + $0x7e0] sm:$0xff] %v1573
      %v1576 = vld [vmem:[%s552] sm:$0xff]
      %v1577 = vld [vmem:[%s552 + $0x8] sm:$0xff]
      %v1578 = vld [vmem:[%s565] sm:$0xff]
      %v1579 = vld [vmem:[%s565 + $0x8] sm:$0xff]
      %v1580 = vld [vmem:[%s578] sm:$0xff]
      %v1581 = vld [vmem:[%s578 + $0x8] sm:$0xff]
      %v1582 = vmul.f32 %v1576, 0.75
      %v1583 = vmul.f32 %v1577, 0.75
      %v1584 = vmul.f32 %v1578, 0.25
      %v1585 = vmul.f32 %v1579, 0.25
      %v1586 = vadd.f32 %v1582, %v1584
      %v1587 = vadd.f32 %v1583, %v1585
      %v1588 = vmul.f32 %v1576, 0.25
      %v1589 = vmul.f32 %v1577, 0.25
      %v1590 = vmul.f32 %v1578, 0.75
      %v1591 = vmul.f32 %v1579, 0.75
      %v1592 = vadd.f32 %v1588, %v1590
      %v1593 = vadd.f32 %v1589, %v1591
      %v1594 = vmul.f32 %v1580, 0.25
      %v1595 = vmul.f32 %v1581, 0.25
      %v1596 = vadd.f32 %v1590, %v1594
      %v1597 = vadd.f32 %v1591, %v1595
      %v1598 = vmul.f32 %v1580, 0.75
      %v1599 = vmul.f32 %v1581, 0.75
      %v1600 = vadd.f32 %v1584, %v1598
      %v1601 = vadd.f32 %v1585, %v1599
      %v1602 = vmul.f32 %v1586, 0.25
      %v1603 = vmul.f32 %v1587, 0.25
      %v1604 = vmul.f32 %v1586, 0.75
      %v1605 = vmul.f32 %v1587, 0.75
      %1608 = vrot.lane.b32.xlu0 %v1604, 118
      %v1609 = vpop.permute.xlu0 %1608
      %1610 = vrot.lane.b32.xlu0 %v1605, 118
      %v1611 = vpop.permute.xlu0 %1610
      %v1612 = vsel %vm660, %v1609, %v1611
      %v1615 = vadd.f32 %v1602, %v1612
      %v1616 = vadd.f32 %v1603, %v1611
      %1619 = vrot.lane.b32.xlu0 %v1602, 118
      %v1620 = vpop.permute.xlu0 %1619
      %1621 = vrot.lane.b32.xlu0 %v1603, 118
      %v1622 = vpop.permute.xlu0 %1621
      %v1623 = vsel %vm660, %v1620, %v1622
      %v1626 = vadd.f32 %v1604, %v1623
      %v1627 = vadd.f32 %v1605, %v1622
      %v1628 = vmul.f32 %v1615, 0.25
      %v1629 = vmul.f32 %v1616, 0.25
      %v1630 = vmul.f32 %v1615, 0.75
      %v1631 = vmul.f32 %v1616, 0.75
      %1634 = vrot.lane.b32.xlu0 %v1630, 127
      %v1635 = vpop.permute.xlu0 %1634
      %1636 = vrot.lane.b32.xlu0 %v1631, 127
      %v1637 = vpop.permute.xlu0 %1636
      %v1638 = vsel %vm687, %v1635, %v1637
      %v1641 = vadd.f32 %v1628, %v1638
      %v1642 = vadd.f32 %v1629, %v1637
      %v1643 = vld [vmem:[%s8] ss:$4 sm:$0x3]
      %v1645 = vlaneseq
      %v1646 = vshrl.u32 %v1645, 7
      %v1647 = vsub.s32 0, %v1646
      %v1648 = vrot.slane %v1643, %v1647
      %v1649 = vlaneseq
      %v1650 = vshrl.u32 %v1649, 7
      %v1651 = vsub.s32 1, %v1650
      %v1652 = vrot.slane %v1643, %v1651
      %v1655 = vmul.f32 %v1641, %v1648
      %v1656 = vmul.f32 %v1642, %v1652
      %1659 = vrot.lane.b32.xlu0 %v1628, 127
      %v1660 = vpop.permute.xlu0 %1659
      %1661 = vrot.lane.b32.xlu0 %v1629, 127
      %v1662 = vpop.permute.xlu0 %1661
      %v1663 = vsel %vm687, %v1660, %v1662
      %v1666 = vadd.f32 %v1630, %v1663
      %v1667 = vadd.f32 %v1631, %v1662
      %v1668 = vld [vmem:[%s718] ss:$4 sm:$0x3]
      %v1670 = vlaneseq
      %v1671 = vshrl.u32 %v1670, 7
      %v1672 = vsub.s32 0, %v1671
      %v1673 = vrot.slane %v1668, %v1672
      %v1674 = vlaneseq
      %v1675 = vshrl.u32 %v1674, 7
      %v1676 = vsub.s32 1, %v1675
      %v1677 = vrot.slane %v1668, %v1676
      %v1680 = vmul.f32 %v1666, %v1673
      %v1681 = vmul.f32 %v1667, %v1677
      %1682 = vst [vmem:[#allocation2 + $0x8] sm:$0xff] %v1655
      %1685 = vrot.lane.b32.xlu0 %v1655, 127
      %v1686 = vpop.permute.xlu0 %1685
      %1687 = vrot.lane.b32.xlu0 %v1656, 127
      %v1688 = vpop.permute.xlu0 %1687
      %v1689 = vsel %vm687, %v1686, %v1688
      %1691 = vst [vmem:[#allocation2 + $0x88] sm:$0xff] %v1689
      %1692 = vrot.lane.b32.xlu0 %v1655, 118
      %v1693 = vpop.permute.xlu0 %1692
      %1694 = vrot.lane.b32.xlu0 %v1656, 118
      %v1695 = vpop.permute.xlu0 %1694
      %v1696 = vsel %vm660, %v1693, %v1695
      %1698 = vst [vmem:[#allocation2 + $0x208] sm:$0xff] %v1696
      %1699 = vrot.lane.b32.xlu0 %v1655, 117
      %v1700 = vpop.permute.xlu0 %1699
      %1701 = vrot.lane.b32.xlu0 %v1656, 117
      %v1702 = vpop.permute.xlu0 %1701
      %v1703 = vsel %vm754, %v1700, %v1702
      %1705 = vst [vmem:[#allocation2 + $0x288] sm:$0xff] %v1703
      %1706 = vst [vmem:[#allocation2 + $0x108] sm:$0xff] %v1680
      %1709 = vrot.lane.b32.xlu0 %v1680, 127
      %v1710 = vpop.permute.xlu0 %1709
      %1711 = vrot.lane.b32.xlu0 %v1681, 127
      %v1712 = vpop.permute.xlu0 %1711
      %v1713 = vsel %vm687, %v1710, %v1712
      %1715 = vst [vmem:[#allocation2 + $0x188] sm:$0xff] %v1713
      %1716 = vrot.lane.b32.xlu0 %v1680, 118
      %v1717 = vpop.permute.xlu0 %1716
      %1718 = vrot.lane.b32.xlu0 %v1681, 118
      %v1719 = vpop.permute.xlu0 %1718
      %v1720 = vsel %vm660, %v1717, %v1719
      %1722 = vst [vmem:[#allocation2 + $0x308] sm:$0xff] %v1720
      %1723 = vrot.lane.b32.xlu0 %v1680, 117
      %v1724 = vpop.permute.xlu0 %1723
      %1725 = vrot.lane.b32.xlu0 %v1681, 117
      %v1726 = vpop.permute.xlu0 %1725
      %v1727 = vsel %vm754, %v1724, %v1726
      %1729 = vst [vmem:[#allocation2 + $0x388] sm:$0xff] %v1727
      %v1730 = vmul.f32 %v1626, 0.25
      %v1731 = vmul.f32 %v1627, 0.25
      %v1732 = vmul.f32 %v1626, 0.75
      %v1733 = vmul.f32 %v1627, 0.75
      %1736 = vrot.lane.b32.xlu0 %v1732, 127
      %v1737 = vpop.permute.xlu0 %1736
      %1738 = vrot.lane.b32.xlu0 %v1733, 127
      %v1739 = vpop.permute.xlu0 %1738
      %v1740 = vsel %vm687, %v1737, %v1739
      %v1743 = vadd.f32 %v1730, %v1740
      %v1744 = vadd.f32 %v1731, %v1739
      %v1745 = vld [vmem:[%s797] ss:$4 sm:$0x3]
      %v1747 = vlaneseq
      %v1748 = vshrl.u32 %v1747, 7
      %v1749 = vsub.s32 0, %v1748
      %v1750 = vrot.slane %v1745, %v1749
      %v1751 = vlaneseq
      %v1752 = vshrl.u32 %v1751, 7
      %v1753 = vsub.s32 1, %v1752
      %v1754 = vrot.slane %v1745, %v1753
      %v1757 = vmul.f32 %v1743, %v1750
      %v1758 = vmul.f32 %v1744, %v1754
      %1761 = vrot.lane.b32.xlu0 %v1730, 127
      %v1762 = vpop.permute.xlu0 %1761
      %1763 = vrot.lane.b32.xlu0 %v1731, 127
      %v1764 = vpop.permute.xlu0 %1763
      %v1765 = vsel %vm687, %v1762, %v1764
      %v1768 = vadd.f32 %v1732, %v1765
      %v1769 = vadd.f32 %v1733, %v1764
      %v1770 = vld [vmem:[%s823] ss:$4 sm:$0x3]
      %v1772 = vlaneseq
      %v1773 = vshrl.u32 %v1772, 7
      %v1774 = vsub.s32 0, %v1773
      %v1775 = vrot.slane %v1770, %v1774
      %v1776 = vlaneseq
      %v1777 = vshrl.u32 %v1776, 7
      %v1778 = vsub.s32 1, %v1777
      %v1779 = vrot.slane %v1770, %v1778
      %v1782 = vmul.f32 %v1768, %v1775
      %v1783 = vmul.f32 %v1769, %v1779
      %1784 = vst [vmem:[#allocation2 + $0x408] sm:$0xff] %v1757
      %1787 = vrot.lane.b32.xlu0 %v1757, 127
      %v1788 = vpop.permute.xlu0 %1787
      %1789 = vrot.lane.b32.xlu0 %v1758, 127
      %v1790 = vpop.permute.xlu0 %1789
      %v1791 = vsel %vm687, %v1788, %v1790
      %1793 = vst [vmem:[#allocation2 + $0x488] sm:$0xff] %v1791
      %1794 = vrot.lane.b32.xlu0 %v1757, 118
      %v1795 = vpop.permute.xlu0 %1794
      %1796 = vrot.lane.b32.xlu0 %v1758, 118
      %v1797 = vpop.permute.xlu0 %1796
      %v1798 = vsel %vm660, %v1795, %v1797
      %1800 = vst [vmem:[#allocation2 + $0x608] sm:$0xff] %v1798
      %1801 = vrot.lane.b32.xlu0 %v1757, 117
      %v1802 = vpop.permute.xlu0 %1801
      %1803 = vrot.lane.b32.xlu0 %v1758, 117
      %v1804 = vpop.permute.xlu0 %1803
      %v1805 = vsel %vm754, %v1802, %v1804
      %1807 = vst [vmem:[#allocation2 + $0x688] sm:$0xff] %v1805
      %1808 = vst [vmem:[#allocation2 + $0x508] sm:$0xff] %v1782
      %1811 = vrot.lane.b32.xlu0 %v1782, 127
      %v1812 = vpop.permute.xlu0 %1811
      %1813 = vrot.lane.b32.xlu0 %v1783, 127
      %v1814 = vpop.permute.xlu0 %1813
      %v1815 = vsel %vm687, %v1812, %v1814
      %1817 = vst [vmem:[#allocation2 + $0x588] sm:$0xff] %v1815
      %1818 = vrot.lane.b32.xlu0 %v1782, 118
      %v1819 = vpop.permute.xlu0 %1818
      %1820 = vrot.lane.b32.xlu0 %v1783, 118
      %v1821 = vpop.permute.xlu0 %1820
      %v1822 = vsel %vm660, %v1819, %v1821
      %1824 = vst [vmem:[#allocation2 + $0x708] sm:$0xff] %v1822
      %1825 = vrot.lane.b32.xlu0 %v1782, 117
      %v1826 = vpop.permute.xlu0 %1825
      %1827 = vrot.lane.b32.xlu0 %v1783, 117
      %v1828 = vpop.permute.xlu0 %1827
      %v1829 = vsel %vm754, %v1826, %v1828
      %1831 = vst [vmem:[#allocation2 + $0x788] sm:$0xff] %v1829
      %v1832 = vmul.f32 %v1592, 0.25
      %v1833 = vmul.f32 %v1593, 0.25
      %v1834 = vmul.f32 %v1592, 0.75
      %v1835 = vmul.f32 %v1593, 0.75
      %1838 = vrot.lane.b32.xlu0 %v1834, 118
      %v1839 = vpop.permute.xlu0 %1838
      %1840 = vrot.lane.b32.xlu0 %v1835, 118
      %v1841 = vpop.permute.xlu0 %1840
      %v1842 = vsel %vm660, %v1839, %v1841
      %v1845 = vadd.f32 %v1832, %v1842
      %v1846 = vadd.f32 %v1833, %v1841
      %1849 = vrot.lane.b32.xlu0 %v1832, 118
      %v1850 = vpop.permute.xlu0 %1849
      %1851 = vrot.lane.b32.xlu0 %v1833, 118
      %v1852 = vpop.permute.xlu0 %1851
      %v1853 = vsel %vm660, %v1850, %v1852
      %v1856 = vadd.f32 %v1834, %v1853
      %v1857 = vadd.f32 %v1835, %v1852
      %v1858 = vmul.f32 %v1845, 0.25
      %v1859 = vmul.f32 %v1846, 0.25
      %v1860 = vmul.f32 %v1845, 0.75
      %v1861 = vmul.f32 %v1846, 0.75
      %1864 = vrot.lane.b32.xlu0 %v1860, 127
      %v1865 = vpop.permute.xlu0 %1864
      %1866 = vrot.lane.b32.xlu0 %v1861, 127
      %v1867 = vpop.permute.xlu0 %1866
      %v1868 = vsel %vm687, %v1865, %v1867
      %v1871 = vadd.f32 %v1858, %v1868
      %v1872 = vadd.f32 %v1859, %v1867
      %v1873 = vld [vmem:[%s8] ss:$4 sm:$0x3]
      %v1875 = vlaneseq
      %v1876 = vshrl.u32 %v1875, 7
      %v1877 = vsub.s32 0, %v1876
      %v1878 = vrot.slane %v1873, %v1877
      %v1879 = vlaneseq
      %v1880 = vshrl.u32 %v1879, 7
      %v1881 = vsub.s32 1, %v1880
      %v1882 = vrot.slane %v1873, %v1881
      %v1885 = vmul.f32 %v1871, %v1878
      %v1886 = vmul.f32 %v1872, %v1882
      %1889 = vrot.lane.b32.xlu0 %v1858, 127
      %v1890 = vpop.permute.xlu0 %1889
      %1891 = vrot.lane.b32.xlu0 %v1859, 127
      %v1892 = vpop.permute.xlu0 %1891
      %v1893 = vsel %vm687, %v1890, %v1892
      %v1896 = vadd.f32 %v1860, %v1893
      %v1897 = vadd.f32 %v1861, %v1892
      %v1898 = vld [vmem:[%s718] ss:$4 sm:$0x3]
      %v1900 = vlaneseq
      %v1901 = vshrl.u32 %v1900, 7
      %v1902 = vsub.s32 0, %v1901
      %v1903 = vrot.slane %v1898, %v1902
      %v1904 = vlaneseq
      %v1905 = vshrl.u32 %v1904, 7
      %v1906 = vsub.s32 1, %v1905
      %v1907 = vrot.slane %v1898, %v1906
      %v1910 = vmul.f32 %v1896, %v1903
      %v1911 = vmul.f32 %v1897, %v1907
      %1912 = vst [vmem:[#allocation2 + $0x28] sm:$0xff] %v1885
      %1915 = vrot.lane.b32.xlu0 %v1885, 127
      %v1916 = vpop.permute.xlu0 %1915
      %1917 = vrot.lane.b32.xlu0 %v1886, 127
      %v1918 = vpop.permute.xlu0 %1917
      %v1919 = vsel %vm687, %v1916, %v1918
      %1921 = vst [vmem:[#allocation2 + $0xa8] sm:$0xff] %v1919
      %1922 = vrot.lane.b32.xlu0 %v1885, 118
      %v1923 = vpop.permute.xlu0 %1922
      %1924 = vrot.lane.b32.xlu0 %v1886, 118
      %v1925 = vpop.permute.xlu0 %1924
      %v1926 = vsel %vm660, %v1923, %v1925
      %1928 = vst [vmem:[#allocation2 + $0x228] sm:$0xff] %v1926
      %1929 = vrot.lane.b32.xlu0 %v1885, 117
      %v1930 = vpop.permute.xlu0 %1929
      %1931 = vrot.lane.b32.xlu0 %v1886, 117
      %v1932 = vpop.permute.xlu0 %1931
      %v1933 = vsel %vm754, %v1930, %v1932
      %1935 = vst [vmem:[#allocation2 + $0x2a8] sm:$0xff] %v1933
      %1936 = vst [vmem:[#allocation2 + $0x128] sm:$0xff] %v1910
      %1939 = vrot.lane.b32.xlu0 %v1910, 127
      %v1940 = vpop.permute.xlu0 %1939
      %1941 = vrot.lane.b32.xlu0 %v1911, 127
      %v1942 = vpop.permute.xlu0 %1941
      %v1943 = vsel %vm687, %v1940, %v1942
      %1945 = vst [vmem:[#allocation2 + $0x1a8] sm:$0xff] %v1943
      %1946 = vrot.lane.b32.xlu0 %v1910, 118
      %v1947 = vpop.permute.xlu0 %1946
      %1948 = vrot.lane.b32.xlu0 %v1911, 118
      %v1949 = vpop.permute.xlu0 %1948
      %v1950 = vsel %vm660, %v1947, %v1949
      %1952 = vst [vmem:[#allocation2 + $0x328] sm:$0xff] %v1950
      %1953 = vrot.lane.b32.xlu0 %v1910, 117
      %v1954 = vpop.permute.xlu0 %1953
      %1955 = vrot.lane.b32.xlu0 %v1911, 117
      %v1956 = vpop.permute.xlu0 %1955
      %v1957 = vsel %vm754, %v1954, %v1956
      %1959 = vst [vmem:[#allocation2 + $0x3a8] sm:$0xff] %v1957
      %v1960 = vmul.f32 %v1856, 0.25
      %v1961 = vmul.f32 %v1857, 0.25
      %v1962 = vmul.f32 %v1856, 0.75
      %v1963 = vmul.f32 %v1857, 0.75
      %1966 = vrot.lane.b32.xlu0 %v1962, 127
      %v1967 = vpop.permute.xlu0 %1966
      %1968 = vrot.lane.b32.xlu0 %v1963, 127
      %v1969 = vpop.permute.xlu0 %1968
      %v1970 = vsel %vm687, %v1967, %v1969
      %v1973 = vadd.f32 %v1960, %v1970
      %v1974 = vadd.f32 %v1961, %v1969
      %v1975 = vld [vmem:[%s797] ss:$4 sm:$0x3]
      %v1977 = vlaneseq
      %v1978 = vshrl.u32 %v1977, 7
      %v1979 = vsub.s32 0, %v1978
      %v1980 = vrot.slane %v1975, %v1979
      %v1981 = vlaneseq
      %v1982 = vshrl.u32 %v1981, 7
      %v1983 = vsub.s32 1, %v1982
      %v1984 = vrot.slane %v1975, %v1983
      %v1987 = vmul.f32 %v1973, %v1980
      %v1988 = vmul.f32 %v1974, %v1984
      %1991 = vrot.lane.b32.xlu0 %v1960, 127
      %v1992 = vpop.permute.xlu0 %1991
      %1993 = vrot.lane.b32.xlu0 %v1961, 127
      %v1994 = vpop.permute.xlu0 %1993
      %v1995 = vsel %vm687, %v1992, %v1994
      %v1998 = vadd.f32 %v1962, %v1995
      %v1999 = vadd.f32 %v1963, %v1994
      %v2000 = vld [vmem:[%s823] ss:$4 sm:$0x3]
      %v2002 = vlaneseq
      %v2003 = vshrl.u32 %v2002, 7
      %v2004 = vsub.s32 0, %v2003
      %v2005 = vrot.slane %v2000, %v2004
      %v2006 = vlaneseq
      %v2007 = vshrl.u32 %v2006, 7
      %v2008 = vsub.s32 1, %v2007
      %v2009 = vrot.slane %v2000, %v2008
      %v2012 = vmul.f32 %v1998, %v2005
      %v2013 = vmul.f32 %v1999, %v2009
      %2014 = vst [vmem:[#allocation2 + $0x428] sm:$0xff] %v1987
      %2017 = vrot.lane.b32.xlu0 %v1987, 127
      %v2018 = vpop.permute.xlu0 %2017
      %2019 = vrot.lane.b32.xlu0 %v1988, 127
      %v2020 = vpop.permute.xlu0 %2019
      %v2021 = vsel %vm687, %v2018, %v2020
      %2023 = vst [vmem:[#allocation2 + $0x4a8] sm:$0xff] %v2021
      %2024 = vrot.lane.b32.xlu0 %v1987, 118
      %v2025 = vpop.permute.xlu0 %2024
      %2026 = vrot.lane.b32.xlu0 %v1988, 118
      %v2027 = vpop.permute.xlu0 %2026
      %v2028 = vsel %vm660, %v2025, %v2027
      %2030 = vst [vmem:[#allocation2 + $0x628] sm:$0xff] %v2028
      %2031 = vrot.lane.b32.xlu0 %v1987, 117
      %v2032 = vpop.permute.xlu0 %2031
      %2033 = vrot.lane.b32.xlu0 %v1988, 117
      %v2034 = vpop.permute.xlu0 %2033
      %v2035 = vsel %vm754, %v2032, %v2034
      %2037 = vst [vmem:[#allocation2 + $0x6a8] sm:$0xff] %v2035
      %2038 = vst [vmem:[#allocation2 + $0x528] sm:$0xff] %v2012
      %2041 = vrot.lane.b32.xlu0 %v2012, 127
      %v2042 = vpop.permute.xlu0 %2041
      %2043 = vrot.lane.b32.xlu0 %v2013, 127
      %v2044 = vpop.permute.xlu0 %2043
      %v2045 = vsel %vm687, %v2042, %v2044
      %2047 = vst [vmem:[#allocation2 + $0x5a8] sm:$0xff] %v2045
      %2048 = vrot.lane.b32.xlu0 %v2012, 118
      %v2049 = vpop.permute.xlu0 %2048
      %2050 = vrot.lane.b32.xlu0 %v2013, 118
      %v2051 = vpop.permute.xlu0 %2050
      %v2052 = vsel %vm660, %v2049, %v2051
      %2054 = vst [vmem:[#allocation2 + $0x728] sm:$0xff] %v2052
      %2055 = vrot.lane.b32.xlu0 %v2012, 117
      %v2056 = vpop.permute.xlu0 %2055
      %2057 = vrot.lane.b32.xlu0 %v2013, 117
      %v2058 = vpop.permute.xlu0 %2057
      %v2059 = vsel %vm754, %v2056, %v2058
      %2061 = vst [vmem:[#allocation2 + $0x7a8] sm:$0xff] %v2059
      %v2062 = vmul.f32 %v1596, 0.25
      %v2063 = vmul.f32 %v1597, 0.25
      %v2064 = vmul.f32 %v1596, 0.75
      %v2065 = vmul.f32 %v1597, 0.75
      %2068 = vrot.lane.b32.xlu0 %v2064, 118
      %v2069 = vpop.permute.xlu0 %2068
      %2070 = vrot.lane.b32.xlu0 %v2065, 118
      %v2071 = vpop.permute.xlu0 %2070
      %v2072 = vsel %vm660, %v2069, %v2071
      %v2075 = vadd.f32 %v2062, %v2072
      %v2076 = vadd.f32 %v2063, %v2071
      %2079 = vrot.lane.b32.xlu0 %v2062, 118
      %v2080 = vpop.permute.xlu0 %2079
      %2081 = vrot.lane.b32.xlu0 %v2063, 118
      %v2082 = vpop.permute.xlu0 %2081
      %v2083 = vsel %vm660, %v2080, %v2082
      %v2086 = vadd.f32 %v2064, %v2083
      %v2087 = vadd.f32 %v2065, %v2082
      %v2088 = vmul.f32 %v2075, 0.25
      %v2089 = vmul.f32 %v2076, 0.25
      %v2090 = vmul.f32 %v2075, 0.75
      %v2091 = vmul.f32 %v2076, 0.75
      %2094 = vrot.lane.b32.xlu0 %v2090, 127
      %v2095 = vpop.permute.xlu0 %2094
      %2096 = vrot.lane.b32.xlu0 %v2091, 127
      %v2097 = vpop.permute.xlu0 %2096
      %v2098 = vsel %vm687, %v2095, %v2097
      %v2101 = vadd.f32 %v2088, %v2098
      %v2102 = vadd.f32 %v2089, %v2097
      %v2103 = vld [vmem:[%s8] ss:$4 sm:$0x3]
      %v2105 = vlaneseq
      %v2106 = vshrl.u32 %v2105, 7
      %v2107 = vsub.s32 0, %v2106
      %v2108 = vrot.slane %v2103, %v2107
      %v2109 = vlaneseq
      %v2110 = vshrl.u32 %v2109, 7
      %v2111 = vsub.s32 1, %v2110
      %v2112 = vrot.slane %v2103, %v2111
      %v2115 = vmul.f32 %v2101, %v2108
      %v2116 = vmul.f32 %v2102, %v2112
      %2119 = vrot.lane.b32.xlu0 %v2088, 127
      %v2120 = vpop.permute.xlu0 %2119
      %2121 = vrot.lane.b32.xlu0 %v2089, 127
      %v2122 = vpop.permute.xlu0 %2121
      %v2123 = vsel %vm687, %v2120, %v2122
      %v2126 = vadd.f32 %v2090, %v2123
      %v2127 = vadd.f32 %v2091, %v2122
      %v2128 = vld [vmem:[%s718] ss:$4 sm:$0x3]
      %v2130 = vlaneseq
      %v2131 = vshrl.u32 %v2130, 7
      %v2132 = vsub.s32 0, %v2131
      %v2133 = vrot.slane %v2128, %v2132
      %v2134 = vlaneseq
      %v2135 = vshrl.u32 %v2134, 7
      %v2136 = vsub.s32 1, %v2135
      %v2137 = vrot.slane %v2128, %v2136
      %v2140 = vmul.f32 %v2126, %v2133
      %v2141 = vmul.f32 %v2127, %v2137
      %2142 = vst [vmem:[#allocation2 + $0x48] sm:$0xff] %v2115
      %2145 = vrot.lane.b32.xlu0 %v2115, 127
      %v2146 = vpop.permute.xlu0 %2145
      %2147 = vrot.lane.b32.xlu0 %v2116, 127
      %v2148 = vpop.permute.xlu0 %2147
      %v2149 = vsel %vm687, %v2146, %v2148
      %2151 = vst [vmem:[#allocation2 + $0xc8] sm:$0xff] %v2149
      %2152 = vrot.lane.b32.xlu0 %v2115, 118
      %v2153 = vpop.permute.xlu0 %2152
      %2154 = vrot.lane.b32.xlu0 %v2116, 118
      %v2155 = vpop.permute.xlu0 %2154
      %v2156 = vsel %vm660, %v2153, %v2155
      %2158 = vst [vmem:[#allocation2 + $0x248] sm:$0xff] %v2156
      %2159 = vrot.lane.b32.xlu0 %v2115, 117
      %v2160 = vpop.permute.xlu0 %2159
      %2161 = vrot.lane.b32.xlu0 %v2116, 117
      %v2162 = vpop.permute.xlu0 %2161
      %v2163 = vsel %vm754, %v2160, %v2162
      %2165 = vst [vmem:[#allocation2 + $0x2c8] sm:$0xff] %v2163
      %2166 = vst [vmem:[#allocation2 + $0x148] sm:$0xff] %v2140
      %2169 = vrot.lane.b32.xlu0 %v2140, 127
      %v2170 = vpop.permute.xlu0 %2169
      %2171 = vrot.lane.b32.xlu0 %v2141, 127
      %v2172 = vpop.permute.xlu0 %2171
      %v2173 = vsel %vm687, %v2170, %v2172
      %2175 = vst [vmem:[#allocation2 + $0x1c8] sm:$0xff] %v2173
      %2176 = vrot.lane.b32.xlu0 %v2140, 118
      %v2177 = vpop.permute.xlu0 %2176
      %2178 = vrot.lane.b32.xlu0 %v2141, 118
      %v2179 = vpop.permute.xlu0 %2178
      %v2180 = vsel %vm660, %v2177, %v2179
      %2182 = vst [vmem:[#allocation2 + $0x348] sm:$0xff] %v2180
      %2183 = vrot.lane.b32.xlu0 %v2140, 117
      %v2184 = vpop.permute.xlu0 %2183
      %2185 = vrot.lane.b32.xlu0 %v2141, 117
      %v2186 = vpop.permute.xlu0 %2185
      %v2187 = vsel %vm754, %v2184, %v2186
      %2189 = vst [vmem:[#allocation2 + $0x3c8] sm:$0xff] %v2187
      %v2190 = vmul.f32 %v2086, 0.25
      %v2191 = vmul.f32 %v2087, 0.25
      %v2192 = vmul.f32 %v2086, 0.75
      %v2193 = vmul.f32 %v2087, 0.75
      %2196 = vrot.lane.b32.xlu0 %v2192, 127
      %v2197 = vpop.permute.xlu0 %2196
      %2198 = vrot.lane.b32.xlu0 %v2193, 127
      %v2199 = vpop.permute.xlu0 %2198
      %v2200 = vsel %vm687, %v2197, %v2199
      %v2203 = vadd.f32 %v2190, %v2200
      %v2204 = vadd.f32 %v2191, %v2199
      %v2205 = vld [vmem:[%s797] ss:$4 sm:$0x3]
      %v2207 = vlaneseq
      %v2208 = vshrl.u32 %v2207, 7
      %v2209 = vsub.s32 0, %v2208
      %v2210 = vrot.slane %v2205, %v2209
      %v2211 = vlaneseq
      %v2212 = vshrl.u32 %v2211, 7
      %v2213 = vsub.s32 1, %v2212
      %v2214 = vrot.slane %v2205, %v2213
      %v2217 = vmul.f32 %v2203, %v2210
      %v2218 = vmul.f32 %v2204, %v2214
      %2221 = vrot.lane.b32.xlu0 %v2190, 127
      %v2222 = vpop.permute.xlu0 %2221
      %2223 = vrot.lane.b32.xlu0 %v2191, 127
      %v2224 = vpop.permute.xlu0 %2223
      %v2225 = vsel %vm687, %v2222, %v2224
      %v2228 = vadd.f32 %v2192, %v2225
      %v2229 = vadd.f32 %v2193, %v2224
      %v2230 = vld [vmem:[%s823] ss:$4 sm:$0x3]
      %v2232 = vlaneseq
      %v2233 = vshrl.u32 %v2232, 7
      %v2234 = vsub.s32 0, %v2233
      %v2235 = vrot.slane %v2230, %v2234
      %v2236 = vlaneseq
      %v2237 = vshrl.u32 %v2236, 7
      %v2238 = vsub.s32 1, %v2237
      %v2239 = vrot.slane %v2230, %v2238
      %v2242 = vmul.f32 %v2228, %v2235
      %v2243 = vmul.f32 %v2229, %v2239
      %2244 = vst [vmem:[#allocation2 + $0x448] sm:$0xff] %v2217
      %2247 = vrot.lane.b32.xlu0 %v2217, 127
      %v2248 = vpop.permute.xlu0 %2247
      %2249 = vrot.lane.b32.xlu0 %v2218, 127
      %v2250 = vpop.permute.xlu0 %2249
      %v2251 = vsel %vm687, %v2248, %v2250
      %2253 = vst [vmem:[#allocation2 + $0x4c8] sm:$0xff] %v2251
      %2254 = vrot.lane.b32.xlu0 %v2217, 118
      %v2255 = vpop.permute.xlu0 %2254
      %2256 = vrot.lane.b32.xlu0 %v2218, 118
      %v2257 = vpop.permute.xlu0 %2256
      %v2258 = vsel %vm660, %v2255, %v2257
      %2260 = vst [vmem:[#allocation2 + $0x648] sm:$0xff] %v2258
      %2261 = vrot.lane.b32.xlu0 %v2217, 117
      %v2262 = vpop.permute.xlu0 %2261
      %2263 = vrot.lane.b32.xlu0 %v2218, 117
      %v2264 = vpop.permute.xlu0 %2263
      %v2265 = vsel %vm754, %v2262, %v2264
      %2267 = vst [vmem:[#allocation2 + $0x6c8] sm:$0xff] %v2265
      %2268 = vst [vmem:[#allocation2 + $0x548] sm:$0xff] %v2242
      %2271 = vrot.lane.b32.xlu0 %v2242, 127
      %v2272 = vpop.permute.xlu0 %2271
      %2273 = vrot.lane.b32.xlu0 %v2243, 127
      %v2274 = vpop.permute.xlu0 %2273
      %v2275 = vsel %vm687, %v2272, %v2274
      %2277 = vst [vmem:[#allocation2 + $0x5c8] sm:$0xff] %v2275
      %2278 = vrot.lane.b32.xlu0 %v2242, 118
      %v2279 = vpop.permute.xlu0 %2278
      %2280 = vrot.lane.b32.xlu0 %v2243, 118
      %v2281 = vpop.permute.xlu0 %2280
      %v2282 = vsel %vm660, %v2279, %v2281
      %2284 = vst [vmem:[#allocation2 + $0x748] sm:$0xff] %v2282
      %2285 = vrot.lane.b32.xlu0 %v2242, 117
      %v2286 = vpop.permute.xlu0 %2285
      %2287 = vrot.lane.b32.xlu0 %v2243, 117
      %v2288 = vpop.permute.xlu0 %2287
      %v2289 = vsel %vm754, %v2286, %v2288
      %2291 = vst [vmem:[#allocation2 + $0x7c8] sm:$0xff] %v2289
      %v2292 = vmul.f32 %v1600, 0.25
      %v2293 = vmul.f32 %v1601, 0.25
      %v2294 = vmul.f32 %v1600, 0.75
      %v2295 = vmul.f32 %v1601, 0.75
      %2298 = vrot.lane.b32.xlu0 %v2294, 118
      %v2299 = vpop.permute.xlu0 %2298
      %2300 = vrot.lane.b32.xlu0 %v2295, 118
      %v2301 = vpop.permute.xlu0 %2300
      %v2302 = vsel %vm660, %v2299, %v2301
      %v2305 = vadd.f32 %v2292, %v2302
      %v2306 = vadd.f32 %v2293, %v2301
      %2309 = vrot.lane.b32.xlu0 %v2292, 118
      %v2310 = vpop.permute.xlu0 %2309
      %2311 = vrot.lane.b32.xlu0 %v2293, 118
      %v2312 = vpop.permute.xlu0 %2311
      %v2313 = vsel %vm660, %v2310, %v2312
      %v2316 = vadd.f32 %v2294, %v2313
      %v2317 = vadd.f32 %v2295, %v2312
      %v2318 = vmul.f32 %v2305, 0.25
      %v2319 = vmul.f32 %v2306, 0.25
      %v2320 = vmul.f32 %v2305, 0.75
      %v2321 = vmul.f32 %v2306, 0.75
      %2324 = vrot.lane.b32.xlu0 %v2320, 127
      %v2325 = vpop.permute.xlu0 %2324
      %2326 = vrot.lane.b32.xlu0 %v2321, 127
      %v2327 = vpop.permute.xlu0 %2326
      %v2328 = vsel %vm687, %v2325, %v2327
      %v2331 = vadd.f32 %v2318, %v2328
      %v2332 = vadd.f32 %v2319, %v2327
      %v2333 = vld [vmem:[%s8] ss:$4 sm:$0x3]
      %v2335 = vlaneseq
      %v2336 = vshrl.u32 %v2335, 7
      %v2337 = vsub.s32 0, %v2336
      %v2338 = vrot.slane %v2333, %v2337
      %v2339 = vlaneseq
      %v2340 = vshrl.u32 %v2339, 7
      %v2341 = vsub.s32 1, %v2340
      %v2342 = vrot.slane %v2333, %v2341
      %v2345 = vmul.f32 %v2331, %v2338
      %v2346 = vmul.f32 %v2332, %v2342
      %2349 = vrot.lane.b32.xlu0 %v2318, 127
      %v2350 = vpop.permute.xlu0 %2349
      %2351 = vrot.lane.b32.xlu0 %v2319, 127
      %v2352 = vpop.permute.xlu0 %2351
      %v2353 = vsel %vm687, %v2350, %v2352
      %v2356 = vadd.f32 %v2320, %v2353
      %v2357 = vadd.f32 %v2321, %v2352
      %v2358 = vld [vmem:[%s718] ss:$4 sm:$0x3]
      %v2360 = vlaneseq
      %v2361 = vshrl.u32 %v2360, 7
      %v2362 = vsub.s32 0, %v2361
      %v2363 = vrot.slane %v2358, %v2362
      %v2364 = vlaneseq
      %v2365 = vshrl.u32 %v2364, 7
      %v2366 = vsub.s32 1, %v2365
      %v2367 = vrot.slane %v2358, %v2366
      %v2370 = vmul.f32 %v2356, %v2363
      %v2371 = vmul.f32 %v2357, %v2367
      %2372 = vst [vmem:[#allocation2 + $0x68] sm:$0xff] %v2345
      %2375 = vrot.lane.b32.xlu0 %v2345, 127
      %v2376 = vpop.permute.xlu0 %2375
      %2377 = vrot.lane.b32.xlu0 %v2346, 127
      %v2378 = vpop.permute.xlu0 %2377
      %v2379 = vsel %vm687, %v2376, %v2378
      %2381 = vst [vmem:[#allocation2 + $0xe8] sm:$0xff] %v2379
      %2382 = vrot.lane.b32.xlu0 %v2345, 118
      %v2383 = vpop.permute.xlu0 %2382
      %2384 = vrot.lane.b32.xlu0 %v2346, 118
      %v2385 = vpop.permute.xlu0 %2384
      %v2386 = vsel %vm660, %v2383, %v2385
      %2388 = vst [vmem:[#allocation2 + $0x268] sm:$0xff] %v2386
      %2389 = vrot.lane.b32.xlu0 %v2345, 117
      %v2390 = vpop.permute.xlu0 %2389
      %2391 = vrot.lane.b32.xlu0 %v2346, 117
      %v2392 = vpop.permute.xlu0 %2391
      %v2393 = vsel %vm754, %v2390, %v2392
      %2395 = vst [vmem:[#allocation2 + $0x2e8] sm:$0xff] %v2393
      %2396 = vst [vmem:[#allocation2 + $0x168] sm:$0xff] %v2370
      %2399 = vrot.lane.b32.xlu0 %v2370, 127
      %v2400 = vpop.permute.xlu0 %2399
      %2401 = vrot.lane.b32.xlu0 %v2371, 127
      %v2402 = vpop.permute.xlu0 %2401
      %v2403 = vsel %vm687, %v2400, %v2402
      %2405 = vst [vmem:[#allocation2 + $0x1e8] sm:$0xff] %v2403
      %2406 = vrot.lane.b32.xlu0 %v2370, 118
      %v2407 = vpop.permute.xlu0 %2406
      %2408 = vrot.lane.b32.xlu0 %v2371, 118
      %v2409 = vpop.permute.xlu0 %2408
      %v2410 = vsel %vm660, %v2407, %v2409
      %2412 = vst [vmem:[#allocation2 + $0x368] sm:$0xff] %v2410
      %2413 = vrot.lane.b32.xlu0 %v2370, 117
      %v2414 = vpop.permute.xlu0 %2413
      %2415 = vrot.lane.b32.xlu0 %v2371, 117
      %v2416 = vpop.permute.xlu0 %2415
      %v2417 = vsel %vm754, %v2414, %v2416
      %2419 = vst [vmem:[#allocation2 + $0x3e8] sm:$0xff] %v2417
      %v2420 = vmul.f32 %v2316, 0.25
      %v2421 = vmul.f32 %v2317, 0.25
      %v2422 = vmul.f32 %v2316, 0.75
      %v2423 = vmul.f32 %v2317, 0.75
      %2426 = vrot.lane.b32.xlu0 %v2422, 127
      %v2427 = vpop.permute.xlu0 %2426
      %2428 = vrot.lane.b32.xlu0 %v2423, 127
      %v2429 = vpop.permute.xlu0 %2428
      %v2430 = vsel %vm687, %v2427, %v2429
      %v2433 = vadd.f32 %v2420, %v2430
      %v2434 = vadd.f32 %v2421, %v2429
      %v2435 = vld [vmem:[%s797] ss:$4 sm:$0x3]
      %v2437 = vlaneseq
      %v2438 = vshrl.u32 %v2437, 7
      %v2439 = vsub.s32 0, %v2438
      %v2440 = vrot.slane %v2435, %v2439
      %v2441 = vlaneseq
      %v2442 = vshrl.u32 %v2441, 7
      %v2443 = vsub.s32 1, %v2442
      %v2444 = vrot.slane %v2435, %v2443
      %v2447 = vmul.f32 %v2433, %v2440
      %v2448 = vmul.f32 %v2434, %v2444
      %2451 = vrot.lane.b32.xlu0 %v2420, 127
      %v2452 = vpop.permute.xlu0 %2451
      %2453 = vrot.lane.b32.xlu0 %v2421, 127
      %v2454 = vpop.permute.xlu0 %2453
      %v2455 = vsel %vm687, %v2452, %v2454
      %v2458 = vadd.f32 %v2422, %v2455
      %v2459 = vadd.f32 %v2423, %v2454
      %v2460 = vld [vmem:[%s823] ss:$4 sm:$0x3]
      %v2462 = vlaneseq
      %v2463 = vshrl.u32 %v2462, 7
      %v2464 = vsub.s32 0, %v2463
      %v2465 = vrot.slane %v2460, %v2464
      %v2466 = vlaneseq
      %v2467 = vshrl.u32 %v2466, 7
      %v2468 = vsub.s32 1, %v2467
      %v2469 = vrot.slane %v2460, %v2468
      %v2472 = vmul.f32 %v2458, %v2465
      %v2473 = vmul.f32 %v2459, %v2469
      %2474 = vst [vmem:[#allocation2 + $0x468] sm:$0xff] %v2447
      %2477 = vrot.lane.b32.xlu0 %v2447, 127
      %v2478 = vpop.permute.xlu0 %2477
      %2479 = vrot.lane.b32.xlu0 %v2448, 127
      %v2480 = vpop.permute.xlu0 %2479
      %v2481 = vsel %vm687, %v2478, %v2480
      %2483 = vst [vmem:[#allocation2 + $0x4e8] sm:$0xff] %v2481
      %2484 = vrot.lane.b32.xlu0 %v2447, 118
      %v2485 = vpop.permute.xlu0 %2484
      %2486 = vrot.lane.b32.xlu0 %v2448, 118
      %v2487 = vpop.permute.xlu0 %2486
      %v2488 = vsel %vm660, %v2485, %v2487
      %2490 = vst [vmem:[#allocation2 + $0x668] sm:$0xff] %v2488
      %2491 = vrot.lane.b32.xlu0 %v2447, 117
      %v2492 = vpop.permute.xlu0 %2491
      %2493 = vrot.lane.b32.xlu0 %v2448, 117
      %v2494 = vpop.permute.xlu0 %2493
      %v2495 = vsel %vm754, %v2492, %v2494
      %2497 = vst [vmem:[#allocation2 + $0x6e8] sm:$0xff] %v2495
      %2498 = vst [vmem:[#allocation2 + $0x568] sm:$0xff] %v2472
      %2501 = vrot.lane.b32.xlu0 %v2472, 127
      %v2502 = vpop.permute.xlu0 %2501
      %2503 = vrot.lane.b32.xlu0 %v2473, 127
      %v2504 = vpop.permute.xlu0 %2503
      %v2505 = vsel %vm687, %v2502, %v2504
      %2507 = vst [vmem:[#allocation2 + $0x5e8] sm:$0xff] %v2505
      %2508 = vrot.lane.b32.xlu0 %v2472, 118
      %v2509 = vpop.permute.xlu0 %2508
      %2510 = vrot.lane.b32.xlu0 %v2473, 118
      %v2511 = vpop.permute.xlu0 %2510
      %v2512 = vsel %vm660, %v2509, %v2511
      %2514 = vst [vmem:[#allocation2 + $0x768] sm:$0xff] %v2512
      %2515 = vrot.lane.b32.xlu0 %v2472, 117
      %v2516 = vpop.permute.xlu0 %2515
      %2517 = vrot.lane.b32.xlu0 %v2473, 117
      %v2518 = vpop.permute.xlu0 %2517
      %v2519 = vsel %vm754, %v2516, %v2518
      %2521 = vst [vmem:[#allocation2 + $0x7e8] sm:$0xff] %v2519
      %v2522 = vld [vmem:[%s565] sm:$0xff]
      %v2523 = vld [vmem:[%s565 + $0x8] sm:$0xff]
      %v2524 = vld [vmem:[%s578] sm:$0xff]
      %v2525 = vld [vmem:[%s578 + $0x8] sm:$0xff]
      %v2526 = vld [vmem:[%s591] sm:$0xff]
      %v2527 = vld [vmem:[%s591 + $0x8] sm:$0xff]
      %v2528 = vmul.f32 %v2522, 0.75
      %v2529 = vmul.f32 %v2523, 0.75
      %v2530 = vmul.f32 %v2524, 0.25
      %v2531 = vmul.f32 %v2525, 0.25
      %v2532 = vadd.f32 %v2528, %v2530
      %v2533 = vadd.f32 %v2529, %v2531
      %v2534 = vmul.f32 %v2522, 0.25
      %v2535 = vmul.f32 %v2523, 0.25
      %v2536 = vmul.f32 %v2524, 0.75
      %v2537 = vmul.f32 %v2525, 0.75
      %v2538 = vadd.f32 %v2534, %v2536
      %v2539 = vadd.f32 %v2535, %v2537
      %v2540 = vmul.f32 %v2526, 0.25
      %v2541 = vmul.f32 %v2527, 0.25
      %v2542 = vadd.f32 %v2536, %v2540
      %v2543 = vadd.f32 %v2537, %v2541
      %v2544 = vmul.f32 %v2526, 0.75
      %v2545 = vmul.f32 %v2527, 0.75
      %v2546 = vadd.f32 %v2530, %v2544
      %v2547 = vadd.f32 %v2531, %v2545
      %v2548 = vmul.f32 %v2532, 0.25
      %v2549 = vmul.f32 %v2533, 0.25
      %v2550 = vmul.f32 %v2532, 0.75
      %v2551 = vmul.f32 %v2533, 0.75
      %2554 = vrot.lane.b32.xlu0 %v2550, 118
      %v2555 = vpop.permute.xlu0 %2554
      %2556 = vrot.lane.b32.xlu0 %v2551, 118
      %v2557 = vpop.permute.xlu0 %2556
      %v2558 = vsel %vm660, %v2555, %v2557
      %v2561 = vadd.f32 %v2548, %v2558
      %v2562 = vadd.f32 %v2549, %v2557
      %2565 = vrot.lane.b32.xlu0 %v2548, 118
      %v2566 = vpop.permute.xlu0 %2565
      %2567 = vrot.lane.b32.xlu0 %v2549, 118
      %v2568 = vpop.permute.xlu0 %2567
      %v2569 = vsel %vm660, %v2566, %v2568
      %v2572 = vadd.f32 %v2550, %v2569
      %v2573 = vadd.f32 %v2551, %v2568
      %v2574 = vmul.f32 %v2561, 0.25
      %v2575 = vmul.f32 %v2562, 0.25
      %v2576 = vmul.f32 %v2561, 0.75
      %v2577 = vmul.f32 %v2562, 0.75
      %2580 = vrot.lane.b32.xlu0 %v2576, 127
      %v2581 = vpop.permute.xlu0 %2580
      %2582 = vrot.lane.b32.xlu0 %v2577, 127
      %v2583 = vpop.permute.xlu0 %2582
      %v2584 = vsel %vm687, %v2581, %v2583
      %v2587 = vadd.f32 %v2574, %v2584
      %v2588 = vadd.f32 %v2575, %v2583
      %v2589 = vld [vmem:[%s8] ss:$4 sm:$0x3]
      %v2591 = vlaneseq
      %v2592 = vshrl.u32 %v2591, 7
      %v2593 = vsub.s32 0, %v2592
      %v2594 = vrot.slane %v2589, %v2593
      %v2595 = vlaneseq
      %v2596 = vshrl.u32 %v2595, 7
      %v2597 = vsub.s32 1, %v2596
      %v2598 = vrot.slane %v2589, %v2597
      %v2601 = vmul.f32 %v2587, %v2594
      %v2602 = vmul.f32 %v2588, %v2598
      %2605 = vrot.lane.b32.xlu0 %v2574, 127
      %v2606 = vpop.permute.xlu0 %2605
      %2607 = vrot.lane.b32.xlu0 %v2575, 127
      %v2608 = vpop.permute.xlu0 %2607
      %v2609 = vsel %vm687, %v2606, %v2608
      %v2612 = vadd.f32 %v2576, %v2609
      %v2613 = vadd.f32 %v2577, %v2608
      %v2614 = vld [vmem:[%s718] ss:$4 sm:$0x3]
      %v2616 = vlaneseq
      %v2617 = vshrl.u32 %v2616, 7
      %v2618 = vsub.s32 0, %v2617
      %v2619 = vrot.slane %v2614, %v2618
      %v2620 = vlaneseq
      %v2621 = vshrl.u32 %v2620, 7
      %v2622 = vsub.s32 1, %v2621
      %v2623 = vrot.slane %v2614, %v2622
      %v2626 = vmul.f32 %v2612, %v2619
      %v2627 = vmul.f32 %v2613, %v2623
      %2628 = vst [vmem:[#allocation2 + $0x10] sm:$0xff] %v2601
      %2631 = vrot.lane.b32.xlu0 %v2601, 127
      %v2632 = vpop.permute.xlu0 %2631
      %2633 = vrot.lane.b32.xlu0 %v2602, 127
      %v2634 = vpop.permute.xlu0 %2633
      %v2635 = vsel %vm687, %v2632, %v2634
      %2637 = vst [vmem:[#allocation2 + $0x90] sm:$0xff] %v2635
      %2638 = vrot.lane.b32.xlu0 %v2601, 118
      %v2639 = vpop.permute.xlu0 %2638
      %2640 = vrot.lane.b32.xlu0 %v2602, 118
      %v2641 = vpop.permute.xlu0 %2640
      %v2642 = vsel %vm660, %v2639, %v2641
      %2644 = vst [vmem:[#allocation2 + $0x210] sm:$0xff] %v2642
      %2645 = vrot.lane.b32.xlu0 %v2601, 117
      %v2646 = vpop.permute.xlu0 %2645
      %2647 = vrot.lane.b32.xlu0 %v2602, 117
      %v2648 = vpop.permute.xlu0 %2647
      %v2649 = vsel %vm754, %v2646, %v2648
      %2651 = vst [vmem:[#allocation2 + $0x290] sm:$0xff] %v2649
      %2652 = vst [vmem:[#allocation2 + $0x110] sm:$0xff] %v2626
      %2655 = vrot.lane.b32.xlu0 %v2626, 127
      %v2656 = vpop.permute.xlu0 %2655
      %2657 = vrot.lane.b32.xlu0 %v2627, 127
      %v2658 = vpop.permute.xlu0 %2657
      %v2659 = vsel %vm687, %v2656, %v2658
      %2661 = vst [vmem:[#allocation2 + $0x190] sm:$0xff] %v2659
      %2662 = vrot.lane.b32.xlu0 %v2626, 118
      %v2663 = vpop.permute.xlu0 %2662
      %2664 = vrot.lane.b32.xlu0 %v2627, 118
      %v2665 = vpop.permute.xlu0 %2664
      %v2666 = vsel %vm660, %v2663, %v2665
      %2668 = vst [vmem:[#allocation2 + $0x310] sm:$0xff] %v2666
      %2669 = vrot.lane.b32.xlu0 %v2626, 117
      %v2670 = vpop.permute.xlu0 %2669
      %2671 = vrot.lane.b32.xlu0 %v2627, 117
      %v2672 = vpop.permute.xlu0 %2671
      %v2673 = vsel %vm754, %v2670, %v2672
      %2675 = vst [vmem:[#allocation2 + $0x390] sm:$0xff] %v2673
      %v2676 = vmul.f32 %v2572, 0.25
      %v2677 = vmul.f32 %v2573, 0.25
      %v2678 = vmul.f32 %v2572, 0.75
      %v2679 = vmul.f32 %v2573, 0.75
      %2682 = vrot.lane.b32.xlu0 %v2678, 127
      %v2683 = vpop.permute.xlu0 %2682
      %2684 = vrot.lane.b32.xlu0 %v2679, 127
      %v2685 = vpop.permute.xlu0 %2684
      %v2686 = vsel %vm687, %v2683, %v2685
      %v2689 = vadd.f32 %v2676, %v2686
      %v2690 = vadd.f32 %v2677, %v2685
      %v2691 = vld [vmem:[%s797] ss:$4 sm:$0x3]
      %v2693 = vlaneseq
      %v2694 = vshrl.u32 %v2693, 7
      %v2695 = vsub.s32 0, %v2694
      %v2696 = vrot.slane %v2691, %v2695
      %v2697 = vlaneseq
      %v2698 = vshrl.u32 %v2697, 7
      %v2699 = vsub.s32 1, %v2698
      %v2700 = vrot.slane %v2691, %v2699
      %v2703 = vmul.f32 %v2689, %v2696
      %v2704 = vmul.f32 %v2690, %v2700
      %2707 = vrot.lane.b32.xlu0 %v2676, 127
      %v2708 = vpop.permute.xlu0 %2707
      %2709 = vrot.lane.b32.xlu0 %v2677, 127
      %v2710 = vpop.permute.xlu0 %2709
      %v2711 = vsel %vm687, %v2708, %v2710
      %v2714 = vadd.f32 %v2678, %v2711
      %v2715 = vadd.f32 %v2679, %v2710
      %v2716 = vld [vmem:[%s823] ss:$4 sm:$0x3]
      %v2718 = vlaneseq
      %v2719 = vshrl.u32 %v2718, 7
      %v2720 = vsub.s32 0, %v2719
      %v2721 = vrot.slane %v2716, %v2720
      %v2722 = vlaneseq
      %v2723 = vshrl.u32 %v2722, 7
      %v2724 = vsub.s32 1, %v2723
      %v2725 = vrot.slane %v2716, %v2724
      %v2728 = vmul.f32 %v2714, %v2721
      %v2729 = vmul.f32 %v2715, %v2725
      %2730 = vst [vmem:[#allocation2 + $0x410] sm:$0xff] %v2703
      %2733 = vrot.lane.b32.xlu0 %v2703, 127
      %v2734 = vpop.permute.xlu0 %2733
      %2735 = vrot.lane.b32.xlu0 %v2704, 127
      %v2736 = vpop.permute.xlu0 %2735
      %v2737 = vsel %vm687, %v2734, %v2736
      %2739 = vst [vmem:[#allocation2 + $0x490] sm:$0xff] %v2737
      %2740 = vrot.lane.b32.xlu0 %v2703, 118
      %v2741 = vpop.permute.xlu0 %2740
      %2742 = vrot.lane.b32.xlu0 %v2704, 118
      %v2743 = vpop.permute.xlu0 %2742
      %v2744 = vsel %vm660, %v2741, %v2743
      %2746 = vst [vmem:[#allocation2 + $0x610] sm:$0xff] %v2744
      %2747 = vrot.lane.b32.xlu0 %v2703, 117
      %v2748 = vpop.permute.xlu0 %2747
      %2749 = vrot.lane.b32.xlu0 %v2704, 117
      %v2750 = vpop.permute.xlu0 %2749
      %v2751 = vsel %vm754, %v2748, %v2750
      %2753 = vst [vmem:[#allocation2 + $0x690] sm:$0xff] %v2751
      %2754 = vst [vmem:[#allocation2 + $0x510] sm:$0xff] %v2728
      %2757 = vrot.lane.b32.xlu0 %v2728, 127
      %v2758 = vpop.permute.xlu0 %2757
      %2759 = vrot.lane.b32.xlu0 %v2729, 127
      %v2760 = vpop.permute.xlu0 %2759
      %v2761 = vsel %vm687, %v2758, %v2760
      %2763 = vst [vmem:[#allocation2 + $0x590] sm:$0xff] %v2761
      %2764 = vrot.lane.b32.xlu0 %v2728, 118
      %v2765 = vpop.permute.xlu0 %2764
      %2766 = vrot.lane.b32.xlu0 %v2729, 118
      %v2767 = vpop.permute.xlu0 %2766
      %v2768 = vsel %vm660, %v2765, %v2767
      %2770 = vst [vmem:[#allocation2 + $0x710] sm:$0xff] %v2768
      %2771 = vrot.lane.b32.xlu0 %v2728, 117
      %v2772 = vpop.permute.xlu0 %2771
      %2773 = vrot.lane.b32.xlu0 %v2729, 117
      %v2774 = vpop.permute.xlu0 %2773
      %v2775 = vsel %vm754, %v2772, %v2774
      %2777 = vst [vmem:[#allocation2 + $0x790] sm:$0xff] %v2775
      %v2778 = vmul.f32 %v2538, 0.25
      %v2779 = vmul.f32 %v2539, 0.25
      %v2780 = vmul.f32 %v2538, 0.75
      %v2781 = vmul.f32 %v2539, 0.75
      %2784 = vrot.lane.b32.xlu0 %v2780, 118
      %v2785 = vpop.permute.xlu0 %2784
      %2786 = vrot.lane.b32.xlu0 %v2781, 118
      %v2787 = vpop.permute.xlu0 %2786
      %v2788 = vsel %vm660, %v2785, %v2787
      %v2791 = vadd.f32 %v2778, %v2788
      %v2792 = vadd.f32 %v2779, %v2787
      %2795 = vrot.lane.b32.xlu0 %v2778, 118
      %v2796 = vpop.permute.xlu0 %2795
      %2797 = vrot.lane.b32.xlu0 %v2779, 118
      %v2798 = vpop.permute.xlu0 %2797
      %v2799 = vsel %vm660, %v2796, %v2798
      %v2802 = vadd.f32 %v2780, %v2799
      %v2803 = vadd.f32 %v2781, %v2798
      %v2804 = vmul.f32 %v2791, 0.25
      %v2805 = vmul.f32 %v2792, 0.25
      %v2806 = vmul.f32 %v2791, 0.75
      %v2807 = vmul.f32 %v2792, 0.75
      %2810 = vrot.lane.b32.xlu0 %v2806, 127
      %v2811 = vpop.permute.xlu0 %2810
      %2812 = vrot.lane.b32.xlu0 %v2807, 127
      %v2813 = vpop.permute.xlu0 %2812
      %v2814 = vsel %vm687, %v2811, %v2813
      %v2817 = vadd.f32 %v2804, %v2814
      %v2818 = vadd.f32 %v2805, %v2813
      %v2819 = vld [vmem:[%s8] ss:$4 sm:$0x3]
      %v2821 = vlaneseq
      %v2822 = vshrl.u32 %v2821, 7
      %v2823 = vsub.s32 0, %v2822
      %v2824 = vrot.slane %v2819, %v2823
      %v2825 = vlaneseq
      %v2826 = vshrl.u32 %v2825, 7
      %v2827 = vsub.s32 1, %v2826
      %v2828 = vrot.slane %v2819, %v2827
      %v2831 = vmul.f32 %v2817, %v2824
      %v2832 = vmul.f32 %v2818, %v2828
      %2835 = vrot.lane.b32.xlu0 %v2804, 127
      %v2836 = vpop.permute.xlu0 %2835
      %2837 = vrot.lane.b32.xlu0 %v2805, 127
      %v2838 = vpop.permute.xlu0 %2837
      %v2839 = vsel %vm687, %v2836, %v2838
      %v2842 = vadd.f32 %v2806, %v2839
      %v2843 = vadd.f32 %v2807, %v2838
      %v2844 = vld [vmem:[%s718] ss:$4 sm:$0x3]
      %v2846 = vlaneseq
      %v2847 = vshrl.u32 %v2846, 7
      %v2848 = vsub.s32 0, %v2847
      %v2849 = vrot.slane %v2844, %v2848
      %v2850 = vlaneseq
      %v2851 = vshrl.u32 %v2850, 7
      %v2852 = vsub.s32 1, %v2851
      %v2853 = vrot.slane %v2844, %v2852
      %v2856 = vmul.f32 %v2842, %v2849
      %v2857 = vmul.f32 %v2843, %v2853
      %2858 = vst [vmem:[#allocation2 + $0x30] sm:$0xff] %v2831
      %2861 = vrot.lane.b32.xlu0 %v2831, 127
      %v2862 = vpop.permute.xlu0 %2861
      %2863 = vrot.lane.b32.xlu0 %v2832, 127
      %v2864 = vpop.permute.xlu0 %2863
      %v2865 = vsel %vm687, %v2862, %v2864
      %2867 = vst [vmem:[#allocation2 + $0xb0] sm:$0xff] %v2865
      %2868 = vrot.lane.b32.xlu0 %v2831, 118
      %v2869 = vpop.permute.xlu0 %2868
      %2870 = vrot.lane.b32.xlu0 %v2832, 118
      %v2871 = vpop.permute.xlu0 %2870
      %v2872 = vsel %vm660, %v2869, %v2871
      %2874 = vst [vmem:[#allocation2 + $0x230] sm:$0xff] %v2872
      %2875 = vrot.lane.b32.xlu0 %v2831, 117
      %v2876 = vpop.permute.xlu0 %2875
      %2877 = vrot.lane.b32.xlu0 %v2832, 117
      %v2878 = vpop.permute.xlu0 %2877
      %v2879 = vsel %vm754, %v2876, %v2878
      %2881 = vst [vmem:[#allocation2 + $0x2b0] sm:$0xff] %v2879
      %2882 = vst [vmem:[#allocation2 + $0x130] sm:$0xff] %v2856
      %2885 = vrot.lane.b32.xlu0 %v2856, 127
      %v2886 = vpop.permute.xlu0 %2885
      %2887 = vrot.lane.b32.xlu0 %v2857, 127
      %v2888 = vpop.permute.xlu0 %2887
      %v2889 = vsel %vm687, %v2886, %v2888
      %2891 = vst [vmem:[#allocation2 + $0x1b0] sm:$0xff] %v2889
      %2892 = vrot.lane.b32.xlu0 %v2856, 118
      %v2893 = vpop.permute.xlu0 %2892
      %2894 = vrot.lane.b32.xlu0 %v2857, 118
      %v2895 = vpop.permute.xlu0 %2894
      %v2896 = vsel %vm660, %v2893, %v2895
      %2898 = vst [vmem:[#allocation2 + $0x330] sm:$0xff] %v2896
      %2899 = vrot.lane.b32.xlu0 %v2856, 117
      %v2900 = vpop.permute.xlu0 %2899
      %2901 = vrot.lane.b32.xlu0 %v2857, 117
      %v2902 = vpop.permute.xlu0 %2901
      %v2903 = vsel %vm754, %v2900, %v2902
      %2905 = vst [vmem:[#allocation2 + $0x3b0] sm:$0xff] %v2903
      %v2906 = vmul.f32 %v2802, 0.25
      %v2907 = vmul.f32 %v2803, 0.25
      %v2908 = vmul.f32 %v2802, 0.75
      %v2909 = vmul.f32 %v2803, 0.75
      %2912 = vrot.lane.b32.xlu0 %v2908, 127
      %v2913 = vpop.permute.xlu0 %2912
      %2914 = vrot.lane.b32.xlu0 %v2909, 127
      %v2915 = vpop.permute.xlu0 %2914
      %v2916 = vsel %vm687, %v2913, %v2915
      %v2919 = vadd.f32 %v2906, %v2916
      %v2920 = vadd.f32 %v2907, %v2915
      %v2921 = vld [vmem:[%s797] ss:$4 sm:$0x3]
      %v2923 = vlaneseq
      %v2924 = vshrl.u32 %v2923, 7
      %v2925 = vsub.s32 0, %v2924
      %v2926 = vrot.slane %v2921, %v2925
      %v2927 = vlaneseq
      %v2928 = vshrl.u32 %v2927, 7
      %v2929 = vsub.s32 1, %v2928
      %v2930 = vrot.slane %v2921, %v2929
      %v2933 = vmul.f32 %v2919, %v2926
      %v2934 = vmul.f32 %v2920, %v2930
      %2937 = vrot.lane.b32.xlu0 %v2906, 127
      %v2938 = vpop.permute.xlu0 %2937
      %2939 = vrot.lane.b32.xlu0 %v2907, 127
      %v2940 = vpop.permute.xlu0 %2939
      %v2941 = vsel %vm687, %v2938, %v2940
      %v2944 = vadd.f32 %v2908, %v2941
      %v2945 = vadd.f32 %v2909, %v2940
      %v2946 = vld [vmem:[%s823] ss:$4 sm:$0x3]
      %v2948 = vlaneseq
      %v2949 = vshrl.u32 %v2948, 7
      %v2950 = vsub.s32 0, %v2949
      %v2951 = vrot.slane %v2946, %v2950
      %v2952 = vlaneseq
      %v2953 = vshrl.u32 %v2952, 7
      %v2954 = vsub.s32 1, %v2953
      %v2955 = vrot.slane %v2946, %v2954
      %v2958 = vmul.f32 %v2944, %v2951
      %v2959 = vmul.f32 %v2945, %v2955
      %2960 = vst [vmem:[#allocation2 + $0x430] sm:$0xff] %v2933
      %2963 = vrot.lane.b32.xlu0 %v2933, 127
      %v2964 = vpop.permute.xlu0 %2963
      %2965 = vrot.lane.b32.xlu0 %v2934, 127
      %v2966 = vpop.permute.xlu0 %2965
      %v2967 = vsel %vm687, %v2964, %v2966
      %2969 = vst [vmem:[#allocation2 + $0x4b0] sm:$0xff] %v2967
      %2970 = vrot.lane.b32.xlu0 %v2933, 118
      %v2971 = vpop.permute.xlu0 %2970
      %2972 = vrot.lane.b32.xlu0 %v2934, 118
      %v2973 = vpop.permute.xlu0 %2972
      %v2974 = vsel %vm660, %v2971, %v2973
      %2976 = vst [vmem:[#allocation2 + $0x630] sm:$0xff] %v2974
      %2977 = vrot.lane.b32.xlu0 %v2933, 117
      %v2978 = vpop.permute.xlu0 %2977
      %2979 = vrot.lane.b32.xlu0 %v2934, 117
      %v2980 = vpop.permute.xlu0 %2979
      %v2981 = vsel %vm754, %v2978, %v2980
      %2983 = vst [vmem:[#allocation2 + $0x6b0] sm:$0xff] %v2981
      %2984 = vst [vmem:[#allocation2 + $0x530] sm:$0xff] %v2958
      %2987 = vrot.lane.b32.xlu0 %v2958, 127
      %v2988 = vpop.permute.xlu0 %2987
      %2989 = vrot.lane.b32.xlu0 %v2959, 127
      %v2990 = vpop.permute.xlu0 %2989
      %v2991 = vsel %vm687, %v2988, %v2990
      %2993 = vst [vmem:[#allocation2 + $0x5b0] sm:$0xff] %v2991
      %2994 = vrot.lane.b32.xlu0 %v2958, 118
      %v2995 = vpop.permute.xlu0 %2994
      %2996 = vrot.lane.b32.xlu0 %v2959, 118
      %v2997 = vpop.permute.xlu0 %2996
      %v2998 = vsel %vm660, %v2995, %v2997
      %3000 = vst [vmem:[#allocation2 + $0x730] sm:$0xff] %v2998
      %3001 = vrot.lane.b32.xlu0 %v2958, 117
      %v3002 = vpop.permute.xlu0 %3001
      %3003 = vrot.lane.b32.xlu0 %v2959, 117
      %v3004 = vpop.permute.xlu0 %3003
      %v3005 = vsel %vm754, %v3002, %v3004
      %3007 = vst [vmem:[#allocation2 + $0x7b0] sm:$0xff] %v3005
      %v3008 = vmul.f32 %v2542, 0.25
      %v3009 = vmul.f32 %v2543, 0.25
      %v3010 = vmul.f32 %v2542, 0.75
      %v3011 = vmul.f32 %v2543, 0.75
      %3014 = vrot.lane.b32.xlu0 %v3010, 118
      %v3015 = vpop.permute.xlu0 %3014
      %3016 = vrot.lane.b32.xlu0 %v3011, 118
      %v3017 = vpop.permute.xlu0 %3016
      %v3018 = vsel %vm660, %v3015, %v3017
      %v3021 = vadd.f32 %v3008, %v3018
      %v3022 = vadd.f32 %v3009, %v3017
      %3025 = vrot.lane.b32.xlu0 %v3008, 118
      %v3026 = vpop.permute.xlu0 %3025
      %3027 = vrot.lane.b32.xlu0 %v3009, 118
      %v3028 = vpop.permute.xlu0 %3027
      %v3029 = vsel %vm660, %v3026, %v3028
      %v3032 = vadd.f32 %v3010, %v3029
      %v3033 = vadd.f32 %v3011, %v3028
      %v3034 = vmul.f32 %v3021, 0.25
      %v3035 = vmul.f32 %v3022, 0.25
      %v3036 = vmul.f32 %v3021, 0.75
      %v3037 = vmul.f32 %v3022, 0.75
      %3040 = vrot.lane.b32.xlu0 %v3036, 127
      %v3041 = vpop.permute.xlu0 %3040
      %3042 = vrot.lane.b32.xlu0 %v3037, 127
      %v3043 = vpop.permute.xlu0 %3042
      %v3044 = vsel %vm687, %v3041, %v3043
      %v3047 = vadd.f32 %v3034, %v3044
      %v3048 = vadd.f32 %v3035, %v3043
      %v3049 = vld [vmem:[%s8] ss:$4 sm:$0x3]
      %v3051 = vlaneseq
      %v3052 = vshrl.u32 %v3051, 7
      %v3053 = vsub.s32 0, %v3052
      %v3054 = vrot.slane %v3049, %v3053
      %v3055 = vlaneseq
      %v3056 = vshrl.u32 %v3055, 7
      %v3057 = vsub.s32 1, %v3056
      %v3058 = vrot.slane %v3049, %v3057
      %v3061 = vmul.f32 %v3047, %v3054
      %v3062 = vmul.f32 %v3048, %v3058
      %3065 = vrot.lane.b32.xlu0 %v3034, 127
      %v3066 = vpop.permute.xlu0 %3065
      %3067 = vrot.lane.b32.xlu0 %v3035, 127
      %v3068 = vpop.permute.xlu0 %3067
      %v3069 = vsel %vm687, %v3066, %v3068
      %v3072 = vadd.f32 %v3036, %v3069
      %v3073 = vadd.f32 %v3037, %v3068
      %v3074 = vld [vmem:[%s718] ss:$4 sm:$0x3]
      %v3076 = vlaneseq
      %v3077 = vshrl.u32 %v3076, 7
      %v3078 = vsub.s32 0, %v3077
      %v3079 = vrot.slane %v3074, %v3078
      %v3080 = vlaneseq
      %v3081 = vshrl.u32 %v3080, 7
      %v3082 = vsub.s32 1, %v3081
      %v3083 = vrot.slane %v3074, %v3082
      %v3086 = vmul.f32 %v3072, %v3079
      %v3087 = vmul.f32 %v3073, %v3083
      %3088 = vst [vmem:[#allocation2 + $0x50] sm:$0xff] %v3061
      %3091 = vrot.lane.b32.xlu0 %v3061, 127
      %v3092 = vpop.permute.xlu0 %3091
      %3093 = vrot.lane.b32.xlu0 %v3062, 127
      %v3094 = vpop.permute.xlu0 %3093
      %v3095 = vsel %vm687, %v3092, %v3094
      %3097 = vst [vmem:[#allocation2 + $0xd0] sm:$0xff] %v3095
      %3098 = vrot.lane.b32.xlu0 %v3061, 118
      %v3099 = vpop.permute.xlu0 %3098
      %3100 = vrot.lane.b32.xlu0 %v3062, 118
      %v3101 = vpop.permute.xlu0 %3100
      %v3102 = vsel %vm660, %v3099, %v3101
      %3104 = vst [vmem:[#allocation2 + $0x250] sm:$0xff] %v3102
      %3105 = vrot.lane.b32.xlu0 %v3061, 117
      %v3106 = vpop.permute.xlu0 %3105
      %3107 = vrot.lane.b32.xlu0 %v3062, 117
      %v3108 = vpop.permute.xlu0 %3107
      %v3109 = vsel %vm754, %v3106, %v3108
      %3111 = vst [vmem:[#allocation2 + $0x2d0] sm:$0xff] %v3109
      %3112 = vst [vmem:[#allocation2 + $0x150] sm:$0xff] %v3086
      %3115 = vrot.lane.b32.xlu0 %v3086, 127
      %v3116 = vpop.permute.xlu0 %3115
      %3117 = vrot.lane.b32.xlu0 %v3087, 127
      %v3118 = vpop.permute.xlu0 %3117
      %v3119 = vsel %vm687, %v3116, %v3118
      %3121 = vst [vmem:[#allocation2 + $0x1d0] sm:$0xff] %v3119
      %3122 = vrot.lane.b32.xlu0 %v3086, 118
      %v3123 = vpop.permute.xlu0 %3122
      %3124 = vrot.lane.b32.xlu0 %v3087, 118
      %v3125 = vpop.permute.xlu0 %3124
      %v3126 = vsel %vm660, %v3123, %v3125
      %3128 = vst [vmem:[#allocation2 + $0x350] sm:$0xff] %v3126
      %3129 = vrot.lane.b32.xlu0 %v3086, 117
      %v3130 = vpop.permute.xlu0 %3129
      %3131 = vrot.lane.b32.xlu0 %v3087, 117
      %v3132 = vpop.permute.xlu0 %3131
      %v3133 = vsel %vm754, %v3130, %v3132
      %3135 = vst [vmem:[#allocation2 + $0x3d0] sm:$0xff] %v3133
      %v3136 = vmul.f32 %v3032, 0.25
      %v3137 = vmul.f32 %v3033, 0.25
      %v3138 = vmul.f32 %v3032, 0.75
      %v3139 = vmul.f32 %v3033, 0.75
      %3142 = vrot.lane.b32.xlu0 %v3138, 127
      %v3143 = vpop.permute.xlu0 %3142
      %3144 = vrot.lane.b32.xlu0 %v3139, 127
      %v3145 = vpop.permute.xlu0 %3144
      %v3146 = vsel %vm687, %v3143, %v3145
      %v3149 = vadd.f32 %v3136, %v3146
      %v3150 = vadd.f32 %v3137, %v3145
      %v3151 = vld [vmem:[%s797] ss:$4 sm:$0x3]
      %v3153 = vlaneseq
      %v3154 = vshrl.u32 %v3153, 7
      %v3155 = vsub.s32 0, %v3154
      %v3156 = vrot.slane %v3151, %v3155
      %v3157 = vlaneseq
      %v3158 = vshrl.u32 %v3157, 7
      %v3159 = vsub.s32 1, %v3158
      %v3160 = vrot.slane %v3151, %v3159
      %v3163 = vmul.f32 %v3149, %v3156
      %v3164 = vmul.f32 %v3150, %v3160
      %3167 = vrot.lane.b32.xlu0 %v3136, 127
      %v3168 = vpop.permute.xlu0 %3167
      %3169 = vrot.lane.b32.xlu0 %v3137, 127
      %v3170 = vpop.permute.xlu0 %3169
      %v3171 = vsel %vm687, %v3168, %v3170
      %v3174 = vadd.f32 %v3138, %v3171
      %v3175 = vadd.f32 %v3139, %v3170
      %v3176 = vld [vmem:[%s823] ss:$4 sm:$0x3]
      %v3178 = vlaneseq
      %v3179 = vshrl.u32 %v3178, 7
      %v3180 = vsub.s32 0, %v3179
      %v3181 = vrot.slane %v3176, %v3180
      %v3182 = vlaneseq
      %v3183 = vshrl.u32 %v3182, 7
      %v3184 = vsub.s32 1, %v3183
      %v3185 = vrot.slane %v3176, %v3184
      %v3188 = vmul.f32 %v3174, %v3181
      %v3189 = vmul.f32 %v3175, %v3185
      %3190 = vst [vmem:[#allocation2 + $0x450] sm:$0xff] %v3163
      %3193 = vrot.lane.b32.xlu0 %v3163, 127
      %v3194 = vpop.permute.xlu0 %3193
      %3195 = vrot.lane.b32.xlu0 %v3164, 127
      %v3196 = vpop.permute.xlu0 %3195
      %v3197 = vsel %vm687, %v3194, %v3196
      %3199 = vst [vmem:[#allocation2 + $0x4d0] sm:$0xff] %v3197
      %3200 = vrot.lane.b32.xlu0 %v3163, 118
      %v3201 = vpop.permute.xlu0 %3200
      %3202 = vrot.lane.b32.xlu0 %v3164, 118
      %v3203 = vpop.permute.xlu0 %3202
      %v3204 = vsel %vm660, %v3201, %v3203
      %3206 = vst [vmem:[#allocation2 + $0x650] sm:$0xff] %v3204
      %3207 = vrot.lane.b32.xlu0 %v3163, 117
      %v3208 = vpop.permute.xlu0 %3207
      %3209 = vrot.lane.b32.xlu0 %v3164, 117
      %v3210 = vpop.permute.xlu0 %3209
      %v3211 = vsel %vm754, %v3208, %v3210
      %3213 = vst [vmem:[#allocation2 + $0x6d0] sm:$0xff] %v3211
      %3214 = vst [vmem:[#allocation2 + $0x550] sm:$0xff] %v3188
      %3217 = vrot.lane.b32.xlu0 %v3188, 127
      %v3218 = vpop.permute.xlu0 %3217
      %3219 = vrot.lane.b32.xlu0 %v3189, 127
      %v3220 = vpop.permute.xlu0 %3219
      %v3221 = vsel %vm687, %v3218, %v3220
      %3223 = vst [vmem:[#allocation2 + $0x5d0] sm:$0xff] %v3221
      %3224 = vrot.lane.b32.xlu0 %v3188, 118
      %v3225 = vpop.permute.xlu0 %3224
      %3226 = vrot.lane.b32.xlu0 %v3189, 118
      %v3227 = vpop.permute.xlu0 %3226
      %v3228 = vsel %vm660, %v3225, %v3227
      %3230 = vst [vmem:[#allocation2 + $0x750] sm:$0xff] %v3228
      %3231 = vrot.lane.b32.xlu0 %v3188, 117
      %v3232 = vpop.permute.xlu0 %3231
      %3233 = vrot.lane.b32.xlu0 %v3189, 117
      %v3234 = vpop.permute.xlu0 %3233
      %v3235 = vsel %vm754, %v3232, %v3234
      %3237 = vst [vmem:[#allocation2 + $0x7d0] sm:$0xff] %v3235
      %v3238 = vmul.f32 %v2546, 0.25
      %v3239 = vmul.f32 %v2547, 0.25
      %v3240 = vmul.f32 %v2546, 0.75
      %v3241 = vmul.f32 %v2547, 0.75
      %3244 = vrot.lane.b32.xlu0 %v3240, 118
      %v3245 = vpop.permute.xlu0 %3244
      %3246 = vrot.lane.b32.xlu0 %v3241, 118
      %v3247 = vpop.permute.xlu0 %3246
      %v3248 = vsel %vm660, %v3245, %v3247
      %v3251 = vadd.f32 %v3238, %v3248
      %v3252 = vadd.f32 %v3239, %v3247
      %3255 = vrot.lane.b32.xlu0 %v3238, 118
      %v3256 = vpop.permute.xlu0 %3255
      %3257 = vrot.lane.b32.xlu0 %v3239, 118
      %v3258 = vpop.permute.xlu0 %3257
      %v3259 = vsel %vm660, %v3256, %v3258
      %v3262 = vadd.f32 %v3240, %v3259
      %v3263 = vadd.f32 %v3241, %v3258
      %v3264 = vmul.f32 %v3251, 0.25
      %v3265 = vmul.f32 %v3252, 0.25
      %v3266 = vmul.f32 %v3251, 0.75
      %v3267 = vmul.f32 %v3252, 0.75
      %3270 = vrot.lane.b32.xlu0 %v3266, 127
      %v3271 = vpop.permute.xlu0 %3270
      %3272 = vrot.lane.b32.xlu0 %v3267, 127
      %v3273 = vpop.permute.xlu0 %3272
      %v3274 = vsel %vm687, %v3271, %v3273
      %v3277 = vadd.f32 %v3264, %v3274
      %v3278 = vadd.f32 %v3265, %v3273
      %v3279 = vld [vmem:[%s8] ss:$4 sm:$0x3]
      %v3281 = vlaneseq
      %v3282 = vshrl.u32 %v3281, 7
      %v3283 = vsub.s32 0, %v3282
      %v3284 = vrot.slane %v3279, %v3283
      %v3285 = vlaneseq
      %v3286 = vshrl.u32 %v3285, 7
      %v3287 = vsub.s32 1, %v3286
      %v3288 = vrot.slane %v3279, %v3287
      %v3291 = vmul.f32 %v3277, %v3284
      %v3292 = vmul.f32 %v3278, %v3288
      %3295 = vrot.lane.b32.xlu0 %v3264, 127
      %v3296 = vpop.permute.xlu0 %3295
      %3297 = vrot.lane.b32.xlu0 %v3265, 127
      %v3298 = vpop.permute.xlu0 %3297
      %v3299 = vsel %vm687, %v3296, %v3298
      %v3302 = vadd.f32 %v3266, %v3299
      %v3303 = vadd.f32 %v3267, %v3298
      %v3304 = vld [vmem:[%s718] ss:$4 sm:$0x3]
      %v3306 = vlaneseq
      %v3307 = vshrl.u32 %v3306, 7
      %v3308 = vsub.s32 0, %v3307
      %v3309 = vrot.slane %v3304, %v3308
      %v3310 = vlaneseq
      %v3311 = vshrl.u32 %v3310, 7
      %v3312 = vsub.s32 1, %v3311
      %v3313 = vrot.slane %v3304, %v3312
      %v3316 = vmul.f32 %v3302, %v3309
      %v3317 = vmul.f32 %v3303, %v3313
      %3318 = vst [vmem:[#allocation2 + $0x70] sm:$0xff] %v3291
      %3321 = vrot.lane.b32.xlu0 %v3291, 127
      %v3322 = vpop.permute.xlu0 %3321
      %3323 = vrot.lane.b32.xlu0 %v3292, 127
      %v3324 = vpop.permute.xlu0 %3323
      %v3325 = vsel %vm687, %v3322, %v3324
      %3327 = vst [vmem:[#allocation2 + $0xf0] sm:$0xff] %v3325
      %3328 = vrot.lane.b32.xlu0 %v3291, 118
      %v3329 = vpop.permute.xlu0 %3328
      %3330 = vrot.lane.b32.xlu0 %v3292, 118
      %v3331 = vpop.permute.xlu0 %3330
      %v3332 = vsel %vm660, %v3329, %v3331
      %3334 = vst [vmem:[#allocation2 + $0x270] sm:$0xff] %v3332
      %3335 = vrot.lane.b32.xlu0 %v3291, 117
      %v3336 = vpop.permute.xlu0 %3335
      %3337 = vrot.lane.b32.xlu0 %v3292, 117
      %v3338 = vpop.permute.xlu0 %3337
      %v3339 = vsel %vm754, %v3336, %v3338
      %3341 = vst [vmem:[#allocation2 + $0x2f0] sm:$0xff] %v3339
      %3342 = vst [vmem:[#allocation2 + $0x170] sm:$0xff] %v3316
      %3345 = vrot.lane.b32.xlu0 %v3316, 127
      %v3346 = vpop.permute.xlu0 %3345
      %3347 = vrot.lane.b32.xlu0 %v3317, 127
      %v3348 = vpop.permute.xlu0 %3347
      %v3349 = vsel %vm687, %v3346, %v3348
      %3351 = vst [vmem:[#allocation2 + $0x1f0] sm:$0xff] %v3349
      %3352 = vrot.lane.b32.xlu0 %v3316, 118
      %v3353 = vpop.permute.xlu0 %3352
      %3354 = vrot.lane.b32.xlu0 %v3317, 118
      %v3355 = vpop.permute.xlu0 %3354
      %v3356 = vsel %vm660, %v3353, %v3355
      %3358 = vst [vmem:[#allocation2 + $0x370] sm:$0xff] %v3356
      %3359 = vrot.lane.b32.xlu0 %v3316, 117
      %v3360 = vpop.permute.xlu0 %3359
      %3361 = vrot.lane.b32.xlu0 %v3317, 117
      %v3362 = vpop.permute.xlu0 %3361
      %v3363 = vsel %vm754, %v3360, %v3362
      %3365 = vst [vmem:[#allocation2 + $0x3f0] sm:$0xff] %v3363
      %v3366 = vmul.f32 %v3262, 0.25
      %v3367 = vmul.f32 %v3263, 0.25
      %v3368 = vmul.f32 %v3262, 0.75
      %v3369 = vmul.f32 %v3263, 0.75
      %3372 = vrot.lane.b32.xlu0 %v3368, 127
      %v3373 = vpop.permute.xlu0 %3372
      %3374 = vrot.lane.b32.xlu0 %v3369, 127
      %v3375 = vpop.permute.xlu0 %3374
      %v3376 = vsel %vm687, %v3373, %v3375
      %v3379 = vadd.f32 %v3366, %v3376
      %v3380 = vadd.f32 %v3367, %v3375
      %v3381 = vld [vmem:[%s797] ss:$4 sm:$0x3]
      %v3383 = vlaneseq
      %v3384 = vshrl.u32 %v3383, 7
      %v3385 = vsub.s32 0, %v3384
      %v3386 = vrot.slane %v3381, %v3385
      %v3387 = vlaneseq
      %v3388 = vshrl.u32 %v3387, 7
      %v3389 = vsub.s32 1, %v3388
      %v3390 = vrot.slane %v3381, %v3389
      %v3393 = vmul.f32 %v3379, %v3386
      %v3394 = vmul.f32 %v3380, %v3390
      %3397 = vrot.lane.b32.xlu0 %v3366, 127
      %v3398 = vpop.permute.xlu0 %3397
      %3399 = vrot.lane.b32.xlu0 %v3367, 127
      %v3400 = vpop.permute.xlu0 %3399
      %v3401 = vsel %vm687, %v3398, %v3400
      %v3404 = vadd.f32 %v3368, %v3401
      %v3405 = vadd.f32 %v3369, %v3400
      %v3406 = vld [vmem:[%s823] ss:$4 sm:$0x3]
      %v3408 = vlaneseq
      %v3409 = vshrl.u32 %v3408, 7
      %v3410 = vsub.s32 0, %v3409
      %v3411 = vrot.slane %v3406, %v3410
      %v3412 = vlaneseq
      %v3413 = vshrl.u32 %v3412, 7
      %v3414 = vsub.s32 1, %v3413
      %v3415 = vrot.slane %v3406, %v3414
      %v3418 = vmul.f32 %v3404, %v3411
      %v3419 = vmul.f32 %v3405, %v3415
      %3420 = vst [vmem:[#allocation2 + $0x470] sm:$0xff] %v3393
      %3423 = vrot.lane.b32.xlu0 %v3393, 127
      %v3424 = vpop.permute.xlu0 %3423
      %3425 = vrot.lane.b32.xlu0 %v3394, 127
      %v3426 = vpop.permute.xlu0 %3425
      %v3427 = vsel %vm687, %v3424, %v3426
      %3429 = vst [vmem:[#allocation2 + $0x4f0] sm:$0xff] %v3427
      %3430 = vrot.lane.b32.xlu0 %v3393, 118
      %v3431 = vpop.permute.xlu0 %3430
      %3432 = vrot.lane.b32.xlu0 %v3394, 118
      %v3433 = vpop.permute.xlu0 %3432
      %v3434 = vsel %vm660, %v3431, %v3433
      %3436 = vst [vmem:[#allocation2 + $0x670] sm:$0xff] %v3434
      %3437 = vrot.lane.b32.xlu0 %v3393, 117
      %v3438 = vpop.permute.xlu0 %3437
      %3439 = vrot.lane.b32.xlu0 %v3394, 117
      %v3440 = vpop.permute.xlu0 %3439
      %v3441 = vsel %vm754, %v3438, %v3440
      %3443 = vst [vmem:[#allocation2 + $0x6f0] sm:$0xff] %v3441
      %3444 = vst [vmem:[#allocation2 + $0x570] sm:$0xff] %v3418
      %3447 = vrot.lane.b32.xlu0 %v3418, 127
      %v3448 = vpop.permute.xlu0 %3447
      %3449 = vrot.lane.b32.xlu0 %v3419, 127
      %v3450 = vpop.permute.xlu0 %3449
      %v3451 = vsel %vm687, %v3448, %v3450
      %3453 = vst [vmem:[#allocation2 + $0x5f0] sm:$0xff] %v3451
      %3454 = vrot.lane.b32.xlu0 %v3418, 118
      %v3455 = vpop.permute.xlu0 %3454
      %3456 = vrot.lane.b32.xlu0 %v3419, 118
      %v3457 = vpop.permute.xlu0 %3456
      %v3458 = vsel %vm660, %v3455, %v3457
      %3460 = vst [vmem:[#allocation2 + $0x770] sm:$0xff] %v3458
      %3461 = vrot.lane.b32.xlu0 %v3418, 117
      %v3462 = vpop.permute.xlu0 %3461
      %3463 = vrot.lane.b32.xlu0 %v3419, 117
      %v3464 = vpop.permute.xlu0 %3463
      %v3465 = vsel %vm754, %v3462, %v3464
      %3467 = vst [vmem:[#allocation2 + $0x7f0] sm:$0xff] %v3465
      %v3468 = vld [vmem:[%s578] sm:$0xff]
      %v3469 = vld [vmem:[%s578 + $0x8] sm:$0xff]
      %v3470 = vld [vmem:[%s591] sm:$0xff]
      %v3471 = vld [vmem:[%s591 + $0x8] sm:$0xff]
      %v3472 = vld [vmem:[%s604] sm:$0xff]
      %v3473 = vld [vmem:[%s604 + $0x8] sm:$0xff]
      %v3474 = vmul.f32 %v3468, 0.75
      %v3475 = vmul.f32 %v3469, 0.75
      %v3476 = vmul.f32 %v3470, 0.25
      %v3477 = vmul.f32 %v3471, 0.25
      %v3478 = vadd.f32 %v3474, %v3476
      %v3479 = vadd.f32 %v3475, %v3477
      %v3480 = vmul.f32 %v3468, 0.25
      %v3481 = vmul.f32 %v3469, 0.25
      %v3482 = vmul.f32 %v3470, 0.75
      %v3483 = vmul.f32 %v3471, 0.75
      %v3484 = vadd.f32 %v3480, %v3482
      %v3485 = vadd.f32 %v3481, %v3483
      %v3486 = vmul.f32 %v3472, 0.25
      %v3487 = vmul.f32 %v3473, 0.25
      %v3488 = vadd.f32 %v3482, %v3486
      %v3489 = vadd.f32 %v3483, %v3487
      %p3490 = scmp.eq.s32.totalorder %s25, 1
      %s3491 = scalar_select %p3490, 0.0, 1.0
      %s3492 = smul.f32 %s3491, 0.25
      %v3493 = vstv %s3492
      %v3494 = vmul.f32 %v3493, %v3470
      %v3495 = vmul.f32 %v3493, %v3471
      %s3496 = smul.f32 %s3491, 0.75
      %v3497 = vstv %s3496
      %v3498 = vmul.f32 %v3497, %v3472
      %v3499 = vmul.f32 %v3497, %v3473
      %v3500 = vadd.f32 %v3494, %v3498
      %v3501 = vadd.f32 %v3495, %v3499
      %v3502 = vmul.f32 %v3478, 0.25
      %v3503 = vmul.f32 %v3479, 0.25
      %v3504 = vmul.f32 %v3478, 0.75
      %v3505 = vmul.f32 %v3479, 0.75
      %3508 = vrot.lane.b32.xlu0 %v3504, 118
      %v3509 = vpop.permute.xlu0 %3508
      %3510 = vrot.lane.b32.xlu0 %v3505, 118
      %v3511 = vpop.permute.xlu0 %3510
      %v3512 = vsel %vm660, %v3509, %v3511
      %v3515 = vadd.f32 %v3502, %v3512
      %v3516 = vadd.f32 %v3503, %v3511
      %3519 = vrot.lane.b32.xlu0 %v3502, 118
      %v3520 = vpop.permute.xlu0 %3519
      %3521 = vrot.lane.b32.xlu0 %v3503, 118
      %v3522 = vpop.permute.xlu0 %3521
      %v3523 = vsel %vm660, %v3520, %v3522
      %v3526 = vadd.f32 %v3504, %v3523
      %v3527 = vadd.f32 %v3505, %v3522
      %v3528 = vmul.f32 %v3515, 0.25
      %v3529 = vmul.f32 %v3516, 0.25
      %v3530 = vmul.f32 %v3515, 0.75
      %v3531 = vmul.f32 %v3516, 0.75
      %3534 = vrot.lane.b32.xlu0 %v3530, 127
      %v3535 = vpop.permute.xlu0 %3534
      %3536 = vrot.lane.b32.xlu0 %v3531, 127
      %v3537 = vpop.permute.xlu0 %3536
      %v3538 = vsel %vm687, %v3535, %v3537
      %v3541 = vadd.f32 %v3528, %v3538
      %v3542 = vadd.f32 %v3529, %v3537
      %v3543 = vld [vmem:[%s8] ss:$4 sm:$0x3]
      %v3545 = vlaneseq
      %v3546 = vshrl.u32 %v3545, 7
      %v3547 = vsub.s32 0, %v3546
      %v3548 = vrot.slane %v3543, %v3547
      %v3549 = vlaneseq
      %v3550 = vshrl.u32 %v3549, 7
      %v3551 = vsub.s32 1, %v3550
      %v3552 = vrot.slane %v3543, %v3551
      %v3555 = vmul.f32 %v3541, %v3548
      %v3556 = vmul.f32 %v3542, %v3552
      %3559 = vrot.lane.b32.xlu0 %v3528, 127
      %v3560 = vpop.permute.xlu0 %3559
      %3561 = vrot.lane.b32.xlu0 %v3529, 127
      %v3562 = vpop.permute.xlu0 %3561
      %v3563 = vsel %vm687, %v3560, %v3562
      %v3566 = vadd.f32 %v3530, %v3563
      %v3567 = vadd.f32 %v3531, %v3562
      %v3568 = vld [vmem:[%s718] ss:$4 sm:$0x3]
      %v3570 = vlaneseq
      %v3571 = vshrl.u32 %v3570, 7
      %v3572 = vsub.s32 0, %v3571
      %v3573 = vrot.slane %v3568, %v3572
      %v3574 = vlaneseq
      %v3575 = vshrl.u32 %v3574, 7
      %v3576 = vsub.s32 1, %v3575
      %v3577 = vrot.slane %v3568, %v3576
      %v3580 = vmul.f32 %v3566, %v3573
      %v3581 = vmul.f32 %v3567, %v3577
      %3582 = vst [vmem:[#allocation2 + $0x18] sm:$0xff] %v3555
      %3585 = vrot.lane.b32.xlu0 %v3555, 127
      %v3586 = vpop.permute.xlu0 %3585
      %3587 = vrot.lane.b32.xlu0 %v3556, 127
      %v3588 = vpop.permute.xlu0 %3587
      %v3589 = vsel %vm687, %v3586, %v3588
      %3591 = vst [vmem:[#allocation2 + $0x98] sm:$0xff] %v3589
      %3592 = vrot.lane.b32.xlu0 %v3555, 118
      %v3593 = vpop.permute.xlu0 %3592
      %3594 = vrot.lane.b32.xlu0 %v3556, 118
      %v3595 = vpop.permute.xlu0 %3594
      %v3596 = vsel %vm660, %v3593, %v3595
      %3598 = vst [vmem:[#allocation2 + $0x218] sm:$0xff] %v3596
      %3599 = vrot.lane.b32.xlu0 %v3555, 117
      %v3600 = vpop.permute.xlu0 %3599
      %3601 = vrot.lane.b32.xlu0 %v3556, 117
      %v3602 = vpop.permute.xlu0 %3601
      %v3603 = vsel %vm754, %v3600, %v3602
      %3605 = vst [vmem:[#allocation2 + $0x298] sm:$0xff] %v3603
      %3606 = vst [vmem:[#allocation2 + $0x118] sm:$0xff] %v3580
      %3609 = vrot.lane.b32.xlu0 %v3580, 127
      %v3610 = vpop.permute.xlu0 %3609
      %3611 = vrot.lane.b32.xlu0 %v3581, 127
      %v3612 = vpop.permute.xlu0 %3611
      %v3613 = vsel %vm687, %v3610, %v3612
      %3615 = vst [vmem:[#allocation2 + $0x198] sm:$0xff] %v3613
      %3616 = vrot.lane.b32.xlu0 %v3580, 118
      %v3617 = vpop.permute.xlu0 %3616
      %3618 = vrot.lane.b32.xlu0 %v3581, 118
      %v3619 = vpop.permute.xlu0 %3618
      %v3620 = vsel %vm660, %v3617, %v3619
      %3622 = vst [vmem:[#allocation2 + $0x318] sm:$0xff] %v3620
      %3623 = vrot.lane.b32.xlu0 %v3580, 117
      %v3624 = vpop.permute.xlu0 %3623
      %3625 = vrot.lane.b32.xlu0 %v3581, 117
      %v3626 = vpop.permute.xlu0 %3625
      %v3627 = vsel %vm754, %v3624, %v3626
      %3629 = vst [vmem:[#allocation2 + $0x398] sm:$0xff] %v3627
      %v3630 = vmul.f32 %v3526, 0.25
      %v3631 = vmul.f32 %v3527, 0.25
      %v3632 = vmul.f32 %v3526, 0.75
      %v3633 = vmul.f32 %v3527, 0.75
      %3636 = vrot.lane.b32.xlu0 %v3632, 127
      %v3637 = vpop.permute.xlu0 %3636
      %3638 = vrot.lane.b32.xlu0 %v3633, 127
      %v3639 = vpop.permute.xlu0 %3638
      %v3640 = vsel %vm687, %v3637, %v3639
      %v3643 = vadd.f32 %v3630, %v3640
      %v3644 = vadd.f32 %v3631, %v3639
      %v3645 = vld [vmem:[%s797] ss:$4 sm:$0x3]
      %v3647 = vlaneseq
      %v3648 = vshrl.u32 %v3647, 7
      %v3649 = vsub.s32 0, %v3648
      %v3650 = vrot.slane %v3645, %v3649
      %v3651 = vlaneseq
      %v3652 = vshrl.u32 %v3651, 7
      %v3653 = vsub.s32 1, %v3652
      %v3654 = vrot.slane %v3645, %v3653
      %v3657 = vmul.f32 %v3643, %v3650
      %v3658 = vmul.f32 %v3644, %v3654
      %3661 = vrot.lane.b32.xlu0 %v3630, 127
      %v3662 = vpop.permute.xlu0 %3661
      %3663 = vrot.lane.b32.xlu0 %v3631, 127
      %v3664 = vpop.permute.xlu0 %3663
      %v3665 = vsel %vm687, %v3662, %v3664
      %v3668 = vadd.f32 %v3632, %v3665
      %v3669 = vadd.f32 %v3633, %v3664
      %v3670 = vld [vmem:[%s823] ss:$4 sm:$0x3]
      %v3672 = vlaneseq
      %v3673 = vshrl.u32 %v3672, 7
      %v3674 = vsub.s32 0, %v3673
      %v3675 = vrot.slane %v3670, %v3674
      %v3676 = vlaneseq
      %v3677 = vshrl.u32 %v3676, 7
      %v3678 = vsub.s32 1, %v3677
      %v3679 = vrot.slane %v3670, %v3678
      %v3682 = vmul.f32 %v3668, %v3675
      %v3683 = vmul.f32 %v3669, %v3679
      %3684 = vst [vmem:[#allocation2 + $0x418] sm:$0xff] %v3657
      %3687 = vrot.lane.b32.xlu0 %v3657, 127
      %v3688 = vpop.permute.xlu0 %3687
      %3689 = vrot.lane.b32.xlu0 %v3658, 127
      %v3690 = vpop.permute.xlu0 %3689
      %v3691 = vsel %vm687, %v3688, %v3690
      %3693 = vst [vmem:[#allocation2 + $0x498] sm:$0xff] %v3691
      %3694 = vrot.lane.b32.xlu0 %v3657, 118
      %v3695 = vpop.permute.xlu0 %3694
      %3696 = vrot.lane.b32.xlu0 %v3658, 118
      %v3697 = vpop.permute.xlu0 %3696
      %v3698 = vsel %vm660, %v3695, %v3697
      %3700 = vst [vmem:[#allocation2 + $0x618] sm:$0xff] %v3698
      %3701 = vrot.lane.b32.xlu0 %v3657, 117
      %v3702 = vpop.permute.xlu0 %3701
      %3703 = vrot.lane.b32.xlu0 %v3658, 117
      %v3704 = vpop.permute.xlu0 %3703
      %v3705 = vsel %vm754, %v3702, %v3704
      %3707 = vst [vmem:[#allocation2 + $0x698] sm:$0xff] %v3705
      %3708 = vst [vmem:[#allocation2 + $0x518] sm:$0xff] %v3682
      %3711 = vrot.lane.b32.xlu0 %v3682, 127
      %v3712 = vpop.permute.xlu0 %3711
      %3713 = vrot.lane.b32.xlu0 %v3683, 127
      %v3714 = vpop.permute.xlu0 %3713
      %v3715 = vsel %vm687, %v3712, %v3714
      %3717 = vst [vmem:[#allocation2 + $0x598] sm:$0xff] %v3715
      %3718 = vrot.lane.b32.xlu0 %v3682, 118
      %v3719 = vpop.permute.xlu0 %3718
      %3720 = vrot.lane.b32.xlu0 %v3683, 118
      %v3721 = vpop.permute.xlu0 %3720
      %v3722 = vsel %vm660, %v3719, %v3721
      %3724 = vst [vmem:[#allocation2 + $0x718] sm:$0xff] %v3722
      %3725 = vrot.lane.b32.xlu0 %v3682, 117
      %v3726 = vpop.permute.xlu0 %3725
      %3727 = vrot.lane.b32.xlu0 %v3683, 117
      %v3728 = vpop.permute.xlu0 %3727
      %v3729 = vsel %vm754, %v3726, %v3728
      %3731 = vst [vmem:[#allocation2 + $0x798] sm:$0xff] %v3729
      %v3732 = vmul.f32 %v3484, 0.25
      %v3733 = vmul.f32 %v3485, 0.25
      %v3734 = vmul.f32 %v3484, 0.75
      %v3735 = vmul.f32 %v3485, 0.75
      %3738 = vrot.lane.b32.xlu0 %v3734, 118
      %v3739 = vpop.permute.xlu0 %3738
      %3740 = vrot.lane.b32.xlu0 %v3735, 118
      %v3741 = vpop.permute.xlu0 %3740
      %v3742 = vsel %vm660, %v3739, %v3741
      %v3745 = vadd.f32 %v3732, %v3742
      %v3746 = vadd.f32 %v3733, %v3741
      %3749 = vrot.lane.b32.xlu0 %v3732, 118
      %v3750 = vpop.permute.xlu0 %3749
      %3751 = vrot.lane.b32.xlu0 %v3733, 118
      %v3752 = vpop.permute.xlu0 %3751
      %v3753 = vsel %vm660, %v3750, %v3752
      %v3756 = vadd.f32 %v3734, %v3753
      %v3757 = vadd.f32 %v3735, %v3752
      %v3758 = vmul.f32 %v3745, 0.25
      %v3759 = vmul.f32 %v3746, 0.25
      %v3760 = vmul.f32 %v3745, 0.75
      %v3761 = vmul.f32 %v3746, 0.75
      %3764 = vrot.lane.b32.xlu0 %v3760, 127
      %v3765 = vpop.permute.xlu0 %3764
      %3766 = vrot.lane.b32.xlu0 %v3761, 127
      %v3767 = vpop.permute.xlu0 %3766
      %v3768 = vsel %vm687, %v3765, %v3767
      %v3771 = vadd.f32 %v3758, %v3768
      %v3772 = vadd.f32 %v3759, %v3767
      %v3773 = vld [vmem:[%s8] ss:$4 sm:$0x3]
      %v3775 = vlaneseq
      %v3776 = vshrl.u32 %v3775, 7
      %v3777 = vsub.s32 0, %v3776
      %v3778 = vrot.slane %v3773, %v3777
      %v3779 = vlaneseq
      %v3780 = vshrl.u32 %v3779, 7
      %v3781 = vsub.s32 1, %v3780
      %v3782 = vrot.slane %v3773, %v3781
      %v3785 = vmul.f32 %v3771, %v3778
      %v3786 = vmul.f32 %v3772, %v3782
      %3789 = vrot.lane.b32.xlu0 %v3758, 127
      %v3790 = vpop.permute.xlu0 %3789
      %3791 = vrot.lane.b32.xlu0 %v3759, 127
      %v3792 = vpop.permute.xlu0 %3791
      %v3793 = vsel %vm687, %v3790, %v3792
      %v3796 = vadd.f32 %v3760, %v3793
      %v3797 = vadd.f32 %v3761, %v3792
      %v3798 = vld [vmem:[%s718] ss:$4 sm:$0x3]
      %v3800 = vlaneseq
      %v3801 = vshrl.u32 %v3800, 7
      %v3802 = vsub.s32 0, %v3801
      %v3803 = vrot.slane %v3798, %v3802
      %v3804 = vlaneseq
      %v3805 = vshrl.u32 %v3804, 7
      %v3806 = vsub.s32 1, %v3805
      %v3807 = vrot.slane %v3798, %v3806
      %v3810 = vmul.f32 %v3796, %v3803
      %v3811 = vmul.f32 %v3797, %v3807
      %3812 = vst [vmem:[#allocation2 + $0x38] sm:$0xff] %v3785
      %3815 = vrot.lane.b32.xlu0 %v3785, 127
      %v3816 = vpop.permute.xlu0 %3815
      %3817 = vrot.lane.b32.xlu0 %v3786, 127
      %v3818 = vpop.permute.xlu0 %3817
      %v3819 = vsel %vm687, %v3816, %v3818
      %3821 = vst [vmem:[#allocation2 + $0xb8] sm:$0xff] %v3819
      %3822 = vrot.lane.b32.xlu0 %v3785, 118
      %v3823 = vpop.permute.xlu0 %3822
      %3824 = vrot.lane.b32.xlu0 %v3786, 118
      %v3825 = vpop.permute.xlu0 %3824
      %v3826 = vsel %vm660, %v3823, %v3825
      %3828 = vst [vmem:[#allocation2 + $0x238] sm:$0xff] %v3826
      %3829 = vrot.lane.b32.xlu0 %v3785, 117
      %v3830 = vpop.permute.xlu0 %3829
      %3831 = vrot.lane.b32.xlu0 %v3786, 117
      %v3832 = vpop.permute.xlu0 %3831
      %v3833 = vsel %vm754, %v3830, %v3832
      %3835 = vst [vmem:[#allocation2 + $0x2b8] sm:$0xff] %v3833
      %3836 = vst [vmem:[#allocation2 + $0x138] sm:$0xff] %v3810
      %3839 = vrot.lane.b32.xlu0 %v3810, 127
      %v3840 = vpop.permute.xlu0 %3839
      %3841 = vrot.lane.b32.xlu0 %v3811, 127
      %v3842 = vpop.permute.xlu0 %3841
      %v3843 = vsel %vm687, %v3840, %v3842
      %3845 = vst [vmem:[#allocation2 + $0x1b8] sm:$0xff] %v3843
      %3846 = vrot.lane.b32.xlu0 %v3810, 118
      %v3847 = vpop.permute.xlu0 %3846
      %3848 = vrot.lane.b32.xlu0 %v3811, 118
      %v3849 = vpop.permute.xlu0 %3848
      %v3850 = vsel %vm660, %v3847, %v3849
      %3852 = vst [vmem:[#allocation2 + $0x338] sm:$0xff] %v3850
      %3853 = vrot.lane.b32.xlu0 %v3810, 117
      %v3854 = vpop.permute.xlu0 %3853
      %3855 = vrot.lane.b32.xlu0 %v3811, 117
      %v3856 = vpop.permute.xlu0 %3855
      %v3857 = vsel %vm754, %v3854, %v3856
      %3859 = vst [vmem:[#allocation2 + $0x3b8] sm:$0xff] %v3857
      %v3860 = vmul.f32 %v3756, 0.25
      %v3861 = vmul.f32 %v3757, 0.25
      %v3862 = vmul.f32 %v3756, 0.75
      %v3863 = vmul.f32 %v3757, 0.75
      %3866 = vrot.lane.b32.xlu0 %v3862, 127
      %v3867 = vpop.permute.xlu0 %3866
      %3868 = vrot.lane.b32.xlu0 %v3863, 127
      %v3869 = vpop.permute.xlu0 %3868
      %v3870 = vsel %vm687, %v3867, %v3869
      %v3873 = vadd.f32 %v3860, %v3870
      %v3874 = vadd.f32 %v3861, %v3869
      %v3875 = vld [vmem:[%s797] ss:$4 sm:$0x3]
      %v3877 = vlaneseq
      %v3878 = vshrl.u32 %v3877, 7
      %v3879 = vsub.s32 0, %v3878
      %v3880 = vrot.slane %v3875, %v3879
      %v3881 = vlaneseq
      %v3882 = vshrl.u32 %v3881, 7
      %v3883 = vsub.s32 1, %v3882
      %v3884 = vrot.slane %v3875, %v3883
      %v3887 = vmul.f32 %v3873, %v3880
      %v3888 = vmul.f32 %v3874, %v3884
      %3891 = vrot.lane.b32.xlu0 %v3860, 127
      %v3892 = vpop.permute.xlu0 %3891
      %3893 = vrot.lane.b32.xlu0 %v3861, 127
      %v3894 = vpop.permute.xlu0 %3893
      %v3895 = vsel %vm687, %v3892, %v3894
      %v3898 = vadd.f32 %v3862, %v3895
      %v3899 = vadd.f32 %v3863, %v3894
      %v3900 = vld [vmem:[%s823] ss:$4 sm:$0x3]
      %v3902 = vlaneseq
      %v3903 = vshrl.u32 %v3902, 7
      %v3904 = vsub.s32 0, %v3903
      %v3905 = vrot.slane %v3900, %v3904
      %v3906 = vlaneseq
      %v3907 = vshrl.u32 %v3906, 7
      %v3908 = vsub.s32 1, %v3907
      %v3909 = vrot.slane %v3900, %v3908
      %v3912 = vmul.f32 %v3898, %v3905
      %v3913 = vmul.f32 %v3899, %v3909
      %3914 = vst [vmem:[#allocation2 + $0x438] sm:$0xff] %v3887
      %3917 = vrot.lane.b32.xlu0 %v3887, 127
      %v3918 = vpop.permute.xlu0 %3917
      %3919 = vrot.lane.b32.xlu0 %v3888, 127
      %v3920 = vpop.permute.xlu0 %3919
      %v3921 = vsel %vm687, %v3918, %v3920
      %3923 = vst [vmem:[#allocation2 + $0x4b8] sm:$0xff] %v3921
      %3924 = vrot.lane.b32.xlu0 %v3887, 118
      %v3925 = vpop.permute.xlu0 %3924
      %3926 = vrot.lane.b32.xlu0 %v3888, 118
      %v3927 = vpop.permute.xlu0 %3926
      %v3928 = vsel %vm660, %v3925, %v3927
      %3930 = vst [vmem:[#allocation2 + $0x638] sm:$0xff] %v3928
      %3931 = vrot.lane.b32.xlu0 %v3887, 117
      %v3932 = vpop.permute.xlu0 %3931
      %3933 = vrot.lane.b32.xlu0 %v3888, 117
      %v3934 = vpop.permute.xlu0 %3933
      %v3935 = vsel %vm754, %v3932, %v3934
      %3937 = vst [vmem:[#allocation2 + $0x6b8] sm:$0xff] %v3935
      %3938 = vst [vmem:[#allocation2 + $0x538] sm:$0xff] %v3912
      %3941 = vrot.lane.b32.xlu0 %v3912, 127
      %v3942 = vpop.permute.xlu0 %3941
      %3943 = vrot.lane.b32.xlu0 %v3913, 127
      %v3944 = vpop.permute.xlu0 %3943
      %v3945 = vsel %vm687, %v3942, %v3944
      %3947 = vst [vmem:[#allocation2 + $0x5b8] sm:$0xff] %v3945
      %3948 = vrot.lane.b32.xlu0 %v3912, 118
      %v3949 = vpop.permute.xlu0 %3948
      %3950 = vrot.lane.b32.xlu0 %v3913, 118
      %v3951 = vpop.permute.xlu0 %3950
      %v3952 = vsel %vm660, %v3949, %v3951
      %3954 = vst [vmem:[#allocation2 + $0x738] sm:$0xff] %v3952
      %3955 = vrot.lane.b32.xlu0 %v3912, 117
      %v3956 = vpop.permute.xlu0 %3955
      %3957 = vrot.lane.b32.xlu0 %v3913, 117
      %v3958 = vpop.permute.xlu0 %3957
      %v3959 = vsel %vm754, %v3956, %v3958
      %3961 = vst [vmem:[#allocation2 + $0x7b8] sm:$0xff] %v3959
      %v3962 = vmul.f32 %v3488, 0.25
      %v3963 = vmul.f32 %v3489, 0.25
      %v3964 = vmul.f32 %v3488, 0.75
      %v3965 = vmul.f32 %v3489, 0.75
      %3968 = vrot.lane.b32.xlu0 %v3964, 118
      %v3969 = vpop.permute.xlu0 %3968
      %3970 = vrot.lane.b32.xlu0 %v3965, 118
      %v3971 = vpop.permute.xlu0 %3970
      %v3972 = vsel %vm660, %v3969, %v3971
      %v3975 = vadd.f32 %v3962, %v3972
      %v3976 = vadd.f32 %v3963, %v3971
      %3979 = vrot.lane.b32.xlu0 %v3962, 118
      %v3980 = vpop.permute.xlu0 %3979
      %3981 = vrot.lane.b32.xlu0 %v3963, 118
      %v3982 = vpop.permute.xlu0 %3981
      %v3983 = vsel %vm660, %v3980, %v3982
      %v3986 = vadd.f32 %v3964, %v3983
      %v3987 = vadd.f32 %v3965, %v3982
      %v3988 = vmul.f32 %v3975, 0.25
      %v3989 = vmul.f32 %v3976, 0.25
      %v3990 = vmul.f32 %v3975, 0.75
      %v3991 = vmul.f32 %v3976, 0.75
      %3994 = vrot.lane.b32.xlu0 %v3990, 127
      %v3995 = vpop.permute.xlu0 %3994
      %3996 = vrot.lane.b32.xlu0 %v3991, 127
      %v3997 = vpop.permute.xlu0 %3996
      %v3998 = vsel %vm687, %v3995, %v3997
      %v4001 = vadd.f32 %v3988, %v3998
      %v4002 = vadd.f32 %v3989, %v3997
      %v4003 = vld [vmem:[%s8] ss:$4 sm:$0x3]
      %v4005 = vlaneseq
      %v4006 = vshrl.u32 %v4005, 7
      %v4007 = vsub.s32 0, %v4006
      %v4008 = vrot.slane %v4003, %v4007
      %v4009 = vlaneseq
      %v4010 = vshrl.u32 %v4009, 7
      %v4011 = vsub.s32 1, %v4010
      %v4012 = vrot.slane %v4003, %v4011
      %v4015 = vmul.f32 %v4001, %v4008
      %v4016 = vmul.f32 %v4002, %v4012
      %4019 = vrot.lane.b32.xlu0 %v3988, 127
      %v4020 = vpop.permute.xlu0 %4019
      %4021 = vrot.lane.b32.xlu0 %v3989, 127
      %v4022 = vpop.permute.xlu0 %4021
      %v4023 = vsel %vm687, %v4020, %v4022
      %v4026 = vadd.f32 %v3990, %v4023
      %v4027 = vadd.f32 %v3991, %v4022
      %v4028 = vld [vmem:[%s718] ss:$4 sm:$0x3]
      %v4030 = vlaneseq
      %v4031 = vshrl.u32 %v4030, 7
      %v4032 = vsub.s32 0, %v4031
      %v4033 = vrot.slane %v4028, %v4032
      %v4034 = vlaneseq
      %v4035 = vshrl.u32 %v4034, 7
      %v4036 = vsub.s32 1, %v4035
      %v4037 = vrot.slane %v4028, %v4036
      %v4040 = vmul.f32 %v4026, %v4033
      %v4041 = vmul.f32 %v4027, %v4037
      %4042 = vst [vmem:[#allocation2 + $0x58] sm:$0xff] %v4015
      %4045 = vrot.lane.b32.xlu0 %v4015, 127
      %v4046 = vpop.permute.xlu0 %4045
      %4047 = vrot.lane.b32.xlu0 %v4016, 127
      %v4048 = vpop.permute.xlu0 %4047
      %v4049 = vsel %vm687, %v4046, %v4048
      %4051 = vst [vmem:[#allocation2 + $0xd8] sm:$0xff] %v4049
      %4052 = vrot.lane.b32.xlu0 %v4015, 118
      %v4053 = vpop.permute.xlu0 %4052
      %4054 = vrot.lane.b32.xlu0 %v4016, 118
      %v4055 = vpop.permute.xlu0 %4054
      %v4056 = vsel %vm660, %v4053, %v4055
      %4058 = vst [vmem:[#allocation2 + $0x258] sm:$0xff] %v4056
      %4059 = vrot.lane.b32.xlu0 %v4015, 117
      %v4060 = vpop.permute.xlu0 %4059
      %4061 = vrot.lane.b32.xlu0 %v4016, 117
      %v4062 = vpop.permute.xlu0 %4061
      %v4063 = vsel %vm754, %v4060, %v4062
      %4065 = vst [vmem:[#allocation2 + $0x2d8] sm:$0xff] %v4063
      %4066 = vst [vmem:[#allocation2 + $0x158] sm:$0xff] %v4040
      %4069 = vrot.lane.b32.xlu0 %v4040, 127
      %v4070 = vpop.permute.xlu0 %4069
      %4071 = vrot.lane.b32.xlu0 %v4041, 127
      %v4072 = vpop.permute.xlu0 %4071
      %v4073 = vsel %vm687, %v4070, %v4072
      %4075 = vst [vmem:[#allocation2 + $0x1d8] sm:$0xff] %v4073
      %4076 = vrot.lane.b32.xlu0 %v4040, 118
      %v4077 = vpop.permute.xlu0 %4076
      %4078 = vrot.lane.b32.xlu0 %v4041, 118
      %v4079 = vpop.permute.xlu0 %4078
      %v4080 = vsel %vm660, %v4077, %v4079
      %4082 = vst [vmem:[#allocation2 + $0x358] sm:$0xff] %v4080
      %4083 = vrot.lane.b32.xlu0 %v4040, 117
      %v4084 = vpop.permute.xlu0 %4083
      %4085 = vrot.lane.b32.xlu0 %v4041, 117
      %v4086 = vpop.permute.xlu0 %4085
      %v4087 = vsel %vm754, %v4084, %v4086
      %4089 = vst [vmem:[#allocation2 + $0x3d8] sm:$0xff] %v4087
      %v4090 = vmul.f32 %v3986, 0.25
      %v4091 = vmul.f32 %v3987, 0.25
      %v4092 = vmul.f32 %v3986, 0.75
      %v4093 = vmul.f32 %v3987, 0.75
      %4096 = vrot.lane.b32.xlu0 %v4092, 127
      %v4097 = vpop.permute.xlu0 %4096
      %4098 = vrot.lane.b32.xlu0 %v4093, 127
      %v4099 = vpop.permute.xlu0 %4098
      %v4100 = vsel %vm687, %v4097, %v4099
      %v4103 = vadd.f32 %v4090, %v4100
      %v4104 = vadd.f32 %v4091, %v4099
      %v4105 = vld [vmem:[%s797] ss:$4 sm:$0x3]
      %v4107 = vlaneseq
      %v4108 = vshrl.u32 %v4107, 7
      %v4109 = vsub.s32 0, %v4108
      %v4110 = vrot.slane %v4105, %v4109
      %v4111 = vlaneseq
      %v4112 = vshrl.u32 %v4111, 7
      %v4113 = vsub.s32 1, %v4112
      %v4114 = vrot.slane %v4105, %v4113
      %v4117 = vmul.f32 %v4103, %v4110
      %v4118 = vmul.f32 %v4104, %v4114
      %4121 = vrot.lane.b32.xlu0 %v4090, 127
      %v4122 = vpop.permute.xlu0 %4121
      %4123 = vrot.lane.b32.xlu0 %v4091, 127
      %v4124 = vpop.permute.xlu0 %4123
      %v4125 = vsel %vm687, %v4122, %v4124
      %v4128 = vadd.f32 %v4092, %v4125
      %v4129 = vadd.f32 %v4093, %v4124
      %v4130 = vld [vmem:[%s823] ss:$4 sm:$0x3]
      %v4132 = vlaneseq
      %v4133 = vshrl.u32 %v4132, 7
      %v4134 = vsub.s32 0, %v4133
      %v4135 = vrot.slane %v4130, %v4134
      %v4136 = vlaneseq
      %v4137 = vshrl.u32 %v4136, 7
      %v4138 = vsub.s32 1, %v4137
      %v4139 = vrot.slane %v4130, %v4138
      %v4142 = vmul.f32 %v4128, %v4135
      %v4143 = vmul.f32 %v4129, %v4139
      %4144 = vst [vmem:[#allocation2 + $0x458] sm:$0xff] %v4117
      %4147 = vrot.lane.b32.xlu0 %v4117, 127
      %v4148 = vpop.permute.xlu0 %4147
      %4149 = vrot.lane.b32.xlu0 %v4118, 127
      %v4150 = vpop.permute.xlu0 %4149
      %v4151 = vsel %vm687, %v4148, %v4150
      %4153 = vst [vmem:[#allocation2 + $0x4d8] sm:$0xff] %v4151
      %4154 = vrot.lane.b32.xlu0 %v4117, 118
      %v4155 = vpop.permute.xlu0 %4154
      %4156 = vrot.lane.b32.xlu0 %v4118, 118
      %v4157 = vpop.permute.xlu0 %4156
      %v4158 = vsel %vm660, %v4155, %v4157
      %4160 = vst [vmem:[#allocation2 + $0x658] sm:$0xff] %v4158
      %4161 = vrot.lane.b32.xlu0 %v4117, 117
      %v4162 = vpop.permute.xlu0 %4161
      %4163 = vrot.lane.b32.xlu0 %v4118, 117
      %v4164 = vpop.permute.xlu0 %4163
      %v4165 = vsel %vm754, %v4162, %v4164
      %4167 = vst [vmem:[#allocation2 + $0x6d8] sm:$0xff] %v4165
      %4168 = vst [vmem:[#allocation2 + $0x558] sm:$0xff] %v4142
      %4171 = vrot.lane.b32.xlu0 %v4142, 127
      %v4172 = vpop.permute.xlu0 %4171
      %4173 = vrot.lane.b32.xlu0 %v4143, 127
      %v4174 = vpop.permute.xlu0 %4173
      %v4175 = vsel %vm687, %v4172, %v4174
      %4177 = vst [vmem:[#allocation2 + $0x5d8] sm:$0xff] %v4175
      %4178 = vrot.lane.b32.xlu0 %v4142, 118
      %v4179 = vpop.permute.xlu0 %4178
      %4180 = vrot.lane.b32.xlu0 %v4143, 118
      %v4181 = vpop.permute.xlu0 %4180
      %v4182 = vsel %vm660, %v4179, %v4181
      %4184 = vst [vmem:[#allocation2 + $0x758] sm:$0xff] %v4182
      %4185 = vrot.lane.b32.xlu0 %v4142, 117
      %v4186 = vpop.permute.xlu0 %4185
      %4187 = vrot.lane.b32.xlu0 %v4143, 117
      %v4188 = vpop.permute.xlu0 %4187
      %v4189 = vsel %vm754, %v4186, %v4188
      %4191 = vst [vmem:[#allocation2 + $0x7d8] sm:$0xff] %v4189
      %v4192 = vmul.f32 %v3500, 0.25
      %v4193 = vmul.f32 %v3501, 0.25
      %v4194 = vmul.f32 %v3500, 0.75
      %v4195 = vmul.f32 %v3501, 0.75
      %4198 = vrot.lane.b32.xlu0 %v4194, 118
      %v4199 = vpop.permute.xlu0 %4198
      %4200 = vrot.lane.b32.xlu0 %v4195, 118
      %v4201 = vpop.permute.xlu0 %4200
      %v4202 = vsel %vm660, %v4199, %v4201
      %v4205 = vadd.f32 %v4192, %v4202
      %v4206 = vadd.f32 %v4193, %v4201
      %4209 = vrot.lane.b32.xlu0 %v4192, 118
      %v4210 = vpop.permute.xlu0 %4209
      %4211 = vrot.lane.b32.xlu0 %v4193, 118
      %v4212 = vpop.permute.xlu0 %4211
      %v4213 = vsel %vm660, %v4210, %v4212
      %v4216 = vadd.f32 %v4194, %v4213
      %v4217 = vadd.f32 %v4195, %v4212
      %v4218 = vmul.f32 %v4205, 0.25
      %v4219 = vmul.f32 %v4206, 0.25
      %v4220 = vmul.f32 %v4205, 0.75
      %v4221 = vmul.f32 %v4206, 0.75
      %4224 = vrot.lane.b32.xlu0 %v4220, 127
      %v4225 = vpop.permute.xlu0 %4224
      %4226 = vrot.lane.b32.xlu0 %v4221, 127
      %v4227 = vpop.permute.xlu0 %4226
      %v4228 = vsel %vm687, %v4225, %v4227
      %v4231 = vadd.f32 %v4218, %v4228
      %v4232 = vadd.f32 %v4219, %v4227
      %v4233 = vld [vmem:[%s8] ss:$4 sm:$0x3]
      %v4235 = vlaneseq
      %v4236 = vshrl.u32 %v4235, 7
      %v4237 = vsub.s32 0, %v4236
      %v4238 = vrot.slane %v4233, %v4237
      %v4239 = vlaneseq
      %v4240 = vshrl.u32 %v4239, 7
      %v4241 = vsub.s32 1, %v4240
      %v4242 = vrot.slane %v4233, %v4241
      %v4245 = vmul.f32 %v4231, %v4238
      %v4246 = vmul.f32 %v4232, %v4242
      %4249 = vrot.lane.b32.xlu0 %v4218, 127
      %v4250 = vpop.permute.xlu0 %4249
      %4251 = vrot.lane.b32.xlu0 %v4219, 127
      %v4252 = vpop.permute.xlu0 %4251
      %v4253 = vsel %vm687, %v4250, %v4252
      %v4256 = vadd.f32 %v4220, %v4253
      %v4257 = vadd.f32 %v4221, %v4252
      %v4258 = vld [vmem:[%s718] ss:$4 sm:$0x3]
      %v4260 = vlaneseq
      %v4261 = vshrl.u32 %v4260, 7
      %v4262 = vsub.s32 0, %v4261
      %v4263 = vrot.slane %v4258, %v4262
      %v4264 = vlaneseq
      %v4265 = vshrl.u32 %v4264, 7
      %v4266 = vsub.s32 1, %v4265
      %v4267 = vrot.slane %v4258, %v4266
      %v4270 = vmul.f32 %v4256, %v4263
      %v4271 = vmul.f32 %v4257, %v4267
      %4272 = vst [vmem:[#allocation2 + $0x78] sm:$0xff] %v4245
      %4275 = vrot.lane.b32.xlu0 %v4245, 127
      %v4276 = vpop.permute.xlu0 %4275
      %4277 = vrot.lane.b32.xlu0 %v4246, 127
      %v4278 = vpop.permute.xlu0 %4277
      %v4279 = vsel %vm687, %v4276, %v4278
      %4281 = vst [vmem:[#allocation2 + $0xf8] sm:$0xff] %v4279
      %4282 = vrot.lane.b32.xlu0 %v4245, 118
      %v4283 = vpop.permute.xlu0 %4282
      %4284 = vrot.lane.b32.xlu0 %v4246, 118
      %v4285 = vpop.permute.xlu0 %4284
      %v4286 = vsel %vm660, %v4283, %v4285
      %4288 = vst [vmem:[#allocation2 + $0x278] sm:$0xff] %v4286
      %4289 = vrot.lane.b32.xlu0 %v4245, 117
      %v4290 = vpop.permute.xlu0 %4289
      %4291 = vrot.lane.b32.xlu0 %v4246, 117
      %v4292 = vpop.permute.xlu0 %4291
      %v4293 = vsel %vm754, %v4290, %v4292
      %4295 = vst [vmem:[#allocation2 + $0x2f8] sm:$0xff] %v4293
      %4296 = vst [vmem:[#allocation2 + $0x178] sm:$0xff] %v4270
      %4299 = vrot.lane.b32.xlu0 %v4270, 127
      %v4300 = vpop.permute.xlu0 %4299
      %4301 = vrot.lane.b32.xlu0 %v4271, 127
      %v4302 = vpop.permute.xlu0 %4301
      %v4303 = vsel %vm687, %v4300, %v4302
      %4305 = vst [vmem:[#allocation2 + $0x1f8] sm:$0xff] %v4303
      %4306 = vrot.lane.b32.xlu0 %v4270, 118
      %v4307 = vpop.permute.xlu0 %4306
      %4308 = vrot.lane.b32.xlu0 %v4271, 118
      %v4309 = vpop.permute.xlu0 %4308
      %v4310 = vsel %vm660, %v4307, %v4309
      %4312 = vst [vmem:[#allocation2 + $0x378] sm:$0xff] %v4310
      %4313 = vrot.lane.b32.xlu0 %v4270, 117
      %v4314 = vpop.permute.xlu0 %4313
      %4315 = vrot.lane.b32.xlu0 %v4271, 117
      %v4316 = vpop.permute.xlu0 %4315
      %v4317 = vsel %vm754, %v4314, %v4316
      %4319 = vst [vmem:[#allocation2 + $0x3f8] sm:$0xff] %v4317
      %v4320 = vmul.f32 %v4216, 0.25
      %v4321 = vmul.f32 %v4217, 0.25
      %v4322 = vmul.f32 %v4216, 0.75
      %v4323 = vmul.f32 %v4217, 0.75
      %4326 = vrot.lane.b32.xlu0 %v4322, 127
      %v4327 = vpop.permute.xlu0 %4326
      %4328 = vrot.lane.b32.xlu0 %v4323, 127
      %v4329 = vpop.permute.xlu0 %4328
      %v4330 = vsel %vm687, %v4327, %v4329
      %v4333 = vadd.f32 %v4320, %v4330
      %v4334 = vadd.f32 %v4321, %v4329
      %v4335 = vld [vmem:[%s797] ss:$4 sm:$0x3]
      %v4337 = vlaneseq
      %v4338 = vshrl.u32 %v4337, 7
      %v4339 = vsub.s32 0, %v4338
      %v4340 = vrot.slane %v4335, %v4339
      %v4341 = vlaneseq
      %v4342 = vshrl.u32 %v4341, 7
      %v4343 = vsub.s32 1, %v4342
      %v4344 = vrot.slane %v4335, %v4343
      %v4347 = vmul.f32 %v4333, %v4340
      %v4348 = vmul.f32 %v4334, %v4344
      %4351 = vrot.lane.b32.xlu0 %v4320, 127
      %v4352 = vpop.permute.xlu0 %4351
      %4353 = vrot.lane.b32.xlu0 %v4321, 127
      %v4354 = vpop.permute.xlu0 %4353
      %v4355 = vsel %vm687, %v4352, %v4354
      %v4358 = vadd.f32 %v4322, %v4355
      %v4359 = vadd.f32 %v4323, %v4354
      %v4360 = vld [vmem:[%s823] ss:$4 sm:$0x3]
      %v4362 = vlaneseq
      %v4363 = vshrl.u32 %v4362, 7
      %v4364 = vsub.s32 0, %v4363
      %v4365 = vrot.slane %v4360, %v4364
      %v4366 = vlaneseq
      %v4367 = vshrl.u32 %v4366, 7
      %v4368 = vsub.s32 1, %v4367
      %v4369 = vrot.slane %v4360, %v4368
      %v4372 = vmul.f32 %v4358, %v4365
      %v4373 = vmul.f32 %v4359, %v4369
      %4374 = vst [vmem:[#allocation2 + $0x478] sm:$0xff] %v4347
      %4377 = vrot.lane.b32.xlu0 %v4347, 127
      %v4378 = vpop.permute.xlu0 %4377
      %4379 = vrot.lane.b32.xlu0 %v4348, 127
      %v4380 = vpop.permute.xlu0 %4379
      %v4381 = vsel %vm687, %v4378, %v4380
      %4383 = vst [vmem:[#allocation2 + $0x4f8] sm:$0xff] %v4381
      %4384 = vrot.lane.b32.xlu0 %v4347, 118
      %v4385 = vpop.permute.xlu0 %4384
      %4386 = vrot.lane.b32.xlu0 %v4348, 118
      %v4387 = vpop.permute.xlu0 %4386
      %v4388 = vsel %vm660, %v4385, %v4387
      %4390 = vst [vmem:[#allocation2 + $0x678] sm:$0xff] %v4388
      %4391 = vrot.lane.b32.xlu0 %v4347, 117
      %v4392 = vpop.permute.xlu0 %4391
      %4393 = vrot.lane.b32.xlu0 %v4348, 117
      %v4394 = vpop.permute.xlu0 %4393
      %v4395 = vsel %vm754, %v4392, %v4394
      %4397 = vst [vmem:[#allocation2 + $0x6f8] sm:$0xff] %v4395
      %4398 = vst [vmem:[#allocation2 + $0x578] sm:$0xff] %v4372
      %4401 = vrot.lane.b32.xlu0 %v4372, 127
      %v4402 = vpop.permute.xlu0 %4401
      %4403 = vrot.lane.b32.xlu0 %v4373, 127
      %v4404 = vpop.permute.xlu0 %4403
      %v4405 = vsel %vm687, %v4402, %v4404
      %4407 = vst [vmem:[#allocation2 + $0x5f8] sm:$0xff] %v4405
      %4408 = vrot.lane.b32.xlu0 %v4372, 118
      %v4409 = vpop.permute.xlu0 %4408
      %4410 = vrot.lane.b32.xlu0 %v4373, 118
      %v4411 = vpop.permute.xlu0 %4410
      %v4412 = vsel %vm660, %v4409, %v4411
      %4414 = vst [vmem:[#allocation2 + $0x778] sm:$0xff] %v4412
      %4415 = vrot.lane.b32.xlu0 %v4372, 117
      %v4416 = vpop.permute.xlu0 %4415
      %4417 = vrot.lane.b32.xlu0 %v4373, 117
      %v4418 = vpop.permute.xlu0 %4417
      %v4419 = vsel %vm754, %v4416, %v4418
      %4421 = vst [vmem:[#allocation2 + $0x7f8] sm:$0xff] %v4419
      %v4422 = vld [vmem:[%s6] sm:$0xff]
      %v4423 = vld [vmem:[%s6 + $0x8] sm:$0xff]
      %v4424 = vld [vmem:[%s6 + $0x10] sm:$0xff]
      %v4425 = vld [vmem:[%s6 + $0x18] sm:$0xff]
      %v4426 = vld [vmem:[%s6 + $0x20] sm:$0xff]
      %v4427 = vld [vmem:[%s6 + $0x28] sm:$0xff]
      %v4428 = vld [vmem:[%s6 + $0x30] sm:$0xff]
      %v4429 = vld [vmem:[%s6 + $0x38] sm:$0xff]
      %v4430 = vld [vmem:[%s6 + $0x40] sm:$0xff]
      %v4431 = vld [vmem:[%s6 + $0x48] sm:$0xff]
      %v4432 = vld [vmem:[%s6 + $0x50] sm:$0xff]
      %v4433 = vld [vmem:[%s6 + $0x58] sm:$0xff]
      %v4434 = vld [vmem:[%s6 + $0x60] sm:$0xff]
      %v4435 = vld [vmem:[%s6 + $0x68] sm:$0xff]
      %v4436 = vld [vmem:[%s6 + $0x70] sm:$0xff]
      %v4437 = vld [vmem:[%s6 + $0x78] sm:$0xff]
      %v4438 = vld [vmem:[%s6 + $0x80] sm:$0xff]
      %v4439 = vld [vmem:[%s6 + $0x88] sm:$0xff]
      %v4440 = vld [vmem:[%s6 + $0x90] sm:$0xff]
      %v4441 = vld [vmem:[%s6 + $0x98] sm:$0xff]
      %v4442 = vld [vmem:[%s6 + $0xa0] sm:$0xff]
      %v4443 = vld [vmem:[%s6 + $0xa8] sm:$0xff]
      %v4444 = vld [vmem:[%s6 + $0xb0] sm:$0xff]
      %v4445 = vld [vmem:[%s6 + $0xb8] sm:$0xff]
      %v4446 = vld [vmem:[%s6 + $0xc0] sm:$0xff]
      %v4447 = vld [vmem:[%s6 + $0xc8] sm:$0xff]
      %v4448 = vld [vmem:[%s6 + $0xd0] sm:$0xff]
      %v4449 = vld [vmem:[%s6 + $0xd8] sm:$0xff]
      %v4450 = vld [vmem:[%s6 + $0xe0] sm:$0xff]
      %v4451 = vld [vmem:[%s6 + $0xe8] sm:$0xff]
      %v4452 = vld [vmem:[%s6 + $0xf0] sm:$0xff]
      %v4453 = vld [vmem:[%s6 + $0xf8] sm:$0xff]
      %v4454 = vld [vmem:[#allocation2] sm:$0xff]
      %v4455 = vld [vmem:[#allocation2 + $0x8] sm:$0xff]
      %v4456 = vld [vmem:[#allocation2 + $0x10] sm:$0xff]
      %v4457 = vld [vmem:[#allocation2 + $0x18] sm:$0xff]
      %v4458 = vld [vmem:[#allocation2 + $0x20] sm:$0xff]
      %v4459 = vld [vmem:[#allocation2 + $0x28] sm:$0xff]
      %v4460 = vld [vmem:[#allocation2 + $0x30] sm:$0xff]
      %v4461 = vld [vmem:[#allocation2 + $0x38] sm:$0xff]
      %v4462 = vld [vmem:[#allocation2 + $0x40] sm:$0xff]
      %v4463 = vld [vmem:[#allocation2 + $0x48] sm:$0xff]
      %v4464 = vld [vmem:[#allocation2 + $0x50] sm:$0xff]
      %v4465 = vld [vmem:[#allocation2 + $0x58] sm:$0xff]
      %v4466 = vld [vmem:[#allocation2 + $0x60] sm:$0xff]
      %v4467 = vld [vmem:[#allocation2 + $0x68] sm:$0xff]
      %v4468 = vld [vmem:[#allocation2 + $0x70] sm:$0xff]
      %v4469 = vld [vmem:[#allocation2 + $0x78] sm:$0xff]
      %v4470 = vld [vmem:[#allocation2 + $0x80] sm:$0xff]
      %v4471 = vld [vmem:[#allocation2 + $0x88] sm:$0xff]
      %v4472 = vld [vmem:[#allocation2 + $0x90] sm:$0xff]
      %v4473 = vld [vmem:[#allocation2 + $0x98] sm:$0xff]
      %v4474 = vld [vmem:[#allocation2 + $0xa0] sm:$0xff]
      %v4475 = vld [vmem:[#allocation2 + $0xa8] sm:$0xff]
      %v4476 = vld [vmem:[#allocation2 + $0xb0] sm:$0xff]
      %v4477 = vld [vmem:[#allocation2 + $0xb8] sm:$0xff]
      %v4478 = vld [vmem:[#allocation2 + $0xc0] sm:$0xff]
      %v4479 = vld [vmem:[#allocation2 + $0xc8] sm:$0xff]
      %v4480 = vld [vmem:[#allocation2 + $0xd0] sm:$0xff]
      %v4481 = vld [vmem:[#allocation2 + $0xd8] sm:$0xff]
      %v4482 = vld [vmem:[#allocation2 + $0xe0] sm:$0xff]
      %v4483 = vld [vmem:[#allocation2 + $0xe8] sm:$0xff]
      %v4484 = vld [vmem:[#allocation2 + $0xf0] sm:$0xff]
      %v4485 = vld [vmem:[#allocation2 + $0xf8] sm:$0xff]
      %v4486 = vld [vmem:[#allocation2 + $0x100] sm:$0xff]
      %v4487 = vld [vmem:[#allocation2 + $0x108] sm:$0xff]
      %v4488 = vld [vmem:[#allocation2 + $0x110] sm:$0xff]
      %v4489 = vld [vmem:[#allocation2 + $0x118] sm:$0xff]
      %v4490 = vld [vmem:[#allocation2 + $0x120] sm:$0xff]
      %v4491 = vld [vmem:[#allocation2 + $0x128] sm:$0xff]
      %v4492 = vld [vmem:[#allocation2 + $0x130] sm:$0xff]
      %v4493 = vld [vmem:[#allocation2 + $0x138] sm:$0xff]
      %v4494 = vld [vmem:[#allocation2 + $0x140] sm:$0xff]
      %v4495 = vld [vmem:[#allocation2 + $0x148] sm:$0xff]
      %v4496 = vld [vmem:[#allocation2 + $0x150] sm:$0xff]
      %v4497 = vld [vmem:[#allocation2 + $0x158] sm:$0xff]
      %v4498 = vld [vmem:[#allocation2 + $0x160] sm:$0xff]
      %v4499 = vld [vmem:[#allocation2 + $0x168] sm:$0xff]
      %v4500 = vld [vmem:[#allocation2 + $0x170] sm:$0xff]
      %v4501 = vld [vmem:[#allocation2 + $0x178] sm:$0xff]
      %v4502 = vld [vmem:[#allocation2 + $0x180] sm:$0xff]
      %v4503 = vld [vmem:[#allocation2 + $0x188] sm:$0xff]
      %v4504 = vld [vmem:[#allocation2 + $0x190] sm:$0xff]
      %v4505 = vld [vmem:[#allocation2 + $0x198] sm:$0xff]
      %v4506 = vld [vmem:[#allocation2 + $0x1a0] sm:$0xff]
      %v4507 = vld [vmem:[#allocation2 + $0x1a8] sm:$0xff]
      %v4508 = vld [vmem:[#allocation2 + $0x1b0] sm:$0xff]
      %v4509 = vld [vmem:[#allocation2 + $0x1b8] sm:$0xff]
      %v4510 = vld [vmem:[#allocation2 + $0x1c0] sm:$0xff]
      %v4511 = vld [vmem:[#allocation2 + $0x1c8] sm:$0xff]
      %v4512 = vld [vmem:[#allocation2 + $0x1d0] sm:$0xff]
      %v4513 = vld [vmem:[#allocation2 + $0x1d8] sm:$0xff]
      %v4514 = vld [vmem:[#allocation2 + $0x1e0] sm:$0xff]
      %v4515 = vld [vmem:[#allocation2 + $0x1e8] sm:$0xff]
      %v4516 = vld [vmem:[#allocation2 + $0x1f0] sm:$0xff]
      %v4517 = vld [vmem:[#allocation2 + $0x1f8] sm:$0xff]
      %v4518 = vld [vmem:[#allocation2 + $0x200] sm:$0xff]
      %v4519 = vld [vmem:[#allocation2 + $0x208] sm:$0xff]
      %v4520 = vld [vmem:[#allocation2 + $0x210] sm:$0xff]
      %v4521 = vld [vmem:[#allocation2 + $0x218] sm:$0xff]
      %v4522 = vld [vmem:[#allocation2 + $0x220] sm:$0xff]
      %v4523 = vld [vmem:[#allocation2 + $0x228] sm:$0xff]
      %v4524 = vld [vmem:[#allocation2 + $0x230] sm:$0xff]
      %v4525 = vld [vmem:[#allocation2 + $0x238] sm:$0xff]
      %v4526 = vld [vmem:[#allocation2 + $0x240] sm:$0xff]
      %v4527 = vld [vmem:[#allocation2 + $0x248] sm:$0xff]
      %v4528 = vld [vmem:[#allocation2 + $0x250] sm:$0xff]
      %v4529 = vld [vmem:[#allocation2 + $0x258] sm:$0xff]
      %v4530 = vld [vmem:[#allocation2 + $0x260] sm:$0xff]
      %v4531 = vld [vmem:[#allocation2 + $0x268] sm:$0xff]
      %v4532 = vld [vmem:[#allocation2 + $0x270] sm:$0xff]
      %v4533 = vld [vmem:[#allocation2 + $0x278] sm:$0xff]
      %v4534 = vld [vmem:[#allocation2 + $0x280] sm:$0xff]
      %v4535 = vld [vmem:[#allocation2 + $0x288] sm:$0xff]
      %v4536 = vld [vmem:[#allocation2 + $0x290] sm:$0xff]
      %v4537 = vld [vmem:[#allocation2 + $0x298] sm:$0xff]
      %v4538 = vld [vmem:[#allocation2 + $0x2a0] sm:$0xff]
      %v4539 = vld [vmem:[#allocation2 + $0x2a8] sm:$0xff]
      %v4540 = vld [vmem:[#allocation2 + $0x2b0] sm:$0xff]
      %v4541 = vld [vmem:[#allocation2 + $0x2b8] sm:$0xff]
      %v4542 = vld [vmem:[#allocation2 + $0x2c0] sm:$0xff]
      %v4543 = vld [vmem:[#allocation2 + $0x2c8] sm:$0xff]
      %v4544 = vld [vmem:[#allocation2 + $0x2d0] sm:$0xff]
      %v4545 = vld [vmem:[#allocation2 + $0x2d8] sm:$0xff]
      %v4546 = vld [vmem:[#allocation2 + $0x2e0] sm:$0xff]
      %v4547 = vld [vmem:[#allocation2 + $0x2e8] sm:$0xff]
      %v4548 = vld [vmem:[#allocation2 + $0x2f0] sm:$0xff]
      %v4549 = vld [vmem:[#allocation2 + $0x2f8] sm:$0xff]
      %v4550 = vld [vmem:[#allocation2 + $0x300] sm:$0xff]
      %v4551 = vld [vmem:[#allocation2 + $0x308] sm:$0xff]
      %v4552 = vld [vmem:[#allocation2 + $0x310] sm:$0xff]
      %v4553 = vld [vmem:[#allocation2 + $0x318] sm:$0xff]
      %v4554 = vld [vmem:[#allocation2 + $0x320] sm:$0xff]
      %v4555 = vld [vmem:[#allocation2 + $0x328] sm:$0xff]
      %v4556 = vld [vmem:[#allocation2 + $0x330] sm:$0xff]
      %v4557 = vld [vmem:[#allocation2 + $0x338] sm:$0xff]
      %v4558 = vld [vmem:[#allocation2 + $0x340] sm:$0xff]
      %v4559 = vld [vmem:[#allocation2 + $0x348] sm:$0xff]
      %v4560 = vld [vmem:[#allocation2 + $0x350] sm:$0xff]
      %v4561 = vld [vmem:[#allocation2 + $0x358] sm:$0xff]
      %v4562 = vld [vmem:[#allocation2 + $0x360] sm:$0xff]
      %v4563 = vld [vmem:[#allocation2 + $0x368] sm:$0xff]
      %v4564 = vld [vmem:[#allocation2 + $0x370] sm:$0xff]
      %v4565 = vld [vmem:[#allocation2 + $0x378] sm:$0xff]
      %v4566 = vld [vmem:[#allocation2 + $0x380] sm:$0xff]
      %v4567 = vld [vmem:[#allocation2 + $0x388] sm:$0xff]
      %v4568 = vld [vmem:[#allocation2 + $0x390] sm:$0xff]
      %v4569 = vld [vmem:[#allocation2 + $0x398] sm:$0xff]
      %v4570 = vld [vmem:[#allocation2 + $0x3a0] sm:$0xff]
      %v4571 = vld [vmem:[#allocation2 + $0x3a8] sm:$0xff]
      %v4572 = vld [vmem:[#allocation2 + $0x3b0] sm:$0xff]
      %v4573 = vld [vmem:[#allocation2 + $0x3b8] sm:$0xff]
      %v4574 = vld [vmem:[#allocation2 + $0x3c0] sm:$0xff]
      %v4575 = vld [vmem:[#allocation2 + $0x3c8] sm:$0xff]
      %v4576 = vld [vmem:[#allocation2 + $0x3d0] sm:$0xff]
      %v4577 = vld [vmem:[#allocation2 + $0x3d8] sm:$0xff]
      %v4578 = vld [vmem:[#allocation2 + $0x3e0] sm:$0xff]
      %v4579 = vld [vmem:[#allocation2 + $0x3e8] sm:$0xff]
      %v4580 = vld [vmem:[#allocation2 + $0x3f0] sm:$0xff]
      %v4581 = vld [vmem:[#allocation2 + $0x3f8] sm:$0xff]
      %v4582 = vld [vmem:[#allocation2 + $0x400] sm:$0xff]
      %v4583 = vld [vmem:[#allocation2 + $0x408] sm:$0xff]
      %v4584 = vld [vmem:[#allocation2 + $0x410] sm:$0xff]
      %v4585 = vld [vmem:[#allocation2 + $0x418] sm:$0xff]
      %v4586 = vld [vmem:[#allocation2 + $0x420] sm:$0xff]
      %v4587 = vld [vmem:[#allocation2 + $0x428] sm:$0xff]
      %v4588 = vld [vmem:[#allocation2 + $0x430] sm:$0xff]
      %v4589 = vld [vmem:[#allocation2 + $0x438] sm:$0xff]
      %v4590 = vld [vmem:[#allocation2 + $0x440] sm:$0xff]
      %v4591 = vld [vmem:[#allocation2 + $0x448] sm:$0xff]
      %v4592 = vld [vmem:[#allocation2 + $0x450] sm:$0xff]
      %v4593 = vld [vmem:[#allocation2 + $0x458] sm:$0xff]
      %v4594 = vld [vmem:[#allocation2 + $0x460] sm:$0xff]
      %v4595 = vld [vmem:[#allocation2 + $0x468] sm:$0xff]
      %v4596 = vld [vmem:[#allocation2 + $0x470] sm:$0xff]
      %v4597 = vld [vmem:[#allocation2 + $0x478] sm:$0xff]
      %v4598 = vld [vmem:[#allocation2 + $0x480] sm:$0xff]
      %v4599 = vld [vmem:[#allocation2 + $0x488] sm:$0xff]
      %v4600 = vld [vmem:[#allocation2 + $0x490] sm:$0xff]
      %v4601 = vld [vmem:[#allocation2 + $0x498] sm:$0xff]
      %v4602 = vld [vmem:[#allocation2 + $0x4a0] sm:$0xff]
      %v4603 = vld [vmem:[#allocation2 + $0x4a8] sm:$0xff]
      %v4604 = vld [vmem:[#allocation2 + $0x4b0] sm:$0xff]
      %v4605 = vld [vmem:[#allocation2 + $0x4b8] sm:$0xff]
      %v4606 = vld [vmem:[#allocation2 + $0x4c0] sm:$0xff]
      %v4607 = vld [vmem:[#allocation2 + $0x4c8] sm:$0xff]
      %v4608 = vld [vmem:[#allocation2 + $0x4d0] sm:$0xff]
      %v4609 = vld [vmem:[#allocation2 + $0x4d8] sm:$0xff]
      %v4610 = vld [vmem:[#allocation2 + $0x4e0] sm:$0xff]
      %v4611 = vld [vmem:[#allocation2 + $0x4e8] sm:$0xff]
      %v4612 = vld [vmem:[#allocation2 + $0x4f0] sm:$0xff]
      %v4613 = vld [vmem:[#allocation2 + $0x4f8] sm:$0xff]
      %v4614 = vld [vmem:[#allocation2 + $0x500] sm:$0xff]
      %v4615 = vld [vmem:[#allocation2 + $0x508] sm:$0xff]
      %v4616 = vld [vmem:[#allocation2 + $0x510] sm:$0xff]
      %v4617 = vld [vmem:[#allocation2 + $0x518] sm:$0xff]
      %v4618 = vld [vmem:[#allocation2 + $0x520] sm:$0xff]
      %v4619 = vld [vmem:[#allocation2 + $0x528] sm:$0xff]
      %v4620 = vld [vmem:[#allocation2 + $0x530] sm:$0xff]
      %v4621 = vld [vmem:[#allocation2 + $0x538] sm:$0xff]
      %v4622 = vld [vmem:[#allocation2 + $0x540] sm:$0xff]
      %v4623 = vld [vmem:[#allocation2 + $0x548] sm:$0xff]
      %v4624 = vld [vmem:[#allocation2 + $0x550] sm:$0xff]
      %v4625 = vld [vmem:[#allocation2 + $0x558] sm:$0xff]
      %v4626 = vld [vmem:[#allocation2 + $0x560] sm:$0xff]
      %v4627 = vld [vmem:[#allocation2 + $0x568] sm:$0xff]
      %v4628 = vld [vmem:[#allocation2 + $0x570] sm:$0xff]
      %v4629 = vld [vmem:[#allocation2 + $0x578] sm:$0xff]
      %v4630 = vld [vmem:[#allocation2 + $0x580] sm:$0xff]
      %v4631 = vld [vmem:[#allocation2 + $0x588] sm:$0xff]
      %v4632 = vld [vmem:[#allocation2 + $0x590] sm:$0xff]
      %v4633 = vld [vmem:[#allocation2 + $0x598] sm:$0xff]
      %v4634 = vld [vmem:[#allocation2 + $0x5a0] sm:$0xff]
      %v4635 = vld [vmem:[#allocation2 + $0x5a8] sm:$0xff]
      %v4636 = vld [vmem:[#allocation2 + $0x5b0] sm:$0xff]
      %v4637 = vld [vmem:[#allocation2 + $0x5b8] sm:$0xff]
      %v4638 = vld [vmem:[#allocation2 + $0x5c0] sm:$0xff]
      %v4639 = vld [vmem:[#allocation2 + $0x5c8] sm:$0xff]
      %v4640 = vld [vmem:[#allocation2 + $0x5d0] sm:$0xff]
      %v4641 = vld [vmem:[#allocation2 + $0x5d8] sm:$0xff]
      %v4642 = vld [vmem:[#allocation2 + $0x5e0] sm:$0xff]
      %v4643 = vld [vmem:[#allocation2 + $0x5e8] sm:$0xff]
      %v4644 = vld [vmem:[#allocation2 + $0x5f0] sm:$0xff]
      %v4645 = vld [vmem:[#allocation2 + $0x5f8] sm:$0xff]
      %v4646 = vld [vmem:[#allocation2 + $0x600] sm:$0xff]
      %v4647 = vld [vmem:[#allocation2 + $0x608] sm:$0xff]
      %v4648 = vld [vmem:[#allocation2 + $0x610] sm:$0xff]
      %v4649 = vld [vmem:[#allocation2 + $0x618] sm:$0xff]
      %v4650 = vld [vmem:[#allocation2 + $0x620] sm:$0xff]
      %v4651 = vld [vmem:[#allocation2 + $0x628] sm:$0xff]
      %v4652 = vld [vmem:[#allocation2 + $0x630] sm:$0xff]
      %v4653 = vld [vmem:[#allocation2 + $0x638] sm:$0xff]
      %v4654 = vld [vmem:[#allocation2 + $0x640] sm:$0xff]
      %v4655 = vld [vmem:[#allocation2 + $0x648] sm:$0xff]
      %v4656 = vld [vmem:[#allocation2 + $0x650] sm:$0xff]
      %v4657 = vld [vmem:[#allocation2 + $0x658] sm:$0xff]
      %v4658 = vld [vmem:[#allocation2 + $0x660] sm:$0xff]
      %v4659 = vld [vmem:[#allocation2 + $0x668] sm:$0xff]
      %v4660 = vld [vmem:[#allocation2 + $0x670] sm:$0xff]
      %v4661 = vld [vmem:[#allocation2 + $0x678] sm:$0xff]
      %v4662 = vld [vmem:[#allocation2 + $0x680] sm:$0xff]
      %v4663 = vld [vmem:[#allocation2 + $0x688] sm:$0xff]
      %v4664 = vld [vmem:[#allocation2 + $0x690] sm:$0xff]
      %v4665 = vld [vmem:[#allocation2 + $0x698] sm:$0xff]
      %v4666 = vld [vmem:[#allocation2 + $0x6a0] sm:$0xff]
      %v4667 = vld [vmem:[#allocation2 + $0x6a8] sm:$0xff]
      %v4668 = vld [vmem:[#allocation2 + $0x6b0] sm:$0xff]
      %v4669 = vld [vmem:[#allocation2 + $0x6b8] sm:$0xff]
      %v4670 = vld [vmem:[#allocation2 + $0x6c0] sm:$0xff]
      %v4671 = vld [vmem:[#allocation2 + $0x6c8] sm:$0xff]
      %v4672 = vld [vmem:[#allocation2 + $0x6d0] sm:$0xff]
      %v4673 = vld [vmem:[#allocation2 + $0x6d8] sm:$0xff]
      %v4674 = vld [vmem:[#allocation2 + $0x6e0] sm:$0xff]
      %v4675 = vld [vmem:[#allocation2 + $0x6e8] sm:$0xff]
      %v4676 = vld [vmem:[#allocation2 + $0x6f0] sm:$0xff]
      %v4677 = vld [vmem:[#allocation2 + $0x6f8] sm:$0xff]
      %v4678 = vld [vmem:[#allocation2 + $0x700] sm:$0xff]
      %v4679 = vld [vmem:[#allocation2 + $0x708] sm:$0xff]
      %v4680 = vld [vmem:[#allocation2 + $0x710] sm:$0xff]
      %v4681 = vld [vmem:[#allocation2 + $0x718] sm:$0xff]
      %v4682 = vld [vmem:[#allocation2 + $0x720] sm:$0xff]
      %v4683 = vld [vmem:[#allocation2 + $0x728] sm:$0xff]
      %v4684 = vld [vmem:[#allocation2 + $0x730] sm:$0xff]
      %v4685 = vld [vmem:[#allocation2 + $0x738] sm:$0xff]
      %v4686 = vld [vmem:[#allocation2 + $0x740] sm:$0xff]
      %v4687 = vld [vmem:[#allocation2 + $0x748] sm:$0xff]
      %v4688 = vld [vmem:[#allocation2 + $0x750] sm:$0xff]
      %v4689 = vld [vmem:[#allocation2 + $0x758] sm:$0xff]
      %v4690 = vld [vmem:[#allocation2 + $0x760] sm:$0xff]
      %v4691 = vld [vmem:[#allocation2 + $0x768] sm:$0xff]
      %v4692 = vld [vmem:[#allocation2 + $0x770] sm:$0xff]
      %v4693 = vld [vmem:[#allocation2 + $0x778] sm:$0xff]
      %v4694 = vld [vmem:[#allocation2 + $0x780] sm:$0xff]
      %v4695 = vld [vmem:[#allocation2 + $0x788] sm:$0xff]
      %v4696 = vld [vmem:[#allocation2 + $0x790] sm:$0xff]
      %v4697 = vld [vmem:[#allocation2 + $0x798] sm:$0xff]
      %v4698 = vld [vmem:[#allocation2 + $0x7a0] sm:$0xff]
      %v4699 = vld [vmem:[#allocation2 + $0x7a8] sm:$0xff]
      %v4700 = vld [vmem:[#allocation2 + $0x7b0] sm:$0xff]
      %v4701 = vld [vmem:[#allocation2 + $0x7b8] sm:$0xff]
      %v4702 = vld [vmem:[#allocation2 + $0x7c0] sm:$0xff]
      %v4703 = vld [vmem:[#allocation2 + $0x7c8] sm:$0xff]
      %v4704 = vld [vmem:[#allocation2 + $0x7d0] sm:$0xff]
      %v4705 = vld [vmem:[#allocation2 + $0x7d8] sm:$0xff]
      %v4706 = vld [vmem:[#allocation2 + $0x7e0] sm:$0xff]
      %v4707 = vld [vmem:[#allocation2 + $0x7e8] sm:$0xff]
      %v4708 = vld [vmem:[#allocation2 + $0x7f0] sm:$0xff]
      %v4709 = vld [vmem:[#allocation2 + $0x7f8] sm:$0xff]
      %v4710 = vld [vmem:[%s7] sm:$0xff]
      %v4711 = vld [vmem:[%s7 + $0x8] sm:$0xff]
      %v4712 = vld [vmem:[%s7 + $0x10] sm:$0xff]
      %v4713 = vld [vmem:[%s7 + $0x18] sm:$0xff]
      %v4714 = vld [vmem:[%s7 + $0x20] sm:$0xff]
      %v4715 = vld [vmem:[%s7 + $0x28] sm:$0xff]
      %v4716 = vld [vmem:[%s7 + $0x30] sm:$0xff]
      %v4717 = vld [vmem:[%s7 + $0x38] sm:$0xff]
      %4719 = vset.pattern.permute.xlu0 0
      %4720 = vperm.xlu0 %4719, %v4710
      %v4721 = vpop.permute.xlu0 %4720
      %4724 = vset.pattern.permute.xlu0 0
      %4725 = vperm.xlu0 %4724, %v4711
      %v4726 = vpop.permute.xlu0 %4725
      %4729 = vset.pattern.permute.xlu0 0
      %4730 = vperm.xlu0 %4729, %v4712
      %v4731 = vpop.permute.xlu0 %4730
      %4734 = vset.pattern.permute.xlu0 0
      %4735 = vperm.xlu0 %4734, %v4713
      %v4736 = vpop.permute.xlu0 %4735
      %4739 = vset.pattern.permute.xlu0 0
      %4740 = vperm.xlu0 %4739, %v4714
      %v4741 = vpop.permute.xlu0 %4740
      %4744 = vset.pattern.permute.xlu0 0
      %4745 = vperm.xlu0 %4744, %v4715
      %v4746 = vpop.permute.xlu0 %4745
      %4749 = vset.pattern.permute.xlu0 0
      %4750 = vperm.xlu0 %4749, %v4716
      %v4751 = vpop.permute.xlu0 %4750
      %4754 = vset.pattern.permute.xlu0 0
      %4755 = vperm.xlu0 %4754, %v4717
      %v4756 = vpop.permute.xlu0 %4755
      %4758 = vmatprep.subr.mxu0 %v4515
      %4759 = vmatpush1.msra.mxu0 %v4514
      %4760 = vmatprep.subr.mxu0 %v4511
      %4761 = vmatpush1.msra.mxu0 %v4510
      %4762 = vmatprep.subr.mxu0 %v4507
      %4763 = vmatpush1.msra.mxu0 %v4506
      %4764 = vmatprep.subr.mxu0 %v4503
      %4765 = vmatpush1.msra.mxu0 %v4502
      %4766 = vmatprep.subr.mxu0 %v4499
      %4767 = vmatpush1.msra.mxu0 %v4498
      %4768 = vmatprep.subr.mxu0 %v4495
      %4769 = vmatpush1.msra.mxu0 %v4494
      %4770 = vmatprep.subr.mxu0 %v4491
      %4771 = vmatpush1.msra.mxu0 %v4490
      %4772 = vmatprep.subr.mxu0 %v4487
      %4773 = vmatpush1.msra.mxu0 %v4486
      %4774 = vmatprep.subr.mxu0 %v4483
      %4775 = vmatpush1.msra.mxu0 %v4482
      %4776 = vmatprep.subr.mxu0 %v4479
      %4777 = vmatpush1.msra.mxu0 %v4478
      %4778 = vmatprep.subr.mxu0 %v4475
      %4779 = vmatpush1.msra.mxu0 %v4474
      %4780 = vmatprep.subr.mxu0 %v4471
      %4781 = vmatpush1.msra.mxu0 %v4470
      %4782 = vmatprep.subr.mxu0 %v4467
      %4783 = vmatpush1.msra.mxu0 %v4466
      %4784 = vmatprep.subr.mxu0 %v4463
      %4785 = vmatpush1.msra.mxu0 %v4462
      %4786 = vmatprep.subr.mxu0 %v4459
      %4787 = vmatpush1.msra.mxu0 %v4458
      %4788 = vmatprep.subr.mxu0 %v4455
      %4789 = vmatpush1.msra.mxu0 %v4454
      %4790 = vmatprep.subr.mxu0 %v4579
      %4791 = vmatpush2.msra.mxu0 %v4578
      %4792 = vmatprep.subr.mxu0 %v4575
      %4793 = vmatpush2.msra.mxu0 %v4574
      %4794 = vmatprep.subr.mxu0 %v4571
      %4795 = vmatpush2.msra.mxu0 %v4570
      %4796 = vmatprep.subr.mxu0 %v4567
      %4797 = vmatpush2.msra.mxu0 %v4566
      %4798 = vmatprep.subr.mxu0 %v4563
      %4799 = vmatpush2.msra.mxu0 %v4562
      %4800 = vmatprep.subr.mxu0 %v4559
      %4801 = vmatpush2.msra.mxu0 %v4558
      %4802 = vmatprep.subr.mxu0 %v4555
      %4803 = vmatpush2.msra.mxu0 %v4554
      %4804 = vmatprep.subr.mxu0 %v4551
      %4805 = vmatpush2.msra.mxu0 %v4550
      %4806 = vmatprep.subr.mxu0 %v4547
      %4807 = vmatpush2.msra.mxu0 %v4546
      %4808 = vmatprep.subr.mxu0 %v4543
      %4809 = vmatpush2.msra.mxu0 %v4542
      %4810 = vmatprep.subr.mxu0 %v4539
      %4811 = vmatpush2.msra.mxu0 %v4538
      %4812 = vmatprep.subr.mxu0 %v4535
      %4813 = vmatpush2.msra.mxu0 %v4534
      %4814 = vmatprep.subr.mxu0 %v4531
      %4815 = vmatpush2.msra.mxu0 %v4530
      %4816 = vmatprep.subr.mxu0 %v4527
      %4817 = vmatpush2.msra.mxu0 %v4526
      %4818 = vmatprep.subr.mxu0 %v4523
      %4819 = vmatpush2.msra.mxu0 %v4522
      %4820 = vmatprep.subr.mxu0 %v4519
      %4821 = vmatpush2.msra.mxu0 %v4518
      %4822 = vmatprep.mubr.f32.mxu0 %v4423
      %4823 = vmatmul.mubr.f32.gmra.mxu0 %v4422
      %v4824 = vpop.f32.mrf.mxu0
      %v4825 = vadd.f32 %v4721, %v4824
      %v4826 = vpop.f32.mrf.mxu0
      %v4827 = vadd.f32 %v4721, %v4826
      %4828 = vmatprep.mubr.f32.mxu0 %v4427
      %4829 = vmatmul.mubr.f32.gmra.mxu0 %v4426
      %v4830 = vpop.f32.mrf.mxu0
      %v4831 = vadd.f32 %v4726, %v4830
      %v4832 = vpop.f32.mrf.mxu0
      %v4833 = vadd.f32 %v4726, %v4832
      %4834 = vmatprep.mubr.f32.mxu0 %v4431
      %4835 = vmatmul.mubr.f32.gmra.mxu0 %v4430
      %v4836 = vpop.f32.mrf.mxu0
      %v4837 = vadd.f32 %v4731, %v4836
      %v4838 = vpop.f32.mrf.mxu0
      %v4839 = vadd.f32 %v4731, %v4838
      %4840 = vmatprep.mubr.f32.mxu0 %v4435
      %4841 = vmatmul.mubr.f32.gmra.mxu0 %v4434
      %v4842 = vpop.f32.mrf.mxu0
      %v4843 = vadd.f32 %v4736, %v4842
      %v4844 = vpop.f32.mrf.mxu0
      %v4845 = vadd.f32 %v4736, %v4844
      %4846 = vmatprep.mubr.f32.mxu0 %v4439
      %4847 = vmatmul.mubr.f32.gmra.mxu0 %v4438
      %v4848 = vpop.f32.mrf.mxu0
      %v4849 = vadd.f32 %v4741, %v4848
      %v4850 = vpop.f32.mrf.mxu0
      %v4851 = vadd.f32 %v4741, %v4850
      %4852 = vmatprep.mubr.f32.mxu0 %v4443
      %4853 = vmatmul.mubr.f32.gmra.mxu0 %v4442
      %v4854 = vpop.f32.mrf.mxu0
      %v4855 = vadd.f32 %v4746, %v4854
      %v4856 = vpop.f32.mrf.mxu0
      %v4857 = vadd.f32 %v4746, %v4856
      %4858 = vmatprep.mubr.f32.mxu0 %v4447
      %4859 = vmatmul.mubr.f32.gmra.mxu0 %v4446
      %v4860 = vpop.f32.mrf.mxu0
      %v4861 = vadd.f32 %v4751, %v4860
      %v4862 = vpop.f32.mrf.mxu0
      %v4863 = vadd.f32 %v4751, %v4862
      %4864 = vmatprep.mubr.f32.mxu0 %v4451
      %4865 = vmatmul.mubr.f32.gmra.mxu0 %v4450
      %v4866 = vpop.f32.mrf.mxu0
      %v4867 = vadd.f32 %v4756, %v4866
      %v4868 = vpop.f32.mrf.mxu0
      %v4869 = vadd.f32 %v4756, %v4868
      %4870 = vdwg.mxu0
      %4871 = vmatprep.subr.mxu0 %v4643
      %4872 = vmatpush1.msra.mxu0 %v4642
      %4873 = vmatprep.subr.mxu0 %v4639
      %4874 = vmatpush1.msra.mxu0 %v4638
      %4875 = vmatprep.subr.mxu0 %v4635
      %4876 = vmatpush1.msra.mxu0 %v4634
      %4877 = vmatprep.subr.mxu0 %v4631
      %4878 = vmatpush1.msra.mxu0 %v4630
      %4879 = vmatprep.subr.mxu0 %v4627
      %4880 = vmatpush1.msra.mxu0 %v4626
      %4881 = vmatprep.subr.mxu0 %v4623
      %4882 = vmatpush1.msra.mxu0 %v4622
      %4883 = vmatprep.subr.mxu0 %v4619
      %4884 = vmatpush1.msra.mxu0 %v4618
      %4885 = vmatprep.subr.mxu0 %v4615
      %4886 = vmatpush1.msra.mxu0 %v4614
      %4887 = vmatprep.subr.mxu0 %v4611
      %4888 = vmatpush1.msra.mxu0 %v4610
      %4889 = vmatprep.subr.mxu0 %v4607
      %4890 = vmatpush1.msra.mxu0 %v4606
      %4891 = vmatprep.subr.mxu0 %v4603
      %4892 = vmatpush1.msra.mxu0 %v4602
      %4893 = vmatprep.subr.mxu0 %v4599
      %4894 = vmatpush1.msra.mxu0 %v4598
      %4895 = vmatprep.subr.mxu0 %v4595
      %4896 = vmatpush1.msra.mxu0 %v4594
      %4897 = vmatprep.subr.mxu0 %v4591
      %4898 = vmatpush1.msra.mxu0 %v4590
      %4899 = vmatprep.subr.mxu0 %v4587
      %4900 = vmatpush1.msra.mxu0 %v4586
      %4901 = vmatprep.subr.mxu0 %v4583
      %4902 = vmatpush1.msra.mxu0 %v4582
      %4903 = vmatprep.subr.mxu0 %v4707
      %4904 = vmatpush2.msra.mxu0 %v4706
      %4905 = vmatprep.subr.mxu0 %v4703
      %4906 = vmatpush2.msra.mxu0 %v4702
      %4907 = vmatprep.subr.mxu0 %v4699
      %4908 = vmatpush2.msra.mxu0 %v4698
      %4909 = vmatprep.subr.mxu0 %v4695
      %4910 = vmatpush2.msra.mxu0 %v4694
      %4911 = vmatprep.subr.mxu0 %v4691
      %4912 = vmatpush2.msra.mxu0 %v4690
      %4913 = vmatprep.subr.mxu0 %v4687
      %4914 = vmatpush2.msra.mxu0 %v4686
      %4915 = vmatprep.subr.mxu0 %v4683
      %4916 = vmatpush2.msra.mxu0 %v4682
      %4917 = vmatprep.subr.mxu0 %v4679
      %4918 = vmatpush2.msra.mxu0 %v4678
      %4919 = vmatprep.subr.mxu0 %v4675
      %4920 = vmatpush2.msra.mxu0 %v4674
      %4921 = vmatprep.subr.mxu0 %v4671
      %4922 = vmatpush2.msra.mxu0 %v4670
      %4923 = vmatprep.subr.mxu0 %v4667
      %4924 = vmatpush2.msra.mxu0 %v4666
      %4925 = vmatprep.subr.mxu0 %v4663
      %4926 = vmatpush2.msra.mxu0 %v4662
      %4927 = vmatprep.subr.mxu0 %v4659
      %4928 = vmatpush2.msra.mxu0 %v4658
      %4929 = vmatprep.subr.mxu0 %v4655
      %4930 = vmatpush2.msra.mxu0 %v4654
      %4931 = vmatprep.subr.mxu0 %v4651
      %4932 = vmatpush2.msra.mxu0 %v4650
      %4933 = vmatprep.subr.mxu0 %v4647
      %4934 = vmatpush2.msra.mxu0 %v4646
      %4935 = vmatprep.mubr.f32.mxu0 %v4425
      %4936 = vmatmul.mubr.f32.gmra.mxu0 %v4424
      %v4937 = vpop.f32.mrf.mxu0
      %v4938 = vadd.f32 %v4825, %v4937
      %v4939 = vpop.f32.mrf.mxu0
      %v4940 = vadd.f32 %v4827, %v4939
      %4941 = vmatprep.mubr.f32.mxu0 %v4429
      %4942 = vmatmul.mubr.f32.gmra.mxu0 %v4428
      %v4943 = vpop.f32.mrf.mxu0
      %v4944 = vadd.f32 %v4831, %v4943
      %v4945 = vpop.f32.mrf.mxu0
      %v4946 = vadd.f32 %v4833, %v4945
      %4947 = vmatprep.mubr.f32.mxu0 %v4433
      %4948 = vmatmul.mubr.f32.gmra.mxu0 %v4432
      %v4949 = vpop.f32.mrf.mxu0
      %v4950 = vadd.f32 %v4837, %v4949
      %v4951 = vpop.f32.mrf.mxu0
      %v4952 = vadd.f32 %v4839, %v4951
      %4953 = vmatprep.mubr.f32.mxu0 %v4437
      %4954 = vmatmul.mubr.f32.gmra.mxu0 %v4436
      %v4955 = vpop.f32.mrf.mxu0
      %v4956 = vadd.f32 %v4843, %v4955
      %v4957 = vpop.f32.mrf.mxu0
      %v4958 = vadd.f32 %v4845, %v4957
      %4959 = vmatprep.mubr.f32.mxu0 %v4441
      %4960 = vmatmul.mubr.f32.gmra.mxu0 %v4440
      %v4961 = vpop.f32.mrf.mxu0
      %v4962 = vadd.f32 %v4849, %v4961
      %v4963 = vpop.f32.mrf.mxu0
      %v4964 = vadd.f32 %v4851, %v4963
      %4965 = vmatprep.mubr.f32.mxu0 %v4445
      %4966 = vmatmul.mubr.f32.gmra.mxu0 %v4444
      %v4967 = vpop.f32.mrf.mxu0
      %v4968 = vadd.f32 %v4855, %v4967
      %v4969 = vpop.f32.mrf.mxu0
      %v4970 = vadd.f32 %v4857, %v4969
      %4971 = vmatprep.mubr.f32.mxu0 %v4449
      %4972 = vmatmul.mubr.f32.gmra.mxu0 %v4448
      %v4973 = vpop.f32.mrf.mxu0
      %v4974 = vadd.f32 %v4861, %v4973
      %v4975 = vpop.f32.mrf.mxu0
      %v4976 = vadd.f32 %v4863, %v4975
      %4977 = vmatprep.mubr.f32.mxu0 %v4453
      %4978 = vmatmul.mubr.f32.gmra.mxu0 %v4452
      %v4979 = vpop.f32.mrf.mxu0
      %v4980 = vadd.f32 %v4867, %v4979
      %v4981 = vpop.f32.mrf.mxu0
      %v4982 = vadd.f32 %v4869, %v4981
      %4983 = vdwg.mxu0
      %4984 = vmatprep.subr.mxu0 %v4517
      %4985 = vmatpush1.msra.mxu0 %v4516
      %4986 = vmatprep.subr.mxu0 %v4513
      %4987 = vmatpush1.msra.mxu0 %v4512
      %4988 = vmatprep.subr.mxu0 %v4509
      %4989 = vmatpush1.msra.mxu0 %v4508
      %4990 = vmatprep.subr.mxu0 %v4505
      %4991 = vmatpush1.msra.mxu0 %v4504
      %4992 = vmatprep.subr.mxu0 %v4501
      %4993 = vmatpush1.msra.mxu0 %v4500
      %4994 = vmatprep.subr.mxu0 %v4497
      %4995 = vmatpush1.msra.mxu0 %v4496
      %4996 = vmatprep.subr.mxu0 %v4493
      %4997 = vmatpush1.msra.mxu0 %v4492
      %4998 = vmatprep.subr.mxu0 %v4489
      %4999 = vmatpush1.msra.mxu0 %v4488
      %5000 = vmatprep.subr.mxu0 %v4485
      %5001 = vmatpush1.msra.mxu0 %v4484
      %5002 = vmatprep.subr.mxu0 %v4481
      %5003 = vmatpush1.msra.mxu0 %v4480
      %5004 = vmatprep.subr.mxu0 %v4477
      %5005 = vmatpush1.msra.mxu0 %v4476
      %5006 = vmatprep.subr.mxu0 %v4473
      %5007 = vmatpush1.msra.mxu0 %v4472
      %5008 = vmatprep.subr.mxu0 %v4469
      %5009 = vmatpush1.msra.mxu0 %v4468
      %5010 = vmatprep.subr.mxu0 %v4465
      %5011 = vmatpush1.msra.mxu0 %v4464
      %5012 = vmatprep.subr.mxu0 %v4461
      %5013 = vmatpush1.msra.mxu0 %v4460
      %5014 = vmatprep.subr.mxu0 %v4457
      %5015 = vmatpush1.msra.mxu0 %v4456
      %5016 = vmatprep.subr.mxu0 %v4581
      %5017 = vmatpush2.msra.mxu0 %v4580
      %5018 = vmatprep.subr.mxu0 %v4577
      %5019 = vmatpush2.msra.mxu0 %v4576
      %5020 = vmatprep.subr.mxu0 %v4573
      %5021 = vmatpush2.msra.mxu0 %v4572
      %5022 = vmatprep.subr.mxu0 %v4569
      %5023 = vmatpush2.msra.mxu0 %v4568
      %5024 = vmatprep.subr.mxu0 %v4565
      %5025 = vmatpush2.msra.mxu0 %v4564
      %5026 = vmatprep.subr.mxu0 %v4561
      %5027 = vmatpush2.msra.mxu0 %v4560
      %5028 = vmatprep.subr.mxu0 %v4557
      %5029 = vmatpush2.msra.mxu0 %v4556
      %5030 = vmatprep.subr.mxu0 %v4553
      %5031 = vmatpush2.msra.mxu0 %v4552
      %5032 = vmatprep.subr.mxu0 %v4549
      %5033 = vmatpush2.msra.mxu0 %v4548
      %5034 = vmatprep.subr.mxu0 %v4545
      %5035 = vmatpush2.msra.mxu0 %v4544
      %5036 = vmatprep.subr.mxu0 %v4541
      %5037 = vmatpush2.msra.mxu0 %v4540
      %5038 = vmatprep.subr.mxu0 %v4537
      %5039 = vmatpush2.msra.mxu0 %v4536
      %5040 = vmatprep.subr.mxu0 %v4533
      %5041 = vmatpush2.msra.mxu0 %v4532
      %5042 = vmatprep.subr.mxu0 %v4529
      %5043 = vmatpush2.msra.mxu0 %v4528
      %5044 = vmatprep.subr.mxu0 %v4525
      %5045 = vmatpush2.msra.mxu0 %v4524
      %5046 = vmatprep.subr.mxu0 %v4521
      %5047 = vmatpush2.msra.mxu0 %v4520
      %5048 = vmatprep.mubr.f32.mxu0 %v4423
      %5049 = vmatmul.mubr.f32.gmra.mxu0 %v4422
      %v5050 = vpop.f32.mrf.mxu0
      %v5051 = vadd.f32 %v4721, %v5050
      %v5052 = vpop.f32.mrf.mxu0
      %v5053 = vadd.f32 %v4721, %v5052
      %5054 = vmatprep.mubr.f32.mxu0 %v4427
      %5055 = vmatmul.mubr.f32.gmra.mxu0 %v4426
      %v5056 = vpop.f32.mrf.mxu0
      %v5057 = vadd.f32 %v4726, %v5056
      %v5058 = vpop.f32.mrf.mxu0
      %v5059 = vadd.f32 %v4726, %v5058
      %5060 = vmatprep.mubr.f32.mxu0 %v4431
      %5061 = vmatmul.mubr.f32.gmra.mxu0 %v4430
      %v5062 = vpop.f32.mrf.mxu0
      %v5063 = vadd.f32 %v4731, %v5062
      %v5064 = vpop.f32.mrf.mxu0
      %v5065 = vadd.f32 %v4731, %v5064
      %5066 = vmatprep.mubr.f32.mxu0 %v4435
      %5067 = vmatmul.mubr.f32.gmra.mxu0 %v4434
      %v5068 = vpop.f32.mrf.mxu0
      %v5069 = vadd.f32 %v4736, %v5068
      %v5070 = vpop.f32.mrf.mxu0
      %v5071 = vadd.f32 %v4736, %v5070
      %5072 = vmatprep.mubr.f32.mxu0 %v4439
      %5073 = vmatmul.mubr.f32.gmra.mxu0 %v4438
      %v5074 = vpop.f32.mrf.mxu0
      %v5075 = vadd.f32 %v4741, %v5074
      %v5076 = vpop.f32.mrf.mxu0
      %v5077 = vadd.f32 %v4741, %v5076
      %5078 = vmatprep.mubr.f32.mxu0 %v4443
      %5079 = vmatmul.mubr.f32.gmra.mxu0 %v4442
      %v5080 = vpop.f32.mrf.mxu0
      %v5081 = vadd.f32 %v4746, %v5080
      %v5082 = vpop.f32.mrf.mxu0
      %v5083 = vadd.f32 %v4746, %v5082
      %5084 = vmatprep.mubr.f32.mxu0 %v4447
      %5085 = vmatmul.mubr.f32.gmra.mxu0 %v4446
      %v5086 = vpop.f32.mrf.mxu0
      %v5087 = vadd.f32 %v4751, %v5086
      %v5088 = vpop.f32.mrf.mxu0
      %v5089 = vadd.f32 %v4751, %v5088
      %5090 = vmatprep.mubr.f32.mxu0 %v4451
      %5091 = vmatmul.mubr.f32.gmra.mxu0 %v4450
      %v5092 = vpop.f32.mrf.mxu0
      %v5093 = vadd.f32 %v4756, %v5092
      %v5094 = vpop.f32.mrf.mxu0
      %v5095 = vadd.f32 %v4756, %v5094
      %5096 = vdwg.mxu0
      %5097 = vmatprep.subr.mxu0 %v4645
      %5098 = vmatpush1.msra.mxu0 %v4644
      %5099 = vmatprep.subr.mxu0 %v4641
      %5100 = vmatpush1.msra.mxu0 %v4640
      %5101 = vmatprep.subr.mxu0 %v4637
      %5102 = vmatpush1.msra.mxu0 %v4636
      %5103 = vmatprep.subr.mxu0 %v4633
      %5104 = vmatpush1.msra.mxu0 %v4632
      %5105 = vmatprep.subr.mxu0 %v4629
      %5106 = vmatpush1.msra.mxu0 %v4628
      %5107 = vmatprep.subr.mxu0 %v4625
      %5108 = vmatpush1.msra.mxu0 %v4624
      %5109 = vmatprep.subr.mxu0 %v4621
      %5110 = vmatpush1.msra.mxu0 %v4620
      %5111 = vmatprep.subr.mxu0 %v4617
      %5112 = vmatpush1.msra.mxu0 %v4616
      %5113 = vmatprep.subr.mxu0 %v4613
      %5114 = vmatpush1.msra.mxu0 %v4612
      %5115 = vmatprep.subr.mxu0 %v4609
      %5116 = vmatpush1.msra.mxu0 %v4608
      %5117 = vmatprep.subr.mxu0 %v4605
      %5118 = vmatpush1.msra.mxu0 %v4604
      %5119 = vmatprep.subr.mxu0 %v4601
      %5120 = vmatpush1.msra.mxu0 %v4600
      %5121 = vmatprep.subr.mxu0 %v4597
      %5122 = vmatpush1.msra.mxu0 %v4596
      %5123 = vmatprep.subr.mxu0 %v4593
      %5124 = vmatpush1.msra.mxu0 %v4592
      %5125 = vmatprep.subr.mxu0 %v4589
      %5126 = vmatpush1.msra.mxu0 %v4588
      %5127 = vmatprep.subr.mxu0 %v4585
      %5128 = vmatpush1.msra.mxu0 %v4584
      %5129 = vmatprep.subr.mxu0 %v4709
      %5130 = vmatpush2.msra.mxu0 %v4708
      %5131 = vmatprep.subr.mxu0 %v4705
      %5132 = vmatpush2.msra.mxu0 %v4704
      %5133 = vmatprep.subr.mxu0 %v4701
      %5134 = vmatpush2.msra.mxu0 %v4700
      %5135 = vmatprep.subr.mxu0 %v4697
      %5136 = vmatpush2.msra.mxu0 %v4696
      %5137 = vmatprep.subr.mxu0 %v4693
      %5138 = vmatpush2.msra.mxu0 %v4692
      %5139 = vmatprep.subr.mxu0 %v4689
      %5140 = vmatpush2.msra.mxu0 %v4688
      %5141 = vmatprep.subr.mxu0 %v4685
      %5142 = vmatpush2.msra.mxu0 %v4684
      %5143 = vmatprep.subr.mxu0 %v4681
      %5144 = vmatpush2.msra.mxu0 %v4680
      %5145 = vmatprep.subr.mxu0 %v4677
      %5146 = vmatpush2.msra.mxu0 %v4676
      %5147 = vmatprep.subr.mxu0 %v4673
      %5148 = vmatpush2.msra.mxu0 %v4672
      %5149 = vmatprep.subr.mxu0 %v4669
      %5150 = vmatpush2.msra.mxu0 %v4668
      %5151 = vmatprep.subr.mxu0 %v4665
      %5152 = vmatpush2.msra.mxu0 %v4664
      %5153 = vmatprep.subr.mxu0 %v4661
      %5154 = vmatpush2.msra.mxu0 %v4660
      %5155 = vmatprep.subr.mxu0 %v4657
      %5156 = vmatpush2.msra.mxu0 %v4656
      %5157 = vmatprep.subr.mxu0 %v4653
      %5158 = vmatpush2.msra.mxu0 %v4652
      %5159 = vmatprep.subr.mxu0 %v4649
      %5160 = vmatpush2.msra.mxu0 %v4648
      %5161 = vmatprep.mubr.f32.mxu0 %v4425
      %5162 = vmatmul.mubr.f32.gmra.mxu0 %v4424
      %v5163 = vpop.f32.mrf.mxu0
      %v5164 = vadd.f32 %v5051, %v5163
      %v5165 = vpop.f32.mrf.mxu0
      %v5166 = vadd.f32 %v5053, %v5165
      %5167 = vmatprep.mubr.f32.mxu0 %v4429
      %5168 = vmatmul.mubr.f32.gmra.mxu0 %v4428
      %v5169 = vpop.f32.mrf.mxu0
      %v5170 = vadd.f32 %v5057, %v5169
      %v5171 = vpop.f32.mrf.mxu0
      %v5172 = vadd.f32 %v5059, %v5171
      %5173 = vmatprep.mubr.f32.mxu0 %v4433
      %5174 = vmatmul.mubr.f32.gmra.mxu0 %v4432
      %v5175 = vpop.f32.mrf.mxu0
      %v5176 = vadd.f32 %v5063, %v5175
      %v5177 = vpop.f32.mrf.mxu0
      %v5178 = vadd.f32 %v5065, %v5177
      %5179 = vmatprep.mubr.f32.mxu0 %v4437
      %5180 = vmatmul.mubr.f32.gmra.mxu0 %v4436
      %v5181 = vpop.f32.mrf.mxu0
      %v5182 = vadd.f32 %v5069, %v5181
      %v5183 = vpop.f32.mrf.mxu0
      %v5184 = vadd.f32 %v5071, %v5183
      %5185 = vmatprep.mubr.f32.mxu0 %v4441
      %5186 = vmatmul.mubr.f32.gmra.mxu0 %v4440
      %v5187 = vpop.f32.mrf.mxu0
      %v5188 = vadd.f32 %v5075, %v5187
      %v5189 = vpop.f32.mrf.mxu0
      %v5190 = vadd.f32 %v5077, %v5189
      %5191 = vmatprep.mubr.f32.mxu0 %v4445
      %5192 = vmatmul.mubr.f32.gmra.mxu0 %v4444
      %v5193 = vpop.f32.mrf.mxu0
      %v5194 = vadd.f32 %v5081, %v5193
      %v5195 = vpop.f32.mrf.mxu0
      %v5196 = vadd.f32 %v5083, %v5195
      %5197 = vmatprep.mubr.f32.mxu0 %v4449
      %5198 = vmatmul.mubr.f32.gmra.mxu0 %v4448
      %v5199 = vpop.f32.mrf.mxu0
      %v5200 = vadd.f32 %v5087, %v5199
      %v5201 = vpop.f32.mrf.mxu0
      %v5202 = vadd.f32 %v5089, %v5201
      %5203 = vmatprep.mubr.f32.mxu0 %v4453
      %5204 = vmatmul.mubr.f32.gmra.mxu0 %v4452
      %v5205 = vpop.f32.mrf.mxu0
      %v5206 = vadd.f32 %v5093, %v5205
      %v5207 = vpop.f32.mrf.mxu0
      %v5208 = vadd.f32 %v5095, %v5207
      %5209 = vdwg.mxu0
      %v5210 = vmax.f32 %v4938, 0.0
      %v5211 = vmax.f32 %v4940, 0.0
      %v5212 = vmax.f32 %v5164, 0.0
      %v5213 = vmax.f32 %v5166, 0.0
      %v5214 = vmax.f32 %v4944, 0.0
      %v5215 = vmax.f32 %v4946, 0.0
      %v5216 = vmax.f32 %v5170, 0.0
      %v5217 = vmax.f32 %v5172, 0.0
      %v5218 = vmax.f32 %v4950, 0.0
      %v5219 = vmax.f32 %v4952, 0.0
      %v5220 = vmax.f32 %v5176, 0.0
      %v5221 = vmax.f32 %v5178, 0.0
      %v5222 = vmax.f32 %v4956, 0.0
      %v5223 = vmax.f32 %v4958, 0.0
      %v5224 = vmax.f32 %v5182, 0.0
      %v5225 = vmax.f32 %v5184, 0.0
      %v5226 = vmax.f32 %v4962, 0.0
      %v5227 = vmax.f32 %v4964, 0.0
      %v5228 = vmax.f32 %v5188, 0.0
      %v5229 = vmax.f32 %v5190, 0.0
      %v5230 = vmax.f32 %v4968, 0.0
      %v5231 = vmax.f32 %v4970, 0.0
      %v5232 = vmax.f32 %v5194, 0.0
      %v5233 = vmax.f32 %v5196, 0.0
      %v5234 = vmax.f32 %v4974, 0.0
      %v5235 = vmax.f32 %v4976, 0.0
      %v5236 = vmax.f32 %v5200, 0.0
      %v5237 = vmax.f32 %v5202, 0.0
      %v5238 = vmax.f32 %v4980, 0.0
      %v5239 = vmax.f32 %v4982, 0.0
      %v5240 = vmax.f32 %v5206, 0.0
      %v5241 = vmax.f32 %v5208, 0.0
      %5242 = vst [vmem:[%s615] sm:$0xff] %v5210
      %5243 = vst [vmem:[%s615 + $0x8] sm:$0xff] %v5211
      %5244 = vst [vmem:[%s615 + $0x10] sm:$0xff] %v5212
      %5245 = vst [vmem:[%s615 + $0x18] sm:$0xff] %v5213
      %5246 = vst [vmem:[%s615 + $0x20] sm:$0xff] %v5214
      %5247 = vst [vmem:[%s615 + $0x28] sm:$0xff] %v5215
      %5248 = vst [vmem:[%s615 + $0x30] sm:$0xff] %v5216
      %5249 = vst [vmem:[%s615 + $0x38] sm:$0xff] %v5217
      %5250 = vst [vmem:[%s615 + $0x40] sm:$0xff] %v5218
      %5251 = vst [vmem:[%s615 + $0x48] sm:$0xff] %v5219
      %5252 = vst [vmem:[%s615 + $0x50] sm:$0xff] %v5220
      %5253 = vst [vmem:[%s615 + $0x58] sm:$0xff] %v5221
      %5254 = vst [vmem:[%s615 + $0x60] sm:$0xff] %v5222
      %5255 = vst [vmem:[%s615 + $0x68] sm:$0xff] %v5223
      %5256 = vst [vmem:[%s615 + $0x70] sm:$0xff] %v5224
      %5257 = vst [vmem:[%s615 + $0x78] sm:$0xff] %v5225
      %5258 = vst [vmem:[%s615 + $0x80] sm:$0xff] %v5226
      %5259 = vst [vmem:[%s615 + $0x88] sm:$0xff] %v5227
      %5260 = vst [vmem:[%s615 + $0x90] sm:$0xff] %v5228
      %5261 = vst [vmem:[%s615 + $0x98] sm:$0xff] %v5229
      %5262 = vst [vmem:[%s615 + $0xa0] sm:$0xff] %v5230
      %5263 = vst [vmem:[%s615 + $0xa8] sm:$0xff] %v5231
      %5264 = vst [vmem:[%s615 + $0xb0] sm:$0xff] %v5232
      %5265 = vst [vmem:[%s615 + $0xb8] sm:$0xff] %v5233
      %5266 = vst [vmem:[%s615 + $0xc0] sm:$0xff] %v5234
      %5267 = vst [vmem:[%s615 + $0xc8] sm:$0xff] %v5235
      %5268 = vst [vmem:[%s615 + $0xd0] sm:$0xff] %v5236
      %5269 = vst [vmem:[%s615 + $0xd8] sm:$0xff] %v5237
      %5270 = vst [vmem:[%s615 + $0xe0] sm:$0xff] %v5238
      %5271 = vst [vmem:[%s615 + $0xe8] sm:$0xff] %v5239
      %5272 = vst [vmem:[%s615 + $0xf0] sm:$0xff] %v5240
      %5273 = vst [vmem:[%s615 + $0xf8] sm:$0xff] %v5241
      %p5274 = scmp.lt.s32.totalorder %s24, 1
      %s5275 = scalar_select %p5274, %s24, 1
      %p5276 = scmp.lt.s32.totalorder %s25, 1
      %s5277 = scalar_select %p5276, %s25, 1
      %s5278 = smul.addr %s5277, 32
      %s5279 = smul.addr %s5275, 64
      %s5280 = sadd.s32 %s5278, %s5279
      %s5281 = smul.addr %s5280, 8
      %s5282 = scalar_lea.vmem %s9, %s5281
      // Predicated region
      $region57: #{_upsampling_forward.1} parent=55 // pred_check
        %p5283 = pneg %p305
      $region58: #{_upsampling_forward.1} parent=55 // pred_check_branch
        %5285 = sbr.rel (%p5283) target = $region60
      $region59: #{_upsampling_forward.1} parent=55 // pred_region
        _
      $region60: #{_upsampling_forward.1} parent=55 // pred_fallthru
        _
    $region56: #{_upsampling_forward.1} parent=5 // pred_fallthru
      _
    %p5286 = scmp.le.s32.totalorder 2, %s15
    // Predicated region
    $region61: #{_upsampling_forward.1} parent=5 // pred_check
      %p5287 = pneg %p5286
    $region62: #{_upsampling_forward.1} parent=5 // pred_check_branch
      %5289 = sbr.rel (%p5287) target = $region64
    $region63: #{_upsampling_forward.1} parent=5 // pred_region
      %s5290 = ssub.s32 %s15, 2
      // Predicated region
      $region65: #{_upsampling_forward.1} parent=63 // pred_check
        %p5291 = pneg %p311
      $region66: #{_upsampling_forward.1} parent=63 // pred_check_branch
        %5293 = sbr.rel (%p5291) target = $region68
      $region67: #{_upsampling_forward.1} parent=63 // pred_region
        %p5294 = scmp.lt.s32.totalorder %s26, 1
        %s5295 = scalar_select %p5294, %s26, 1
        %p5296 = scmp.lt.s32.totalorder %s27, 1
        %s5297 = scalar_select %p5296, %s27, 1
        %s5298 = smul.addr %s5297, 32
        %s5299 = smul.addr %s5295, 64
        %s5300 = sadd.s32 %s5298, %s5299
        %s5301 = smul.addr %s5300, 8
        %s5302 = scalar_lea.vmem %s9, %s5301
      $region68: #{_upsampling_forward.1} parent=63 // pred_fallthru
        _
    $region64: #{_upsampling_forward.1} parent=5 // pred_fallthru
      _
  $region6: #{_upsampling_forward.1} parent=0 // loop_footer
    %s19 = sadd.s32 1, %s15
  $region7: #{_upsampling_forward.1} parent=0 // loop_footer_branch
    %14 = sbr.rel target = $region3
  $region8: #{_upsampling_forward.1} parent=0 // loop_exit
    _

</llo_original>
